<compile_context>
chip_gen: v7x
topology: tpu7x:2x2x1
jax: 0.10.0
libtpu: 0.0.40
codegen_flags: <defaults>
</compile_context>

<pallas_src>
import functools

import numpy as np
import jax
import jax.numpy as jnp
from jax import lax
from jax.experimental import pallas as pl
from jax.experimental.pallas import tpu as pltpu

LEAKY_SLOPE = 0.01   # nn.LeakyReLU() default negative_slope
BN_EPS = 1e-5        # nn.BatchNorm2d default eps


# -----------------------------------------------------------------------------
# In-kernel conv helper: 3x3 'same' conv + folded-BN bias, pure VPU
# -----------------------------------------------------------------------------
def _conv3x3_vpu(x3, w_ref, b_ref, mask_l, mask_r, *, N, C, H, W):
    """3x3 conv (+ folded-BN bias) on a channels-outer, spatially lane-dense tile.

    x3:     (N, C, H*W) f32 value (H*W on lanes).
    w_ref:  SMEM f32 (C*C*9,)  folded conv+BN weight, index (o*C + i)*9 + ky*3 + kx.
    b_ref:  SMEM f32 (C,)      folded conv+BN bias.
    mask_l: (1, 1, H*W) f32, zero where x == 0     (kills row wrap of dx=-1 taps).
    mask_r: (1, 1, H*W) f32, zero where x == W-1   (kills row wrap of dx=+1 taps).

    Each tap is a static lane-shifted slice of a zero-padded copy of x3: the vertical
    image border comes from the zero pad, the horizontal border from the lane masks.
    Accumulation is scalar-broadcast VPU FMAs only (no MXU).
    """
    HW = H * W
    P = W + 1                                           # covers the largest tap shift W+1
    zpad = jnp.zeros((N, C, P), jnp.float32)
    padded = jnp.concatenate([zpad, x3, zpad], axis=2)  # (N, C, HW + 2P)

    # Per-tap, per-input-channel slabs: computed once, reused for every output channel.
    slabs = []                                          # (tap_idx, [C slabs of (N,1,HW)])
    for dy in (-1, 0, 1):
        for dx in (-1, 0, 1):
            kidx = (dy + 1) * 3 + (dx + 1)
            off = P + dy * W + dx
            win = padded[:, :, off:off + HW]            # (N, C, HW), static lane slice
            if dx == -1:
                win = win * mask_l
            elif dx == 1:
                win = win * mask_r
            slabs.append((kidx, [win[:, i:i + 1, :] for i in range(C)]))

    outs = []
    for o in range(C):
        acc = jnp.zeros((N, 1, HW), jnp.float32)
        for kidx, per_i in slabs:
            for i in range(C):
                acc = acc + w_ref[(o * C + i) * 9 + kidx] * per_i[i]   # scalar-bcast FMA
        outs.append(acc + b_ref[o])
    return jnp.concatenate(outs, axis=1)                # (N, C, HW)


# -----------------------------------------------------------------------------
# Fused residual-block kernel (single grid step, whole batch resident in VMEM)
# -----------------------------------------------------------------------------
def residual_block_kernel(x_ref, mask_l_ref, mask_r_ref,
                          w1_ref, b1_ref, w2_ref, b2_ref, out_ref, *, N, C, H, W):
    x = x_ref[...].astype(jnp.float32)                  # (N, C, H*W); reused for residual
    mask_l = mask_l_ref[...]
    mask_r = mask_r_ref[...]

    h = _conv3x3_vpu(x, w1_ref, b1_ref, mask_l, mask_r, N=N, C=C, H=H, W=W)
    h = jnp.maximum(h, LEAKY_SLOPE * h)                 # LeakyReLU (slope < 1)
    h = _conv3x3_vpu(h, w2_ref, b2_ref, mask_l, mask_r, N=N, C=C, H=H, W=W)

    out_ref[...] = (h + x).astype(out_ref.dtype)        # residual add, lane-dense store


# -----------------------------------------------------------------------------
# Parameter setup / BN folding (plain-JAX glue)
# -----------------------------------------------------------------------------
def init_params(key, C):
    ks = jax.random.split(key, 12)
    p = {}
    for i, base in ((1, 0), (2, 6)):
        p[f"w{i}"] = 0.05 * jax.random.normal(ks[base + 0], (C, C, 3, 3), jnp.float32)  # OIHW
        p[f"b{i}"] = 0.05 * jax.random.normal(ks[base + 1], (C,), jnp.float32)
        p[f"gamma{i}"] = 1.0 + 0.1 * jax.random.normal(ks[base + 2], (C,), jnp.float32)
        p[f"beta{i}"] = 0.1 * jax.random.normal(ks[base + 3], (C,), jnp.float32)
        p[f"mean{i}"] = 0.1 * jax.random.normal(ks[base + 4], (C,), jnp.float32)
        p[f"var{i}"] = 0.5 + jax.random.uniform(ks[base + 5], (C,), jnp.float32)
    return p


def fold_conv_bn(w, b, gamma, beta, mean, var):
    """Fold eval-mode BN into the conv. Returns flat weight (Cout*Cin*9,) and bias (Cout,)."""
    scale = gamma / jnp.sqrt(var + BN_EPS)              # (Cout,)
    wf = w * scale[:, None, None, None]                 # (Cout, Cin, 3, 3), OIHW
    bf = (b - mean) * scale + beta                      # (Cout,)
    return wf.reshape(-1), bf


# -----------------------------------------------------------------------------
# Forward wrapper (no transposes -- only free reshapes of contiguous NCHW data)
# -----------------------------------------------------------------------------
def residual_block_forward(x_nchw, params):
    N, C, H, W = x_nchw.shape
    HW = H * W

    x3 = x_nchw.reshape(N, C, HW)                       # channels-outer, lane-dense view

    w1f, b1f = fold_conv_bn(params["w1"], params["b1"], params["gamma1"],
                            params["beta1"], params["mean1"], params["var1"])
    w2f, b2f = fold_conv_bn(params["w2"], params["b2"], params["gamma2"],
                            params["beta2"], params["mean2"], params["var2"])

    # Static 0/1 lane masks killing the row wrap of the dx = +/-1 taps in the flat layout.
    colx = np.arange(HW, dtype=np.int32) % W
    mask_l = jnp.asarray(colx >= 1, dtype=jnp.float32).reshape(1, 1, HW)
    mask_r = jnp.asarray(colx <= W - 2, dtype=jnp.float32).reshape(1, 1, HW)

    vmem = pl.BlockSpec(memory_space=pltpu.MemorySpace.VMEM)
    smem = pl.BlockSpec(memory_space=pltpu.MemorySpace.SMEM)

    y3 = pl.pallas_call(
        functools.partial(residual_block_kernel, N=N, C=C, H=H, W=W),
        out_shape=jax.ShapeDtypeStruct((N, C, HW), x3.dtype),
        in_specs=[vmem,    # x (also the residual)
                  vmem,    # mask_l
                  vmem,    # mask_r
                  smem,    # folded conv1+BN1 weights (scalar-broadcast)
                  smem,    # folded conv1+BN1 bias
                  smem,    # folded conv2+BN2 weights
                  smem],   # folded conv2+BN2 bias
        out_specs=vmem,
    )(x3, mask_l, mask_r, w1f, b1f, w2f, b2f)

    return y3.reshape(N, C, H, W)


# -----------------------------------------------------------------------------
# Pure-JAX reference (same semantics as the torch module in eval mode)
# -----------------------------------------------------------------------------
def reference_forward(x_nchw, p):
    def conv(x, w, b):
        out = lax.conv_general_dilated(
            x, w, window_strides=(1, 1), padding=((1, 1), (1, 1)),
            dimension_numbers=("NCHW", "OIHW", "NCHW"))
        return out + b[None, :, None, None]

    def bn(x, g, be, m, v):
        return (x - m[None, :, None, None]) / jnp.sqrt(v[None, :, None, None] + BN_EPS) \
            * g[None, :, None, None] + be[None, :, None, None]

    h = conv(x_nchw, p["w1"], p["b1"])
    h = bn(h, p["gamma1"], p["beta1"], p["mean1"], p["var1"])
    h = jnp.where(h >= 0, h, LEAKY_SLOPE * h)
    h = conv(h, p["w2"], p["b2"])
    h = bn(h, p["gamma2"], p["beta2"], p["mean2"], p["var2"])
    return h + x_nchw


if __name__ == "__main__":
    key = jax.random.PRNGKey(0)
    k_in, k_p = jax.random.split(key)

    N, C, H, W = 2, 4, 16, 16                  # small synthetic shapes (in_c_and_out_c=4)
    x = jax.random.normal(k_in, (N, C, H, W), jnp.float32)
    params = init_params(k_p, C)

    y = residual_block_forward(x, params)
    y = jax.block_until_ready(y)

    assert y.shape == x.shape, "error design"
    y_ref = reference_forward(x, params)
    assert jnp.allclose(y, y_ref, rtol=1e-3, atol=1e-3), "mismatch vs reference"

    print("KERNEL_OK")
</pallas_src>

<mosaic_0001>
module attributes {stable_mosaic.version = 11 : i64} {
  func.func @residual_block_kernel(%arg0: memref<2x4x256xf32, #tpu.memory_space<vmem>>, %arg1: memref<1x1x256xf32, #tpu.memory_space<vmem>>, %arg2: memref<1x1x256xf32, #tpu.memory_space<vmem>>, %arg3: memref<144xf32, #tpu.memory_space<smem>>, %arg4: memref<4xf32, #tpu.memory_space<smem>>, %arg5: memref<144xf32, #tpu.memory_space<smem>>, %arg6: memref<4xf32, #tpu.memory_space<smem>>, %arg7: memref<2x4x256xf32, #tpu.memory_space<vmem>>) attributes {dimension_semantics = [], scalar_prefetch = 0 : i64, scratch_operands = 0 : i64, tpu.core_type = #tpu.core_type<tc>} {
    %c0 = arith.constant 0 : index
    %c0_0 = arith.constant 0 : index
    %c0_1 = arith.constant 0 : index
    %0 = vector.load %arg0[%c0, %c0_0, %c0_1] : memref<2x4x256xf32, #tpu.memory_space<vmem>>, vector<2x4x256xf32>
    %c0_2 = arith.constant 0 : index
    %c0_3 = arith.constant 0 : index
    %c0_4 = arith.constant 0 : index
    %1 = vector.load %arg1[%c0_2, %c0_3, %c0_4] : memref<1x1x256xf32, #tpu.memory_space<vmem>>, vector<1x1x256xf32>
    %c0_5 = arith.constant 0 : index
    %c0_6 = arith.constant 0 : index
    %c0_7 = arith.constant 0 : index
    %2 = vector.load %arg2[%c0_5, %c0_6, %c0_7] : memref<1x1x256xf32, #tpu.memory_space<vmem>>, vector<1x1x256xf32>
    %cst = arith.constant 0.000000e+00 : f32
    %3 = vector.broadcast %cst : f32 to vector<2x4x17xf32>
    %4 = tpu.concatenate %3, %0, %3 in 2 : vector<2x4x17xf32>, vector<2x4x256xf32>, vector<2x4x17xf32> -> vector<2x4x290xf32>
    %5 = vector.extract_strided_slice %4 {offsets = [0, 0, 0], sizes = [2, 4, 256], strides = [1, 1, 1]} : vector<2x4x290xf32> to vector<2x4x256xf32>
    %6 = vector.broadcast %1 : vector<1x1x256xf32> to vector<2x4x256xf32>
    %7 = arith.mulf %5, %6 : vector<2x4x256xf32>
    %8 = vector.extract_strided_slice %7 {offsets = [0, 0, 0], sizes = [2, 1, 256], strides = [1, 1, 1]} : vector<2x4x256xf32> to vector<2x1x256xf32>
    %9 = vector.extract_strided_slice %7 {offsets = [0, 1, 0], sizes = [2, 1, 256], strides = [1, 1, 1]} : vector<2x4x256xf32> to vector<2x1x256xf32>
    %10 = vector.extract_strided_slice %7 {offsets = [0, 2, 0], sizes = [2, 1, 256], strides = [1, 1, 1]} : vector<2x4x256xf32> to vector<2x1x256xf32>
    %11 = vector.extract_strided_slice %7 {offsets = [0, 3, 0], sizes = [2, 1, 256], strides = [1, 1, 1]} : vector<2x4x256xf32> to vector<2x1x256xf32>
    %12 = vector.extract_strided_slice %4 {offsets = [0, 0, 1], sizes = [2, 4, 256], strides = [1, 1, 1]} : vector<2x4x290xf32> to vector<2x4x256xf32>
    %13 = vector.extract_strided_slice %12 {offsets = [0, 0, 0], sizes = [2, 1, 256], strides = [1, 1, 1]} : vector<2x4x256xf32> to vector<2x1x256xf32>
    %14 = vector.extract_strided_slice %12 {offsets = [0, 1, 0], sizes = [2, 1, 256], strides = [1, 1, 1]} : vector<2x4x256xf32> to vector<2x1x256xf32>
    %15 = vector.extract_strided_slice %12 {offsets = [0, 2, 0], sizes = [2, 1, 256], strides = [1, 1, 1]} : vector<2x4x256xf32> to vector<2x1x256xf32>
    %16 = vector.extract_strided_slice %12 {offsets = [0, 3, 0], sizes = [2, 1, 256], strides = [1, 1, 1]} : vector<2x4x256xf32> to vector<2x1x256xf32>
    %17 = vector.extract_strided_slice %4 {offsets = [0, 0, 2], sizes = [2, 4, 256], strides = [1, 1, 1]} : vector<2x4x290xf32> to vector<2x4x256xf32>
    %18 = vector.broadcast %2 : vector<1x1x256xf32> to vector<2x4x256xf32>
    %19 = arith.mulf %17, %18 : vector<2x4x256xf32>
    %20 = vector.extract_strided_slice %19 {offsets = [0, 0, 0], sizes = [2, 1, 256], strides = [1, 1, 1]} : vector<2x4x256xf32> to vector<2x1x256xf32>
    %21 = vector.extract_strided_slice %19 {offsets = [0, 1, 0], sizes = [2, 1, 256], strides = [1, 1, 1]} : vector<2x4x256xf32> to vector<2x1x256xf32>
    %22 = vector.extract_strided_slice %19 {offsets = [0, 2, 0], sizes = [2, 1, 256], strides = [1, 1, 1]} : vector<2x4x256xf32> to vector<2x1x256xf32>
    %23 = vector.extract_strided_slice %19 {offsets = [0, 3, 0], sizes = [2, 1, 256], strides = [1, 1, 1]} : vector<2x4x256xf32> to vector<2x1x256xf32>
    %24 = vector.extract_strided_slice %4 {offsets = [0, 0, 16], sizes = [2, 4, 256], strides = [1, 1, 1]} : vector<2x4x290xf32> to vector<2x4x256xf32>
    %25 = vector.broadcast %1 : vector<1x1x256xf32> to vector<2x4x256xf32>
    %26 = arith.mulf %24, %25 : vector<2x4x256xf32>
    %27 = vector.extract_strided_slice %26 {offsets = [0, 0, 0], sizes = [2, 1, 256], strides = [1, 1, 1]} : vector<2x4x256xf32> to vector<2x1x256xf32>
    %28 = vector.extract_strided_slice %26 {offsets = [0, 1, 0], sizes = [2, 1, 256], strides = [1, 1, 1]} : vector<2x4x256xf32> to vector<2x1x256xf32>
    %29 = vector.extract_strided_slice %26 {offsets = [0, 2, 0], sizes = [2, 1, 256], strides = [1, 1, 1]} : vector<2x4x256xf32> to vector<2x1x256xf32>
    %30 = vector.extract_strided_slice %26 {offsets = [0, 3, 0], sizes = [2, 1, 256], strides = [1, 1, 1]} : vector<2x4x256xf32> to vector<2x1x256xf32>
    %31 = vector.extract_strided_slice %4 {offsets = [0, 0, 17], sizes = [2, 4, 256], strides = [1, 1, 1]} : vector<2x4x290xf32> to vector<2x4x256xf32>
    %32 = vector.extract_strided_slice %31 {offsets = [0, 0, 0], sizes = [2, 1, 256], strides = [1, 1, 1]} : vector<2x4x256xf32> to vector<2x1x256xf32>
    %33 = vector.extract_strided_slice %31 {offsets = [0, 1, 0], sizes = [2, 1, 256], strides = [1, 1, 1]} : vector<2x4x256xf32> to vector<2x1x256xf32>
    %34 = vector.extract_strided_slice %31 {offsets = [0, 2, 0], sizes = [2, 1, 256], strides = [1, 1, 1]} : vector<2x4x256xf32> to vector<2x1x256xf32>
    %35 = vector.extract_strided_slice %31 {offsets = [0, 3, 0], sizes = [2, 1, 256], strides = [1, 1, 1]} : vector<2x4x256xf32> to vector<2x1x256xf32>
    %36 = vector.extract_strided_slice %4 {offsets = [0, 0, 18], sizes = [2, 4, 256], strides = [1, 1, 1]} : vector<2x4x290xf32> to vector<2x4x256xf32>
    %37 = vector.broadcast %2 : vector<1x1x256xf32> to vector<2x4x256xf32>
    %38 = arith.mulf %36, %37 : vector<2x4x256xf32>
    %39 = vector.extract_strided_slice %38 {offsets = [0, 0, 0], sizes = [2, 1, 256], strides = [1, 1, 1]} : vector<2x4x256xf32> to vector<2x1x256xf32>
    %40 = vector.extract_strided_slice %38 {offsets = [0, 1, 0], sizes = [2, 1, 256], strides = [1, 1, 1]} : vector<2x4x256xf32> to vector<2x1x256xf32>
    %41 = vector.extract_strided_slice %38 {offsets = [0, 2, 0], sizes = [2, 1, 256], strides = [1, 1, 1]} : vector<2x4x256xf32> to vector<2x1x256xf32>
    %42 = vector.extract_strided_slice %38 {offsets = [0, 3, 0], sizes = [2, 1, 256], strides = [1, 1, 1]} : vector<2x4x256xf32> to vector<2x1x256xf32>
    %43 = vector.extract_strided_slice %4 {offsets = [0, 0, 32], sizes = [2, 4, 256], strides = [1, 1, 1]} : vector<2x4x290xf32> to vector<2x4x256xf32>
    %44 = vector.broadcast %1 : vector<1x1x256xf32> to vector<2x4x256xf32>
    %45 = arith.mulf %43, %44 : vector<2x4x256xf32>
    %46 = vector.extract_strided_slice %45 {offsets = [0, 0, 0], sizes = [2, 1, 256], strides = [1, 1, 1]} : vector<2x4x256xf32> to vector<2x1x256xf32>
    %47 = vector.extract_strided_slice %45 {offsets = [0, 1, 0], sizes = [2, 1, 256], strides = [1, 1, 1]} : vector<2x4x256xf32> to vector<2x1x256xf32>
    %48 = vector.extract_strided_slice %45 {offsets = [0, 2, 0], sizes = [2, 1, 256], strides = [1, 1, 1]} : vector<2x4x256xf32> to vector<2x1x256xf32>
    %49 = vector.extract_strided_slice %45 {offsets = [0, 3, 0], sizes = [2, 1, 256], strides = [1, 1, 1]} : vector<2x4x256xf32> to vector<2x1x256xf32>
    %50 = vector.extract_strided_slice %4 {offsets = [0, 0, 33], sizes = [2, 4, 256], strides = [1, 1, 1]} : vector<2x4x290xf32> to vector<2x4x256xf32>
    %51 = vector.extract_strided_slice %50 {offsets = [0, 0, 0], sizes = [2, 1, 256], strides = [1, 1, 1]} : vector<2x4x256xf32> to vector<2x1x256xf32>
    %52 = vector.extract_strided_slice %50 {offsets = [0, 1, 0], sizes = [2, 1, 256], strides = [1, 1, 1]} : vector<2x4x256xf32> to vector<2x1x256xf32>
    %53 = vector.extract_strided_slice %50 {offsets = [0, 2, 0], sizes = [2, 1, 256], strides = [1, 1, 1]} : vector<2x4x256xf32> to vector<2x1x256xf32>
    %54 = vector.extract_strided_slice %50 {offsets = [0, 3, 0], sizes = [2, 1, 256], strides = [1, 1, 1]} : vector<2x4x256xf32> to vector<2x1x256xf32>
    %55 = vector.extract_strided_slice %4 {offsets = [0, 0, 34], sizes = [2, 4, 256], strides = [1, 1, 1]} : vector<2x4x290xf32> to vector<2x4x256xf32>
    %56 = vector.broadcast %2 : vector<1x1x256xf32> to vector<2x4x256xf32>
    %57 = arith.mulf %55, %56 : vector<2x4x256xf32>
    %58 = vector.extract_strided_slice %57 {offsets = [0, 0, 0], sizes = [2, 1, 256], strides = [1, 1, 1]} : vector<2x4x256xf32> to vector<2x1x256xf32>
    %59 = vector.extract_strided_slice %57 {offsets = [0, 1, 0], sizes = [2, 1, 256], strides = [1, 1, 1]} : vector<2x4x256xf32> to vector<2x1x256xf32>
    %60 = vector.extract_strided_slice %57 {offsets = [0, 2, 0], sizes = [2, 1, 256], strides = [1, 1, 1]} : vector<2x4x256xf32> to vector<2x1x256xf32>
    %61 = vector.extract_strided_slice %57 {offsets = [0, 3, 0], sizes = [2, 1, 256], strides = [1, 1, 1]} : vector<2x4x256xf32> to vector<2x1x256xf32>
    %cst_8 = arith.constant 0.000000e+00 : f32
    %62 = vector.broadcast %cst_8 : f32 to vector<2x1x256xf32>
    %c0_9 = arith.constant 0 : index
    %63 = memref.load %arg3[%c0_9] : memref<144xf32, #tpu.memory_space<smem>>
    %64 = vector.broadcast %63 : f32 to vector<2x1x256xf32>
    %65 = arith.mulf %64, %8 : vector<2x1x256xf32>
    %66 = arith.addf %62, %65 : vector<2x1x256xf32>
    %c9 = arith.constant 9 : index
    %67 = memref.load %arg3[%c9] : memref<144xf32, #tpu.memory_space<smem>>
    %68 = vector.broadcast %67 : f32 to vector<2x1x256xf32>
    %69 = arith.mulf %68, %9 : vector<2x1x256xf32>
    %70 = arith.addf %66, %69 : vector<2x1x256xf32>
    %c18 = arith.constant 18 : index
    %71 = memref.load %arg3[%c18] : memref<144xf32, #tpu.memory_space<smem>>
    %72 = vector.broadcast %71 : f32 to vector<2x1x256xf32>
    %73 = arith.mulf %72, %10 : vector<2x1x256xf32>
    %74 = arith.addf %70, %73 : vector<2x1x256xf32>
    %c27 = arith.constant 27 : index
    %75 = memref.load %arg3[%c27] : memref<144xf32, #tpu.memory_space<smem>>
    %76 = vector.broadcast %75 : f32 to vector<2x1x256xf32>
    %77 = arith.mulf %76, %11 : vector<2x1x256xf32>
    %78 = arith.addf %74, %77 : vector<2x1x256xf32>
    %c1 = arith.constant 1 : index
    %79 = memref.load %arg3[%c1] : memref<144xf32, #tpu.memory_space<smem>>
    %80 = vector.broadcast %79 : f32 to vector<2x1x256xf32>
    %81 = arith.mulf %80, %13 : vector<2x1x256xf32>
    %82 = arith.addf %78, %81 : vector<2x1x256xf32>
    %c10 = arith.constant 10 : index
    %83 = memref.load %arg3[%c10] : memref<144xf32, #tpu.memory_space<smem>>
    %84 = vector.broadcast %83 : f32 to vector<2x1x256xf32>
    %85 = arith.mulf %84, %14 : vector<2x1x256xf32>
    %86 = arith.addf %82, %85 : vector<2x1x256xf32>
    %c19 = arith.constant 19 : index
    %87 = memref.load %arg3[%c19] : memref<144xf32, #tpu.memory_space<smem>>
    %88 = vector.broadcast %87 : f32 to vector<2x1x256xf32>
    %89 = arith.mulf %88, %15 : vector<2x1x256xf32>
    %90 = arith.addf %86, %89 : vector<2x1x256xf32>
    %c28 = arith.constant 28 : index
    %91 = memref.load %arg3[%c28] : memref<144xf32, #tpu.memory_space<smem>>
    %92 = vector.broadcast %91 : f32 to vector<2x1x256xf32>
    %93 = arith.mulf %92, %16 : vector<2x1x256xf32>
    %94 = arith.addf %90, %93 : vector<2x1x256xf32>
    %c2 = arith.constant 2 : index
    %95 = memref.load %arg3[%c2] : memref<144xf32, #tpu.memory_space<smem>>
    %96 = vector.broadcast %95 : f32 to vector<2x1x256xf32>
    %97 = arith.mulf %96, %20 : vector<2x1x256xf32>
    %98 = arith.addf %94, %97 : vector<2x1x256xf32>
    %c11 = arith.constant 11 : index
    %99 = memref.load %arg3[%c11] : memref<144xf32, #tpu.memory_space<smem>>
    %100 = vector.broadcast %99 : f32 to vector<2x1x256xf32>
    %101 = arith.mulf %100, %21 : vector<2x1x256xf32>
    %102 = arith.addf %98, %101 : vector<2x1x256xf32>
    %c20 = arith.constant 20 : index
    %103 = memref.load %arg3[%c20] : memref<144xf32, #tpu.memory_space<smem>>
    %104 = vector.broadcast %103 : f32 to vector<2x1x256xf32>
    %105 = arith.mulf %104, %22 : vector<2x1x256xf32>
    %106 = arith.addf %102, %105 : vector<2x1x256xf32>
    %c29 = arith.constant 29 : index
    %107 = memref.load %arg3[%c29] : memref<144xf32, #tpu.memory_space<smem>>
    %108 = vector.broadcast %107 : f32 to vector<2x1x256xf32>
    %109 = arith.mulf %108, %23 : vector<2x1x256xf32>
    %110 = arith.addf %106, %109 : vector<2x1x256xf32>
    %c3 = arith.constant 3 : index
    %111 = memref.load %arg3[%c3] : memref<144xf32, #tpu.memory_space<smem>>
    %112 = vector.broadcast %111 : f32 to vector<2x1x256xf32>
    %113 = arith.mulf %112, %27 : vector<2x1x256xf32>
    %114 = arith.addf %110, %113 : vector<2x1x256xf32>
    %c12 = arith.constant 12 : index
    %115 = memref.load %arg3[%c12] : memref<144xf32, #tpu.memory_space<smem>>
    %116 = vector.broadcast %115 : f32 to vector<2x1x256xf32>
    %117 = arith.mulf %116, %28 : vector<2x1x256xf32>
    %118 = arith.addf %114, %117 : vector<2x1x256xf32>
    %c21 = arith.constant 21 : index
    %119 = memref.load %arg3[%c21] : memref<144xf32, #tpu.memory_space<smem>>
    %120 = vector.broadcast %119 : f32 to vector<2x1x256xf32>
    %121 = arith.mulf %120, %29 : vector<2x1x256xf32>
    %122 = arith.addf %118, %121 : vector<2x1x256xf32>
    %c30 = arith.constant 30 : index
    %123 = memref.load %arg3[%c30] : memref<144xf32, #tpu.memory_space<smem>>
    %124 = vector.broadcast %123 : f32 to vector<2x1x256xf32>
    %125 = arith.mulf %124, %30 : vector<2x1x256xf32>
    %126 = arith.addf %122, %125 : vector<2x1x256xf32>
    %c4 = arith.constant 4 : index
    %127 = memref.load %arg3[%c4] : memref<144xf32, #tpu.memory_space<smem>>
    %128 = vector.broadcast %127 : f32 to vector<2x1x256xf32>
    %129 = arith.mulf %128, %32 : vector<2x1x256xf32>
    %130 = arith.addf %126, %129 : vector<2x1x256xf32>
    %c13 = arith.constant 13 : index
    %131 = memref.load %arg3[%c13] : memref<144xf32, #tpu.memory_space<smem>>
    %132 = vector.broadcast %131 : f32 to vector<2x1x256xf32>
    %133 = arith.mulf %132, %33 : vector<2x1x256xf32>
    %134 = arith.addf %130, %133 : vector<2x1x256xf32>
    %c22 = arith.constant 22 : index
    %135 = memref.load %arg3[%c22] : memref<144xf32, #tpu.memory_space<smem>>
    %136 = vector.broadcast %135 : f32 to vector<2x1x256xf32>
    %137 = arith.mulf %136, %34 : vector<2x1x256xf32>
    %138 = arith.addf %134, %137 : vector<2x1x256xf32>
    %c31 = arith.constant 31 : index
    %139 = memref.load %arg3[%c31] : memref<144xf32, #tpu.memory_space<smem>>
    %140 = vector.broadcast %139 : f32 to vector<2x1x256xf32>
    %141 = arith.mulf %140, %35 : vector<2x1x256xf32>
    %142 = arith.addf %138, %141 : vector<2x1x256xf32>
    %c5 = arith.constant 5 : index
    %143 = memref.load %arg3[%c5] : memref<144xf32, #tpu.memory_space<smem>>
    %144 = vector.broadcast %143 : f32 to vector<2x1x256xf32>
    %145 = arith.mulf %144, %39 : vector<2x1x256xf32>
    %146 = arith.addf %142, %145 : vector<2x1x256xf32>
    %c14 = arith.constant 14 : index
    %147 = memref.load %arg3[%c14] : memref<144xf32, #tpu.memory_space<smem>>
    %148 = vector.broadcast %147 : f32 to vector<2x1x256xf32>
    %149 = arith.mulf %148, %40 : vector<2x1x256xf32>
    %150 = arith.addf %146, %149 : vector<2x1x256xf32>
    %c23 = arith.constant 23 : index
    %151 = memref.load %arg3[%c23] : memref<144xf32, #tpu.memory_space<smem>>
    %152 = vector.broadcast %151 : f32 to vector<2x1x256xf32>
    %153 = arith.mulf %152, %41 : vector<2x1x256xf32>
    %154 = arith.addf %150, %153 : vector<2x1x256xf32>
    %c32 = arith.constant 32 : index
    %155 = memref.load %arg3[%c32] : memref<144xf32, #tpu.memory_space<smem>>
    %156 = vector.broadcast %155 : f32 to vector<2x1x256xf32>
    %157 = arith.mulf %156, %42 : vector<2x1x256xf32>
    %158 = arith.addf %154, %157 : vector<2x1x256xf32>
    %c6 = arith.constant 6 : index
    %159 = memref.load %arg3[%c6] : memref<144xf32, #tpu.memory_space<smem>>
    %160 = vector.broadcast %159 : f32 to vector<2x1x256xf32>
    %161 = arith.mulf %160, %46 : vector<2x1x256xf32>
    %162 = arith.addf %158, %161 : vector<2x1x256xf32>
    %c15 = arith.constant 15 : index
    %163 = memref.load %arg3[%c15] : memref<144xf32, #tpu.memory_space<smem>>
    %164 = vector.broadcast %163 : f32 to vector<2x1x256xf32>
    %165 = arith.mulf %164, %47 : vector<2x1x256xf32>
    %166 = arith.addf %162, %165 : vector<2x1x256xf32>
    %c24 = arith.constant 24 : index
    %167 = memref.load %arg3[%c24] : memref<144xf32, #tpu.memory_space<smem>>
    %168 = vector.broadcast %167 : f32 to vector<2x1x256xf32>
    %169 = arith.mulf %168, %48 : vector<2x1x256xf32>
    %170 = arith.addf %166, %169 : vector<2x1x256xf32>
    %c33 = arith.constant 33 : index
    %171 = memref.load %arg3[%c33] : memref<144xf32, #tpu.memory_space<smem>>
    %172 = vector.broadcast %171 : f32 to vector<2x1x256xf32>
    %173 = arith.mulf %172, %49 : vector<2x1x256xf32>
    %174 = arith.addf %170, %173 : vector<2x1x256xf32>
    %c7 = arith.constant 7 : index
    %175 = memref.load %arg3[%c7] : memref<144xf32, #tpu.memory_space<smem>>
    %176 = vector.broadcast %175 : f32 to vector<2x1x256xf32>
    %177 = arith.mulf %176, %51 : vector<2x1x256xf32>
    %178 = arith.addf %174, %177 : vector<2x1x256xf32>
    %c16 = arith.constant 16 : index
    %179 = memref.load %arg3[%c16] : memref<144xf32, #tpu.memory_space<smem>>
    %180 = vector.broadcast %179 : f32 to vector<2x1x256xf32>
    %181 = arith.mulf %180, %52 : vector<2x1x256xf32>
    %182 = arith.addf %178, %181 : vector<2x1x256xf32>
    %c25 = arith.constant 25 : index
    %183 = memref.load %arg3[%c25] : memref<144xf32, #tpu.memory_space<smem>>
    %184 = vector.broadcast %183 : f32 to vector<2x1x256xf32>
    %185 = arith.mulf %184, %53 : vector<2x1x256xf32>
    %186 = arith.addf %182, %185 : vector<2x1x256xf32>
    %c34 = arith.constant 34 : index
    %187 = memref.load %arg3[%c34] : memref<144xf32, #tpu.memory_space<smem>>
    %188 = vector.broadcast %187 : f32 to vector<2x1x256xf32>
    %189 = arith.mulf %188, %54 : vector<2x1x256xf32>
    %190 = arith.addf %186, %189 : vector<2x1x256xf32>
    %c8 = arith.constant 8 : index
    %191 = memref.load %arg3[%c8] : memref<144xf32, #tpu.memory_space<smem>>
    %192 = vector.broadcast %191 : f32 to vector<2x1x256xf32>
    %193 = arith.mulf %192, %58 : vector<2x1x256xf32>
    %194 = arith.addf %190, %193 : vector<2x1x256xf32>
    %c17 = arith.constant 17 : index
    %195 = memref.load %arg3[%c17] : memref<144xf32, #tpu.memory_space<smem>>
    %196 = vector.broadcast %195 : f32 to vector<2x1x256xf32>
    %197 = arith.mulf %196, %59 : vector<2x1x256xf32>
    %198 = arith.addf %194, %197 : vector<2x1x256xf32>
    %c26 = arith.constant 26 : index
    %199 = memref.load %arg3[%c26] : memref<144xf32, #tpu.memory_space<smem>>
    %200 = vector.broadcast %199 : f32 to vector<2x1x256xf32>
    %201 = arith.mulf %200, %60 : vector<2x1x256xf32>
    %202 = arith.addf %198, %201 : vector<2x1x256xf32>
    %c35 = arith.constant 35 : index
    %203 = memref.load %arg3[%c35] : memref<144xf32, #tpu.memory_space<smem>>
    %204 = vector.broadcast %203 : f32 to vector<2x1x256xf32>
    %205 = arith.mulf %204, %61 : vector<2x1x256xf32>
    %206 = arith.addf %202, %205 : vector<2x1x256xf32>
    %c0_10 = arith.constant 0 : index
    %207 = memref.load %arg4[%c0_10] : memref<4xf32, #tpu.memory_space<smem>>
    %208 = vector.broadcast %207 : f32 to vector<2x1x256xf32>
    %209 = arith.addf %206, %208 : vector<2x1x256xf32>
    %cst_11 = arith.constant 0.000000e+00 : f32
    %210 = vector.broadcast %cst_11 : f32 to vector<2x1x256xf32>
    %c36 = arith.constant 36 : index
    %211 = memref.load %arg3[%c36] : memref<144xf32, #tpu.memory_space<smem>>
    %212 = vector.broadcast %211 : f32 to vector<2x1x256xf32>
    %213 = arith.mulf %212, %8 : vector<2x1x256xf32>
    %214 = arith.addf %210, %213 : vector<2x1x256xf32>
    %c45 = arith.constant 45 : index
    %215 = memref.load %arg3[%c45] : memref<144xf32, #tpu.memory_space<smem>>
    %216 = vector.broadcast %215 : f32 to vector<2x1x256xf32>
    %217 = arith.mulf %216, %9 : vector<2x1x256xf32>
    %218 = arith.addf %214, %217 : vector<2x1x256xf32>
    %c54 = arith.constant 54 : index
    %219 = memref.load %arg3[%c54] : memref<144xf32, #tpu.memory_space<smem>>
    %220 = vector.broadcast %219 : f32 to vector<2x1x256xf32>
    %221 = arith.mulf %220, %10 : vector<2x1x256xf32>
    %222 = arith.addf %218, %221 : vector<2x1x256xf32>
    %c63 = arith.constant 63 : index
    %223 = memref.load %arg3[%c63] : memref<144xf32, #tpu.memory_space<smem>>
    %224 = vector.broadcast %223 : f32 to vector<2x1x256xf32>
    %225 = arith.mulf %224, %11 : vector<2x1x256xf32>
    %226 = arith.addf %222, %225 : vector<2x1x256xf32>
    %c37 = arith.constant 37 : index
    %227 = memref.load %arg3[%c37] : memref<144xf32, #tpu.memory_space<smem>>
    %228 = vector.broadcast %227 : f32 to vector<2x1x256xf32>
    %229 = arith.mulf %228, %13 : vector<2x1x256xf32>
    %230 = arith.addf %226, %229 : vector<2x1x256xf32>
    %c46 = arith.constant 46 : index
    %231 = memref.load %arg3[%c46] : memref<144xf32, #tpu.memory_space<smem>>
    %232 = vector.broadcast %231 : f32 to vector<2x1x256xf32>
    %233 = arith.mulf %232, %14 : vector<2x1x256xf32>
    %234 = arith.addf %230, %233 : vector<2x1x256xf32>
    %c55 = arith.constant 55 : index
    %235 = memref.load %arg3[%c55] : memref<144xf32, #tpu.memory_space<smem>>
    %236 = vector.broadcast %235 : f32 to vector<2x1x256xf32>
    %237 = arith.mulf %236, %15 : vector<2x1x256xf32>
    %238 = arith.addf %234, %237 : vector<2x1x256xf32>
    %c64 = arith.constant 64 : index
    %239 = memref.load %arg3[%c64] : memref<144xf32, #tpu.memory_space<smem>>
    %240 = vector.broadcast %239 : f32 to vector<2x1x256xf32>
    %241 = arith.mulf %240, %16 : vector<2x1x256xf32>
    %242 = arith.addf %238, %241 : vector<2x1x256xf32>
    %c38 = arith.constant 38 : index
    %243 = memref.load %arg3[%c38] : memref<144xf32, #tpu.memory_space<smem>>
    %244 = vector.broadcast %243 : f32 to vector<2x1x256xf32>
    %245 = arith.mulf %244, %20 : vector<2x1x256xf32>
    %246 = arith.addf %242, %245 : vector<2x1x256xf32>
    %c47 = arith.constant 47 : index
    %247 = memref.load %arg3[%c47] : memref<144xf32, #tpu.memory_space<smem>>
    %248 = vector.broadcast %247 : f32 to vector<2x1x256xf32>
    %249 = arith.mulf %248, %21 : vector<2x1x256xf32>
    %250 = arith.addf %246, %249 : vector<2x1x256xf32>
    %c56 = arith.constant 56 : index
    %251 = memref.load %arg3[%c56] : memref<144xf32, #tpu.memory_space<smem>>
    %252 = vector.broadcast %251 : f32 to vector<2x1x256xf32>
    %253 = arith.mulf %252, %22 : vector<2x1x256xf32>
    %254 = arith.addf %250, %253 : vector<2x1x256xf32>
    %c65 = arith.constant 65 : index
    %255 = memref.load %arg3[%c65] : memref<144xf32, #tpu.memory_space<smem>>
    %256 = vector.broadcast %255 : f32 to vector<2x1x256xf32>
    %257 = arith.mulf %256, %23 : vector<2x1x256xf32>
    %258 = arith.addf %254, %257 : vector<2x1x256xf32>
    %c39 = arith.constant 39 : index
    %259 = memref.load %arg3[%c39] : memref<144xf32, #tpu.memory_space<smem>>
    %260 = vector.broadcast %259 : f32 to vector<2x1x256xf32>
    %261 = arith.mulf %260, %27 : vector<2x1x256xf32>
    %262 = arith.addf %258, %261 : vector<2x1x256xf32>
    %c48 = arith.constant 48 : index
    %263 = memref.load %arg3[%c48] : memref<144xf32, #tpu.memory_space<smem>>
    %264 = vector.broadcast %263 : f32 to vector<2x1x256xf32>
    %265 = arith.mulf %264, %28 : vector<2x1x256xf32>
    %266 = arith.addf %262, %265 : vector<2x1x256xf32>
    %c57 = arith.constant 57 : index
    %267 = memref.load %arg3[%c57] : memref<144xf32, #tpu.memory_space<smem>>
    %268 = vector.broadcast %267 : f32 to vector<2x1x256xf32>
    %269 = arith.mulf %268, %29 : vector<2x1x256xf32>
    %270 = arith.addf %266, %269 : vector<2x1x256xf32>
    %c66 = arith.constant 66 : index
    %271 = memref.load %arg3[%c66] : memref<144xf32, #tpu.memory_space<smem>>
    %272 = vector.broadcast %271 : f32 to vector<2x1x256xf32>
    %273 = arith.mulf %272, %30 : vector<2x1x256xf32>
    %274 = arith.addf %270, %273 : vector<2x1x256xf32>
    %c40 = arith.constant 40 : index
    %275 = memref.load %arg3[%c40] : memref<144xf32, #tpu.memory_space<smem>>
    %276 = vector.broadcast %275 : f32 to vector<2x1x256xf32>
    %277 = arith.mulf %276, %32 : vector<2x1x256xf32>
    %278 = arith.addf %274, %277 : vector<2x1x256xf32>
    %c49 = arith.constant 49 : index
    %279 = memref.load %arg3[%c49] : memref<144xf32, #tpu.memory_space<smem>>
    %280 = vector.broadcast %279 : f32 to vector<2x1x256xf32>
    %281 = arith.mulf %280, %33 : vector<2x1x256xf32>
    %282 = arith.addf %278, %281 : vector<2x1x256xf32>
    %c58 = arith.constant 58 : index
    %283 = memref.load %arg3[%c58] : memref<144xf32, #tpu.memory_space<smem>>
    %284 = vector.broadcast %283 : f32 to vector<2x1x256xf32>
    %285 = arith.mulf %284, %34 : vector<2x1x256xf32>
    %286 = arith.addf %282, %285 : vector<2x1x256xf32>
    %c67 = arith.constant 67 : index
    %287 = memref.load %arg3[%c67] : memref<144xf32, #tpu.memory_space<smem>>
    %288 = vector.broadcast %287 : f32 to vector<2x1x256xf32>
    %289 = arith.mulf %288, %35 : vector<2x1x256xf32>
    %290 = arith.addf %286, %289 : vector<2x1x256xf32>
    %c41 = arith.constant 41 : index
    %291 = memref.load %arg3[%c41] : memref<144xf32, #tpu.memory_space<smem>>
    %292 = vector.broadcast %291 : f32 to vector<2x1x256xf32>
    %293 = arith.mulf %292, %39 : vector<2x1x256xf32>
    %294 = arith.addf %290, %293 : vector<2x1x256xf32>
    %c50 = arith.constant 50 : index
    %295 = memref.load %arg3[%c50] : memref<144xf32, #tpu.memory_space<smem>>
    %296 = vector.broadcast %295 : f32 to vector<2x1x256xf32>
    %297 = arith.mulf %296, %40 : vector<2x1x256xf32>
    %298 = arith.addf %294, %297 : vector<2x1x256xf32>
    %c59 = arith.constant 59 : index
    %299 = memref.load %arg3[%c59] : memref<144xf32, #tpu.memory_space<smem>>
    %300 = vector.broadcast %299 : f32 to vector<2x1x256xf32>
    %301 = arith.mulf %300, %41 : vector<2x1x256xf32>
    %302 = arith.addf %298, %301 : vector<2x1x256xf32>
    %c68 = arith.constant 68 : index
    %303 = memref.load %arg3[%c68] : memref<144xf32, #tpu.memory_space<smem>>
    %304 = vector.broadcast %303 : f32 to vector<2x1x256xf32>
    %305 = arith.mulf %304, %42 : vector<2x1x256xf32>
    %306 = arith.addf %302, %305 : vector<2x1x256xf32>
    %c42 = arith.constant 42 : index
    %307 = memref.load %arg3[%c42] : memref<144xf32, #tpu.memory_space<smem>>
    %308 = vector.broadcast %307 : f32 to vector<2x1x256xf32>
    %309 = arith.mulf %308, %46 : vector<2x1x256xf32>
    %310 = arith.addf %306, %309 : vector<2x1x256xf32>
    %c51 = arith.constant 51 : index
    %311 = memref.load %arg3[%c51] : memref<144xf32, #tpu.memory_space<smem>>
    %312 = vector.broadcast %311 : f32 to vector<2x1x256xf32>
    %313 = arith.mulf %312, %47 : vector<2x1x256xf32>
    %314 = arith.addf %310, %313 : vector<2x1x256xf32>
    %c60 = arith.constant 60 : index
    %315 = memref.load %arg3[%c60] : memref<144xf32, #tpu.memory_space<smem>>
    %316 = vector.broadcast %315 : f32 to vector<2x1x256xf32>
    %317 = arith.mulf %316, %48 : vector<2x1x256xf32>
    %318 = arith.addf %314, %317 : vector<2x1x256xf32>
    %c69 = arith.constant 69 : index
    %319 = memref.load %arg3[%c69] : memref<144xf32, #tpu.memory_space<smem>>
    %320 = vector.broadcast %319 : f32 to vector<2x1x256xf32>
    %321 = arith.mulf %320, %49 : vector<2x1x256xf32>
    %322 = arith.addf %318, %321 : vector<2x1x256xf32>
    %c43 = arith.constant 43 : index
    %323 = memref.load %arg3[%c43] : memref<144xf32, #tpu.memory_space<smem>>
    %324 = vector.broadcast %323 : f32 to vector<2x1x256xf32>
    %325 = arith.mulf %324, %51 : vector<2x1x256xf32>
    %326 = arith.addf %322, %325 : vector<2x1x256xf32>
    %c52 = arith.constant 52 : index
    %327 = memref.load %arg3[%c52] : memref<144xf32, #tpu.memory_space<smem>>
    %328 = vector.broadcast %327 : f32 to vector<2x1x256xf32>
    %329 = arith.mulf %328, %52 : vector<2x1x256xf32>
    %330 = arith.addf %326, %329 : vector<2x1x256xf32>
    %c61 = arith.constant 61 : index
    %331 = memref.load %arg3[%c61] : memref<144xf32, #tpu.memory_space<smem>>
    %332 = vector.broadcast %331 : f32 to vector<2x1x256xf32>
    %333 = arith.mulf %332, %53 : vector<2x1x256xf32>
    %334 = arith.addf %330, %333 : vector<2x1x256xf32>
    %c70 = arith.constant 70 : index
    %335 = memref.load %arg3[%c70] : memref<144xf32, #tpu.memory_space<smem>>
    %336 = vector.broadcast %335 : f32 to vector<2x1x256xf32>
    %337 = arith.mulf %336, %54 : vector<2x1x256xf32>
    %338 = arith.addf %334, %337 : vector<2x1x256xf32>
    %c44 = arith.constant 44 : index
    %339 = memref.load %arg3[%c44] : memref<144xf32, #tpu.memory_space<smem>>
    %340 = vector.broadcast %339 : f32 to vector<2x1x256xf32>
    %341 = arith.mulf %340, %58 : vector<2x1x256xf32>
    %342 = arith.addf %338, %341 : vector<2x1x256xf32>
    %c53 = arith.constant 53 : index
    %343 = memref.load %arg3[%c53] : memref<144xf32, #tpu.memory_space<smem>>
    %344 = vector.broadcast %343 : f32 to vector<2x1x256xf32>
    %345 = arith.mulf %344, %59 : vector<2x1x256xf32>
    %346 = arith.addf %342, %345 : vector<2x1x256xf32>
    %c62 = arith.constant 62 : index
    %347 = memref.load %arg3[%c62] : memref<144xf32, #tpu.memory_space<smem>>
    %348 = vector.broadcast %347 : f32 to vector<2x1x256xf32>
    %349 = arith.mulf %348, %60 : vector<2x1x256xf32>
    %350 = arith.addf %346, %349 : vector<2x1x256xf32>
    %c71 = arith.constant 71 : index
    %351 = memref.load %arg3[%c71] : memref<144xf32, #tpu.memory_space<smem>>
    %352 = vector.broadcast %351 : f32 to vector<2x1x256xf32>
    %353 = arith.mulf %352, %61 : vector<2x1x256xf32>
    %354 = arith.addf %350, %353 : vector<2x1x256xf32>
    %c1_12 = arith.constant 1 : index
    %355 = memref.load %arg4[%c1_12] : memref<4xf32, #tpu.memory_space<smem>>
    %356 = vector.broadcast %355 : f32 to vector<2x1x256xf32>
    %357 = arith.addf %354, %356 : vector<2x1x256xf32>
    %cst_13 = arith.constant 0.000000e+00 : f32
    %358 = vector.broadcast %cst_13 : f32 to vector<2x1x256xf32>
    %c72 = arith.constant 72 : index
    %359 = memref.load %arg3[%c72] : memref<144xf32, #tpu.memory_space<smem>>
    %360 = vector.broadcast %359 : f32 to vector<2x1x256xf32>
    %361 = arith.mulf %360, %8 : vector<2x1x256xf32>
    %362 = arith.addf %358, %361 : vector<2x1x256xf32>
    %c81 = arith.constant 81 : index
    %363 = memref.load %arg3[%c81] : memref<144xf32, #tpu.memory_space<smem>>
    %364 = vector.broadcast %363 : f32 to vector<2x1x256xf32>
    %365 = arith.mulf %364, %9 : vector<2x1x256xf32>
    %366 = arith.addf %362, %365 : vector<2x1x256xf32>
    %c90 = arith.constant 90 : index
    %367 = memref.load %arg3[%c90] : memref<144xf32, #tpu.memory_space<smem>>
    %368 = vector.broadcast %367 : f32 to vector<2x1x256xf32>
    %369 = arith.mulf %368, %10 : vector<2x1x256xf32>
    %370 = arith.addf %366, %369 : vector<2x1x256xf32>
    %c99 = arith.constant 99 : index
    %371 = memref.load %arg3[%c99] : memref<144xf32, #tpu.memory_space<smem>>
    %372 = vector.broadcast %371 : f32 to vector<2x1x256xf32>
    %373 = arith.mulf %372, %11 : vector<2x1x256xf32>
    %374 = arith.addf %370, %373 : vector<2x1x256xf32>
    %c73 = arith.constant 73 : index
    %375 = memref.load %arg3[%c73] : memref<144xf32, #tpu.memory_space<smem>>
    %376 = vector.broadcast %375 : f32 to vector<2x1x256xf32>
    %377 = arith.mulf %376, %13 : vector<2x1x256xf32>
    %378 = arith.addf %374, %377 : vector<2x1x256xf32>
    %c82 = arith.constant 82 : index
    %379 = memref.load %arg3[%c82] : memref<144xf32, #tpu.memory_space<smem>>
    %380 = vector.broadcast %379 : f32 to vector<2x1x256xf32>
    %381 = arith.mulf %380, %14 : vector<2x1x256xf32>
    %382 = arith.addf %378, %381 : vector<2x1x256xf32>
    %c91 = arith.constant 91 : index
    %383 = memref.load %arg3[%c91] : memref<144xf32, #tpu.memory_space<smem>>
    %384 = vector.broadcast %383 : f32 to vector<2x1x256xf32>
    %385 = arith.mulf %384, %15 : vector<2x1x256xf32>
    %386 = arith.addf %382, %385 : vector<2x1x256xf32>
    %c100 = arith.constant 100 : index
    %387 = memref.load %arg3[%c100] : memref<144xf32, #tpu.memory_space<smem>>
    %388 = vector.broadcast %387 : f32 to vector<2x1x256xf32>
    %389 = arith.mulf %388, %16 : vector<2x1x256xf32>
    %390 = arith.addf %386, %389 : vector<2x1x256xf32>
    %c74 = arith.constant 74 : index
    %391 = memref.load %arg3[%c74] : memref<144xf32, #tpu.memory_space<smem>>
    %392 = vector.broadcast %391 : f32 to vector<2x1x256xf32>
    %393 = arith.mulf %392, %20 : vector<2x1x256xf32>
    %394 = arith.addf %390, %393 : vector<2x1x256xf32>
    %c83 = arith.constant 83 : index
    %395 = memref.load %arg3[%c83] : memref<144xf32, #tpu.memory_space<smem>>
    %396 = vector.broadcast %395 : f32 to vector<2x1x256xf32>
    %397 = arith.mulf %396, %21 : vector<2x1x256xf32>
    %398 = arith.addf %394, %397 : vector<2x1x256xf32>
    %c92 = arith.constant 92 : index
    %399 = memref.load %arg3[%c92] : memref<144xf32, #tpu.memory_space<smem>>
    %400 = vector.broadcast %399 : f32 to vector<2x1x256xf32>
    %401 = arith.mulf %400, %22 : vector<2x1x256xf32>
    %402 = arith.addf %398, %401 : vector<2x1x256xf32>
    %c101 = arith.constant 101 : index
    %403 = memref.load %arg3[%c101] : memref<144xf32, #tpu.memory_space<smem>>
    %404 = vector.broadcast %403 : f32 to vector<2x1x256xf32>
    %405 = arith.mulf %404, %23 : vector<2x1x256xf32>
    %406 = arith.addf %402, %405 : vector<2x1x256xf32>
    %c75 = arith.constant 75 : index
    %407 = memref.load %arg3[%c75] : memref<144xf32, #tpu.memory_space<smem>>
    %408 = vector.broadcast %407 : f32 to vector<2x1x256xf32>
    %409 = arith.mulf %408, %27 : vector<2x1x256xf32>
    %410 = arith.addf %406, %409 : vector<2x1x256xf32>
    %c84 = arith.constant 84 : index
    %411 = memref.load %arg3[%c84] : memref<144xf32, #tpu.memory_space<smem>>
    %412 = vector.broadcast %411 : f32 to vector<2x1x256xf32>
    %413 = arith.mulf %412, %28 : vector<2x1x256xf32>
    %414 = arith.addf %410, %413 : vector<2x1x256xf32>
    %c93 = arith.constant 93 : index
    %415 = memref.load %arg3[%c93] : memref<144xf32, #tpu.memory_space<smem>>
    %416 = vector.broadcast %415 : f32 to vector<2x1x256xf32>
    %417 = arith.mulf %416, %29 : vector<2x1x256xf32>
    %418 = arith.addf %414, %417 : vector<2x1x256xf32>
    %c102 = arith.constant 102 : index
    %419 = memref.load %arg3[%c102] : memref<144xf32, #tpu.memory_space<smem>>
    %420 = vector.broadcast %419 : f32 to vector<2x1x256xf32>
    %421 = arith.mulf %420, %30 : vector<2x1x256xf32>
    %422 = arith.addf %418, %421 : vector<2x1x256xf32>
    %c76 = arith.constant 76 : index
    %423 = memref.load %arg3[%c76] : memref<144xf32, #tpu.memory_space<smem>>
    %424 = vector.broadcast %423 : f32 to vector<2x1x256xf32>
    %425 = arith.mulf %424, %32 : vector<2x1x256xf32>
    %426 = arith.addf %422, %425 : vector<2x1x256xf32>
    %c85 = arith.constant 85 : index
    %427 = memref.load %arg3[%c85] : memref<144xf32, #tpu.memory_space<smem>>
    %428 = vector.broadcast %427 : f32 to vector<2x1x256xf32>
    %429 = arith.mulf %428, %33 : vector<2x1x256xf32>
    %430 = arith.addf %426, %429 : vector<2x1x256xf32>
    %c94 = arith.constant 94 : index
    %431 = memref.load %arg3[%c94] : memref<144xf32, #tpu.memory_space<smem>>
    %432 = vector.broadcast %431 : f32 to vector<2x1x256xf32>
    %433 = arith.mulf %432, %34 : vector<2x1x256xf32>
    %434 = arith.addf %430, %433 : vector<2x1x256xf32>
    %c103 = arith.constant 103 : index
    %435 = memref.load %arg3[%c103] : memref<144xf32, #tpu.memory_space<smem>>
    %436 = vector.broadcast %435 : f32 to vector<2x1x256xf32>
    %437 = arith.mulf %436, %35 : vector<2x1x256xf32>
    %438 = arith.addf %434, %437 : vector<2x1x256xf32>
    %c77 = arith.constant 77 : index
    %439 = memref.load %arg3[%c77] : memref<144xf32, #tpu.memory_space<smem>>
    %440 = vector.broadcast %439 : f32 to vector<2x1x256xf32>
    %441 = arith.mulf %440, %39 : vector<2x1x256xf32>
    %442 = arith.addf %438, %441 : vector<2x1x256xf32>
    %c86 = arith.constant 86 : index
    %443 = memref.load %arg3[%c86] : memref<144xf32, #tpu.memory_space<smem>>
    %444 = vector.broadcast %443 : f32 to vector<2x1x256xf32>
    %445 = arith.mulf %444, %40 : vector<2x1x256xf32>
    %446 = arith.addf %442, %445 : vector<2x1x256xf32>
    %c95 = arith.constant 95 : index
    %447 = memref.load %arg3[%c95] : memref<144xf32, #tpu.memory_space<smem>>
    %448 = vector.broadcast %447 : f32 to vector<2x1x256xf32>
    %449 = arith.mulf %448, %41 : vector<2x1x256xf32>
    %450 = arith.addf %446, %449 : vector<2x1x256xf32>
    %c104 = arith.constant 104 : index
    %451 = memref.load %arg3[%c104] : memref<144xf32, #tpu.memory_space<smem>>
    %452 = vector.broadcast %451 : f32 to vector<2x1x256xf32>
    %453 = arith.mulf %452, %42 : vector<2x1x256xf32>
    %454 = arith.addf %450, %453 : vector<2x1x256xf32>
    %c78 = arith.constant 78 : index
    %455 = memref.load %arg3[%c78] : memref<144xf32, #tpu.memory_space<smem>>
    %456 = vector.broadcast %455 : f32 to vector<2x1x256xf32>
    %457 = arith.mulf %456, %46 : vector<2x1x256xf32>
    %458 = arith.addf %454, %457 : vector<2x1x256xf32>
    %c87 = arith.constant 87 : index
    %459 = memref.load %arg3[%c87] : memref<144xf32, #tpu.memory_space<smem>>
    %460 = vector.broadcast %459 : f32 to vector<2x1x256xf32>
    %461 = arith.mulf %460, %47 : vector<2x1x256xf32>
    %462 = arith.addf %458, %461 : vector<2x1x256xf32>
    %c96 = arith.constant 96 : index
    %463 = memref.load %arg3[%c96] : memref<144xf32, #tpu.memory_space<smem>>
    %464 = vector.broadcast %463 : f32 to vector<2x1x256xf32>
    %465 = arith.mulf %464, %48 : vector<2x1x256xf32>
    %466 = arith.addf %462, %465 : vector<2x1x256xf32>
    %c105 = arith.constant 105 : index
    %467 = memref.load %arg3[%c105] : memref<144xf32, #tpu.memory_space<smem>>
    %468 = vector.broadcast %467 : f32 to vector<2x1x256xf32>
    %469 = arith.mulf %468, %49 : vector<2x1x256xf32>
    %470 = arith.addf %466, %469 : vector<2x1x256xf32>
    %c79 = arith.constant 79 : index
    %471 = memref.load %arg3[%c79] : memref<144xf32, #tpu.memory_space<smem>>
    %472 = vector.broadcast %471 : f32 to vector<2x1x256xf32>
    %473 = arith.mulf %472, %51 : vector<2x1x256xf32>
    %474 = arith.addf %470, %473 : vector<2x1x256xf32>
    %c88 = arith.constant 88 : index
    %475 = memref.load %arg3[%c88] : memref<144xf32, #tpu.memory_space<smem>>
    %476 = vector.broadcast %475 : f32 to vector<2x1x256xf32>
    %477 = arith.mulf %476, %52 : vector<2x1x256xf32>
    %478 = arith.addf %474, %477 : vector<2x1x256xf32>
    %c97 = arith.constant 97 : index
    %479 = memref.load %arg3[%c97] : memref<144xf32, #tpu.memory_space<smem>>
    %480 = vector.broadcast %479 : f32 to vector<2x1x256xf32>
    %481 = arith.mulf %480, %53 : vector<2x1x256xf32>
    %482 = arith.addf %478, %481 : vector<2x1x256xf32>
    %c106 = arith.constant 106 : index
    %483 = memref.load %arg3[%c106] : memref<144xf32, #tpu.memory_space<smem>>
    %484 = vector.broadcast %483 : f32 to vector<2x1x256xf32>
    %485 = arith.mulf %484, %54 : vector<2x1x256xf32>
    %486 = arith.addf %482, %485 : vector<2x1x256xf32>
    %c80 = arith.constant 80 : index
    %487 = memref.load %arg3[%c80] : memref<144xf32, #tpu.memory_space<smem>>
    %488 = vector.broadcast %487 : f32 to vector<2x1x256xf32>
    %489 = arith.mulf %488, %58 : vector<2x1x256xf32>
    %490 = arith.addf %486, %489 : vector<2x1x256xf32>
    %c89 = arith.constant 89 : index
    %491 = memref.load %arg3[%c89] : memref<144xf32, #tpu.memory_space<smem>>
    %492 = vector.broadcast %491 : f32 to vector<2x1x256xf32>
    %493 = arith.mulf %492, %59 : vector<2x1x256xf32>
    %494 = arith.addf %490, %493 : vector<2x1x256xf32>
    %c98 = arith.constant 98 : index
    %495 = memref.load %arg3[%c98] : memref<144xf32, #tpu.memory_space<smem>>
    %496 = vector.broadcast %495 : f32 to vector<2x1x256xf32>
    %497 = arith.mulf %496, %60 : vector<2x1x256xf32>
    %498 = arith.addf %494, %497 : vector<2x1x256xf32>
    %c107 = arith.constant 107 : index
    %499 = memref.load %arg3[%c107] : memref<144xf32, #tpu.memory_space<smem>>
    %500 = vector.broadcast %499 : f32 to vector<2x1x256xf32>
    %501 = arith.mulf %500, %61 : vector<2x1x256xf32>
    %502 = arith.addf %498, %501 : vector<2x1x256xf32>
    %c2_14 = arith.constant 2 : index
    %503 = memref.load %arg4[%c2_14] : memref<4xf32, #tpu.memory_space<smem>>
    %504 = vector.broadcast %503 : f32 to vector<2x1x256xf32>
    %505 = arith.addf %502, %504 : vector<2x1x256xf32>
    %cst_15 = arith.constant 0.000000e+00 : f32
    %506 = vector.broadcast %cst_15 : f32 to vector<2x1x256xf32>
    %c108 = arith.constant 108 : index
    %507 = memref.load %arg3[%c108] : memref<144xf32, #tpu.memory_space<smem>>
    %508 = vector.broadcast %507 : f32 to vector<2x1x256xf32>
    %509 = arith.mulf %508, %8 : vector<2x1x256xf32>
    %510 = arith.addf %506, %509 : vector<2x1x256xf32>
    %c117 = arith.constant 117 : index
    %511 = memref.load %arg3[%c117] : memref<144xf32, #tpu.memory_space<smem>>
    %512 = vector.broadcast %511 : f32 to vector<2x1x256xf32>
    %513 = arith.mulf %512, %9 : vector<2x1x256xf32>
    %514 = arith.addf %510, %513 : vector<2x1x256xf32>
    %c126 = arith.constant 126 : index
    %515 = memref.load %arg3[%c126] : memref<144xf32, #tpu.memory_space<smem>>
    %516 = vector.broadcast %515 : f32 to vector<2x1x256xf32>
    %517 = arith.mulf %516, %10 : vector<2x1x256xf32>
    %518 = arith.addf %514, %517 : vector<2x1x256xf32>
    %c135 = arith.constant 135 : index
    %519 = memref.load %arg3[%c135] : memref<144xf32, #tpu.memory_space<smem>>
    %520 = vector.broadcast %519 : f32 to vector<2x1x256xf32>
    %521 = arith.mulf %520, %11 : vector<2x1x256xf32>
    %522 = arith.addf %518, %521 : vector<2x1x256xf32>
    %c109 = arith.constant 109 : index
    %523 = memref.load %arg3[%c109] : memref<144xf32, #tpu.memory_space<smem>>
    %524 = vector.broadcast %523 : f32 to vector<2x1x256xf32>
    %525 = arith.mulf %524, %13 : vector<2x1x256xf32>
    %526 = arith.addf %522, %525 : vector<2x1x256xf32>
    %c118 = arith.constant 118 : index
    %527 = memref.load %arg3[%c118] : memref<144xf32, #tpu.memory_space<smem>>
    %528 = vector.broadcast %527 : f32 to vector<2x1x256xf32>
    %529 = arith.mulf %528, %14 : vector<2x1x256xf32>
    %530 = arith.addf %526, %529 : vector<2x1x256xf32>
    %c127 = arith.constant 127 : index
    %531 = memref.load %arg3[%c127] : memref<144xf32, #tpu.memory_space<smem>>
    %532 = vector.broadcast %531 : f32 to vector<2x1x256xf32>
    %533 = arith.mulf %532, %15 : vector<2x1x256xf32>
    %534 = arith.addf %530, %533 : vector<2x1x256xf32>
    %c136 = arith.constant 136 : index
    %535 = memref.load %arg3[%c136] : memref<144xf32, #tpu.memory_space<smem>>
    %536 = vector.broadcast %535 : f32 to vector<2x1x256xf32>
    %537 = arith.mulf %536, %16 : vector<2x1x256xf32>
    %538 = arith.addf %534, %537 : vector<2x1x256xf32>
    %c110 = arith.constant 110 : index
    %539 = memref.load %arg3[%c110] : memref<144xf32, #tpu.memory_space<smem>>
    %540 = vector.broadcast %539 : f32 to vector<2x1x256xf32>
    %541 = arith.mulf %540, %20 : vector<2x1x256xf32>
    %542 = arith.addf %538, %541 : vector<2x1x256xf32>
    %c119 = arith.constant 119 : index
    %543 = memref.load %arg3[%c119] : memref<144xf32, #tpu.memory_space<smem>>
    %544 = vector.broadcast %543 : f32 to vector<2x1x256xf32>
    %545 = arith.mulf %544, %21 : vector<2x1x256xf32>
    %546 = arith.addf %542, %545 : vector<2x1x256xf32>
    %c128 = arith.constant 128 : index
    %547 = memref.load %arg3[%c128] : memref<144xf32, #tpu.memory_space<smem>>
    %548 = vector.broadcast %547 : f32 to vector<2x1x256xf32>
    %549 = arith.mulf %548, %22 : vector<2x1x256xf32>
    %550 = arith.addf %546, %549 : vector<2x1x256xf32>
    %c137 = arith.constant 137 : index
    %551 = memref.load %arg3[%c137] : memref<144xf32, #tpu.memory_space<smem>>
    %552 = vector.broadcast %551 : f32 to vector<2x1x256xf32>
    %553 = arith.mulf %552, %23 : vector<2x1x256xf32>
    %554 = arith.addf %550, %553 : vector<2x1x256xf32>
    %c111 = arith.constant 111 : index
    %555 = memref.load %arg3[%c111] : memref<144xf32, #tpu.memory_space<smem>>
    %556 = vector.broadcast %555 : f32 to vector<2x1x256xf32>
    %557 = arith.mulf %556, %27 : vector<2x1x256xf32>
    %558 = arith.addf %554, %557 : vector<2x1x256xf32>
    %c120 = arith.constant 120 : index
    %559 = memref.load %arg3[%c120] : memref<144xf32, #tpu.memory_space<smem>>
    %560 = vector.broadcast %559 : f32 to vector<2x1x256xf32>
    %561 = arith.mulf %560, %28 : vector<2x1x256xf32>
    %562 = arith.addf %558, %561 : vector<2x1x256xf32>
    %c129 = arith.constant 129 : index
    %563 = memref.load %arg3[%c129] : memref<144xf32, #tpu.memory_space<smem>>
    %564 = vector.broadcast %563 : f32 to vector<2x1x256xf32>
    %565 = arith.mulf %564, %29 : vector<2x1x256xf32>
    %566 = arith.addf %562, %565 : vector<2x1x256xf32>
    %c138 = arith.constant 138 : index
    %567 = memref.load %arg3[%c138] : memref<144xf32, #tpu.memory_space<smem>>
    %568 = vector.broadcast %567 : f32 to vector<2x1x256xf32>
    %569 = arith.mulf %568, %30 : vector<2x1x256xf32>
    %570 = arith.addf %566, %569 : vector<2x1x256xf32>
    %c112 = arith.constant 112 : index
    %571 = memref.load %arg3[%c112] : memref<144xf32, #tpu.memory_space<smem>>
    %572 = vector.broadcast %571 : f32 to vector<2x1x256xf32>
    %573 = arith.mulf %572, %32 : vector<2x1x256xf32>
    %574 = arith.addf %570, %573 : vector<2x1x256xf32>
    %c121 = arith.constant 121 : index
    %575 = memref.load %arg3[%c121] : memref<144xf32, #tpu.memory_space<smem>>
    %576 = vector.broadcast %575 : f32 to vector<2x1x256xf32>
    %577 = arith.mulf %576, %33 : vector<2x1x256xf32>
    %578 = arith.addf %574, %577 : vector<2x1x256xf32>
    %c130 = arith.constant 130 : index
    %579 = memref.load %arg3[%c130] : memref<144xf32, #tpu.memory_space<smem>>
    %580 = vector.broadcast %579 : f32 to vector<2x1x256xf32>
    %581 = arith.mulf %580, %34 : vector<2x1x256xf32>
    %582 = arith.addf %578, %581 : vector<2x1x256xf32>
    %c139 = arith.constant 139 : index
    %583 = memref.load %arg3[%c139] : memref<144xf32, #tpu.memory_space<smem>>
    %584 = vector.broadcast %583 : f32 to vector<2x1x256xf32>
    %585 = arith.mulf %584, %35 : vector<2x1x256xf32>
    %586 = arith.addf %582, %585 : vector<2x1x256xf32>
    %c113 = arith.constant 113 : index
    %587 = memref.load %arg3[%c113] : memref<144xf32, #tpu.memory_space<smem>>
    %588 = vector.broadcast %587 : f32 to vector<2x1x256xf32>
    %589 = arith.mulf %588, %39 : vector<2x1x256xf32>
    %590 = arith.addf %586, %589 : vector<2x1x256xf32>
    %c122 = arith.constant 122 : index
    %591 = memref.load %arg3[%c122] : memref<144xf32, #tpu.memory_space<smem>>
    %592 = vector.broadcast %591 : f32 to vector<2x1x256xf32>
    %593 = arith.mulf %592, %40 : vector<2x1x256xf32>
    %594 = arith.addf %590, %593 : vector<2x1x256xf32>
    %c131 = arith.constant 131 : index
    %595 = memref.load %arg3[%c131] : memref<144xf32, #tpu.memory_space<smem>>
    %596 = vector.broadcast %595 : f32 to vector<2x1x256xf32>
    %597 = arith.mulf %596, %41 : vector<2x1x256xf32>
    %598 = arith.addf %594, %597 : vector<2x1x256xf32>
    %c140 = arith.constant 140 : index
    %599 = memref.load %arg3[%c140] : memref<144xf32, #tpu.memory_space<smem>>
    %600 = vector.broadcast %599 : f32 to vector<2x1x256xf32>
    %601 = arith.mulf %600, %42 : vector<2x1x256xf32>
    %602 = arith.addf %598, %601 : vector<2x1x256xf32>
    %c114 = arith.constant 114 : index
    %603 = memref.load %arg3[%c114] : memref<144xf32, #tpu.memory_space<smem>>
    %604 = vector.broadcast %603 : f32 to vector<2x1x256xf32>
    %605 = arith.mulf %604, %46 : vector<2x1x256xf32>
    %606 = arith.addf %602, %605 : vector<2x1x256xf32>
    %c123 = arith.constant 123 : index
    %607 = memref.load %arg3[%c123] : memref<144xf32, #tpu.memory_space<smem>>
    %608 = vector.broadcast %607 : f32 to vector<2x1x256xf32>
    %609 = arith.mulf %608, %47 : vector<2x1x256xf32>
    %610 = arith.addf %606, %609 : vector<2x1x256xf32>
    %c132 = arith.constant 132 : index
    %611 = memref.load %arg3[%c132] : memref<144xf32, #tpu.memory_space<smem>>
    %612 = vector.broadcast %611 : f32 to vector<2x1x256xf32>
    %613 = arith.mulf %612, %48 : vector<2x1x256xf32>
    %614 = arith.addf %610, %613 : vector<2x1x256xf32>
    %c141 = arith.constant 141 : index
    %615 = memref.load %arg3[%c141] : memref<144xf32, #tpu.memory_space<smem>>
    %616 = vector.broadcast %615 : f32 to vector<2x1x256xf32>
    %617 = arith.mulf %616, %49 : vector<2x1x256xf32>
    %618 = arith.addf %614, %617 : vector<2x1x256xf32>
    %c115 = arith.constant 115 : index
    %619 = memref.load %arg3[%c115] : memref<144xf32, #tpu.memory_space<smem>>
    %620 = vector.broadcast %619 : f32 to vector<2x1x256xf32>
    %621 = arith.mulf %620, %51 : vector<2x1x256xf32>
    %622 = arith.addf %618, %621 : vector<2x1x256xf32>
    %c124 = arith.constant 124 : index
    %623 = memref.load %arg3[%c124] : memref<144xf32, #tpu.memory_space<smem>>
    %624 = vector.broadcast %623 : f32 to vector<2x1x256xf32>
    %625 = arith.mulf %624, %52 : vector<2x1x256xf32>
    %626 = arith.addf %622, %625 : vector<2x1x256xf32>
    %c133 = arith.constant 133 : index
    %627 = memref.load %arg3[%c133] : memref<144xf32, #tpu.memory_space<smem>>
    %628 = vector.broadcast %627 : f32 to vector<2x1x256xf32>
    %629 = arith.mulf %628, %53 : vector<2x1x256xf32>
    %630 = arith.addf %626, %629 : vector<2x1x256xf32>
    %c142 = arith.constant 142 : index
    %631 = memref.load %arg3[%c142] : memref<144xf32, #tpu.memory_space<smem>>
    %632 = vector.broadcast %631 : f32 to vector<2x1x256xf32>
    %633 = arith.mulf %632, %54 : vector<2x1x256xf32>
    %634 = arith.addf %630, %633 : vector<2x1x256xf32>
    %c116 = arith.constant 116 : index
    %635 = memref.load %arg3[%c116] : memref<144xf32, #tpu.memory_space<smem>>
    %636 = vector.broadcast %635 : f32 to vector<2x1x256xf32>
    %637 = arith.mulf %636, %58 : vector<2x1x256xf32>
    %638 = arith.addf %634, %637 : vector<2x1x256xf32>
    %c125 = arith.constant 125 : index
    %639 = memref.load %arg3[%c125] : memref<144xf32, #tpu.memory_space<smem>>
    %640 = vector.broadcast %639 : f32 to vector<2x1x256xf32>
    %641 = arith.mulf %640, %59 : vector<2x1x256xf32>
    %642 = arith.addf %638, %641 : vector<2x1x256xf32>
    %c134 = arith.constant 134 : index
    %643 = memref.load %arg3[%c134] : memref<144xf32, #tpu.memory_space<smem>>
    %644 = vector.broadcast %643 : f32 to vector<2x1x256xf32>
    %645 = arith.mulf %644, %60 : vector<2x1x256xf32>
    %646 = arith.addf %642, %645 : vector<2x1x256xf32>
    %c143 = arith.constant 143 : index
    %647 = memref.load %arg3[%c143] : memref<144xf32, #tpu.memory_space<smem>>
    %648 = vector.broadcast %647 : f32 to vector<2x1x256xf32>
    %649 = arith.mulf %648, %61 : vector<2x1x256xf32>
    %650 = arith.addf %646, %649 : vector<2x1x256xf32>
    %c3_16 = arith.constant 3 : index
    %651 = memref.load %arg4[%c3_16] : memref<4xf32, #tpu.memory_space<smem>>
    %652 = vector.broadcast %651 : f32 to vector<2x1x256xf32>
    %653 = arith.addf %650, %652 : vector<2x1x256xf32>
    %654 = tpu.concatenate %209, %357, %505, %653 in 1 : vector<2x1x256xf32>, vector<2x1x256xf32>, vector<2x1x256xf32>, vector<2x1x256xf32> -> vector<2x4x256xf32>
    %cst_17 = arith.constant 0.00999999977 : f32
    %655 = vector.broadcast %cst_17 : f32 to vector<2x4x256xf32>
    %656 = arith.mulf %655, %654 : vector<2x4x256xf32>
    %657 = arith.maximumf %654, %656 : vector<2x4x256xf32>
    %cst_18 = arith.constant 0.000000e+00 : f32
    %658 = vector.broadcast %cst_18 : f32 to vector<2x4x17xf32>
    %659 = tpu.concatenate %658, %657, %658 in 2 : vector<2x4x17xf32>, vector<2x4x256xf32>, vector<2x4x17xf32> -> vector<2x4x290xf32>
    %660 = vector.extract_strided_slice %659 {offsets = [0, 0, 0], sizes = [2, 4, 256], strides = [1, 1, 1]} : vector<2x4x290xf32> to vector<2x4x256xf32>
    %661 = vector.broadcast %1 : vector<1x1x256xf32> to vector<2x4x256xf32>
    %662 = arith.mulf %660, %661 : vector<2x4x256xf32>
    %663 = vector.extract_strided_slice %662 {offsets = [0, 0, 0], sizes = [2, 1, 256], strides = [1, 1, 1]} : vector<2x4x256xf32> to vector<2x1x256xf32>
    %664 = vector.extract_strided_slice %662 {offsets = [0, 1, 0], sizes = [2, 1, 256], strides = [1, 1, 1]} : vector<2x4x256xf32> to vector<2x1x256xf32>
    %665 = vector.extract_strided_slice %662 {offsets = [0, 2, 0], sizes = [2, 1, 256], strides = [1, 1, 1]} : vector<2x4x256xf32> to vector<2x1x256xf32>
    %666 = vector.extract_strided_slice %662 {offsets = [0, 3, 0], sizes = [2, 1, 256], strides = [1, 1, 1]} : vector<2x4x256xf32> to vector<2x1x256xf32>
    %667 = vector.extract_strided_slice %659 {offsets = [0, 0, 1], sizes = [2, 4, 256], strides = [1, 1, 1]} : vector<2x4x290xf32> to vector<2x4x256xf32>
    %668 = vector.extract_strided_slice %667 {offsets = [0, 0, 0], sizes = [2, 1, 256], strides = [1, 1, 1]} : vector<2x4x256xf32> to vector<2x1x256xf32>
    %669 = vector.extract_strided_slice %667 {offsets = [0, 1, 0], sizes = [2, 1, 256], strides = [1, 1, 1]} : vector<2x4x256xf32> to vector<2x1x256xf32>
    %670 = vector.extract_strided_slice %667 {offsets = [0, 2, 0], sizes = [2, 1, 256], strides = [1, 1, 1]} : vector<2x4x256xf32> to vector<2x1x256xf32>
    %671 = vector.extract_strided_slice %667 {offsets = [0, 3, 0], sizes = [2, 1, 256], strides = [1, 1, 1]} : vector<2x4x256xf32> to vector<2x1x256xf32>
    %672 = vector.extract_strided_slice %659 {offsets = [0, 0, 2], sizes = [2, 4, 256], strides = [1, 1, 1]} : vector<2x4x290xf32> to vector<2x4x256xf32>
    %673 = vector.broadcast %2 : vector<1x1x256xf32> to vector<2x4x256xf32>
    %674 = arith.mulf %672, %673 : vector<2x4x256xf32>
    %675 = vector.extract_strided_slice %674 {offsets = [0, 0, 0], sizes = [2, 1, 256], strides = [1, 1, 1]} : vector<2x4x256xf32> to vector<2x1x256xf32>
    %676 = vector.extract_strided_slice %674 {offsets = [0, 1, 0], sizes = [2, 1, 256], strides = [1, 1, 1]} : vector<2x4x256xf32> to vector<2x1x256xf32>
    %677 = vector.extract_strided_slice %674 {offsets = [0, 2, 0], sizes = [2, 1, 256], strides = [1, 1, 1]} : vector<2x4x256xf32> to vector<2x1x256xf32>
    %678 = vector.extract_strided_slice %674 {offsets = [0, 3, 0], sizes = [2, 1, 256], strides = [1, 1, 1]} : vector<2x4x256xf32> to vector<2x1x256xf32>
    %679 = vector.extract_strided_slice %659 {offsets = [0, 0, 16], sizes = [2, 4, 256], strides = [1, 1, 1]} : vector<2x4x290xf32> to vector<2x4x256xf32>
    %680 = vector.broadcast %1 : vector<1x1x256xf32> to vector<2x4x256xf32>
    %681 = arith.mulf %679, %680 : vector<2x4x256xf32>
    %682 = vector.extract_strided_slice %681 {offsets = [0, 0, 0], sizes = [2, 1, 256], strides = [1, 1, 1]} : vector<2x4x256xf32> to vector<2x1x256xf32>
    %683 = vector.extract_strided_slice %681 {offsets = [0, 1, 0], sizes = [2, 1, 256], strides = [1, 1, 1]} : vector<2x4x256xf32> to vector<2x1x256xf32>
    %684 = vector.extract_strided_slice %681 {offsets = [0, 2, 0], sizes = [2, 1, 256], strides = [1, 1, 1]} : vector<2x4x256xf32> to vector<2x1x256xf32>
    %685 = vector.extract_strided_slice %681 {offsets = [0, 3, 0], sizes = [2, 1, 256], strides = [1, 1, 1]} : vector<2x4x256xf32> to vector<2x1x256xf32>
    %686 = vector.extract_strided_slice %659 {offsets = [0, 0, 17], sizes = [2, 4, 256], strides = [1, 1, 1]} : vector<2x4x290xf32> to vector<2x4x256xf32>
    %687 = vector.extract_strided_slice %686 {offsets = [0, 0, 0], sizes = [2, 1, 256], strides = [1, 1, 1]} : vector<2x4x256xf32> to vector<2x1x256xf32>
    %688 = vector.extract_strided_slice %686 {offsets = [0, 1, 0], sizes = [2, 1, 256], strides = [1, 1, 1]} : vector<2x4x256xf32> to vector<2x1x256xf32>
    %689 = vector.extract_strided_slice %686 {offsets = [0, 2, 0], sizes = [2, 1, 256], strides = [1, 1, 1]} : vector<2x4x256xf32> to vector<2x1x256xf32>
    %690 = vector.extract_strided_slice %686 {offsets = [0, 3, 0], sizes = [2, 1, 256], strides = [1, 1, 1]} : vector<2x4x256xf32> to vector<2x1x256xf32>
    %691 = vector.extract_strided_slice %659 {offsets = [0, 0, 18], sizes = [2, 4, 256], strides = [1, 1, 1]} : vector<2x4x290xf32> to vector<2x4x256xf32>
    %692 = vector.broadcast %2 : vector<1x1x256xf32> to vector<2x4x256xf32>
    %693 = arith.mulf %691, %692 : vector<2x4x256xf32>
    %694 = vector.extract_strided_slice %693 {offsets = [0, 0, 0], sizes = [2, 1, 256], strides = [1, 1, 1]} : vector<2x4x256xf32> to vector<2x1x256xf32>
    %695 = vector.extract_strided_slice %693 {offsets = [0, 1, 0], sizes = [2, 1, 256], strides = [1, 1, 1]} : vector<2x4x256xf32> to vector<2x1x256xf32>
    %696 = vector.extract_strided_slice %693 {offsets = [0, 2, 0], sizes = [2, 1, 256], strides = [1, 1, 1]} : vector<2x4x256xf32> to vector<2x1x256xf32>
    %697 = vector.extract_strided_slice %693 {offsets = [0, 3, 0], sizes = [2, 1, 256], strides = [1, 1, 1]} : vector<2x4x256xf32> to vector<2x1x256xf32>
    %698 = vector.extract_strided_slice %659 {offsets = [0, 0, 32], sizes = [2, 4, 256], strides = [1, 1, 1]} : vector<2x4x290xf32> to vector<2x4x256xf32>
    %699 = vector.broadcast %1 : vector<1x1x256xf32> to vector<2x4x256xf32>
    %700 = arith.mulf %698, %699 : vector<2x4x256xf32>
    %701 = vector.extract_strided_slice %700 {offsets = [0, 0, 0], sizes = [2, 1, 256], strides = [1, 1, 1]} : vector<2x4x256xf32> to vector<2x1x256xf32>
    %702 = vector.extract_strided_slice %700 {offsets = [0, 1, 0], sizes = [2, 1, 256], strides = [1, 1, 1]} : vector<2x4x256xf32> to vector<2x1x256xf32>
    %703 = vector.extract_strided_slice %700 {offsets = [0, 2, 0], sizes = [2, 1, 256], strides = [1, 1, 1]} : vector<2x4x256xf32> to vector<2x1x256xf32>
    %704 = vector.extract_strided_slice %700 {offsets = [0, 3, 0], sizes = [2, 1, 256], strides = [1, 1, 1]} : vector<2x4x256xf32> to vector<2x1x256xf32>
    %705 = vector.extract_strided_slice %659 {offsets = [0, 0, 33], sizes = [2, 4, 256], strides = [1, 1, 1]} : vector<2x4x290xf32> to vector<2x4x256xf32>
    %706 = vector.extract_strided_slice %705 {offsets = [0, 0, 0], sizes = [2, 1, 256], strides = [1, 1, 1]} : vector<2x4x256xf32> to vector<2x1x256xf32>
    %707 = vector.extract_strided_slice %705 {offsets = [0, 1, 0], sizes = [2, 1, 256], strides = [1, 1, 1]} : vector<2x4x256xf32> to vector<2x1x256xf32>
    %708 = vector.extract_strided_slice %705 {offsets = [0, 2, 0], sizes = [2, 1, 256], strides = [1, 1, 1]} : vector<2x4x256xf32> to vector<2x1x256xf32>
    %709 = vector.extract_strided_slice %705 {offsets = [0, 3, 0], sizes = [2, 1, 256], strides = [1, 1, 1]} : vector<2x4x256xf32> to vector<2x1x256xf32>
    %710 = vector.extract_strided_slice %659 {offsets = [0, 0, 34], sizes = [2, 4, 256], strides = [1, 1, 1]} : vector<2x4x290xf32> to vector<2x4x256xf32>
    %711 = vector.broadcast %2 : vector<1x1x256xf32> to vector<2x4x256xf32>
    %712 = arith.mulf %710, %711 : vector<2x4x256xf32>
    %713 = vector.extract_strided_slice %712 {offsets = [0, 0, 0], sizes = [2, 1, 256], strides = [1, 1, 1]} : vector<2x4x256xf32> to vector<2x1x256xf32>
    %714 = vector.extract_strided_slice %712 {offsets = [0, 1, 0], sizes = [2, 1, 256], strides = [1, 1, 1]} : vector<2x4x256xf32> to vector<2x1x256xf32>
    %715 = vector.extract_strided_slice %712 {offsets = [0, 2, 0], sizes = [2, 1, 256], strides = [1, 1, 1]} : vector<2x4x256xf32> to vector<2x1x256xf32>
    %716 = vector.extract_strided_slice %712 {offsets = [0, 3, 0], sizes = [2, 1, 256], strides = [1, 1, 1]} : vector<2x4x256xf32> to vector<2x1x256xf32>
    %cst_19 = arith.constant 0.000000e+00 : f32
    %717 = vector.broadcast %cst_19 : f32 to vector<2x1x256xf32>
    %c0_20 = arith.constant 0 : index
    %718 = memref.load %arg5[%c0_20] : memref<144xf32, #tpu.memory_space<smem>>
    %719 = vector.broadcast %718 : f32 to vector<2x1x256xf32>
    %720 = arith.mulf %719, %663 : vector<2x1x256xf32>
    %721 = arith.addf %717, %720 : vector<2x1x256xf32>
    %c9_21 = arith.constant 9 : index
    %722 = memref.load %arg5[%c9_21] : memref<144xf32, #tpu.memory_space<smem>>
    %723 = vector.broadcast %722 : f32 to vector<2x1x256xf32>
    %724 = arith.mulf %723, %664 : vector<2x1x256xf32>
    %725 = arith.addf %721, %724 : vector<2x1x256xf32>
    %c18_22 = arith.constant 18 : index
    %726 = memref.load %arg5[%c18_22] : memref<144xf32, #tpu.memory_space<smem>>
    %727 = vector.broadcast %726 : f32 to vector<2x1x256xf32>
    %728 = arith.mulf %727, %665 : vector<2x1x256xf32>
    %729 = arith.addf %725, %728 : vector<2x1x256xf32>
    %c27_23 = arith.constant 27 : index
    %730 = memref.load %arg5[%c27_23] : memref<144xf32, #tpu.memory_space<smem>>
    %731 = vector.broadcast %730 : f32 to vector<2x1x256xf32>
    %732 = arith.mulf %731, %666 : vector<2x1x256xf32>
    %733 = arith.addf %729, %732 : vector<2x1x256xf32>
    %c1_24 = arith.constant 1 : index
    %734 = memref.load %arg5[%c1_24] : memref<144xf32, #tpu.memory_space<smem>>
    %735 = vector.broadcast %734 : f32 to vector<2x1x256xf32>
    %736 = arith.mulf %735, %668 : vector<2x1x256xf32>
    %737 = arith.addf %733, %736 : vector<2x1x256xf32>
    %c10_25 = arith.constant 10 : index
    %738 = memref.load %arg5[%c10_25] : memref<144xf32, #tpu.memory_space<smem>>
    %739 = vector.broadcast %738 : f32 to vector<2x1x256xf32>
    %740 = arith.mulf %739, %669 : vector<2x1x256xf32>
    %741 = arith.addf %737, %740 : vector<2x1x256xf32>
    %c19_26 = arith.constant 19 : index
    %742 = memref.load %arg5[%c19_26] : memref<144xf32, #tpu.memory_space<smem>>
    %743 = vector.broadcast %742 : f32 to vector<2x1x256xf32>
    %744 = arith.mulf %743, %670 : vector<2x1x256xf32>
    %745 = arith.addf %741, %744 : vector<2x1x256xf32>
    %c28_27 = arith.constant 28 : index
    %746 = memref.load %arg5[%c28_27] : memref<144xf32, #tpu.memory_space<smem>>
    %747 = vector.broadcast %746 : f32 to vector<2x1x256xf32>
    %748 = arith.mulf %747, %671 : vector<2x1x256xf32>
    %749 = arith.addf %745, %748 : vector<2x1x256xf32>
    %c2_28 = arith.constant 2 : index
    %750 = memref.load %arg5[%c2_28] : memref<144xf32, #tpu.memory_space<smem>>
    %751 = vector.broadcast %750 : f32 to vector<2x1x256xf32>
    %752 = arith.mulf %751, %675 : vector<2x1x256xf32>
    %753 = arith.addf %749, %752 : vector<2x1x256xf32>
    %c11_29 = arith.constant 11 : index
    %754 = memref.load %arg5[%c11_29] : memref<144xf32, #tpu.memory_space<smem>>
    %755 = vector.broadcast %754 : f32 to vector<2x1x256xf32>
    %756 = arith.mulf %755, %676 : vector<2x1x256xf32>
    %757 = arith.addf %753, %756 : vector<2x1x256xf32>
    %c20_30 = arith.constant 20 : index
    %758 = memref.load %arg5[%c20_30] : memref<144xf32, #tpu.memory_space<smem>>
    %759 = vector.broadcast %758 : f32 to vector<2x1x256xf32>
    %760 = arith.mulf %759, %677 : vector<2x1x256xf32>
    %761 = arith.addf %757, %760 : vector<2x1x256xf32>
    %c29_31 = arith.constant 29 : index
    %762 = memref.load %arg5[%c29_31] : memref<144xf32, #tpu.memory_space<smem>>
    %763 = vector.broadcast %762 : f32 to vector<2x1x256xf32>
    %764 = arith.mulf %763, %678 : vector<2x1x256xf32>
    %765 = arith.addf %761, %764 : vector<2x1x256xf32>
    %c3_32 = arith.constant 3 : index
    %766 = memref.load %arg5[%c3_32] : memref<144xf32, #tpu.memory_space<smem>>
    %767 = vector.broadcast %766 : f32 to vector<2x1x256xf32>
    %768 = arith.mulf %767, %682 : vector<2x1x256xf32>
    %769 = arith.addf %765, %768 : vector<2x1x256xf32>
    %c12_33 = arith.constant 12 : index
    %770 = memref.load %arg5[%c12_33] : memref<144xf32, #tpu.memory_space<smem>>
    %771 = vector.broadcast %770 : f32 to vector<2x1x256xf32>
    %772 = arith.mulf %771, %683 : vector<2x1x256xf32>
    %773 = arith.addf %769, %772 : vector<2x1x256xf32>
    %c21_34 = arith.constant 21 : index
    %774 = memref.load %arg5[%c21_34] : memref<144xf32, #tpu.memory_space<smem>>
    %775 = vector.broadcast %774 : f32 to vector<2x1x256xf32>
    %776 = arith.mulf %775, %684 : vector<2x1x256xf32>
    %777 = arith.addf %773, %776 : vector<2x1x256xf32>
    %c30_35 = arith.constant 30 : index
    %778 = memref.load %arg5[%c30_35] : memref<144xf32, #tpu.memory_space<smem>>
    %779 = vector.broadcast %778 : f32 to vector<2x1x256xf32>
    %780 = arith.mulf %779, %685 : vector<2x1x256xf32>
    %781 = arith.addf %777, %780 : vector<2x1x256xf32>
    %c4_36 = arith.constant 4 : index
    %782 = memref.load %arg5[%c4_36] : memref<144xf32, #tpu.memory_space<smem>>
    %783 = vector.broadcast %782 : f32 to vector<2x1x256xf32>
    %784 = arith.mulf %783, %687 : vector<2x1x256xf32>
    %785 = arith.addf %781, %784 : vector<2x1x256xf32>
    %c13_37 = arith.constant 13 : index
    %786 = memref.load %arg5[%c13_37] : memref<144xf32, #tpu.memory_space<smem>>
    %787 = vector.broadcast %786 : f32 to vector<2x1x256xf32>
    %788 = arith.mulf %787, %688 : vector<2x1x256xf32>
    %789 = arith.addf %785, %788 : vector<2x1x256xf32>
    %c22_38 = arith.constant 22 : index
    %790 = memref.load %arg5[%c22_38] : memref<144xf32, #tpu.memory_space<smem>>
    %791 = vector.broadcast %790 : f32 to vector<2x1x256xf32>
    %792 = arith.mulf %791, %689 : vector<2x1x256xf32>
    %793 = arith.addf %789, %792 : vector<2x1x256xf32>
    %c31_39 = arith.constant 31 : index
    %794 = memref.load %arg5[%c31_39] : memref<144xf32, #tpu.memory_space<smem>>
    %795 = vector.broadcast %794 : f32 to vector<2x1x256xf32>
    %796 = arith.mulf %795, %690 : vector<2x1x256xf32>
    %797 = arith.addf %793, %796 : vector<2x1x256xf32>
    %c5_40 = arith.constant 5 : index
    %798 = memref.load %arg5[%c5_40] : memref<144xf32, #tpu.memory_space<smem>>
    %799 = vector.broadcast %798 : f32 to vector<2x1x256xf32>
    %800 = arith.mulf %799, %694 : vector<2x1x256xf32>
    %801 = arith.addf %797, %800 : vector<2x1x256xf32>
    %c14_41 = arith.constant 14 : index
    %802 = memref.load %arg5[%c14_41] : memref<144xf32, #tpu.memory_space<smem>>
    %803 = vector.broadcast %802 : f32 to vector<2x1x256xf32>
    %804 = arith.mulf %803, %695 : vector<2x1x256xf32>
    %805 = arith.addf %801, %804 : vector<2x1x256xf32>
    %c23_42 = arith.constant 23 : index
    %806 = memref.load %arg5[%c23_42] : memref<144xf32, #tpu.memory_space<smem>>
    %807 = vector.broadcast %806 : f32 to vector<2x1x256xf32>
    %808 = arith.mulf %807, %696 : vector<2x1x256xf32>
    %809 = arith.addf %805, %808 : vector<2x1x256xf32>
    %c32_43 = arith.constant 32 : index
    %810 = memref.load %arg5[%c32_43] : memref<144xf32, #tpu.memory_space<smem>>
    %811 = vector.broadcast %810 : f32 to vector<2x1x256xf32>
    %812 = arith.mulf %811, %697 : vector<2x1x256xf32>
    %813 = arith.addf %809, %812 : vector<2x1x256xf32>
    %c6_44 = arith.constant 6 : index
    %814 = memref.load %arg5[%c6_44] : memref<144xf32, #tpu.memory_space<smem>>
    %815 = vector.broadcast %814 : f32 to vector<2x1x256xf32>
    %816 = arith.mulf %815, %701 : vector<2x1x256xf32>
    %817 = arith.addf %813, %816 : vector<2x1x256xf32>
    %c15_45 = arith.constant 15 : index
    %818 = memref.load %arg5[%c15_45] : memref<144xf32, #tpu.memory_space<smem>>
    %819 = vector.broadcast %818 : f32 to vector<2x1x256xf32>
    %820 = arith.mulf %819, %702 : vector<2x1x256xf32>
    %821 = arith.addf %817, %820 : vector<2x1x256xf32>
    %c24_46 = arith.constant 24 : index
    %822 = memref.load %arg5[%c24_46] : memref<144xf32, #tpu.memory_space<smem>>
    %823 = vector.broadcast %822 : f32 to vector<2x1x256xf32>
    %824 = arith.mulf %823, %703 : vector<2x1x256xf32>
    %825 = arith.addf %821, %824 : vector<2x1x256xf32>
    %c33_47 = arith.constant 33 : index
    %826 = memref.load %arg5[%c33_47] : memref<144xf32, #tpu.memory_space<smem>>
    %827 = vector.broadcast %826 : f32 to vector<2x1x256xf32>
    %828 = arith.mulf %827, %704 : vector<2x1x256xf32>
    %829 = arith.addf %825, %828 : vector<2x1x256xf32>
    %c7_48 = arith.constant 7 : index
    %830 = memref.load %arg5[%c7_48] : memref<144xf32, #tpu.memory_space<smem>>
    %831 = vector.broadcast %830 : f32 to vector<2x1x256xf32>
    %832 = arith.mulf %831, %706 : vector<2x1x256xf32>
    %833 = arith.addf %829, %832 : vector<2x1x256xf32>
    %c16_49 = arith.constant 16 : index
    %834 = memref.load %arg5[%c16_49] : memref<144xf32, #tpu.memory_space<smem>>
    %835 = vector.broadcast %834 : f32 to vector<2x1x256xf32>
    %836 = arith.mulf %835, %707 : vector<2x1x256xf32>
    %837 = arith.addf %833, %836 : vector<2x1x256xf32>
    %c25_50 = arith.constant 25 : index
    %838 = memref.load %arg5[%c25_50] : memref<144xf32, #tpu.memory_space<smem>>
    %839 = vector.broadcast %838 : f32 to vector<2x1x256xf32>
    %840 = arith.mulf %839, %708 : vector<2x1x256xf32>
    %841 = arith.addf %837, %840 : vector<2x1x256xf32>
    %c34_51 = arith.constant 34 : index
    %842 = memref.load %arg5[%c34_51] : memref<144xf32, #tpu.memory_space<smem>>
    %843 = vector.broadcast %842 : f32 to vector<2x1x256xf32>
    %844 = arith.mulf %843, %709 : vector<2x1x256xf32>
    %845 = arith.addf %841, %844 : vector<2x1x256xf32>
    %c8_52 = arith.constant 8 : index
    %846 = memref.load %arg5[%c8_52] : memref<144xf32, #tpu.memory_space<smem>>
    %847 = vector.broadcast %846 : f32 to vector<2x1x256xf32>
    %848 = arith.mulf %847, %713 : vector<2x1x256xf32>
    %849 = arith.addf %845, %848 : vector<2x1x256xf32>
    %c17_53 = arith.constant 17 : index
    %850 = memref.load %arg5[%c17_53] : memref<144xf32, #tpu.memory_space<smem>>
    %851 = vector.broadcast %850 : f32 to vector<2x1x256xf32>
    %852 = arith.mulf %851, %714 : vector<2x1x256xf32>
    %853 = arith.addf %849, %852 : vector<2x1x256xf32>
    %c26_54 = arith.constant 26 : index
    %854 = memref.load %arg5[%c26_54] : memref<144xf32, #tpu.memory_space<smem>>
    %855 = vector.broadcast %854 : f32 to vector<2x1x256xf32>
    %856 = arith.mulf %855, %715 : vector<2x1x256xf32>
    %857 = arith.addf %853, %856 : vector<2x1x256xf32>
    %c35_55 = arith.constant 35 : index
    %858 = memref.load %arg5[%c35_55] : memref<144xf32, #tpu.memory_space<smem>>
    %859 = vector.broadcast %858 : f32 to vector<2x1x256xf32>
    %860 = arith.mulf %859, %716 : vector<2x1x256xf32>
    %861 = arith.addf %857, %860 : vector<2x1x256xf32>
    %c0_56 = arith.constant 0 : index
    %862 = memref.load %arg6[%c0_56] : memref<4xf32, #tpu.memory_space<smem>>
    %863 = vector.broadcast %862 : f32 to vector<2x1x256xf32>
    %864 = arith.addf %861, %863 : vector<2x1x256xf32>
    %cst_57 = arith.constant 0.000000e+00 : f32
    %865 = vector.broadcast %cst_57 : f32 to vector<2x1x256xf32>
    %c36_58 = arith.constant 36 : index
    %866 = memref.load %arg5[%c36_58] : memref<144xf32, #tpu.memory_space<smem>>
    %867 = vector.broadcast %866 : f32 to vector<2x1x256xf32>
    %868 = arith.mulf %867, %663 : vector<2x1x256xf32>
    %869 = arith.addf %865, %868 : vector<2x1x256xf32>
    %c45_59 = arith.constant 45 : index
    %870 = memref.load %arg5[%c45_59] : memref<144xf32, #tpu.memory_space<smem>>
    %871 = vector.broadcast %870 : f32 to vector<2x1x256xf32>
    %872 = arith.mulf %871, %664 : vector<2x1x256xf32>
    %873 = arith.addf %869, %872 : vector<2x1x256xf32>
    %c54_60 = arith.constant 54 : index
    %874 = memref.load %arg5[%c54_60] : memref<144xf32, #tpu.memory_space<smem>>
    %875 = vector.broadcast %874 : f32 to vector<2x1x256xf32>
    %876 = arith.mulf %875, %665 : vector<2x1x256xf32>
    %877 = arith.addf %873, %876 : vector<2x1x256xf32>
    %c63_61 = arith.constant 63 : index
    %878 = memref.load %arg5[%c63_61] : memref<144xf32, #tpu.memory_space<smem>>
    %879 = vector.broadcast %878 : f32 to vector<2x1x256xf32>
    %880 = arith.mulf %879, %666 : vector<2x1x256xf32>
    %881 = arith.addf %877, %880 : vector<2x1x256xf32>
    %c37_62 = arith.constant 37 : index
    %882 = memref.load %arg5[%c37_62] : memref<144xf32, #tpu.memory_space<smem>>
    %883 = vector.broadcast %882 : f32 to vector<2x1x256xf32>
    %884 = arith.mulf %883, %668 : vector<2x1x256xf32>
    %885 = arith.addf %881, %884 : vector<2x1x256xf32>
    %c46_63 = arith.constant 46 : index
    %886 = memref.load %arg5[%c46_63] : memref<144xf32, #tpu.memory_space<smem>>
    %887 = vector.broadcast %886 : f32 to vector<2x1x256xf32>
    %888 = arith.mulf %887, %669 : vector<2x1x256xf32>
    %889 = arith.addf %885, %888 : vector<2x1x256xf32>
    %c55_64 = arith.constant 55 : index
    %890 = memref.load %arg5[%c55_64] : memref<144xf32, #tpu.memory_space<smem>>
    %891 = vector.broadcast %890 : f32 to vector<2x1x256xf32>
    %892 = arith.mulf %891, %670 : vector<2x1x256xf32>
    %893 = arith.addf %889, %892 : vector<2x1x256xf32>
    %c64_65 = arith.constant 64 : index
    %894 = memref.load %arg5[%c64_65] : memref<144xf32, #tpu.memory_space<smem>>
    %895 = vector.broadcast %894 : f32 to vector<2x1x256xf32>
    %896 = arith.mulf %895, %671 : vector<2x1x256xf32>
    %897 = arith.addf %893, %896 : vector<2x1x256xf32>
    %c38_66 = arith.constant 38 : index
    %898 = memref.load %arg5[%c38_66] : memref<144xf32, #tpu.memory_space<smem>>
    %899 = vector.broadcast %898 : f32 to vector<2x1x256xf32>
    %900 = arith.mulf %899, %675 : vector<2x1x256xf32>
    %901 = arith.addf %897, %900 : vector<2x1x256xf32>
    %c47_67 = arith.constant 47 : index
    %902 = memref.load %arg5[%c47_67] : memref<144xf32, #tpu.memory_space<smem>>
    %903 = vector.broadcast %902 : f32 to vector<2x1x256xf32>
    %904 = arith.mulf %903, %676 : vector<2x1x256xf32>
    %905 = arith.addf %901, %904 : vector<2x1x256xf32>
    %c56_68 = arith.constant 56 : index
    %906 = memref.load %arg5[%c56_68] : memref<144xf32, #tpu.memory_space<smem>>
    %907 = vector.broadcast %906 : f32 to vector<2x1x256xf32>
    %908 = arith.mulf %907, %677 : vector<2x1x256xf32>
    %909 = arith.addf %905, %908 : vector<2x1x256xf32>
    %c65_69 = arith.constant 65 : index
    %910 = memref.load %arg5[%c65_69] : memref<144xf32, #tpu.memory_space<smem>>
    %911 = vector.broadcast %910 : f32 to vector<2x1x256xf32>
    %912 = arith.mulf %911, %678 : vector<2x1x256xf32>
    %913 = arith.addf %909, %912 : vector<2x1x256xf32>
    %c39_70 = arith.constant 39 : index
    %914 = memref.load %arg5[%c39_70] : memref<144xf32, #tpu.memory_space<smem>>
    %915 = vector.broadcast %914 : f32 to vector<2x1x256xf32>
    %916 = arith.mulf %915, %682 : vector<2x1x256xf32>
    %917 = arith.addf %913, %916 : vector<2x1x256xf32>
    %c48_71 = arith.constant 48 : index
    %918 = memref.load %arg5[%c48_71] : memref<144xf32, #tpu.memory_space<smem>>
    %919 = vector.broadcast %918 : f32 to vector<2x1x256xf32>
    %920 = arith.mulf %919, %683 : vector<2x1x256xf32>
    %921 = arith.addf %917, %920 : vector<2x1x256xf32>
    %c57_72 = arith.constant 57 : index
    %922 = memref.load %arg5[%c57_72] : memref<144xf32, #tpu.memory_space<smem>>
    %923 = vector.broadcast %922 : f32 to vector<2x1x256xf32>
    %924 = arith.mulf %923, %684 : vector<2x1x256xf32>
    %925 = arith.addf %921, %924 : vector<2x1x256xf32>
    %c66_73 = arith.constant 66 : index
    %926 = memref.load %arg5[%c66_73] : memref<144xf32, #tpu.memory_space<smem>>
    %927 = vector.broadcast %926 : f32 to vector<2x1x256xf32>
    %928 = arith.mulf %927, %685 : vector<2x1x256xf32>
    %929 = arith.addf %925, %928 : vector<2x1x256xf32>
    %c40_74 = arith.constant 40 : index
    %930 = memref.load %arg5[%c40_74] : memref<144xf32, #tpu.memory_space<smem>>
    %931 = vector.broadcast %930 : f32 to vector<2x1x256xf32>
    %932 = arith.mulf %931, %687 : vector<2x1x256xf32>
    %933 = arith.addf %929, %932 : vector<2x1x256xf32>
    %c49_75 = arith.constant 49 : index
    %934 = memref.load %arg5[%c49_75] : memref<144xf32, #tpu.memory_space<smem>>
    %935 = vector.broadcast %934 : f32 to vector<2x1x256xf32>
    %936 = arith.mulf %935, %688 : vector<2x1x256xf32>
    %937 = arith.addf %933, %936 : vector<2x1x256xf32>
    %c58_76 = arith.constant 58 : index
    %938 = memref.load %arg5[%c58_76] : memref<144xf32, #tpu.memory_space<smem>>
    %939 = vector.broadcast %938 : f32 to vector<2x1x256xf32>
    %940 = arith.mulf %939, %689 : vector<2x1x256xf32>
    %941 = arith.addf %937, %940 : vector<2x1x256xf32>
    %c67_77 = arith.constant 67 : index
    %942 = memref.load %arg5[%c67_77] : memref<144xf32, #tpu.memory_space<smem>>
    %943 = vector.broadcast %942 : f32 to vector<2x1x256xf32>
    %944 = arith.mulf %943, %690 : vector<2x1x256xf32>
    %945 = arith.addf %941, %944 : vector<2x1x256xf32>
    %c41_78 = arith.constant 41 : index
    %946 = memref.load %arg5[%c41_78] : memref<144xf32, #tpu.memory_space<smem>>
    %947 = vector.broadcast %946 : f32 to vector<2x1x256xf32>
    %948 = arith.mulf %947, %694 : vector<2x1x256xf32>
    %949 = arith.addf %945, %948 : vector<2x1x256xf32>
    %c50_79 = arith.constant 50 : index
    %950 = memref.load %arg5[%c50_79] : memref<144xf32, #tpu.memory_space<smem>>
    %951 = vector.broadcast %950 : f32 to vector<2x1x256xf32>
    %952 = arith.mulf %951, %695 : vector<2x1x256xf32>
    %953 = arith.addf %949, %952 : vector<2x1x256xf32>
    %c59_80 = arith.constant 59 : index
    %954 = memref.load %arg5[%c59_80] : memref<144xf32, #tpu.memory_space<smem>>
    %955 = vector.broadcast %954 : f32 to vector<2x1x256xf32>
    %956 = arith.mulf %955, %696 : vector<2x1x256xf32>
    %957 = arith.addf %953, %956 : vector<2x1x256xf32>
    %c68_81 = arith.constant 68 : index
    %958 = memref.load %arg5[%c68_81] : memref<144xf32, #tpu.memory_space<smem>>
    %959 = vector.broadcast %958 : f32 to vector<2x1x256xf32>
    %960 = arith.mulf %959, %697 : vector<2x1x256xf32>
    %961 = arith.addf %957, %960 : vector<2x1x256xf32>
    %c42_82 = arith.constant 42 : index
    %962 = memref.load %arg5[%c42_82] : memref<144xf32, #tpu.memory_space<smem>>
    %963 = vector.broadcast %962 : f32 to vector<2x1x256xf32>
    %964 = arith.mulf %963, %701 : vector<2x1x256xf32>
    %965 = arith.addf %961, %964 : vector<2x1x256xf32>
    %c51_83 = arith.constant 51 : index
    %966 = memref.load %arg5[%c51_83] : memref<144xf32, #tpu.memory_space<smem>>
    %967 = vector.broadcast %966 : f32 to vector<2x1x256xf32>
    %968 = arith.mulf %967, %702 : vector<2x1x256xf32>
    %969 = arith.addf %965, %968 : vector<2x1x256xf32>
    %c60_84 = arith.constant 60 : index
    %970 = memref.load %arg5[%c60_84] : memref<144xf32, #tpu.memory_space<smem>>
    %971 = vector.broadcast %970 : f32 to vector<2x1x256xf32>
    %972 = arith.mulf %971, %703 : vector<2x1x256xf32>
    %973 = arith.addf %969, %972 : vector<2x1x256xf32>
    %c69_85 = arith.constant 69 : index
    %974 = memref.load %arg5[%c69_85] : memref<144xf32, #tpu.memory_space<smem>>
    %975 = vector.broadcast %974 : f32 to vector<2x1x256xf32>
    %976 = arith.mulf %975, %704 : vector<2x1x256xf32>
    %977 = arith.addf %973, %976 : vector<2x1x256xf32>
    %c43_86 = arith.constant 43 : index
    %978 = memref.load %arg5[%c43_86] : memref<144xf32, #tpu.memory_space<smem>>
    %979 = vector.broadcast %978 : f32 to vector<2x1x256xf32>
    %980 = arith.mulf %979, %706 : vector<2x1x256xf32>
    %981 = arith.addf %977, %980 : vector<2x1x256xf32>
    %c52_87 = arith.constant 52 : index
    %982 = memref.load %arg5[%c52_87] : memref<144xf32, #tpu.memory_space<smem>>
    %983 = vector.broadcast %982 : f32 to vector<2x1x256xf32>
    %984 = arith.mulf %983, %707 : vector<2x1x256xf32>
    %985 = arith.addf %981, %984 : vector<2x1x256xf32>
    %c61_88 = arith.constant 61 : index
    %986 = memref.load %arg5[%c61_88] : memref<144xf32, #tpu.memory_space<smem>>
    %987 = vector.broadcast %986 : f32 to vector<2x1x256xf32>
    %988 = arith.mulf %987, %708 : vector<2x1x256xf32>
    %989 = arith.addf %985, %988 : vector<2x1x256xf32>
    %c70_89 = arith.constant 70 : index
    %990 = memref.load %arg5[%c70_89] : memref<144xf32, #tpu.memory_space<smem>>
    %991 = vector.broadcast %990 : f32 to vector<2x1x256xf32>
    %992 = arith.mulf %991, %709 : vector<2x1x256xf32>
    %993 = arith.addf %989, %992 : vector<2x1x256xf32>
    %c44_90 = arith.constant 44 : index
    %994 = memref.load %arg5[%c44_90] : memref<144xf32, #tpu.memory_space<smem>>
    %995 = vector.broadcast %994 : f32 to vector<2x1x256xf32>
    %996 = arith.mulf %995, %713 : vector<2x1x256xf32>
    %997 = arith.addf %993, %996 : vector<2x1x256xf32>
    %c53_91 = arith.constant 53 : index
    %998 = memref.load %arg5[%c53_91] : memref<144xf32, #tpu.memory_space<smem>>
    %999 = vector.broadcast %998 : f32 to vector<2x1x256xf32>
    %1000 = arith.mulf %999, %714 : vector<2x1x256xf32>
    %1001 = arith.addf %997, %1000 : vector<2x1x256xf32>
    %c62_92 = arith.constant 62 : index
    %1002 = memref.load %arg5[%c62_92] : memref<144xf32, #tpu.memory_space<smem>>
    %1003 = vector.broadcast %1002 : f32 to vector<2x1x256xf32>
    %1004 = arith.mulf %1003, %715 : vector<2x1x256xf32>
    %1005 = arith.addf %1001, %1004 : vector<2x1x256xf32>
    %c71_93 = arith.constant 71 : index
    %1006 = memref.load %arg5[%c71_93] : memref<144xf32, #tpu.memory_space<smem>>
    %1007 = vector.broadcast %1006 : f32 to vector<2x1x256xf32>
    %1008 = arith.mulf %1007, %716 : vector<2x1x256xf32>
    %1009 = arith.addf %1005, %1008 : vector<2x1x256xf32>
    %c1_94 = arith.constant 1 : index
    %1010 = memref.load %arg6[%c1_94] : memref<4xf32, #tpu.memory_space<smem>>
    %1011 = vector.broadcast %1010 : f32 to vector<2x1x256xf32>
    %1012 = arith.addf %1009, %1011 : vector<2x1x256xf32>
    %cst_95 = arith.constant 0.000000e+00 : f32
    %1013 = vector.broadcast %cst_95 : f32 to vector<2x1x256xf32>
    %c72_96 = arith.constant 72 : index
    %1014 = memref.load %arg5[%c72_96] : memref<144xf32, #tpu.memory_space<smem>>
    %1015 = vector.broadcast %1014 : f32 to vector<2x1x256xf32>
    %1016 = arith.mulf %1015, %663 : vector<2x1x256xf32>
    %1017 = arith.addf %1013, %1016 : vector<2x1x256xf32>
    %c81_97 = arith.constant 81 : index
    %1018 = memref.load %arg5[%c81_97] : memref<144xf32, #tpu.memory_space<smem>>
    %1019 = vector.broadcast %1018 : f32 to vector<2x1x256xf32>
    %1020 = arith.mulf %1019, %664 : vector<2x1x256xf32>
    %1021 = arith.addf %1017, %1020 : vector<2x1x256xf32>
    %c90_98 = arith.constant 90 : index
    %1022 = memref.load %arg5[%c90_98] : memref<144xf32, #tpu.memory_space<smem>>
    %1023 = vector.broadcast %1022 : f32 to vector<2x1x256xf32>
    %1024 = arith.mulf %1023, %665 : vector<2x1x256xf32>
    %1025 = arith.addf %1021, %1024 : vector<2x1x256xf32>
    %c99_99 = arith.constant 99 : index
    %1026 = memref.load %arg5[%c99_99] : memref<144xf32, #tpu.memory_space<smem>>
    %1027 = vector.broadcast %1026 : f32 to vector<2x1x256xf32>
    %1028 = arith.mulf %1027, %666 : vector<2x1x256xf32>
    %1029 = arith.addf %1025, %1028 : vector<2x1x256xf32>
    %c73_100 = arith.constant 73 : index
    %1030 = memref.load %arg5[%c73_100] : memref<144xf32, #tpu.memory_space<smem>>
    %1031 = vector.broadcast %1030 : f32 to vector<2x1x256xf32>
    %1032 = arith.mulf %1031, %668 : vector<2x1x256xf32>
    %1033 = arith.addf %1029, %1032 : vector<2x1x256xf32>
    %c82_101 = arith.constant 82 : index
    %1034 = memref.load %arg5[%c82_101] : memref<144xf32, #tpu.memory_space<smem>>
    %1035 = vector.broadcast %1034 : f32 to vector<2x1x256xf32>
    %1036 = arith.mulf %1035, %669 : vector<2x1x256xf32>
    %1037 = arith.addf %1033, %1036 : vector<2x1x256xf32>
    %c91_102 = arith.constant 91 : index
    %1038 = memref.load %arg5[%c91_102] : memref<144xf32, #tpu.memory_space<smem>>
    %1039 = vector.broadcast %1038 : f32 to vector<2x1x256xf32>
    %1040 = arith.mulf %1039, %670 : vector<2x1x256xf32>
    %1041 = arith.addf %1037, %1040 : vector<2x1x256xf32>
    %c100_103 = arith.constant 100 : index
    %1042 = memref.load %arg5[%c100_103] : memref<144xf32, #tpu.memory_space<smem>>
    %1043 = vector.broadcast %1042 : f32 to vector<2x1x256xf32>
    %1044 = arith.mulf %1043, %671 : vector<2x1x256xf32>
    %1045 = arith.addf %1041, %1044 : vector<2x1x256xf32>
    %c74_104 = arith.constant 74 : index
    %1046 = memref.load %arg5[%c74_104] : memref<144xf32, #tpu.memory_space<smem>>
    %1047 = vector.broadcast %1046 : f32 to vector<2x1x256xf32>
    %1048 = arith.mulf %1047, %675 : vector<2x1x256xf32>
    %1049 = arith.addf %1045, %1048 : vector<2x1x256xf32>
    %c83_105 = arith.constant 83 : index
    %1050 = memref.load %arg5[%c83_105] : memref<144xf32, #tpu.memory_space<smem>>
    %1051 = vector.broadcast %1050 : f32 to vector<2x1x256xf32>
    %1052 = arith.mulf %1051, %676 : vector<2x1x256xf32>
    %1053 = arith.addf %1049, %1052 : vector<2x1x256xf32>
    %c92_106 = arith.constant 92 : index
    %1054 = memref.load %arg5[%c92_106] : memref<144xf32, #tpu.memory_space<smem>>
    %1055 = vector.broadcast %1054 : f32 to vector<2x1x256xf32>
    %1056 = arith.mulf %1055, %677 : vector<2x1x256xf32>
    %1057 = arith.addf %1053, %1056 : vector<2x1x256xf32>
    %c101_107 = arith.constant 101 : index
    %1058 = memref.load %arg5[%c101_107] : memref<144xf32, #tpu.memory_space<smem>>
    %1059 = vector.broadcast %1058 : f32 to vector<2x1x256xf32>
    %1060 = arith.mulf %1059, %678 : vector<2x1x256xf32>
    %1061 = arith.addf %1057, %1060 : vector<2x1x256xf32>
    %c75_108 = arith.constant 75 : index
    %1062 = memref.load %arg5[%c75_108] : memref<144xf32, #tpu.memory_space<smem>>
    %1063 = vector.broadcast %1062 : f32 to vector<2x1x256xf32>
    %1064 = arith.mulf %1063, %682 : vector<2x1x256xf32>
    %1065 = arith.addf %1061, %1064 : vector<2x1x256xf32>
    %c84_109 = arith.constant 84 : index
    %1066 = memref.load %arg5[%c84_109] : memref<144xf32, #tpu.memory_space<smem>>
    %1067 = vector.broadcast %1066 : f32 to vector<2x1x256xf32>
    %1068 = arith.mulf %1067, %683 : vector<2x1x256xf32>
    %1069 = arith.addf %1065, %1068 : vector<2x1x256xf32>
    %c93_110 = arith.constant 93 : index
    %1070 = memref.load %arg5[%c93_110] : memref<144xf32, #tpu.memory_space<smem>>
    %1071 = vector.broadcast %1070 : f32 to vector<2x1x256xf32>
    %1072 = arith.mulf %1071, %684 : vector<2x1x256xf32>
    %1073 = arith.addf %1069, %1072 : vector<2x1x256xf32>
    %c102_111 = arith.constant 102 : index
    %1074 = memref.load %arg5[%c102_111] : memref<144xf32, #tpu.memory_space<smem>>
    %1075 = vector.broadcast %1074 : f32 to vector<2x1x256xf32>
    %1076 = arith.mulf %1075, %685 : vector<2x1x256xf32>
    %1077 = arith.addf %1073, %1076 : vector<2x1x256xf32>
    %c76_112 = arith.constant 76 : index
    %1078 = memref.load %arg5[%c76_112] : memref<144xf32, #tpu.memory_space<smem>>
    %1079 = vector.broadcast %1078 : f32 to vector<2x1x256xf32>
    %1080 = arith.mulf %1079, %687 : vector<2x1x256xf32>
    %1081 = arith.addf %1077, %1080 : vector<2x1x256xf32>
    %c85_113 = arith.constant 85 : index
    %1082 = memref.load %arg5[%c85_113] : memref<144xf32, #tpu.memory_space<smem>>
    %1083 = vector.broadcast %1082 : f32 to vector<2x1x256xf32>
    %1084 = arith.mulf %1083, %688 : vector<2x1x256xf32>
    %1085 = arith.addf %1081, %1084 : vector<2x1x256xf32>
    %c94_114 = arith.constant 94 : index
    %1086 = memref.load %arg5[%c94_114] : memref<144xf32, #tpu.memory_space<smem>>
    %1087 = vector.broadcast %1086 : f32 to vector<2x1x256xf32>
    %1088 = arith.mulf %1087, %689 : vector<2x1x256xf32>
    %1089 = arith.addf %1085, %1088 : vector<2x1x256xf32>
    %c103_115 = arith.constant 103 : index
    %1090 = memref.load %arg5[%c103_115] : memref<144xf32, #tpu.memory_space<smem>>
    %1091 = vector.broadcast %1090 : f32 to vector<2x1x256xf32>
    %1092 = arith.mulf %1091, %690 : vector<2x1x256xf32>
    %1093 = arith.addf %1089, %1092 : vector<2x1x256xf32>
    %c77_116 = arith.constant 77 : index
    %1094 = memref.load %arg5[%c77_116] : memref<144xf32, #tpu.memory_space<smem>>
    %1095 = vector.broadcast %1094 : f32 to vector<2x1x256xf32>
    %1096 = arith.mulf %1095, %694 : vector<2x1x256xf32>
    %1097 = arith.addf %1093, %1096 : vector<2x1x256xf32>
    %c86_117 = arith.constant 86 : index
    %1098 = memref.load %arg5[%c86_117] : memref<144xf32, #tpu.memory_space<smem>>
    %1099 = vector.broadcast %1098 : f32 to vector<2x1x256xf32>
    %1100 = arith.mulf %1099, %695 : vector<2x1x256xf32>
    %1101 = arith.addf %1097, %1100 : vector<2x1x256xf32>
    %c95_118 = arith.constant 95 : index
    %1102 = memref.load %arg5[%c95_118] : memref<144xf32, #tpu.memory_space<smem>>
    %1103 = vector.broadcast %1102 : f32 to vector<2x1x256xf32>
    %1104 = arith.mulf %1103, %696 : vector<2x1x256xf32>
    %1105 = arith.addf %1101, %1104 : vector<2x1x256xf32>
    %c104_119 = arith.constant 104 : index
    %1106 = memref.load %arg5[%c104_119] : memref<144xf32, #tpu.memory_space<smem>>
    %1107 = vector.broadcast %1106 : f32 to vector<2x1x256xf32>
    %1108 = arith.mulf %1107, %697 : vector<2x1x256xf32>
    %1109 = arith.addf %1105, %1108 : vector<2x1x256xf32>
    %c78_120 = arith.constant 78 : index
    %1110 = memref.load %arg5[%c78_120] : memref<144xf32, #tpu.memory_space<smem>>
    %1111 = vector.broadcast %1110 : f32 to vector<2x1x256xf32>
    %1112 = arith.mulf %1111, %701 : vector<2x1x256xf32>
    %1113 = arith.addf %1109, %1112 : vector<2x1x256xf32>
    %c87_121 = arith.constant 87 : index
    %1114 = memref.load %arg5[%c87_121] : memref<144xf32, #tpu.memory_space<smem>>
    %1115 = vector.broadcast %1114 : f32 to vector<2x1x256xf32>
    %1116 = arith.mulf %1115, %702 : vector<2x1x256xf32>
    %1117 = arith.addf %1113, %1116 : vector<2x1x256xf32>
    %c96_122 = arith.constant 96 : index
    %1118 = memref.load %arg5[%c96_122] : memref<144xf32, #tpu.memory_space<smem>>
    %1119 = vector.broadcast %1118 : f32 to vector<2x1x256xf32>
    %1120 = arith.mulf %1119, %703 : vector<2x1x256xf32>
    %1121 = arith.addf %1117, %1120 : vector<2x1x256xf32>
    %c105_123 = arith.constant 105 : index
    %1122 = memref.load %arg5[%c105_123] : memref<144xf32, #tpu.memory_space<smem>>
    %1123 = vector.broadcast %1122 : f32 to vector<2x1x256xf32>
    %1124 = arith.mulf %1123, %704 : vector<2x1x256xf32>
    %1125 = arith.addf %1121, %1124 : vector<2x1x256xf32>
    %c79_124 = arith.constant 79 : index
    %1126 = memref.load %arg5[%c79_124] : memref<144xf32, #tpu.memory_space<smem>>
    %1127 = vector.broadcast %1126 : f32 to vector<2x1x256xf32>
    %1128 = arith.mulf %1127, %706 : vector<2x1x256xf32>
    %1129 = arith.addf %1125, %1128 : vector<2x1x256xf32>
    %c88_125 = arith.constant 88 : index
    %1130 = memref.load %arg5[%c88_125] : memref<144xf32, #tpu.memory_space<smem>>
    %1131 = vector.broadcast %1130 : f32 to vector<2x1x256xf32>
    %1132 = arith.mulf %1131, %707 : vector<2x1x256xf32>
    %1133 = arith.addf %1129, %1132 : vector<2x1x256xf32>
    %c97_126 = arith.constant 97 : index
    %1134 = memref.load %arg5[%c97_126] : memref<144xf32, #tpu.memory_space<smem>>
    %1135 = vector.broadcast %1134 : f32 to vector<2x1x256xf32>
    %1136 = arith.mulf %1135, %708 : vector<2x1x256xf32>
    %1137 = arith.addf %1133, %1136 : vector<2x1x256xf32>
    %c106_127 = arith.constant 106 : index
    %1138 = memref.load %arg5[%c106_127] : memref<144xf32, #tpu.memory_space<smem>>
    %1139 = vector.broadcast %1138 : f32 to vector<2x1x256xf32>
    %1140 = arith.mulf %1139, %709 : vector<2x1x256xf32>
    %1141 = arith.addf %1137, %1140 : vector<2x1x256xf32>
    %c80_128 = arith.constant 80 : index
    %1142 = memref.load %arg5[%c80_128] : memref<144xf32, #tpu.memory_space<smem>>
    %1143 = vector.broadcast %1142 : f32 to vector<2x1x256xf32>
    %1144 = arith.mulf %1143, %713 : vector<2x1x256xf32>
    %1145 = arith.addf %1141, %1144 : vector<2x1x256xf32>
    %c89_129 = arith.constant 89 : index
    %1146 = memref.load %arg5[%c89_129] : memref<144xf32, #tpu.memory_space<smem>>
    %1147 = vector.broadcast %1146 : f32 to vector<2x1x256xf32>
    %1148 = arith.mulf %1147, %714 : vector<2x1x256xf32>
    %1149 = arith.addf %1145, %1148 : vector<2x1x256xf32>
    %c98_130 = arith.constant 98 : index
    %1150 = memref.load %arg5[%c98_130] : memref<144xf32, #tpu.memory_space<smem>>
    %1151 = vector.broadcast %1150 : f32 to vector<2x1x256xf32>
    %1152 = arith.mulf %1151, %715 : vector<2x1x256xf32>
    %1153 = arith.addf %1149, %1152 : vector<2x1x256xf32>
    %c107_131 = arith.constant 107 : index
    %1154 = memref.load %arg5[%c107_131] : memref<144xf32, #tpu.memory_space<smem>>
    %1155 = vector.broadcast %1154 : f32 to vector<2x1x256xf32>
    %1156 = arith.mulf %1155, %716 : vector<2x1x256xf32>
    %1157 = arith.addf %1153, %1156 : vector<2x1x256xf32>
    %c2_132 = arith.constant 2 : index
    %1158 = memref.load %arg6[%c2_132] : memref<4xf32, #tpu.memory_space<smem>>
    %1159 = vector.broadcast %1158 : f32 to vector<2x1x256xf32>
    %1160 = arith.addf %1157, %1159 : vector<2x1x256xf32>
    %cst_133 = arith.constant 0.000000e+00 : f32
    %1161 = vector.broadcast %cst_133 : f32 to vector<2x1x256xf32>
    %c108_134 = arith.constant 108 : index
    %1162 = memref.load %arg5[%c108_134] : memref<144xf32, #tpu.memory_space<smem>>
    %1163 = vector.broadcast %1162 : f32 to vector<2x1x256xf32>
    %1164 = arith.mulf %1163, %663 : vector<2x1x256xf32>
    %1165 = arith.addf %1161, %1164 : vector<2x1x256xf32>
    %c117_135 = arith.constant 117 : index
    %1166 = memref.load %arg5[%c117_135] : memref<144xf32, #tpu.memory_space<smem>>
    %1167 = vector.broadcast %1166 : f32 to vector<2x1x256xf32>
    %1168 = arith.mulf %1167, %664 : vector<2x1x256xf32>
    %1169 = arith.addf %1165, %1168 : vector<2x1x256xf32>
    %c126_136 = arith.constant 126 : index
    %1170 = memref.load %arg5[%c126_136] : memref<144xf32, #tpu.memory_space<smem>>
    %1171 = vector.broadcast %1170 : f32 to vector<2x1x256xf32>
    %1172 = arith.mulf %1171, %665 : vector<2x1x256xf32>
    %1173 = arith.addf %1169, %1172 : vector<2x1x256xf32>
    %c135_137 = arith.constant 135 : index
    %1174 = memref.load %arg5[%c135_137] : memref<144xf32, #tpu.memory_space<smem>>
    %1175 = vector.broadcast %1174 : f32 to vector<2x1x256xf32>
    %1176 = arith.mulf %1175, %666 : vector<2x1x256xf32>
    %1177 = arith.addf %1173, %1176 : vector<2x1x256xf32>
    %c109_138 = arith.constant 109 : index
    %1178 = memref.load %arg5[%c109_138] : memref<144xf32, #tpu.memory_space<smem>>
    %1179 = vector.broadcast %1178 : f32 to vector<2x1x256xf32>
    %1180 = arith.mulf %1179, %668 : vector<2x1x256xf32>
    %1181 = arith.addf %1177, %1180 : vector<2x1x256xf32>
    %c118_139 = arith.constant 118 : index
    %1182 = memref.load %arg5[%c118_139] : memref<144xf32, #tpu.memory_space<smem>>
    %1183 = vector.broadcast %1182 : f32 to vector<2x1x256xf32>
    %1184 = arith.mulf %1183, %669 : vector<2x1x256xf32>
    %1185 = arith.addf %1181, %1184 : vector<2x1x256xf32>
    %c127_140 = arith.constant 127 : index
    %1186 = memref.load %arg5[%c127_140] : memref<144xf32, #tpu.memory_space<smem>>
    %1187 = vector.broadcast %1186 : f32 to vector<2x1x256xf32>
    %1188 = arith.mulf %1187, %670 : vector<2x1x256xf32>
    %1189 = arith.addf %1185, %1188 : vector<2x1x256xf32>
    %c136_141 = arith.constant 136 : index
    %1190 = memref.load %arg5[%c136_141] : memref<144xf32, #tpu.memory_space<smem>>
    %1191 = vector.broadcast %1190 : f32 to vector<2x1x256xf32>
    %1192 = arith.mulf %1191, %671 : vector<2x1x256xf32>
    %1193 = arith.addf %1189, %1192 : vector<2x1x256xf32>
    %c110_142 = arith.constant 110 : index
    %1194 = memref.load %arg5[%c110_142] : memref<144xf32, #tpu.memory_space<smem>>
    %1195 = vector.broadcast %1194 : f32 to vector<2x1x256xf32>
    %1196 = arith.mulf %1195, %675 : vector<2x1x256xf32>
    %1197 = arith.addf %1193, %1196 : vector<2x1x256xf32>
    %c119_143 = arith.constant 119 : index
    %1198 = memref.load %arg5[%c119_143] : memref<144xf32, #tpu.memory_space<smem>>
    %1199 = vector.broadcast %1198 : f32 to vector<2x1x256xf32>
    %1200 = arith.mulf %1199, %676 : vector<2x1x256xf32>
    %1201 = arith.addf %1197, %1200 : vector<2x1x256xf32>
    %c128_144 = arith.constant 128 : index
    %1202 = memref.load %arg5[%c128_144] : memref<144xf32, #tpu.memory_space<smem>>
    %1203 = vector.broadcast %1202 : f32 to vector<2x1x256xf32>
    %1204 = arith.mulf %1203, %677 : vector<2x1x256xf32>
    %1205 = arith.addf %1201, %1204 : vector<2x1x256xf32>
    %c137_145 = arith.constant 137 : index
    %1206 = memref.load %arg5[%c137_145] : memref<144xf32, #tpu.memory_space<smem>>
    %1207 = vector.broadcast %1206 : f32 to vector<2x1x256xf32>
    %1208 = arith.mulf %1207, %678 : vector<2x1x256xf32>
    %1209 = arith.addf %1205, %1208 : vector<2x1x256xf32>
    %c111_146 = arith.constant 111 : index
    %1210 = memref.load %arg5[%c111_146] : memref<144xf32, #tpu.memory_space<smem>>
    %1211 = vector.broadcast %1210 : f32 to vector<2x1x256xf32>
    %1212 = arith.mulf %1211, %682 : vector<2x1x256xf32>
    %1213 = arith.addf %1209, %1212 : vector<2x1x256xf32>
    %c120_147 = arith.constant 120 : index
    %1214 = memref.load %arg5[%c120_147] : memref<144xf32, #tpu.memory_space<smem>>
    %1215 = vector.broadcast %1214 : f32 to vector<2x1x256xf32>
    %1216 = arith.mulf %1215, %683 : vector<2x1x256xf32>
    %1217 = arith.addf %1213, %1216 : vector<2x1x256xf32>
    %c129_148 = arith.constant 129 : index
    %1218 = memref.load %arg5[%c129_148] : memref<144xf32, #tpu.memory_space<smem>>
    %1219 = vector.broadcast %1218 : f32 to vector<2x1x256xf32>
    %1220 = arith.mulf %1219, %684 : vector<2x1x256xf32>
    %1221 = arith.addf %1217, %1220 : vector<2x1x256xf32>
    %c138_149 = arith.constant 138 : index
    %1222 = memref.load %arg5[%c138_149] : memref<144xf32, #tpu.memory_space<smem>>
    %1223 = vector.broadcast %1222 : f32 to vector<2x1x256xf32>
    %1224 = arith.mulf %1223, %685 : vector<2x1x256xf32>
    %1225 = arith.addf %1221, %1224 : vector<2x1x256xf32>
    %c112_150 = arith.constant 112 : index
    %1226 = memref.load %arg5[%c112_150] : memref<144xf32, #tpu.memory_space<smem>>
    %1227 = vector.broadcast %1226 : f32 to vector<2x1x256xf32>
    %1228 = arith.mulf %1227, %687 : vector<2x1x256xf32>
    %1229 = arith.addf %1225, %1228 : vector<2x1x256xf32>
    %c121_151 = arith.constant 121 : index
    %1230 = memref.load %arg5[%c121_151] : memref<144xf32, #tpu.memory_space<smem>>
    %1231 = vector.broadcast %1230 : f32 to vector<2x1x256xf32>
    %1232 = arith.mulf %1231, %688 : vector<2x1x256xf32>
    %1233 = arith.addf %1229, %1232 : vector<2x1x256xf32>
    %c130_152 = arith.constant 130 : index
    %1234 = memref.load %arg5[%c130_152] : memref<144xf32, #tpu.memory_space<smem>>
    %1235 = vector.broadcast %1234 : f32 to vector<2x1x256xf32>
    %1236 = arith.mulf %1235, %689 : vector<2x1x256xf32>
    %1237 = arith.addf %1233, %1236 : vector<2x1x256xf32>
    %c139_153 = arith.constant 139 : index
    %1238 = memref.load %arg5[%c139_153] : memref<144xf32, #tpu.memory_space<smem>>
    %1239 = vector.broadcast %1238 : f32 to vector<2x1x256xf32>
    %1240 = arith.mulf %1239, %690 : vector<2x1x256xf32>
    %1241 = arith.addf %1237, %1240 : vector<2x1x256xf32>
    %c113_154 = arith.constant 113 : index
    %1242 = memref.load %arg5[%c113_154] : memref<144xf32, #tpu.memory_space<smem>>
    %1243 = vector.broadcast %1242 : f32 to vector<2x1x256xf32>
    %1244 = arith.mulf %1243, %694 : vector<2x1x256xf32>
    %1245 = arith.addf %1241, %1244 : vector<2x1x256xf32>
    %c122_155 = arith.constant 122 : index
    %1246 = memref.load %arg5[%c122_155] : memref<144xf32, #tpu.memory_space<smem>>
    %1247 = vector.broadcast %1246 : f32 to vector<2x1x256xf32>
    %1248 = arith.mulf %1247, %695 : vector<2x1x256xf32>
    %1249 = arith.addf %1245, %1248 : vector<2x1x256xf32>
    %c131_156 = arith.constant 131 : index
    %1250 = memref.load %arg5[%c131_156] : memref<144xf32, #tpu.memory_space<smem>>
    %1251 = vector.broadcast %1250 : f32 to vector<2x1x256xf32>
    %1252 = arith.mulf %1251, %696 : vector<2x1x256xf32>
    %1253 = arith.addf %1249, %1252 : vector<2x1x256xf32>
    %c140_157 = arith.constant 140 : index
    %1254 = memref.load %arg5[%c140_157] : memref<144xf32, #tpu.memory_space<smem>>
    %1255 = vector.broadcast %1254 : f32 to vector<2x1x256xf32>
    %1256 = arith.mulf %1255, %697 : vector<2x1x256xf32>
    %1257 = arith.addf %1253, %1256 : vector<2x1x256xf32>
    %c114_158 = arith.constant 114 : index
    %1258 = memref.load %arg5[%c114_158] : memref<144xf32, #tpu.memory_space<smem>>
    %1259 = vector.broadcast %1258 : f32 to vector<2x1x256xf32>
    %1260 = arith.mulf %1259, %701 : vector<2x1x256xf32>
    %1261 = arith.addf %1257, %1260 : vector<2x1x256xf32>
    %c123_159 = arith.constant 123 : index
    %1262 = memref.load %arg5[%c123_159] : memref<144xf32, #tpu.memory_space<smem>>
    %1263 = vector.broadcast %1262 : f32 to vector<2x1x256xf32>
    %1264 = arith.mulf %1263, %702 : vector<2x1x256xf32>
    %1265 = arith.addf %1261, %1264 : vector<2x1x256xf32>
    %c132_160 = arith.constant 132 : index
    %1266 = memref.load %arg5[%c132_160] : memref<144xf32, #tpu.memory_space<smem>>
    %1267 = vector.broadcast %1266 : f32 to vector<2x1x256xf32>
    %1268 = arith.mulf %1267, %703 : vector<2x1x256xf32>
    %1269 = arith.addf %1265, %1268 : vector<2x1x256xf32>
    %c141_161 = arith.constant 141 : index
    %1270 = memref.load %arg5[%c141_161] : memref<144xf32, #tpu.memory_space<smem>>
    %1271 = vector.broadcast %1270 : f32 to vector<2x1x256xf32>
    %1272 = arith.mulf %1271, %704 : vector<2x1x256xf32>
    %1273 = arith.addf %1269, %1272 : vector<2x1x256xf32>
    %c115_162 = arith.constant 115 : index
    %1274 = memref.load %arg5[%c115_162] : memref<144xf32, #tpu.memory_space<smem>>
    %1275 = vector.broadcast %1274 : f32 to vector<2x1x256xf32>
    %1276 = arith.mulf %1275, %706 : vector<2x1x256xf32>
    %1277 = arith.addf %1273, %1276 : vector<2x1x256xf32>
    %c124_163 = arith.constant 124 : index
    %1278 = memref.load %arg5[%c124_163] : memref<144xf32, #tpu.memory_space<smem>>
    %1279 = vector.broadcast %1278 : f32 to vector<2x1x256xf32>
    %1280 = arith.mulf %1279, %707 : vector<2x1x256xf32>
    %1281 = arith.addf %1277, %1280 : vector<2x1x256xf32>
    %c133_164 = arith.constant 133 : index
    %1282 = memref.load %arg5[%c133_164] : memref<144xf32, #tpu.memory_space<smem>>
    %1283 = vector.broadcast %1282 : f32 to vector<2x1x256xf32>
    %1284 = arith.mulf %1283, %708 : vector<2x1x256xf32>
    %1285 = arith.addf %1281, %1284 : vector<2x1x256xf32>
    %c142_165 = arith.constant 142 : index
    %1286 = memref.load %arg5[%c142_165] : memref<144xf32, #tpu.memory_space<smem>>
    %1287 = vector.broadcast %1286 : f32 to vector<2x1x256xf32>
    %1288 = arith.mulf %1287, %709 : vector<2x1x256xf32>
    %1289 = arith.addf %1285, %1288 : vector<2x1x256xf32>
    %c116_166 = arith.constant 116 : index
    %1290 = memref.load %arg5[%c116_166] : memref<144xf32, #tpu.memory_space<smem>>
    %1291 = vector.broadcast %1290 : f32 to vector<2x1x256xf32>
    %1292 = arith.mulf %1291, %713 : vector<2x1x256xf32>
    %1293 = arith.addf %1289, %1292 : vector<2x1x256xf32>
    %c125_167 = arith.constant 125 : index
    %1294 = memref.load %arg5[%c125_167] : memref<144xf32, #tpu.memory_space<smem>>
    %1295 = vector.broadcast %1294 : f32 to vector<2x1x256xf32>
    %1296 = arith.mulf %1295, %714 : vector<2x1x256xf32>
    %1297 = arith.addf %1293, %1296 : vector<2x1x256xf32>
    %c134_168 = arith.constant 134 : index
    %1298 = memref.load %arg5[%c134_168] : memref<144xf32, #tpu.memory_space<smem>>
    %1299 = vector.broadcast %1298 : f32 to vector<2x1x256xf32>
    %1300 = arith.mulf %1299, %715 : vector<2x1x256xf32>
    %1301 = arith.addf %1297, %1300 : vector<2x1x256xf32>
    %c143_169 = arith.constant 143 : index
    %1302 = memref.load %arg5[%c143_169] : memref<144xf32, #tpu.memory_space<smem>>
    %1303 = vector.broadcast %1302 : f32 to vector<2x1x256xf32>
    %1304 = arith.mulf %1303, %716 : vector<2x1x256xf32>
    %1305 = arith.addf %1301, %1304 : vector<2x1x256xf32>
    %c3_170 = arith.constant 3 : index
    %1306 = memref.load %arg6[%c3_170] : memref<4xf32, #tpu.memory_space<smem>>
    %1307 = vector.broadcast %1306 : f32 to vector<2x1x256xf32>
    %1308 = arith.addf %1305, %1307 : vector<2x1x256xf32>
    %1309 = tpu.concatenate %864, %1012, %1160, %1308 in 1 : vector<2x1x256xf32>, vector<2x1x256xf32>, vector<2x1x256xf32>, vector<2x1x256xf32> -> vector<2x4x256xf32>
    %1310 = arith.addf %1309, %0 : vector<2x4x256xf32>
    %c0_171 = arith.constant 0 : index
    %c0_172 = arith.constant 0 : index
    %c0_173 = arith.constant 0 : index
    %1311 = vector.load %arg7[%c0_171, %c0_172, %c0_173] : memref<2x4x256xf32, #tpu.memory_space<vmem>>, vector<2x4x256xf32>
    tpu.vector_store %arg7[%c0_171, %c0_172, %c0_173], %1310 {strides = array<i32>} : memref<2x4x256xf32, #tpu.memory_space<vmem>>, vector<2x4x256xf32>,
    return
  }
}

</mosaic_0001>

<llo_original>
// kernel: tpu_custom_call.1
$region0: #{tpu_custom_call.1}
  #allocation0 [shape = 'u32[]', space=smem, size = 0x4, offset = 0x4, fixed_abs, tag = 'smem constant byte address 0x4 - core index']
  #allocation1 [shape = 'u32[144,128]{1,0:T(1,128)}', space=vmem, size = 0x12000, scoped, tag = 'internal scratch']
  %s0 = inlined_call_operand.hbm [shape: f32[2,4,256], index: 0, kind: input, shape index: {}]
  %s1 = inlined_call_operand.vmem [shape: f32[1,1,256], index: 1, kind: input, shape index: {}]
  %s2 = inlined_call_operand.vmem [shape: f32[1,1,256], index: 2, kind: input, shape index: {}]
  %s3 = inlined_call_operand.vmem [shape: f32[144], index: 3, kind: input, shape index: {}]
  %s4 = inlined_call_operand.vmem [shape: f32[4], index: 4, kind: input, shape index: {}]
  %s5 = inlined_call_operand.vmem [shape: f32[144], index: 5, kind: input, shape index: {}]
  %s6 = inlined_call_operand.vmem [shape: f32[4], index: 6, kind: input, shape index: {}]
  %s7 = inlined_call_operand.hbm [shape: f32[2,4,256], index: 7, kind: output, shape index: {}]
  %s8 = sld [smem:[#allocation0]]
  $region58: #{tpu_custom_call.1} parent=0
    _
  %s10 = ssub.s32 1, %s8
  %s11 = scalar_select 0, %s10, %s8
  $region1: #{tpu_custom_call.1} parent=0
    #allocation2 [shape = 'u8[8192]{0}', space=vmem, size = 0x2000, scoped, tag = 'input window, operand 0, single buffered']
    #allocation3 [shape = 's32[1]{0}', space=sflag, size = 0x4, scoped, tag = 'scoped memory for tpu_custom_call.1']
    #allocation4 [shape = 's32[1]{0}', space=sflag, size = 0x4, scoped, tag = 'scoped memory for tpu_custom_call.1']
    #allocation5 [shape = 's32[1]{0}', space=sflag, size = 0x4, scoped, tag = 'scoped memory for tpu_custom_call.1']
    #allocation6 [shape = 'u8[1024]{0}', space=smem, size = 0x400, scoped, tag = 'input window, operand 3, single buffered']
    #allocation7 [shape = 'u8[512]{0}', space=smem, size = 0x200, scoped, tag = 'input window, operand 4, single buffered']
    #allocation8 [shape = 's32[1]{0}', space=sflag, size = 0x4, scoped, tag = 'scoped memory for tpu_custom_call.1']
    #allocation9 [shape = 'u8[1024]{0}', space=smem, size = 0x400, scoped, tag = 'input window, operand 5, single buffered']
    #allocation10 [shape = 'u8[512]{0}', space=smem, size = 0x200, scoped, tag = 'input window, operand 6, single buffered']
    #allocation11 [shape = 's32[1]{0}', space=sflag, size = 0x4, scoped, tag = 'scoped memory for tpu_custom_call.1']
    #allocation12 [shape = 'u8[8192]{0}', space=vmem, size = 0x2000, scoped, tag = 'output window, operand 0, single buffered']
    %12 = vsyncpa [#allocation3], 0
    %13 = vsyncpa [#allocation5], 0
    %14 = vsyncpa [#allocation8], 0
    %15 = vsyncpa [#allocation11], 0
    %16 = vsyncpa [#allocation4], 0
    // Predicated region
    $region2: #{tpu_custom_call.1} parent=1 // pred_check
      _
    $region3: #{tpu_custom_call.1} parent=1 // pred_check_branch
      %18 = sbr.rel (0) target = $region5
    $region4: #{tpu_custom_call.1} parent=1 // pred_region
      %s20 = ssub.s32 256, 256
      %21 = vsyncadd [#allocation3], %s20
      %s22 = sshll.u32 [#allocation2], 4
      %s23 = int_to_ptr.vmem [resolvable:$true] %s22
      %28 = dma.hbm_to_vmem [thread:$0]  %s0, 256, %s23, [#allocation3], 128, 128, 8
    $region5: #{tpu_custom_call.1} parent=1 // pred_fallthru
      _
    // Predicated region
    $region6: #{tpu_custom_call.1} parent=1 // pred_check
      _
    $region7: #{tpu_custom_call.1} parent=1 // pred_check_branch
      %30 = sbr.rel (0) target = $region9
    $region8: #{tpu_custom_call.1} parent=1 // pred_region
      _
    $region9: #{tpu_custom_call.1} parent=1 // pred_fallthru
      _
    // Predicated region
    $region10: #{tpu_custom_call.1} parent=1 // pred_check
      _
    $region11: #{tpu_custom_call.1} parent=1 // pred_check_branch
      %32 = sbr.rel (0) target = $region13
    $region12: #{tpu_custom_call.1} parent=1 // pred_region
      _
    $region13: #{tpu_custom_call.1} parent=1 // pred_fallthru
      _
    // Predicated region
    $region14: #{tpu_custom_call.1} parent=1 // pred_check
      _
    $region15: #{tpu_custom_call.1} parent=1 // pred_check_branch
      %34 = sbr.rel (0) target = $region17
    $region16: #{tpu_custom_call.1} parent=1 // pred_region
      %s36 = ssub.s32 32, 32
      %37 = vsyncadd [#allocation5], %s36
      %s39 = sshll.u32 %s3, 4
      %s40 = int_to_ptr.vmem [resolvable:$true] %s39
      %42 = dma.vmem_to_smem %s40, 32, [#allocation6], [#allocation5]
    $region17: #{tpu_custom_call.1} parent=1 // pred_fallthru
      _
    // Predicated region
    $region18: #{tpu_custom_call.1} parent=1 // pred_check
      _
    $region19: #{tpu_custom_call.1} parent=1 // pred_check_branch
      %44 = sbr.rel (0) target = $region21
    $region20: #{tpu_custom_call.1} parent=1 // pred_region
      %s46 = ssub.s32 16, 16
      %47 = vsyncadd [#allocation8], %s46
      %s49 = sshll.u32 %s4, 4
      %s50 = int_to_ptr.vmem [resolvable:$true] %s49
      %52 = dma.vmem_to_smem %s50, 16, [#allocation7], [#allocation8]
    $region21: #{tpu_custom_call.1} parent=1 // pred_fallthru
      _
    // Predicated region
    $region22: #{tpu_custom_call.1} parent=1 // pred_check
      _
    $region23: #{tpu_custom_call.1} parent=1 // pred_check_branch
      %54 = sbr.rel (0) target = $region25
    $region24: #{tpu_custom_call.1} parent=1 // pred_region
      %s56 = ssub.s32 32, 32
      %57 = vsyncadd [#allocation8], %s56
      %s59 = sshll.u32 %s5, 4
      %s60 = int_to_ptr.vmem [resolvable:$true] %s59
      %62 = dma.vmem_to_smem %s60, 32, [#allocation9], [#allocation8]
    $region25: #{tpu_custom_call.1} parent=1 // pred_fallthru
      _
    // Predicated region
    $region26: #{tpu_custom_call.1} parent=1 // pred_check
      _
    $region27: #{tpu_custom_call.1} parent=1 // pred_check_branch
      %64 = sbr.rel (0) target = $region29
    $region28: #{tpu_custom_call.1} parent=1 // pred_region
      %s66 = ssub.s32 16, 16
      %67 = vsyncadd [#allocation11], %s66
      %s69 = sshll.u32 %s6, 4
      %s70 = int_to_ptr.vmem [resolvable:$true] %s69
      %72 = dma.vmem_to_smem %s70, 16, [#allocation10], [#allocation11]
    $region29: #{tpu_custom_call.1} parent=1 // pred_fallthru
      _
    // Predicated region
    $region30: #{tpu_custom_call.1} parent=1 // pred_check
      _
    $region31: #{tpu_custom_call.1} parent=1 // pred_check_branch
      %74 = sbr.rel (0) target = $region33
    $region32: #{tpu_custom_call.1} parent=1 // pred_region
      %75 = dma.done [#allocation3], 256
    $region33: #{tpu_custom_call.1} parent=1 // pred_fallthru
      _
    // Predicated region
    $region34: #{tpu_custom_call.1} parent=1 // pred_check
      _
    $region35: #{tpu_custom_call.1} parent=1 // pred_check_branch
      %77 = sbr.rel (0) target = $region37
    $region36: #{tpu_custom_call.1} parent=1 // pred_region
      %78 = dma.done [#allocation5], 32
    $region37: #{tpu_custom_call.1} parent=1 // pred_fallthru
      _
    // Predicated region
    $region38: #{tpu_custom_call.1} parent=1 // pred_check
      _
    $region39: #{tpu_custom_call.1} parent=1 // pred_check_branch
      %80 = sbr.rel (0) target = $region41
    $region40: #{tpu_custom_call.1} parent=1 // pred_region
      %81 = dma.done [#allocation8], 16
    $region41: #{tpu_custom_call.1} parent=1 // pred_fallthru
      _
    // Predicated region
    $region42: #{tpu_custom_call.1} parent=1 // pred_check
      _
    $region43: #{tpu_custom_call.1} parent=1 // pred_check_branch
      %83 = sbr.rel (0) target = $region45
    $region44: #{tpu_custom_call.1} parent=1 // pred_region
      %84 = dma.done [#allocation8], 32
    $region45: #{tpu_custom_call.1} parent=1 // pred_fallthru
      _
    // Predicated region
    $region46: #{tpu_custom_call.1} parent=1 // pred_check
      _
    $region47: #{tpu_custom_call.1} parent=1 // pred_check_branch
      %86 = sbr.rel (0) target = $region49
    $region48: #{tpu_custom_call.1} parent=1 // pred_region
      %87 = dma.done [#allocation11], 16
    $region49: #{tpu_custom_call.1} parent=1 // pred_fallthru
      _
    %88 = sfence
    %v89 = vld [vmem:[#allocation2] sm:$0xff]
    %v90 = vld [vmem:[#allocation2 + $0x8] sm:$0xff]
    %v91 = vld [vmem:[%s1] sm:$0x3]
    %v92 = vld [vmem:[%s2] sm:$0x3]
    %v95 = vcombine.high %v89, %v89
    %v96 = vcombine.high %v90, %v90
    %97 = vrot.lane.b32.xlu0 %v89, 17
    %v98 = vpop.permute.xlu0 %97
    %99 = vrot.lane.b32.xlu0 %v95, 17
    %v100 = vpop.permute.xlu0 %99
    %101 = vrot.lane.b32.xlu0 %v90, 17
    %v102 = vpop.permute.xlu0 %101
    %103 = vrot.lane.b32.xlu0 %v96, 17
    %v104 = vpop.permute.xlu0 %103
    %vm105 = vcmask 138240
    %v106 = vsel %vm105, %v98, %v100
    %v107 = vsel %vm105, %v102, %v104
    %v114 = vsel %vm105, 0.0, %v98
    %v115 = vsel %vm105, 0.0, %v102
    %v116 = vsel %vm105, %v100, 0.0
    %v117 = vsel %vm105, %v104, 0.0
    %v119 = vlaneseq
    %v120 = vshrl.u32 %v119, 7
    %v121 = vsub.s32 0, %v120
    %v122 = vrot.slane %v91, %v121
    %v123 = vlaneseq
    %v124 = vshrl.u32 %v123, 7
    %v125 = vsub.s32 1, %v124
    %v126 = vrot.slane %v91, %v125
    %v129 = vmul.f32 %v114, %v122
    %v130 = vmul.f32 %v106, %v126
    %v131 = vmul.f32 %v115, %v122
    %v132 = vmul.f32 %v107, %v126
    %v134 = vlaneseq
    %v135 = vshrl.u32 %v134, 7
    %v136 = vsub.s32 0, %v135
    %v137 = vrot.slane %v92, %v136
    %v138 = vlaneseq
    %v139 = vshrl.u32 %v138, 7
    %v140 = vsub.s32 1, %v139
    %v141 = vrot.slane %v92, %v140
    %142 = vrot.lane.b32.xlu0 %v137, 2
    %v143 = vpop.permute.xlu0 %142
    %144 = vrot.lane.b32.xlu0 %v141, 2
    %v145 = vpop.permute.xlu0 %144
    %vm146 = vcmask 15360
    %v147 = vsel %vm146, %v143, %v145
    %v151 = vmul.f32 %v114, %v143
    %v152 = vmul.f32 %v106, %v147
    %v153 = vmul.f32 %v116, %v145
    %v154 = vmul.f32 %v115, %v143
    %v155 = vmul.f32 %v107, %v147
    %v156 = vmul.f32 %v117, %v145
    %157 = vrot.lane.b32.xlu0 %v122, 16
    %v158 = vpop.permute.xlu0 %157
    %159 = vrot.lane.b32.xlu0 %v126, 16
    %v160 = vpop.permute.xlu0 %159
    %vm161 = vcmask 130048
    %v162 = vsel %vm161, %v158, %v160
    %v166 = vmul.f32 %v114, %v158
    %v167 = vmul.f32 %v106, %v162
    %v168 = vmul.f32 %v116, %v160
    %v169 = vmul.f32 %v115, %v158
    %v170 = vmul.f32 %v107, %v162
    %v171 = vmul.f32 %v117, %v160
    %172 = vrot.lane.b32.xlu0 %v137, 18
    %v173 = vpop.permute.xlu0 %172
    %174 = vrot.lane.b32.xlu0 %v141, 18
    %v175 = vpop.permute.xlu0 %174
    %vm176 = vcmask 146432
    %v177 = vsel %vm176, %v173, %v175
    %v181 = vmul.f32 %v114, %v173
    %v182 = vmul.f32 %v106, %v177
    %v183 = vmul.f32 %v116, %v175
    %v184 = vmul.f32 %v115, %v173
    %v185 = vmul.f32 %v107, %v177
    %v186 = vmul.f32 %v117, %v175
    %187 = vrot.lane.b32.xlu0 %v122, 32
    %v188 = vpop.permute.xlu0 %187
    %189 = vrot.lane.b32.xlu0 %v126, 32
    %v190 = vpop.permute.xlu0 %189
    %vm191 = vcmask 261120
    %v192 = vsel %vm191, %v188, %v190
    %v196 = vmul.f32 %v114, %v188
    %v197 = vmul.f32 %v106, %v192
    %v198 = vmul.f32 %v116, %v190
    %v199 = vmul.f32 %v115, %v188
    %v200 = vmul.f32 %v107, %v192
    %v201 = vmul.f32 %v117, %v190
    %202 = vrot.lane.b32.xlu0 %v137, 34
    %v203 = vpop.permute.xlu0 %202
    %204 = vrot.lane.b32.xlu0 %v141, 34
    %v205 = vpop.permute.xlu0 %204
    %vm206 = vcmask 277504
    %v207 = vsel %vm206, %v203, %v205
    %v211 = vmul.f32 %v114, %v203
    %v212 = vmul.f32 %v106, %v207
    %v213 = vmul.f32 %v116, %v205
    %v214 = vmul.f32 %v115, %v203
    %v215 = vmul.f32 %v107, %v207
    %v216 = vmul.f32 %v117, %v205
    %s217 = sld [smem:[#allocation6]]
    %v218 = vstv %s217
    %v219 = vmul.f32 %v218, %v129
    %v220 = vmul.f32 %v218, %v130
    %v221 = vmul.f32 %v218, %v131
    %v222 = vmul.f32 %v218, %v132
    %v223 = vadd.f32 %v219, 0.0
    %v224 = vadd.f32 %v220, 0.0
    %v225 = vadd.f32 %v221, 0.0
    %v226 = vadd.f32 %v222, 0.0
    %s227 = sld [smem:[#allocation6 + $0x9]]
    %v228 = vstv %s227
    %v229 = vmul.f32 %v228, %v129
    %v230 = vmul.f32 %v228, %v130
    %v231 = vmul.f32 %v228, %v131
    %v232 = vmul.f32 %v228, %v132
    %v237 = vrot.slane %v229, 1
    %v238 = vrot.slane %v230, 1
    %v239 = vrot.slane %v231, 1
    %v240 = vrot.slane %v232, 1
    %v245 = vadd.f32 %v223, %v237
    %v246 = vadd.f32 %v224, %v238
    %v247 = vadd.f32 %v225, %v239
    %v248 = vadd.f32 %v226, %v240
    %s249 = sld [smem:[#allocation6 + $0x12]]
    %v250 = vstv %s249
    %v251 = vmul.f32 %v250, %v129
    %v252 = vmul.f32 %v250, %v130
    %v253 = vmul.f32 %v250, %v131
    %v254 = vmul.f32 %v250, %v132
    %v259 = vrot.slane %v251, 2
    %v260 = vrot.slane %v252, 2
    %v261 = vrot.slane %v253, 2
    %v262 = vrot.slane %v254, 2
    %v267 = vadd.f32 %v245, %v259
    %v268 = vadd.f32 %v246, %v260
    %v269 = vadd.f32 %v247, %v261
    %v270 = vadd.f32 %v248, %v262
    %s271 = sld [smem:[#allocation6 + $0x1b]]
    %v272 = vstv %s271
    %v273 = vmul.f32 %v272, %v129
    %v274 = vmul.f32 %v272, %v130
    %v275 = vmul.f32 %v272, %v131
    %v276 = vmul.f32 %v272, %v132
    %v281 = vrot.slane %v273, 3
    %v282 = vrot.slane %v274, 3
    %v283 = vrot.slane %v275, 3
    %v284 = vrot.slane %v276, 3
    %v289 = vadd.f32 %v267, %v281
    %v290 = vadd.f32 %v268, %v282
    %v291 = vadd.f32 %v269, %v283
    %v292 = vadd.f32 %v270, %v284
    %s293 = sld [smem:[#allocation6 + $0x1]]
    %v294 = vstv %s293
    %v295 = vmul.f32 %v294, %v114
    %v296 = vmul.f32 %v294, %v106
    %v297 = vmul.f32 %v294, %v116
    %v298 = vmul.f32 %v294, %v115
    %v299 = vmul.f32 %v294, %v107
    %v300 = vmul.f32 %v294, %v117
    %307 = vrot.lane.b32.xlu0 %v295, 127
    %v308 = vpop.permute.xlu0 %307
    %309 = vrot.lane.b32.xlu0 %v296, 127
    %v310 = vpop.permute.xlu0 %309
    %311 = vrot.lane.b32.xlu0 %v297, 127
    %v312 = vpop.permute.xlu0 %311
    %313 = vrot.lane.b32.xlu0 %v298, 127
    %v314 = vpop.permute.xlu0 %313
    %315 = vrot.lane.b32.xlu0 %v299, 127
    %v316 = vpop.permute.xlu0 %315
    %317 = vrot.lane.b32.xlu0 %v300, 127
    %v318 = vpop.permute.xlu0 %317
    %vm319 = vcmask 1039360
    %v320 = vsel %vm319, %v308, %v310
    %v321 = vsel %vm319, %v310, %v312
    %v322 = vsel %vm319, %v314, %v316
    %v323 = vsel %vm319, %v316, %v318
    %v328 = vadd.f32 %v289, %v320
    %v329 = vadd.f32 %v290, %v321
    %v330 = vadd.f32 %v291, %v322
    %v331 = vadd.f32 %v292, %v323
    %s332 = sld [smem:[#allocation6 + $0xa]]
    %v333 = vstv %s332
    %v334 = vmul.f32 %v333, %v114
    %v335 = vmul.f32 %v333, %v106
    %v336 = vmul.f32 %v333, %v116
    %v337 = vmul.f32 %v333, %v115
    %v338 = vmul.f32 %v333, %v107
    %v339 = vmul.f32 %v333, %v117
    %v346 = vrot.slane %v334, 1
    %v347 = vrot.slane %v335, 1
    %v348 = vrot.slane %v336, 1
    %v349 = vrot.slane %v337, 1
    %v350 = vrot.slane %v338, 1
    %v351 = vrot.slane %v339, 1
    %352 = vrot.lane.b32.xlu0 %v346, 127
    %v353 = vpop.permute.xlu0 %352
    %354 = vrot.lane.b32.xlu0 %v347, 127
    %v355 = vpop.permute.xlu0 %354
    %356 = vrot.lane.b32.xlu0 %v348, 127
    %v357 = vpop.permute.xlu0 %356
    %358 = vrot.lane.b32.xlu0 %v349, 127
    %v359 = vpop.permute.xlu0 %358
    %360 = vrot.lane.b32.xlu0 %v350, 127
    %v361 = vpop.permute.xlu0 %360
    %362 = vrot.lane.b32.xlu0 %v351, 127
    %v363 = vpop.permute.xlu0 %362
    %v364 = vsel %vm319, %v353, %v355
    %v365 = vsel %vm319, %v355, %v357
    %v366 = vsel %vm319, %v359, %v361
    %v367 = vsel %vm319, %v361, %v363
    %v372 = vadd.f32 %v328, %v364
    %v373 = vadd.f32 %v329, %v365
    %v374 = vadd.f32 %v330, %v366
    %v375 = vadd.f32 %v331, %v367
    %s376 = sld [smem:[#allocation6 + $0x13]]
    %v377 = vstv %s376
    %v378 = vmul.f32 %v377, %v114
    %v379 = vmul.f32 %v377, %v106
    %v380 = vmul.f32 %v377, %v116
    %v381 = vmul.f32 %v377, %v115
    %v382 = vmul.f32 %v377, %v107
    %v383 = vmul.f32 %v377, %v117
    %v390 = vrot.slane %v378, 2
    %v391 = vrot.slane %v379, 2
    %v392 = vrot.slane %v380, 2
    %v393 = vrot.slane %v381, 2
    %v394 = vrot.slane %v382, 2
    %v395 = vrot.slane %v383, 2
    %396 = vrot.lane.b32.xlu0 %v390, 127
    %v397 = vpop.permute.xlu0 %396
    %398 = vrot.lane.b32.xlu0 %v391, 127
    %v399 = vpop.permute.xlu0 %398
    %400 = vrot.lane.b32.xlu0 %v392, 127
    %v401 = vpop.permute.xlu0 %400
    %402 = vrot.lane.b32.xlu0 %v393, 127
    %v403 = vpop.permute.xlu0 %402
    %404 = vrot.lane.b32.xlu0 %v394, 127
    %v405 = vpop.permute.xlu0 %404
    %406 = vrot.lane.b32.xlu0 %v395, 127
    %v407 = vpop.permute.xlu0 %406
    %v408 = vsel %vm319, %v397, %v399
    %v409 = vsel %vm319, %v399, %v401
    %v410 = vsel %vm319, %v403, %v405
    %v411 = vsel %vm319, %v405, %v407
    %v416 = vadd.f32 %v372, %v408
    %v417 = vadd.f32 %v373, %v409
    %v418 = vadd.f32 %v374, %v410
    %v419 = vadd.f32 %v375, %v411
    %s420 = sld [smem:[#allocation6 + $0x1c]]
    %v421 = vstv %s420
    %v422 = vmul.f32 %v421, %v114
    %v423 = vmul.f32 %v421, %v106
    %v424 = vmul.f32 %v421, %v116
    %v425 = vmul.f32 %v421, %v115
    %v426 = vmul.f32 %v421, %v107
    %v427 = vmul.f32 %v421, %v117
    %v434 = vrot.slane %v422, 3
    %v435 = vrot.slane %v423, 3
    %v436 = vrot.slane %v424, 3
    %v437 = vrot.slane %v425, 3
    %v438 = vrot.slane %v426, 3
    %v439 = vrot.slane %v427, 3
    %440 = vrot.lane.b32.xlu0 %v434, 127
    %v441 = vpop.permute.xlu0 %440
    %442 = vrot.lane.b32.xlu0 %v435, 127
    %v443 = vpop.permute.xlu0 %442
    %444 = vrot.lane.b32.xlu0 %v436, 127
    %v445 = vpop.permute.xlu0 %444
    %446 = vrot.lane.b32.xlu0 %v437, 127
    %v447 = vpop.permute.xlu0 %446
    %448 = vrot.lane.b32.xlu0 %v438, 127
    %v449 = vpop.permute.xlu0 %448
    %450 = vrot.lane.b32.xlu0 %v439, 127
    %v451 = vpop.permute.xlu0 %450
    %v452 = vsel %vm319, %v441, %v443
    %v453 = vsel %vm319, %v443, %v445
    %v454 = vsel %vm319, %v447, %v449
    %v455 = vsel %vm319, %v449, %v451
    %v460 = vadd.f32 %v416, %v452
    %v461 = vadd.f32 %v417, %v453
    %v462 = vadd.f32 %v418, %v454
    %v463 = vadd.f32 %v419, %v455
    %s464 = sld [smem:[#allocation6 + $0x2]]
    %v465 = vstv %s464
    %v466 = vmul.f32 %v465, %v151
    %v467 = vmul.f32 %v465, %v152
    %v468 = vmul.f32 %v465, %v153
    %v469 = vmul.f32 %v465, %v154
    %v470 = vmul.f32 %v465, %v155
    %v471 = vmul.f32 %v465, %v156
    %478 = vrot.lane.b32.xlu0 %v466, 126
    %v479 = vpop.permute.xlu0 %478
    %480 = vrot.lane.b32.xlu0 %v467, 126
    %v481 = vpop.permute.xlu0 %480
    %482 = vrot.lane.b32.xlu0 %v468, 126
    %v483 = vpop.permute.xlu0 %482
    %484 = vrot.lane.b32.xlu0 %v469, 126
    %v485 = vpop.permute.xlu0 %484
    %486 = vrot.lane.b32.xlu0 %v470, 126
    %v487 = vpop.permute.xlu0 %486
    %488 = vrot.lane.b32.xlu0 %v471, 126
    %v489 = vpop.permute.xlu0 %488
    %vm490 = vcmask 1031168
    %v491 = vsel %vm490, %v479, %v481
    %v492 = vsel %vm490, %v481, %v483
    %v493 = vsel %vm490, %v485, %v487
    %v494 = vsel %vm490, %v487, %v489
    %v499 = vadd.f32 %v460, %v491
    %v500 = vadd.f32 %v461, %v492
    %v501 = vadd.f32 %v462, %v493
    %v502 = vadd.f32 %v463, %v494
    %s503 = sld [smem:[#allocation6 + $0xb]]
    %v504 = vstv %s503
    %v505 = vmul.f32 %v504, %v151
    %v506 = vmul.f32 %v504, %v152
    %v507 = vmul.f32 %v504, %v153
    %v508 = vmul.f32 %v504, %v154
    %v509 = vmul.f32 %v504, %v155
    %v510 = vmul.f32 %v504, %v156
    %v517 = vrot.slane %v505, 1
    %v518 = vrot.slane %v506, 1
    %v519 = vrot.slane %v507, 1
    %v520 = vrot.slane %v508, 1
    %v521 = vrot.slane %v509, 1
    %v522 = vrot.slane %v510, 1
    %523 = vrot.lane.b32.xlu0 %v517, 126
    %v524 = vpop.permute.xlu0 %523
    %525 = vrot.lane.b32.xlu0 %v518, 126
    %v526 = vpop.permute.xlu0 %525
    %527 = vrot.lane.b32.xlu0 %v519, 126
    %v528 = vpop.permute.xlu0 %527
    %529 = vrot.lane.b32.xlu0 %v520, 126
    %v530 = vpop.permute.xlu0 %529
    %531 = vrot.lane.b32.xlu0 %v521, 126
    %v532 = vpop.permute.xlu0 %531
    %533 = vrot.lane.b32.xlu0 %v522, 126
    %v534 = vpop.permute.xlu0 %533
    %v535 = vsel %vm490, %v524, %v526
    %v536 = vsel %vm490, %v526, %v528
    %v537 = vsel %vm490, %v530, %v532
    %v538 = vsel %vm490, %v532, %v534
    %v543 = vadd.f32 %v499, %v535
    %v544 = vadd.f32 %v500, %v536
    %v545 = vadd.f32 %v501, %v537
    %v546 = vadd.f32 %v502, %v538
    %s547 = sld [smem:[#allocation6 + $0x14]]
    %v548 = vstv %s547
    %v549 = vmul.f32 %v548, %v151
    %v550 = vmul.f32 %v548, %v152
    %v551 = vmul.f32 %v548, %v153
    %v552 = vmul.f32 %v548, %v154
    %v553 = vmul.f32 %v548, %v155
    %v554 = vmul.f32 %v548, %v156
    %v561 = vrot.slane %v549, 2
    %v562 = vrot.slane %v550, 2
    %v563 = vrot.slane %v551, 2
    %v564 = vrot.slane %v552, 2
    %v565 = vrot.slane %v553, 2
    %v566 = vrot.slane %v554, 2
    %567 = vrot.lane.b32.xlu0 %v561, 126
    %v568 = vpop.permute.xlu0 %567
    %569 = vrot.lane.b32.xlu0 %v562, 126
    %v570 = vpop.permute.xlu0 %569
    %571 = vrot.lane.b32.xlu0 %v563, 126
    %v572 = vpop.permute.xlu0 %571
    %573 = vrot.lane.b32.xlu0 %v564, 126
    %v574 = vpop.permute.xlu0 %573
    %575 = vrot.lane.b32.xlu0 %v565, 126
    %v576 = vpop.permute.xlu0 %575
    %577 = vrot.lane.b32.xlu0 %v566, 126
    %v578 = vpop.permute.xlu0 %577
    %v579 = vsel %vm490, %v568, %v570
    %v580 = vsel %vm490, %v570, %v572
    %v581 = vsel %vm490, %v574, %v576
    %v582 = vsel %vm490, %v576, %v578
    %v587 = vadd.f32 %v543, %v579
    %v588 = vadd.f32 %v544, %v580
    %v589 = vadd.f32 %v545, %v581
    %v590 = vadd.f32 %v546, %v582
    %s591 = sld [smem:[#allocation6 + $0x1d]]
    %v592 = vstv %s591
    %v593 = vmul.f32 %v592, %v151
    %v594 = vmul.f32 %v592, %v152
    %v595 = vmul.f32 %v592, %v153
    %v596 = vmul.f32 %v592, %v154
    %v597 = vmul.f32 %v592, %v155
    %v598 = vmul.f32 %v592, %v156
    %v605 = vrot.slane %v593, 3
    %v606 = vrot.slane %v594, 3
    %v607 = vrot.slane %v595, 3
    %v608 = vrot.slane %v596, 3
    %v609 = vrot.slane %v597, 3
    %v610 = vrot.slane %v598, 3
    %611 = vrot.lane.b32.xlu0 %v605, 126
    %v612 = vpop.permute.xlu0 %611
    %613 = vrot.lane.b32.xlu0 %v606, 126
    %v614 = vpop.permute.xlu0 %613
    %615 = vrot.lane.b32.xlu0 %v607, 126
    %v616 = vpop.permute.xlu0 %615
    %617 = vrot.lane.b32.xlu0 %v608, 126
    %v618 = vpop.permute.xlu0 %617
    %619 = vrot.lane.b32.xlu0 %v609, 126
    %v620 = vpop.permute.xlu0 %619
    %621 = vrot.lane.b32.xlu0 %v610, 126
    %v622 = vpop.permute.xlu0 %621
    %v623 = vsel %vm490, %v612, %v614
    %v624 = vsel %vm490, %v614, %v616
    %v625 = vsel %vm490, %v618, %v620
    %v626 = vsel %vm490, %v620, %v622
    %v631 = vadd.f32 %v587, %v623
    %v632 = vadd.f32 %v588, %v624
    %v633 = vadd.f32 %v589, %v625
    %v634 = vadd.f32 %v590, %v626
    %s635 = sld [smem:[#allocation6 + $0x3]]
    %v636 = vstv %s635
    %v637 = vmul.f32 %v636, %v166
    %v638 = vmul.f32 %v636, %v167
    %v639 = vmul.f32 %v636, %v168
    %v640 = vmul.f32 %v636, %v169
    %v641 = vmul.f32 %v636, %v170
    %v642 = vmul.f32 %v636, %v171
    %649 = vrot.lane.b32.xlu0 %v637, 112
    %v650 = vpop.permute.xlu0 %649
    %651 = vrot.lane.b32.xlu0 %v638, 112
    %v652 = vpop.permute.xlu0 %651
    %653 = vrot.lane.b32.xlu0 %v639, 112
    %v654 = vpop.permute.xlu0 %653
    %655 = vrot.lane.b32.xlu0 %v640, 112
    %v656 = vpop.permute.xlu0 %655
    %657 = vrot.lane.b32.xlu0 %v641, 112
    %v658 = vpop.permute.xlu0 %657
    %659 = vrot.lane.b32.xlu0 %v642, 112
    %v660 = vpop.permute.xlu0 %659
    %vm661 = vcmask 916480
    %v662 = vsel %vm661, %v650, %v652
    %v663 = vsel %vm661, %v652, %v654
    %v664 = vsel %vm661, %v656, %v658
    %v665 = vsel %vm661, %v658, %v660
    %v670 = vadd.f32 %v631, %v662
    %v671 = vadd.f32 %v632, %v663
    %v672 = vadd.f32 %v633, %v664
    %v673 = vadd.f32 %v634, %v665
    %s674 = sld [smem:[#allocation6 + $0xc]]
    %v675 = vstv %s674
    %v676 = vmul.f32 %v675, %v166
    %v677 = vmul.f32 %v675, %v167
    %v678 = vmul.f32 %v675, %v168
    %v679 = vmul.f32 %v675, %v169
    %v680 = vmul.f32 %v675, %v170
    %v681 = vmul.f32 %v675, %v171
    %v688 = vrot.slane %v676, 1
    %v689 = vrot.slane %v677, 1
    %v690 = vrot.slane %v678, 1
    %v691 = vrot.slane %v679, 1
    %v692 = vrot.slane %v680, 1
    %v693 = vrot.slane %v681, 1
    %694 = vrot.lane.b32.xlu0 %v688, 112
    %v695 = vpop.permute.xlu0 %694
    %696 = vrot.lane.b32.xlu0 %v689, 112
    %v697 = vpop.permute.xlu0 %696
    %698 = vrot.lane.b32.xlu0 %v690, 112
    %v699 = vpop.permute.xlu0 %698
    %700 = vrot.lane.b32.xlu0 %v691, 112
    %v701 = vpop.permute.xlu0 %700
    %702 = vrot.lane.b32.xlu0 %v692, 112
    %v703 = vpop.permute.xlu0 %702
    %704 = vrot.lane.b32.xlu0 %v693, 112
    %v705 = vpop.permute.xlu0 %704
    %v706 = vsel %vm661, %v695, %v697
    %v707 = vsel %vm661, %v697, %v699
    %v708 = vsel %vm661, %v701, %v703
    %v709 = vsel %vm661, %v703, %v705
    %v714 = vadd.f32 %v670, %v706
    %v715 = vadd.f32 %v671, %v707
    %v716 = vadd.f32 %v672, %v708
    %v717 = vadd.f32 %v673, %v709
    %s718 = sld [smem:[#allocation6 + $0x15]]
    %v719 = vstv %s718
    %v720 = vmul.f32 %v719, %v166
    %v721 = vmul.f32 %v719, %v167
    %v722 = vmul.f32 %v719, %v168
    %v723 = vmul.f32 %v719, %v169
    %v724 = vmul.f32 %v719, %v170
    %v725 = vmul.f32 %v719, %v171
    %v732 = vrot.slane %v720, 2
    %v733 = vrot.slane %v721, 2
    %v734 = vrot.slane %v722, 2
    %v735 = vrot.slane %v723, 2
    %v736 = vrot.slane %v724, 2
    %v737 = vrot.slane %v725, 2
    %738 = vrot.lane.b32.xlu0 %v732, 112
    %v739 = vpop.permute.xlu0 %738
    %740 = vrot.lane.b32.xlu0 %v733, 112
    %v741 = vpop.permute.xlu0 %740
    %742 = vrot.lane.b32.xlu0 %v734, 112
    %v743 = vpop.permute.xlu0 %742
    %744 = vrot.lane.b32.xlu0 %v735, 112
    %v745 = vpop.permute.xlu0 %744
    %746 = vrot.lane.b32.xlu0 %v736, 112
    %v747 = vpop.permute.xlu0 %746
    %748 = vrot.lane.b32.xlu0 %v737, 112
    %v749 = vpop.permute.xlu0 %748
    %v750 = vsel %vm661, %v739, %v741
    %v751 = vsel %vm661, %v741, %v743
    %v752 = vsel %vm661, %v745, %v747
    %v753 = vsel %vm661, %v747, %v749
    %v758 = vadd.f32 %v714, %v750
    %v759 = vadd.f32 %v715, %v751
    %v760 = vadd.f32 %v716, %v752
    %v761 = vadd.f32 %v717, %v753
    %s762 = sld [smem:[#allocation6 + $0x1e]]
    %v763 = vstv %s762
    %v764 = vmul.f32 %v763, %v166
    %v765 = vmul.f32 %v763, %v167
    %v766 = vmul.f32 %v763, %v168
    %v767 = vmul.f32 %v763, %v169
    %v768 = vmul.f32 %v763, %v170
    %v769 = vmul.f32 %v763, %v171
    %v776 = vrot.slane %v764, 3
    %v777 = vrot.slane %v765, 3
    %v778 = vrot.slane %v766, 3
    %v779 = vrot.slane %v767, 3
    %v780 = vrot.slane %v768, 3
    %v781 = vrot.slane %v769, 3
    %782 = vrot.lane.b32.xlu0 %v776, 112
    %v783 = vpop.permute.xlu0 %782
    %784 = vrot.lane.b32.xlu0 %v777, 112
    %v785 = vpop.permute.xlu0 %784
    %786 = vrot.lane.b32.xlu0 %v778, 112
    %v787 = vpop.permute.xlu0 %786
    %788 = vrot.lane.b32.xlu0 %v779, 112
    %v789 = vpop.permute.xlu0 %788
    %790 = vrot.lane.b32.xlu0 %v780, 112
    %v791 = vpop.permute.xlu0 %790
    %792 = vrot.lane.b32.xlu0 %v781, 112
    %v793 = vpop.permute.xlu0 %792
    %v794 = vsel %vm661, %v783, %v785
    %v795 = vsel %vm661, %v785, %v787
    %v796 = vsel %vm661, %v789, %v791
    %v797 = vsel %vm661, %v791, %v793
    %v802 = vadd.f32 %v758, %v794
    %v803 = vadd.f32 %v759, %v795
    %v804 = vadd.f32 %v760, %v796
    %v805 = vadd.f32 %v761, %v797
    %s806 = sld [smem:[#allocation6 + $0x4]]
    %v807 = vstv %s806
    %v808 = vmul.f32 %v807, %v114
    %v809 = vmul.f32 %v807, %v106
    %v810 = vmul.f32 %v807, %v116
    %v811 = vmul.f32 %v807, %v115
    %v812 = vmul.f32 %v807, %v107
    %v813 = vmul.f32 %v807, %v117
    %820 = vrot.lane.b32.xlu0 %v808, 111
    %v821 = vpop.permute.xlu0 %820
    %822 = vrot.lane.b32.xlu0 %v809, 111
    %v823 = vpop.permute.xlu0 %822
    %824 = vrot.lane.b32.xlu0 %v810, 111
    %v825 = vpop.permute.xlu0 %824
    %826 = vrot.lane.b32.xlu0 %v811, 111
    %v827 = vpop.permute.xlu0 %826
    %828 = vrot.lane.b32.xlu0 %v812, 111
    %v829 = vpop.permute.xlu0 %828
    %830 = vrot.lane.b32.xlu0 %v813, 111
    %v831 = vpop.permute.xlu0 %830
    %vm832 = vcmask 908288
    %v833 = vsel %vm832, %v821, %v823
    %v834 = vsel %vm832, %v823, %v825
    %v835 = vsel %vm832, %v827, %v829
    %v836 = vsel %vm832, %v829, %v831
    %v841 = vadd.f32 %v802, %v833
    %v842 = vadd.f32 %v803, %v834
    %v843 = vadd.f32 %v804, %v835
    %v844 = vadd.f32 %v805, %v836
    %s845 = sld [smem:[#allocation6 + $0xd]]
    %v846 = vstv %s845
    %v847 = vmul.f32 %v846, %v114
    %v848 = vmul.f32 %v846, %v106
    %v849 = vmul.f32 %v846, %v116
    %v850 = vmul.f32 %v846, %v115
    %v851 = vmul.f32 %v846, %v107
    %v852 = vmul.f32 %v846, %v117
    %v859 = vrot.slane %v847, 1
    %v860 = vrot.slane %v848, 1
    %v861 = vrot.slane %v849, 1
    %v862 = vrot.slane %v850, 1
    %v863 = vrot.slane %v851, 1
    %v864 = vrot.slane %v852, 1
    %865 = vrot.lane.b32.xlu0 %v859, 111
    %v866 = vpop.permute.xlu0 %865
    %867 = vrot.lane.b32.xlu0 %v860, 111
    %v868 = vpop.permute.xlu0 %867
    %869 = vrot.lane.b32.xlu0 %v861, 111
    %v870 = vpop.permute.xlu0 %869
    %871 = vrot.lane.b32.xlu0 %v862, 111
    %v872 = vpop.permute.xlu0 %871
    %873 = vrot.lane.b32.xlu0 %v863, 111
    %v874 = vpop.permute.xlu0 %873
    %875 = vrot.lane.b32.xlu0 %v864, 111
    %v876 = vpop.permute.xlu0 %875
    %v877 = vsel %vm832, %v866, %v868
    %v878 = vsel %vm832, %v868, %v870
    %v879 = vsel %vm832, %v872, %v874
    %v880 = vsel %vm832, %v874, %v876
    %v885 = vadd.f32 %v841, %v877
    %v886 = vadd.f32 %v842, %v878
    %v887 = vadd.f32 %v843, %v879
    %v888 = vadd.f32 %v844, %v880
    %s889 = sld [smem:[#allocation6 + $0x16]]
    %v890 = vstv %s889
    %v891 = vmul.f32 %v890, %v114
    %v892 = vmul.f32 %v890, %v106
    %v893 = vmul.f32 %v890, %v116
    %v894 = vmul.f32 %v890, %v115
    %v895 = vmul.f32 %v890, %v107
    %v896 = vmul.f32 %v890, %v117
    %v903 = vrot.slane %v891, 2
    %v904 = vrot.slane %v892, 2
    %v905 = vrot.slane %v893, 2
    %v906 = vrot.slane %v894, 2
    %v907 = vrot.slane %v895, 2
    %v908 = vrot.slane %v896, 2
    %909 = vrot.lane.b32.xlu0 %v903, 111
    %v910 = vpop.permute.xlu0 %909
    %911 = vrot.lane.b32.xlu0 %v904, 111
    %v912 = vpop.permute.xlu0 %911
    %913 = vrot.lane.b32.xlu0 %v905, 111
    %v914 = vpop.permute.xlu0 %913
    %915 = vrot.lane.b32.xlu0 %v906, 111
    %v916 = vpop.permute.xlu0 %915
    %917 = vrot.lane.b32.xlu0 %v907, 111
    %v918 = vpop.permute.xlu0 %917
    %919 = vrot.lane.b32.xlu0 %v908, 111
    %v920 = vpop.permute.xlu0 %919
    %v921 = vsel %vm832, %v910, %v912
    %v922 = vsel %vm832, %v912, %v914
    %v923 = vsel %vm832, %v916, %v918
    %v924 = vsel %vm832, %v918, %v920
    %v929 = vadd.f32 %v885, %v921
    %v930 = vadd.f32 %v886, %v922
    %v931 = vadd.f32 %v887, %v923
    %v932 = vadd.f32 %v888, %v924
    %s933 = sld [smem:[#allocation6 + $0x1f]]
    %v934 = vstv %s933
    %v935 = vmul.f32 %v934, %v114
    %v936 = vmul.f32 %v934, %v106
    %v937 = vmul.f32 %v934, %v116
    %v938 = vmul.f32 %v934, %v115
    %v939 = vmul.f32 %v934, %v107
    %v940 = vmul.f32 %v934, %v117
    %v947 = vrot.slane %v935, 3
    %v948 = vrot.slane %v936, 3
    %v949 = vrot.slane %v937, 3
    %v950 = vrot.slane %v938, 3
    %v951 = vrot.slane %v939, 3
    %v952 = vrot.slane %v940, 3
    %953 = vrot.lane.b32.xlu0 %v947, 111
    %v954 = vpop.permute.xlu0 %953
    %955 = vrot.lane.b32.xlu0 %v948, 111
    %v956 = vpop.permute.xlu0 %955
    %957 = vrot.lane.b32.xlu0 %v949, 111
    %v958 = vpop.permute.xlu0 %957
    %959 = vrot.lane.b32.xlu0 %v950, 111
    %v960 = vpop.permute.xlu0 %959
    %961 = vrot.lane.b32.xlu0 %v951, 111
    %v962 = vpop.permute.xlu0 %961
    %963 = vrot.lane.b32.xlu0 %v952, 111
    %v964 = vpop.permute.xlu0 %963
    %v965 = vsel %vm832, %v954, %v956
    %v966 = vsel %vm832, %v956, %v958
    %v967 = vsel %vm832, %v960, %v962
    %v968 = vsel %vm832, %v962, %v964
    %v973 = vadd.f32 %v929, %v965
    %v974 = vadd.f32 %v930, %v966
    %v975 = vadd.f32 %v931, %v967
    %v976 = vadd.f32 %v932, %v968
    %s977 = sld [smem:[#allocation6 + $0x5]]
    %v978 = vstv %s977
    %v979 = vmul.f32 %v978, %v181
    %v980 = vmul.f32 %v978, %v182
    %v981 = vmul.f32 %v978, %v183
    %v982 = vmul.f32 %v978, %v184
    %v983 = vmul.f32 %v978, %v185
    %v984 = vmul.f32 %v978, %v186
    %991 = vrot.lane.b32.xlu0 %v979, 110
    %v992 = vpop.permute.xlu0 %991
    %993 = vrot.lane.b32.xlu0 %v980, 110
    %v994 = vpop.permute.xlu0 %993
    %995 = vrot.lane.b32.xlu0 %v981, 110
    %v996 = vpop.permute.xlu0 %995
    %997 = vrot.lane.b32.xlu0 %v982, 110
    %v998 = vpop.permute.xlu0 %997
    %999 = vrot.lane.b32.xlu0 %v983, 110
    %v1000 = vpop.permute.xlu0 %999
    %1001 = vrot.lane.b32.xlu0 %v984, 110
    %v1002 = vpop.permute.xlu0 %1001
    %vm1003 = vcmask 900096
    %v1004 = vsel %vm1003, %v992, %v994
    %v1005 = vsel %vm1003, %v994, %v996
    %v1006 = vsel %vm1003, %v998, %v1000
    %v1007 = vsel %vm1003, %v1000, %v1002
    %v1012 = vadd.f32 %v973, %v1004
    %v1013 = vadd.f32 %v974, %v1005
    %v1014 = vadd.f32 %v975, %v1006
    %v1015 = vadd.f32 %v976, %v1007
    %s1016 = sld [smem:[#allocation6 + $0xe]]
    %v1017 = vstv %s1016
    %v1018 = vmul.f32 %v1017, %v181
    %v1019 = vmul.f32 %v1017, %v182
    %v1020 = vmul.f32 %v1017, %v183
    %v1021 = vmul.f32 %v1017, %v184
    %v1022 = vmul.f32 %v1017, %v185
    %v1023 = vmul.f32 %v1017, %v186
    %v1030 = vrot.slane %v1018, 1
    %v1031 = vrot.slane %v1019, 1
    %v1032 = vrot.slane %v1020, 1
    %v1033 = vrot.slane %v1021, 1
    %v1034 = vrot.slane %v1022, 1
    %v1035 = vrot.slane %v1023, 1
    %1036 = vrot.lane.b32.xlu0 %v1030, 110
    %v1037 = vpop.permute.xlu0 %1036
    %1038 = vrot.lane.b32.xlu0 %v1031, 110
    %v1039 = vpop.permute.xlu0 %1038
    %1040 = vrot.lane.b32.xlu0 %v1032, 110
    %v1041 = vpop.permute.xlu0 %1040
    %1042 = vrot.lane.b32.xlu0 %v1033, 110
    %v1043 = vpop.permute.xlu0 %1042
    %1044 = vrot.lane.b32.xlu0 %v1034, 110
    %v1045 = vpop.permute.xlu0 %1044
    %1046 = vrot.lane.b32.xlu0 %v1035, 110
    %v1047 = vpop.permute.xlu0 %1046
    %v1048 = vsel %vm1003, %v1037, %v1039
    %v1049 = vsel %vm1003, %v1039, %v1041
    %v1050 = vsel %vm1003, %v1043, %v1045
    %v1051 = vsel %vm1003, %v1045, %v1047
    %v1056 = vadd.f32 %v1012, %v1048
    %v1057 = vadd.f32 %v1013, %v1049
    %v1058 = vadd.f32 %v1014, %v1050
    %v1059 = vadd.f32 %v1015, %v1051
    %s1060 = sld [smem:[#allocation6 + $0x17]]
    %v1061 = vstv %s1060
    %v1062 = vmul.f32 %v1061, %v181
    %v1063 = vmul.f32 %v1061, %v182
    %v1064 = vmul.f32 %v1061, %v183
    %v1065 = vmul.f32 %v1061, %v184
    %v1066 = vmul.f32 %v1061, %v185
    %v1067 = vmul.f32 %v1061, %v186
    %v1074 = vrot.slane %v1062, 2
    %v1075 = vrot.slane %v1063, 2
    %v1076 = vrot.slane %v1064, 2
    %v1077 = vrot.slane %v1065, 2
    %v1078 = vrot.slane %v1066, 2
    %v1079 = vrot.slane %v1067, 2
    %1080 = vrot.lane.b32.xlu0 %v1074, 110
    %v1081 = vpop.permute.xlu0 %1080
    %1082 = vrot.lane.b32.xlu0 %v1075, 110
    %v1083 = vpop.permute.xlu0 %1082
    %1084 = vrot.lane.b32.xlu0 %v1076, 110
    %v1085 = vpop.permute.xlu0 %1084
    %1086 = vrot.lane.b32.xlu0 %v1077, 110
    %v1087 = vpop.permute.xlu0 %1086
    %1088 = vrot.lane.b32.xlu0 %v1078, 110
    %v1089 = vpop.permute.xlu0 %1088
    %1090 = vrot.lane.b32.xlu0 %v1079, 110
    %v1091 = vpop.permute.xlu0 %1090
    %v1092 = vsel %vm1003, %v1081, %v1083
    %v1093 = vsel %vm1003, %v1083, %v1085
    %v1094 = vsel %vm1003, %v1087, %v1089
    %v1095 = vsel %vm1003, %v1089, %v1091
    %v1100 = vadd.f32 %v1056, %v1092
    %v1101 = vadd.f32 %v1057, %v1093
    %v1102 = vadd.f32 %v1058, %v1094
    %v1103 = vadd.f32 %v1059, %v1095
    %s1104 = sld [smem:[#allocation6 + $0x20]]
    %v1105 = vstv %s1104
    %v1106 = vmul.f32 %v1105, %v181
    %v1107 = vmul.f32 %v1105, %v182
    %v1108 = vmul.f32 %v1105, %v183
    %v1109 = vmul.f32 %v1105, %v184
    %v1110 = vmul.f32 %v1105, %v185
    %v1111 = vmul.f32 %v1105, %v186
    %v1118 = vrot.slane %v1106, 3
    %v1119 = vrot.slane %v1107, 3
    %v1120 = vrot.slane %v1108, 3
    %v1121 = vrot.slane %v1109, 3
    %v1122 = vrot.slane %v1110, 3
    %v1123 = vrot.slane %v1111, 3
    %1124 = vrot.lane.b32.xlu0 %v1118, 110
    %v1125 = vpop.permute.xlu0 %1124
    %1126 = vrot.lane.b32.xlu0 %v1119, 110
    %v1127 = vpop.permute.xlu0 %1126
    %1128 = vrot.lane.b32.xlu0 %v1120, 110
    %v1129 = vpop.permute.xlu0 %1128
    %1130 = vrot.lane.b32.xlu0 %v1121, 110
    %v1131 = vpop.permute.xlu0 %1130
    %1132 = vrot.lane.b32.xlu0 %v1122, 110
    %v1133 = vpop.permute.xlu0 %1132
    %1134 = vrot.lane.b32.xlu0 %v1123, 110
    %v1135 = vpop.permute.xlu0 %1134
    %v1136 = vsel %vm1003, %v1125, %v1127
    %v1137 = vsel %vm1003, %v1127, %v1129
    %v1138 = vsel %vm1003, %v1131, %v1133
    %v1139 = vsel %vm1003, %v1133, %v1135
    %v1144 = vadd.f32 %v1100, %v1136
    %v1145 = vadd.f32 %v1101, %v1137
    %v1146 = vadd.f32 %v1102, %v1138
    %v1147 = vadd.f32 %v1103, %v1139
    %s1148 = sld [smem:[#allocation6 + $0x6]]
    %v1149 = vstv %s1148
    %v1150 = vmul.f32 %v1149, %v196
    %v1151 = vmul.f32 %v1149, %v197
    %v1152 = vmul.f32 %v1149, %v198
    %v1153 = vmul.f32 %v1149, %v199
    %v1154 = vmul.f32 %v1149, %v200
    %v1155 = vmul.f32 %v1149, %v201
    %1162 = vrot.lane.b32.xlu0 %v1150, 96
    %v1163 = vpop.permute.xlu0 %1162
    %1164 = vrot.lane.b32.xlu0 %v1151, 96
    %v1165 = vpop.permute.xlu0 %1164
    %1166 = vrot.lane.b32.xlu0 %v1152, 96
    %v1167 = vpop.permute.xlu0 %1166
    %1168 = vrot.lane.b32.xlu0 %v1153, 96
    %v1169 = vpop.permute.xlu0 %1168
    %1170 = vrot.lane.b32.xlu0 %v1154, 96
    %v1171 = vpop.permute.xlu0 %1170
    %1172 = vrot.lane.b32.xlu0 %v1155, 96
    %v1173 = vpop.permute.xlu0 %1172
    %vm1174 = vcmask 785408
    %v1175 = vsel %vm1174, %v1163, %v1165
    %v1176 = vsel %vm1174, %v1165, %v1167
    %v1177 = vsel %vm1174, %v1169, %v1171
    %v1178 = vsel %vm1174, %v1171, %v1173
    %v1183 = vadd.f32 %v1144, %v1175
    %v1184 = vadd.f32 %v1145, %v1176
    %v1185 = vadd.f32 %v1146, %v1177
    %v1186 = vadd.f32 %v1147, %v1178
    %s1187 = sld [smem:[#allocation6 + $0xf]]
    %v1188 = vstv %s1187
    %v1189 = vmul.f32 %v1188, %v196
    %v1190 = vmul.f32 %v1188, %v197
    %v1191 = vmul.f32 %v1188, %v198
    %v1192 = vmul.f32 %v1188, %v199
    %v1193 = vmul.f32 %v1188, %v200
    %v1194 = vmul.f32 %v1188, %v201
    %v1201 = vrot.slane %v1189, 1
    %v1202 = vrot.slane %v1190, 1
    %v1203 = vrot.slane %v1191, 1
    %v1204 = vrot.slane %v1192, 1
    %v1205 = vrot.slane %v1193, 1
    %v1206 = vrot.slane %v1194, 1
    %1207 = vrot.lane.b32.xlu0 %v1201, 96
    %v1208 = vpop.permute.xlu0 %1207
    %1209 = vrot.lane.b32.xlu0 %v1202, 96
    %v1210 = vpop.permute.xlu0 %1209
    %1211 = vrot.lane.b32.xlu0 %v1203, 96
    %v1212 = vpop.permute.xlu0 %1211
    %1213 = vrot.lane.b32.xlu0 %v1204, 96
    %v1214 = vpop.permute.xlu0 %1213
    %1215 = vrot.lane.b32.xlu0 %v1205, 96
    %v1216 = vpop.permute.xlu0 %1215
    %1217 = vrot.lane.b32.xlu0 %v1206, 96
    %v1218 = vpop.permute.xlu0 %1217
    %v1219 = vsel %vm1174, %v1208, %v1210
    %v1220 = vsel %vm1174, %v1210, %v1212
    %v1221 = vsel %vm1174, %v1214, %v1216
    %v1222 = vsel %vm1174, %v1216, %v1218
    %v1227 = vadd.f32 %v1183, %v1219
    %v1228 = vadd.f32 %v1184, %v1220
    %v1229 = vadd.f32 %v1185, %v1221
    %v1230 = vadd.f32 %v1186, %v1222
    %s1231 = sld [smem:[#allocation6 + $0x18]]
    %v1232 = vstv %s1231
    %v1233 = vmul.f32 %v1232, %v196
    %v1234 = vmul.f32 %v1232, %v197
    %v1235 = vmul.f32 %v1232, %v198
    %v1236 = vmul.f32 %v1232, %v199
    %v1237 = vmul.f32 %v1232, %v200
    %v1238 = vmul.f32 %v1232, %v201
    %v1245 = vrot.slane %v1233, 2
    %v1246 = vrot.slane %v1234, 2
    %v1247 = vrot.slane %v1235, 2
    %v1248 = vrot.slane %v1236, 2
    %v1249 = vrot.slane %v1237, 2
    %v1250 = vrot.slane %v1238, 2
    %1251 = vrot.lane.b32.xlu0 %v1245, 96
    %v1252 = vpop.permute.xlu0 %1251
    %1253 = vrot.lane.b32.xlu0 %v1246, 96
    %v1254 = vpop.permute.xlu0 %1253
    %1255 = vrot.lane.b32.xlu0 %v1247, 96
    %v1256 = vpop.permute.xlu0 %1255
    %1257 = vrot.lane.b32.xlu0 %v1248, 96
    %v1258 = vpop.permute.xlu0 %1257
    %1259 = vrot.lane.b32.xlu0 %v1249, 96
    %v1260 = vpop.permute.xlu0 %1259
    %1261 = vrot.lane.b32.xlu0 %v1250, 96
    %v1262 = vpop.permute.xlu0 %1261
    %v1263 = vsel %vm1174, %v1252, %v1254
    %v1264 = vsel %vm1174, %v1254, %v1256
    %v1265 = vsel %vm1174, %v1258, %v1260
    %v1266 = vsel %vm1174, %v1260, %v1262
    %v1271 = vadd.f32 %v1227, %v1263
    %v1272 = vadd.f32 %v1228, %v1264
    %v1273 = vadd.f32 %v1229, %v1265
    %v1274 = vadd.f32 %v1230, %v1266
    %s1275 = sld [smem:[#allocation6 + $0x21]]
    %v1276 = vstv %s1275
    %v1277 = vmul.f32 %v1276, %v196
    %v1278 = vmul.f32 %v1276, %v197
    %v1279 = vmul.f32 %v1276, %v198
    %v1280 = vmul.f32 %v1276, %v199
    %v1281 = vmul.f32 %v1276, %v200
    %v1282 = vmul.f32 %v1276, %v201
    %v1289 = vrot.slane %v1277, 3
    %v1290 = vrot.slane %v1278, 3
    %v1291 = vrot.slane %v1279, 3
    %v1292 = vrot.slane %v1280, 3
    %v1293 = vrot.slane %v1281, 3
    %v1294 = vrot.slane %v1282, 3
    %1295 = vrot.lane.b32.xlu0 %v1289, 96
    %v1296 = vpop.permute.xlu0 %1295
    %1297 = vrot.lane.b32.xlu0 %v1290, 96
    %v1298 = vpop.permute.xlu0 %1297
    %1299 = vrot.lane.b32.xlu0 %v1291, 96
    %v1300 = vpop.permute.xlu0 %1299
    %1301 = vrot.lane.b32.xlu0 %v1292, 96
    %v1302 = vpop.permute.xlu0 %1301
    %1303 = vrot.lane.b32.xlu0 %v1293, 96
    %v1304 = vpop.permute.xlu0 %1303
    %1305 = vrot.lane.b32.xlu0 %v1294, 96
    %v1306 = vpop.permute.xlu0 %1305
    %v1307 = vsel %vm1174, %v1296, %v1298
    %v1308 = vsel %vm1174, %v1298, %v1300
    %v1309 = vsel %vm1174, %v1302, %v1304
    %v1310 = vsel %vm1174, %v1304, %v1306
    %v1315 = vadd.f32 %v1271, %v1307
    %v1316 = vadd.f32 %v1272, %v1308
    %v1317 = vadd.f32 %v1273, %v1309
    %v1318 = vadd.f32 %v1274, %v1310
    %s1319 = sld [smem:[#allocation6 + $0x7]]
    %v1320 = vstv %s1319
    %v1321 = vmul.f32 %v1320, %v114
    %v1322 = vmul.f32 %v1320, %v106
    %v1323 = vmul.f32 %v1320, %v116
    %v1324 = vmul.f32 %v1320, %v115
    %v1325 = vmul.f32 %v1320, %v107
    %v1326 = vmul.f32 %v1320, %v117
    %1333 = vrot.lane.b32.xlu0 %v1321, 95
    %v1334 = vpop.permute.xlu0 %1333
    %1335 = vrot.lane.b32.xlu0 %v1322, 95
    %v1336 = vpop.permute.xlu0 %1335
    %1337 = vrot.lane.b32.xlu0 %v1323, 95
    %v1338 = vpop.permute.xlu0 %1337
    %1339 = vrot.lane.b32.xlu0 %v1324, 95
    %v1340 = vpop.permute.xlu0 %1339
    %1341 = vrot.lane.b32.xlu0 %v1325, 95
    %v1342 = vpop.permute.xlu0 %1341
    %1343 = vrot.lane.b32.xlu0 %v1326, 95
    %v1344 = vpop.permute.xlu0 %1343
    %vm1345 = vcmask 777216
    %v1346 = vsel %vm1345, %v1334, %v1336
    %v1347 = vsel %vm1345, %v1336, %v1338
    %v1348 = vsel %vm1345, %v1340, %v1342
    %v1349 = vsel %vm1345, %v1342, %v1344
    %v1354 = vadd.f32 %v1315, %v1346
    %v1355 = vadd.f32 %v1316, %v1347
    %v1356 = vadd.f32 %v1317, %v1348
    %v1357 = vadd.f32 %v1318, %v1349
    %s1358 = sld [smem:[#allocation6 + $0x10]]
    %v1359 = vstv %s1358
    %v1360 = vmul.f32 %v1359, %v114
    %v1361 = vmul.f32 %v1359, %v106
    %v1362 = vmul.f32 %v1359, %v116
    %v1363 = vmul.f32 %v1359, %v115
    %v1364 = vmul.f32 %v1359, %v107
    %v1365 = vmul.f32 %v1359, %v117
    %v1372 = vrot.slane %v1360, 1
    %v1373 = vrot.slane %v1361, 1
    %v1374 = vrot.slane %v1362, 1
    %v1375 = vrot.slane %v1363, 1
    %v1376 = vrot.slane %v1364, 1
    %v1377 = vrot.slane %v1365, 1
    %1378 = vrot.lane.b32.xlu0 %v1372, 95
    %v1379 = vpop.permute.xlu0 %1378
    %1380 = vrot.lane.b32.xlu0 %v1373, 95
    %v1381 = vpop.permute.xlu0 %1380
    %1382 = vrot.lane.b32.xlu0 %v1374, 95
    %v1383 = vpop.permute.xlu0 %1382
    %1384 = vrot.lane.b32.xlu0 %v1375, 95
    %v1385 = vpop.permute.xlu0 %1384
    %1386 = vrot.lane.b32.xlu0 %v1376, 95
    %v1387 = vpop.permute.xlu0 %1386
    %1388 = vrot.lane.b32.xlu0 %v1377, 95
    %v1389 = vpop.permute.xlu0 %1388
    %v1390 = vsel %vm1345, %v1379, %v1381
    %v1391 = vsel %vm1345, %v1381, %v1383
    %v1392 = vsel %vm1345, %v1385, %v1387
    %v1393 = vsel %vm1345, %v1387, %v1389
    %v1398 = vadd.f32 %v1354, %v1390
    %v1399 = vadd.f32 %v1355, %v1391
    %v1400 = vadd.f32 %v1356, %v1392
    %v1401 = vadd.f32 %v1357, %v1393
    %s1402 = sld [smem:[#allocation6 + $0x19]]
    %v1403 = vstv %s1402
    %v1404 = vmul.f32 %v1403, %v114
    %v1405 = vmul.f32 %v1403, %v106
    %v1406 = vmul.f32 %v1403, %v116
    %v1407 = vmul.f32 %v1403, %v115
    %v1408 = vmul.f32 %v1403, %v107
    %v1409 = vmul.f32 %v1403, %v117
    %v1416 = vrot.slane %v1404, 2
    %v1417 = vrot.slane %v1405, 2
    %v1418 = vrot.slane %v1406, 2
    %v1419 = vrot.slane %v1407, 2
    %v1420 = vrot.slane %v1408, 2
    %v1421 = vrot.slane %v1409, 2
    %1422 = vrot.lane.b32.xlu0 %v1416, 95
    %v1423 = vpop.permute.xlu0 %1422
    %1424 = vrot.lane.b32.xlu0 %v1417, 95
    %v1425 = vpop.permute.xlu0 %1424
    %1426 = vrot.lane.b32.xlu0 %v1418, 95
    %v1427 = vpop.permute.xlu0 %1426
    %1428 = vrot.lane.b32.xlu0 %v1419, 95
    %v1429 = vpop.permute.xlu0 %1428
    %1430 = vrot.lane.b32.xlu0 %v1420, 95
    %v1431 = vpop.permute.xlu0 %1430
    %1432 = vrot.lane.b32.xlu0 %v1421, 95
    %v1433 = vpop.permute.xlu0 %1432
    %v1434 = vsel %vm1345, %v1423, %v1425
    %v1435 = vsel %vm1345, %v1425, %v1427
    %v1436 = vsel %vm1345, %v1429, %v1431
    %v1437 = vsel %vm1345, %v1431, %v1433
    %v1442 = vadd.f32 %v1398, %v1434
    %v1443 = vadd.f32 %v1399, %v1435
    %v1444 = vadd.f32 %v1400, %v1436
    %v1445 = vadd.f32 %v1401, %v1437
    %s1446 = sld [smem:[#allocation6 + $0x22]]
    %v1447 = vstv %s1446
    %v1448 = vmul.f32 %v1447, %v114
    %v1449 = vmul.f32 %v1447, %v106
    %v1450 = vmul.f32 %v1447, %v116
    %v1451 = vmul.f32 %v1447, %v115
    %v1452 = vmul.f32 %v1447, %v107
    %v1453 = vmul.f32 %v1447, %v117
    %v1460 = vrot.slane %v1448, 3
    %v1461 = vrot.slane %v1449, 3
    %v1462 = vrot.slane %v1450, 3
    %v1463 = vrot.slane %v1451, 3
    %v1464 = vrot.slane %v1452, 3
    %v1465 = vrot.slane %v1453, 3
    %1466 = vrot.lane.b32.xlu0 %v1460, 95
    %v1467 = vpop.permute.xlu0 %1466
    %1468 = vrot.lane.b32.xlu0 %v1461, 95
    %v1469 = vpop.permute.xlu0 %1468
    %1470 = vrot.lane.b32.xlu0 %v1462, 95
    %v1471 = vpop.permute.xlu0 %1470
    %1472 = vrot.lane.b32.xlu0 %v1463, 95
    %v1473 = vpop.permute.xlu0 %1472
    %1474 = vrot.lane.b32.xlu0 %v1464, 95
    %v1475 = vpop.permute.xlu0 %1474
    %1476 = vrot.lane.b32.xlu0 %v1465, 95
    %v1477 = vpop.permute.xlu0 %1476
    %v1478 = vsel %vm1345, %v1467, %v1469
    %v1479 = vsel %vm1345, %v1469, %v1471
    %v1480 = vsel %vm1345, %v1473, %v1475
    %v1481 = vsel %vm1345, %v1475, %v1477
    %v1486 = vadd.f32 %v1442, %v1478
    %v1487 = vadd.f32 %v1443, %v1479
    %v1488 = vadd.f32 %v1444, %v1480
    %v1489 = vadd.f32 %v1445, %v1481
    %s1490 = sld [smem:[#allocation6 + $0x8]]
    %v1491 = vstv %s1490
    %v1492 = vmul.f32 %v1491, %v211
    %v1493 = vmul.f32 %v1491, %v212
    %v1494 = vmul.f32 %v1491, %v213
    %v1495 = vmul.f32 %v1491, %v214
    %v1496 = vmul.f32 %v1491, %v215
    %v1497 = vmul.f32 %v1491, %v216
    %1504 = vrot.lane.b32.xlu0 %v1492, 94
    %v1505 = vpop.permute.xlu0 %1504
    %1506 = vrot.lane.b32.xlu0 %v1493, 94
    %v1507 = vpop.permute.xlu0 %1506
    %1508 = vrot.lane.b32.xlu0 %v1494, 94
    %v1509 = vpop.permute.xlu0 %1508
    %1510 = vrot.lane.b32.xlu0 %v1495, 94
    %v1511 = vpop.permute.xlu0 %1510
    %1512 = vrot.lane.b32.xlu0 %v1496, 94
    %v1513 = vpop.permute.xlu0 %1512
    %1514 = vrot.lane.b32.xlu0 %v1497, 94
    %v1515 = vpop.permute.xlu0 %1514
    %vm1516 = vcmask 769024
    %v1517 = vsel %vm1516, %v1505, %v1507
    %v1518 = vsel %vm1516, %v1507, %v1509
    %v1519 = vsel %vm1516, %v1511, %v1513
    %v1520 = vsel %vm1516, %v1513, %v1515
    %v1525 = vadd.f32 %v1486, %v1517
    %v1526 = vadd.f32 %v1487, %v1518
    %v1527 = vadd.f32 %v1488, %v1519
    %v1528 = vadd.f32 %v1489, %v1520
    %s1529 = sld [smem:[#allocation6 + $0x11]]
    %v1530 = vstv %s1529
    %v1531 = vmul.f32 %v1530, %v211
    %v1532 = vmul.f32 %v1530, %v212
    %v1533 = vmul.f32 %v1530, %v213
    %v1534 = vmul.f32 %v1530, %v214
    %v1535 = vmul.f32 %v1530, %v215
    %v1536 = vmul.f32 %v1530, %v216
    %v1543 = vrot.slane %v1531, 1
    %v1544 = vrot.slane %v1532, 1
    %v1545 = vrot.slane %v1533, 1
    %v1546 = vrot.slane %v1534, 1
    %v1547 = vrot.slane %v1535, 1
    %v1548 = vrot.slane %v1536, 1
    %1549 = vrot.lane.b32.xlu0 %v1543, 94
    %v1550 = vpop.permute.xlu0 %1549
    %1551 = vrot.lane.b32.xlu0 %v1544, 94
    %v1552 = vpop.permute.xlu0 %1551
    %1553 = vrot.lane.b32.xlu0 %v1545, 94
    %v1554 = vpop.permute.xlu0 %1553
    %1555 = vrot.lane.b32.xlu0 %v1546, 94
    %v1556 = vpop.permute.xlu0 %1555
    %1557 = vrot.lane.b32.xlu0 %v1547, 94
    %v1558 = vpop.permute.xlu0 %1557
    %1559 = vrot.lane.b32.xlu0 %v1548, 94
    %v1560 = vpop.permute.xlu0 %1559
    %v1561 = vsel %vm1516, %v1550, %v1552
    %v1562 = vsel %vm1516, %v1552, %v1554
    %v1563 = vsel %vm1516, %v1556, %v1558
    %v1564 = vsel %vm1516, %v1558, %v1560
    %v1569 = vadd.f32 %v1525, %v1561
    %v1570 = vadd.f32 %v1526, %v1562
    %v1571 = vadd.f32 %v1527, %v1563
    %v1572 = vadd.f32 %v1528, %v1564
    %s1573 = sld [smem:[#allocation6 + $0x1a]]
    %v1574 = vstv %s1573
    %v1575 = vmul.f32 %v1574, %v211
    %v1576 = vmul.f32 %v1574, %v212
    %v1577 = vmul.f32 %v1574, %v213
    %v1578 = vmul.f32 %v1574, %v214
    %v1579 = vmul.f32 %v1574, %v215
    %v1580 = vmul.f32 %v1574, %v216
    %v1587 = vrot.slane %v1575, 2
    %v1588 = vrot.slane %v1576, 2
    %v1589 = vrot.slane %v1577, 2
    %v1590 = vrot.slane %v1578, 2
    %v1591 = vrot.slane %v1579, 2
    %v1592 = vrot.slane %v1580, 2
    %1593 = vrot.lane.b32.xlu0 %v1587, 94
    %v1594 = vpop.permute.xlu0 %1593
    %1595 = vrot.lane.b32.xlu0 %v1588, 94
    %v1596 = vpop.permute.xlu0 %1595
    %1597 = vrot.lane.b32.xlu0 %v1589, 94
    %v1598 = vpop.permute.xlu0 %1597
    %1599 = vrot.lane.b32.xlu0 %v1590, 94
    %v1600 = vpop.permute.xlu0 %1599
    %1601 = vrot.lane.b32.xlu0 %v1591, 94
    %v1602 = vpop.permute.xlu0 %1601
    %1603 = vrot.lane.b32.xlu0 %v1592, 94
    %v1604 = vpop.permute.xlu0 %1603
    %v1605 = vsel %vm1516, %v1594, %v1596
    %v1606 = vsel %vm1516, %v1596, %v1598
    %v1607 = vsel %vm1516, %v1600, %v1602
    %v1608 = vsel %vm1516, %v1602, %v1604
    %v1613 = vadd.f32 %v1569, %v1605
    %v1614 = vadd.f32 %v1570, %v1606
    %v1615 = vadd.f32 %v1571, %v1607
    %v1616 = vadd.f32 %v1572, %v1608
    %s1617 = sld [smem:[#allocation6 + $0x23]]
    %v1618 = vstv %s1617
    %v1619 = vmul.f32 %v1618, %v211
    %v1620 = vmul.f32 %v1618, %v212
    %v1621 = vmul.f32 %v1618, %v213
    %v1622 = vmul.f32 %v1618, %v214
    %v1623 = vmul.f32 %v1618, %v215
    %v1624 = vmul.f32 %v1618, %v216
    %v1631 = vrot.slane %v1619, 3
    %v1632 = vrot.slane %v1620, 3
    %v1633 = vrot.slane %v1621, 3
    %v1634 = vrot.slane %v1622, 3
    %v1635 = vrot.slane %v1623, 3
    %v1636 = vrot.slane %v1624, 3
    %1637 = vrot.lane.b32.xlu0 %v1631, 94
    %v1638 = vpop.permute.xlu0 %1637
    %1639 = vrot.lane.b32.xlu0 %v1632, 94
    %v1640 = vpop.permute.xlu0 %1639
    %1641 = vrot.lane.b32.xlu0 %v1633, 94
    %v1642 = vpop.permute.xlu0 %1641
    %1643 = vrot.lane.b32.xlu0 %v1634, 94
    %v1644 = vpop.permute.xlu0 %1643
    %1645 = vrot.lane.b32.xlu0 %v1635, 94
    %v1646 = vpop.permute.xlu0 %1645
    %1647 = vrot.lane.b32.xlu0 %v1636, 94
    %v1648 = vpop.permute.xlu0 %1647
    %v1649 = vsel %vm1516, %v1638, %v1640
    %v1650 = vsel %vm1516, %v1640, %v1642
    %v1651 = vsel %vm1516, %v1644, %v1646
    %v1652 = vsel %vm1516, %v1646, %v1648
    %v1657 = vadd.f32 %v1613, %v1649
    %v1658 = vadd.f32 %v1614, %v1650
    %v1659 = vadd.f32 %v1615, %v1651
    %v1660 = vadd.f32 %v1616, %v1652
    %s1661 = sld [smem:[#allocation7]]
    %v1662 = vstv %s1661
    %v1663 = vadd.f32 %v1657, %v1662
    %v1664 = vadd.f32 %v1658, %v1662
    %v1665 = vadd.f32 %v1659, %v1662
    %v1666 = vadd.f32 %v1660, %v1662
    %s1667 = sld [smem:[#allocation6 + $0x24]]
    %v1668 = vstv %s1667
    %v1669 = vmul.f32 %v1668, %v129
    %v1670 = vmul.f32 %v1668, %v130
    %v1671 = vmul.f32 %v1668, %v131
    %v1672 = vmul.f32 %v1668, %v132
    %v1673 = vadd.f32 %v1669, 0.0
    %v1674 = vadd.f32 %v1670, 0.0
    %v1675 = vadd.f32 %v1671, 0.0
    %v1676 = vadd.f32 %v1672, 0.0
    %s1677 = sld [smem:[#allocation6 + $0x2d]]
    %v1678 = vstv %s1677
    %v1679 = vmul.f32 %v1678, %v129
    %v1680 = vmul.f32 %v1678, %v130
    %v1681 = vmul.f32 %v1678, %v131
    %v1682 = vmul.f32 %v1678, %v132
    %v1687 = vrot.slane %v1679, 1
    %v1688 = vrot.slane %v1680, 1
    %v1689 = vrot.slane %v1681, 1
    %v1690 = vrot.slane %v1682, 1
    %v1695 = vadd.f32 %v1673, %v1687
    %v1696 = vadd.f32 %v1674, %v1688
    %v1697 = vadd.f32 %v1675, %v1689
    %v1698 = vadd.f32 %v1676, %v1690
    %s1699 = sld [smem:[#allocation6 + $0x36]]
    %v1700 = vstv %s1699
    %v1701 = vmul.f32 %v1700, %v129
    %v1702 = vmul.f32 %v1700, %v130
    %v1703 = vmul.f32 %v1700, %v131
    %v1704 = vmul.f32 %v1700, %v132
    %v1709 = vrot.slane %v1701, 2
    %v1710 = vrot.slane %v1702, 2
    %v1711 = vrot.slane %v1703, 2
    %v1712 = vrot.slane %v1704, 2
    %v1717 = vadd.f32 %v1695, %v1709
    %v1718 = vadd.f32 %v1696, %v1710
    %v1719 = vadd.f32 %v1697, %v1711
    %v1720 = vadd.f32 %v1698, %v1712
    %s1721 = sld [smem:[#allocation6 + $0x3f]]
    %v1722 = vstv %s1721
    %v1723 = vmul.f32 %v1722, %v129
    %v1724 = vmul.f32 %v1722, %v130
    %v1725 = vmul.f32 %v1722, %v131
    %v1726 = vmul.f32 %v1722, %v132
    %v1731 = vrot.slane %v1723, 3
    %v1732 = vrot.slane %v1724, 3
    %v1733 = vrot.slane %v1725, 3
    %v1734 = vrot.slane %v1726, 3
    %v1739 = vadd.f32 %v1717, %v1731
    %v1740 = vadd.f32 %v1718, %v1732
    %v1741 = vadd.f32 %v1719, %v1733
    %v1742 = vadd.f32 %v1720, %v1734
    %s1743 = sld [smem:[#allocation6 + $0x25]]
    %v1744 = vstv %s1743
    %v1745 = vmul.f32 %v1744, %v114
    %v1746 = vmul.f32 %v1744, %v106
    %v1747 = vmul.f32 %v1744, %v116
    %v1748 = vmul.f32 %v1744, %v115
    %v1749 = vmul.f32 %v1744, %v107
    %v1750 = vmul.f32 %v1744, %v117
    %1757 = vrot.lane.b32.xlu0 %v1745, 127
    %v1758 = vpop.permute.xlu0 %1757
    %1759 = vrot.lane.b32.xlu0 %v1746, 127
    %v1760 = vpop.permute.xlu0 %1759
    %1761 = vrot.lane.b32.xlu0 %v1747, 127
    %v1762 = vpop.permute.xlu0 %1761
    %1763 = vrot.lane.b32.xlu0 %v1748, 127
    %v1764 = vpop.permute.xlu0 %1763
    %1765 = vrot.lane.b32.xlu0 %v1749, 127
    %v1766 = vpop.permute.xlu0 %1765
    %1767 = vrot.lane.b32.xlu0 %v1750, 127
    %v1768 = vpop.permute.xlu0 %1767
    %v1769 = vsel %vm319, %v1758, %v1760
    %v1770 = vsel %vm319, %v1760, %v1762
    %v1771 = vsel %vm319, %v1764, %v1766
    %v1772 = vsel %vm319, %v1766, %v1768
    %v1777 = vadd.f32 %v1739, %v1769
    %v1778 = vadd.f32 %v1740, %v1770
    %v1779 = vadd.f32 %v1741, %v1771
    %v1780 = vadd.f32 %v1742, %v1772
    %s1781 = sld [smem:[#allocation6 + $0x2e]]
    %v1782 = vstv %s1781
    %v1783 = vmul.f32 %v1782, %v114
    %v1784 = vmul.f32 %v1782, %v106
    %v1785 = vmul.f32 %v1782, %v116
    %v1786 = vmul.f32 %v1782, %v115
    %v1787 = vmul.f32 %v1782, %v107
    %v1788 = vmul.f32 %v1782, %v117
    %v1795 = vrot.slane %v1783, 1
    %v1796 = vrot.slane %v1784, 1
    %v1797 = vrot.slane %v1785, 1
    %v1798 = vrot.slane %v1786, 1
    %v1799 = vrot.slane %v1787, 1
    %v1800 = vrot.slane %v1788, 1
    %1801 = vrot.lane.b32.xlu0 %v1795, 127
    %v1802 = vpop.permute.xlu0 %1801
    %1803 = vrot.lane.b32.xlu0 %v1796, 127
    %v1804 = vpop.permute.xlu0 %1803
    %1805 = vrot.lane.b32.xlu0 %v1797, 127
    %v1806 = vpop.permute.xlu0 %1805
    %1807 = vrot.lane.b32.xlu0 %v1798, 127
    %v1808 = vpop.permute.xlu0 %1807
    %1809 = vrot.lane.b32.xlu0 %v1799, 127
    %v1810 = vpop.permute.xlu0 %1809
    %1811 = vrot.lane.b32.xlu0 %v1800, 127
    %v1812 = vpop.permute.xlu0 %1811
    %v1813 = vsel %vm319, %v1802, %v1804
    %v1814 = vsel %vm319, %v1804, %v1806
    %v1815 = vsel %vm319, %v1808, %v1810
    %v1816 = vsel %vm319, %v1810, %v1812
    %v1821 = vadd.f32 %v1777, %v1813
    %v1822 = vadd.f32 %v1778, %v1814
    %v1823 = vadd.f32 %v1779, %v1815
    %v1824 = vadd.f32 %v1780, %v1816
    %s1825 = sld [smem:[#allocation6 + $0x37]]
    %v1826 = vstv %s1825
    %v1827 = vmul.f32 %v1826, %v114
    %v1828 = vmul.f32 %v1826, %v106
    %v1829 = vmul.f32 %v1826, %v116
    %v1830 = vmul.f32 %v1826, %v115
    %v1831 = vmul.f32 %v1826, %v107
    %v1832 = vmul.f32 %v1826, %v117
    %v1839 = vrot.slane %v1827, 2
    %v1840 = vrot.slane %v1828, 2
    %v1841 = vrot.slane %v1829, 2
    %v1842 = vrot.slane %v1830, 2
    %v1843 = vrot.slane %v1831, 2
    %v1844 = vrot.slane %v1832, 2
    %1845 = vrot.lane.b32.xlu0 %v1839, 127
    %v1846 = vpop.permute.xlu0 %1845
    %1847 = vrot.lane.b32.xlu0 %v1840, 127
    %v1848 = vpop.permute.xlu0 %1847
    %1849 = vrot.lane.b32.xlu0 %v1841, 127
    %v1850 = vpop.permute.xlu0 %1849
    %1851 = vrot.lane.b32.xlu0 %v1842, 127
    %v1852 = vpop.permute.xlu0 %1851
    %1853 = vrot.lane.b32.xlu0 %v1843, 127
    %v1854 = vpop.permute.xlu0 %1853
    %1855 = vrot.lane.b32.xlu0 %v1844, 127
    %v1856 = vpop.permute.xlu0 %1855
    %v1857 = vsel %vm319, %v1846, %v1848
    %v1858 = vsel %vm319, %v1848, %v1850
    %v1859 = vsel %vm319, %v1852, %v1854
    %v1860 = vsel %vm319, %v1854, %v1856
    %v1865 = vadd.f32 %v1821, %v1857
    %v1866 = vadd.f32 %v1822, %v1858
    %v1867 = vadd.f32 %v1823, %v1859
    %v1868 = vadd.f32 %v1824, %v1860
    %s1869 = sld [smem:[#allocation6 + $0x40]]
    %v1870 = vstv %s1869
    %v1871 = vmul.f32 %v1870, %v114
    %v1872 = vmul.f32 %v1870, %v106
    %v1873 = vmul.f32 %v1870, %v116
    %v1874 = vmul.f32 %v1870, %v115
    %v1875 = vmul.f32 %v1870, %v107
    %v1876 = vmul.f32 %v1870, %v117
    %v1883 = vrot.slane %v1871, 3
    %v1884 = vrot.slane %v1872, 3
    %v1885 = vrot.slane %v1873, 3
    %v1886 = vrot.slane %v1874, 3
    %v1887 = vrot.slane %v1875, 3
    %v1888 = vrot.slane %v1876, 3
    %1889 = vrot.lane.b32.xlu0 %v1883, 127
    %v1890 = vpop.permute.xlu0 %1889
    %1891 = vrot.lane.b32.xlu0 %v1884, 127
    %v1892 = vpop.permute.xlu0 %1891
    %1893 = vrot.lane.b32.xlu0 %v1885, 127
    %v1894 = vpop.permute.xlu0 %1893
    %1895 = vrot.lane.b32.xlu0 %v1886, 127
    %v1896 = vpop.permute.xlu0 %1895
    %1897 = vrot.lane.b32.xlu0 %v1887, 127
    %v1898 = vpop.permute.xlu0 %1897
    %1899 = vrot.lane.b32.xlu0 %v1888, 127
    %v1900 = vpop.permute.xlu0 %1899
    %v1901 = vsel %vm319, %v1890, %v1892
    %v1902 = vsel %vm319, %v1892, %v1894
    %v1903 = vsel %vm319, %v1896, %v1898
    %v1904 = vsel %vm319, %v1898, %v1900
    %v1909 = vadd.f32 %v1865, %v1901
    %v1910 = vadd.f32 %v1866, %v1902
    %v1911 = vadd.f32 %v1867, %v1903
    %v1912 = vadd.f32 %v1868, %v1904
    %s1913 = sld [smem:[#allocation6 + $0x26]]
    %v1914 = vstv %s1913
    %v1915 = vmul.f32 %v1914, %v151
    %v1916 = vmul.f32 %v1914, %v152
    %v1917 = vmul.f32 %v1914, %v153
    %v1918 = vmul.f32 %v1914, %v154
    %v1919 = vmul.f32 %v1914, %v155
    %v1920 = vmul.f32 %v1914, %v156
    %1927 = vrot.lane.b32.xlu0 %v1915, 126
    %v1928 = vpop.permute.xlu0 %1927
    %1929 = vrot.lane.b32.xlu0 %v1916, 126
    %v1930 = vpop.permute.xlu0 %1929
    %1931 = vrot.lane.b32.xlu0 %v1917, 126
    %v1932 = vpop.permute.xlu0 %1931
    %1933 = vrot.lane.b32.xlu0 %v1918, 126
    %v1934 = vpop.permute.xlu0 %1933
    %1935 = vrot.lane.b32.xlu0 %v1919, 126
    %v1936 = vpop.permute.xlu0 %1935
    %1937 = vrot.lane.b32.xlu0 %v1920, 126
    %v1938 = vpop.permute.xlu0 %1937
    %v1939 = vsel %vm490, %v1928, %v1930
    %v1940 = vsel %vm490, %v1930, %v1932
    %v1941 = vsel %vm490, %v1934, %v1936
    %v1942 = vsel %vm490, %v1936, %v1938
    %v1947 = vadd.f32 %v1909, %v1939
    %v1948 = vadd.f32 %v1910, %v1940
    %v1949 = vadd.f32 %v1911, %v1941
    %v1950 = vadd.f32 %v1912, %v1942
    %s1951 = sld [smem:[#allocation6 + $0x2f]]
    %v1952 = vstv %s1951
    %v1953 = vmul.f32 %v1952, %v151
    %v1954 = vmul.f32 %v1952, %v152
    %v1955 = vmul.f32 %v1952, %v153
    %v1956 = vmul.f32 %v1952, %v154
    %v1957 = vmul.f32 %v1952, %v155
    %v1958 = vmul.f32 %v1952, %v156
    %v1965 = vrot.slane %v1953, 1
    %v1966 = vrot.slane %v1954, 1
    %v1967 = vrot.slane %v1955, 1
    %v1968 = vrot.slane %v1956, 1
    %v1969 = vrot.slane %v1957, 1
    %v1970 = vrot.slane %v1958, 1
    %1971 = vrot.lane.b32.xlu0 %v1965, 126
    %v1972 = vpop.permute.xlu0 %1971
    %1973 = vrot.lane.b32.xlu0 %v1966, 126
    %v1974 = vpop.permute.xlu0 %1973
    %1975 = vrot.lane.b32.xlu0 %v1967, 126
    %v1976 = vpop.permute.xlu0 %1975
    %1977 = vrot.lane.b32.xlu0 %v1968, 126
    %v1978 = vpop.permute.xlu0 %1977
    %1979 = vrot.lane.b32.xlu0 %v1969, 126
    %v1980 = vpop.permute.xlu0 %1979
    %1981 = vrot.lane.b32.xlu0 %v1970, 126
    %v1982 = vpop.permute.xlu0 %1981
    %v1983 = vsel %vm490, %v1972, %v1974
    %v1984 = vsel %vm490, %v1974, %v1976
    %v1985 = vsel %vm490, %v1978, %v1980
    %v1986 = vsel %vm490, %v1980, %v1982
    %v1991 = vadd.f32 %v1947, %v1983
    %v1992 = vadd.f32 %v1948, %v1984
    %v1993 = vadd.f32 %v1949, %v1985
    %v1994 = vadd.f32 %v1950, %v1986
    %s1995 = sld [smem:[#allocation6 + $0x38]]
    %v1996 = vstv %s1995
    %v1997 = vmul.f32 %v1996, %v151
    %v1998 = vmul.f32 %v1996, %v152
    %v1999 = vmul.f32 %v1996, %v153
    %v2000 = vmul.f32 %v1996, %v154
    %v2001 = vmul.f32 %v1996, %v155
    %v2002 = vmul.f32 %v1996, %v156
    %v2009 = vrot.slane %v1997, 2
    %v2010 = vrot.slane %v1998, 2
    %v2011 = vrot.slane %v1999, 2
    %v2012 = vrot.slane %v2000, 2
    %v2013 = vrot.slane %v2001, 2
    %v2014 = vrot.slane %v2002, 2
    %2015 = vrot.lane.b32.xlu0 %v2009, 126
    %v2016 = vpop.permute.xlu0 %2015
    %2017 = vrot.lane.b32.xlu0 %v2010, 126
    %v2018 = vpop.permute.xlu0 %2017
    %2019 = vrot.lane.b32.xlu0 %v2011, 126
    %v2020 = vpop.permute.xlu0 %2019
    %2021 = vrot.lane.b32.xlu0 %v2012, 126
    %v2022 = vpop.permute.xlu0 %2021
    %2023 = vrot.lane.b32.xlu0 %v2013, 126
    %v2024 = vpop.permute.xlu0 %2023
    %2025 = vrot.lane.b32.xlu0 %v2014, 126
    %v2026 = vpop.permute.xlu0 %2025
    %v2027 = vsel %vm490, %v2016, %v2018
    %v2028 = vsel %vm490, %v2018, %v2020
    %v2029 = vsel %vm490, %v2022, %v2024
    %v2030 = vsel %vm490, %v2024, %v2026
    %v2035 = vadd.f32 %v1991, %v2027
    %v2036 = vadd.f32 %v1992, %v2028
    %v2037 = vadd.f32 %v1993, %v2029
    %v2038 = vadd.f32 %v1994, %v2030
    %s2039 = sld [smem:[#allocation6 + $0x41]]
    %v2040 = vstv %s2039
    %v2041 = vmul.f32 %v2040, %v151
    %v2042 = vmul.f32 %v2040, %v152
    %v2043 = vmul.f32 %v2040, %v153
    %v2044 = vmul.f32 %v2040, %v154
    %v2045 = vmul.f32 %v2040, %v155
    %v2046 = vmul.f32 %v2040, %v156
    %v2053 = vrot.slane %v2041, 3
    %v2054 = vrot.slane %v2042, 3
    %v2055 = vrot.slane %v2043, 3
    %v2056 = vrot.slane %v2044, 3
    %v2057 = vrot.slane %v2045, 3
    %v2058 = vrot.slane %v2046, 3
    %2059 = vrot.lane.b32.xlu0 %v2053, 126
    %v2060 = vpop.permute.xlu0 %2059
    %2061 = vrot.lane.b32.xlu0 %v2054, 126
    %v2062 = vpop.permute.xlu0 %2061
    %2063 = vrot.lane.b32.xlu0 %v2055, 126
    %v2064 = vpop.permute.xlu0 %2063
    %2065 = vrot.lane.b32.xlu0 %v2056, 126
    %v2066 = vpop.permute.xlu0 %2065
    %2067 = vrot.lane.b32.xlu0 %v2057, 126
    %v2068 = vpop.permute.xlu0 %2067
    %2069 = vrot.lane.b32.xlu0 %v2058, 126
    %v2070 = vpop.permute.xlu0 %2069
    %v2071 = vsel %vm490, %v2060, %v2062
    %v2072 = vsel %vm490, %v2062, %v2064
    %v2073 = vsel %vm490, %v2066, %v2068
    %v2074 = vsel %vm490, %v2068, %v2070
    %v2079 = vadd.f32 %v2035, %v2071
    %v2080 = vadd.f32 %v2036, %v2072
    %v2081 = vadd.f32 %v2037, %v2073
    %v2082 = vadd.f32 %v2038, %v2074
    %s2083 = sld [smem:[#allocation6 + $0x27]]
    %v2084 = vstv %s2083
    %v2085 = vmul.f32 %v2084, %v166
    %v2086 = vmul.f32 %v2084, %v167
    %v2087 = vmul.f32 %v2084, %v168
    %v2088 = vmul.f32 %v2084, %v169
    %v2089 = vmul.f32 %v2084, %v170
    %v2090 = vmul.f32 %v2084, %v171
    %2097 = vrot.lane.b32.xlu0 %v2085, 112
    %v2098 = vpop.permute.xlu0 %2097
    %2099 = vrot.lane.b32.xlu0 %v2086, 112
    %v2100 = vpop.permute.xlu0 %2099
    %2101 = vrot.lane.b32.xlu0 %v2087, 112
    %v2102 = vpop.permute.xlu0 %2101
    %2103 = vrot.lane.b32.xlu0 %v2088, 112
    %v2104 = vpop.permute.xlu0 %2103
    %2105 = vrot.lane.b32.xlu0 %v2089, 112
    %v2106 = vpop.permute.xlu0 %2105
    %2107 = vrot.lane.b32.xlu0 %v2090, 112
    %v2108 = vpop.permute.xlu0 %2107
    %v2109 = vsel %vm661, %v2098, %v2100
    %v2110 = vsel %vm661, %v2100, %v2102
    %v2111 = vsel %vm661, %v2104, %v2106
    %v2112 = vsel %vm661, %v2106, %v2108
    %v2117 = vadd.f32 %v2079, %v2109
    %v2118 = vadd.f32 %v2080, %v2110
    %v2119 = vadd.f32 %v2081, %v2111
    %v2120 = vadd.f32 %v2082, %v2112
    %s2121 = sld [smem:[#allocation6 + $0x30]]
    %v2122 = vstv %s2121
    %v2123 = vmul.f32 %v2122, %v166
    %v2124 = vmul.f32 %v2122, %v167
    %v2125 = vmul.f32 %v2122, %v168
    %v2126 = vmul.f32 %v2122, %v169
    %v2127 = vmul.f32 %v2122, %v170
    %v2128 = vmul.f32 %v2122, %v171
    %v2135 = vrot.slane %v2123, 1
    %v2136 = vrot.slane %v2124, 1
    %v2137 = vrot.slane %v2125, 1
    %v2138 = vrot.slane %v2126, 1
    %v2139 = vrot.slane %v2127, 1
    %v2140 = vrot.slane %v2128, 1
    %2141 = vrot.lane.b32.xlu0 %v2135, 112
    %v2142 = vpop.permute.xlu0 %2141
    %2143 = vrot.lane.b32.xlu0 %v2136, 112
    %v2144 = vpop.permute.xlu0 %2143
    %2145 = vrot.lane.b32.xlu0 %v2137, 112
    %v2146 = vpop.permute.xlu0 %2145
    %2147 = vrot.lane.b32.xlu0 %v2138, 112
    %v2148 = vpop.permute.xlu0 %2147
    %2149 = vrot.lane.b32.xlu0 %v2139, 112
    %v2150 = vpop.permute.xlu0 %2149
    %2151 = vrot.lane.b32.xlu0 %v2140, 112
    %v2152 = vpop.permute.xlu0 %2151
    %v2153 = vsel %vm661, %v2142, %v2144
    %v2154 = vsel %vm661, %v2144, %v2146
    %v2155 = vsel %vm661, %v2148, %v2150
    %v2156 = vsel %vm661, %v2150, %v2152
    %v2161 = vadd.f32 %v2117, %v2153
    %v2162 = vadd.f32 %v2118, %v2154
    %v2163 = vadd.f32 %v2119, %v2155
    %v2164 = vadd.f32 %v2120, %v2156
    %s2165 = sld [smem:[#allocation6 + $0x39]]
    %v2166 = vstv %s2165
    %v2167 = vmul.f32 %v2166, %v166
    %v2168 = vmul.f32 %v2166, %v167
    %v2169 = vmul.f32 %v2166, %v168
    %v2170 = vmul.f32 %v2166, %v169
    %v2171 = vmul.f32 %v2166, %v170
    %v2172 = vmul.f32 %v2166, %v171
    %v2179 = vrot.slane %v2167, 2
    %v2180 = vrot.slane %v2168, 2
    %v2181 = vrot.slane %v2169, 2
    %v2182 = vrot.slane %v2170, 2
    %v2183 = vrot.slane %v2171, 2
    %v2184 = vrot.slane %v2172, 2
    %2185 = vrot.lane.b32.xlu0 %v2179, 112
    %v2186 = vpop.permute.xlu0 %2185
    %2187 = vrot.lane.b32.xlu0 %v2180, 112
    %v2188 = vpop.permute.xlu0 %2187
    %2189 = vrot.lane.b32.xlu0 %v2181, 112
    %v2190 = vpop.permute.xlu0 %2189
    %2191 = vrot.lane.b32.xlu0 %v2182, 112
    %v2192 = vpop.permute.xlu0 %2191
    %2193 = vrot.lane.b32.xlu0 %v2183, 112
    %v2194 = vpop.permute.xlu0 %2193
    %2195 = vrot.lane.b32.xlu0 %v2184, 112
    %v2196 = vpop.permute.xlu0 %2195
    %v2197 = vsel %vm661, %v2186, %v2188
    %v2198 = vsel %vm661, %v2188, %v2190
    %v2199 = vsel %vm661, %v2192, %v2194
    %v2200 = vsel %vm661, %v2194, %v2196
    %v2205 = vadd.f32 %v2161, %v2197
    %v2206 = vadd.f32 %v2162, %v2198
    %v2207 = vadd.f32 %v2163, %v2199
    %v2208 = vadd.f32 %v2164, %v2200
    %s2209 = sld [smem:[#allocation6 + $0x42]]
    %v2210 = vstv %s2209
    %v2211 = vmul.f32 %v2210, %v166
    %v2212 = vmul.f32 %v2210, %v167
    %v2213 = vmul.f32 %v2210, %v168
    %v2214 = vmul.f32 %v2210, %v169
    %v2215 = vmul.f32 %v2210, %v170
    %v2216 = vmul.f32 %v2210, %v171
    %v2223 = vrot.slane %v2211, 3
    %v2224 = vrot.slane %v2212, 3
    %v2225 = vrot.slane %v2213, 3
    %v2226 = vrot.slane %v2214, 3
    %v2227 = vrot.slane %v2215, 3
    %v2228 = vrot.slane %v2216, 3
    %2229 = vrot.lane.b32.xlu0 %v2223, 112
    %v2230 = vpop.permute.xlu0 %2229
    %2231 = vrot.lane.b32.xlu0 %v2224, 112
    %v2232 = vpop.permute.xlu0 %2231
    %2233 = vrot.lane.b32.xlu0 %v2225, 112
    %v2234 = vpop.permute.xlu0 %2233
    %2235 = vrot.lane.b32.xlu0 %v2226, 112
    %v2236 = vpop.permute.xlu0 %2235
    %2237 = vrot.lane.b32.xlu0 %v2227, 112
    %v2238 = vpop.permute.xlu0 %2237
    %2239 = vrot.lane.b32.xlu0 %v2228, 112
    %v2240 = vpop.permute.xlu0 %2239
    %v2241 = vsel %vm661, %v2230, %v2232
    %v2242 = vsel %vm661, %v2232, %v2234
    %v2243 = vsel %vm661, %v2236, %v2238
    %v2244 = vsel %vm661, %v2238, %v2240
    %v2249 = vadd.f32 %v2205, %v2241
    %v2250 = vadd.f32 %v2206, %v2242
    %v2251 = vadd.f32 %v2207, %v2243
    %v2252 = vadd.f32 %v2208, %v2244
    %s2253 = sld [smem:[#allocation6 + $0x28]]
    %v2254 = vstv %s2253
    %v2255 = vmul.f32 %v2254, %v114
    %v2256 = vmul.f32 %v2254, %v106
    %v2257 = vmul.f32 %v2254, %v116
    %v2258 = vmul.f32 %v2254, %v115
    %v2259 = vmul.f32 %v2254, %v107
    %v2260 = vmul.f32 %v2254, %v117
    %2267 = vrot.lane.b32.xlu0 %v2255, 111
    %v2268 = vpop.permute.xlu0 %2267
    %2269 = vrot.lane.b32.xlu0 %v2256, 111
    %v2270 = vpop.permute.xlu0 %2269
    %2271 = vrot.lane.b32.xlu0 %v2257, 111
    %v2272 = vpop.permute.xlu0 %2271
    %2273 = vrot.lane.b32.xlu0 %v2258, 111
    %v2274 = vpop.permute.xlu0 %2273
    %2275 = vrot.lane.b32.xlu0 %v2259, 111
    %v2276 = vpop.permute.xlu0 %2275
    %2277 = vrot.lane.b32.xlu0 %v2260, 111
    %v2278 = vpop.permute.xlu0 %2277
    %v2279 = vsel %vm832, %v2268, %v2270
    %v2280 = vsel %vm832, %v2270, %v2272
    %v2281 = vsel %vm832, %v2274, %v2276
    %v2282 = vsel %vm832, %v2276, %v2278
    %v2287 = vadd.f32 %v2249, %v2279
    %v2288 = vadd.f32 %v2250, %v2280
    %v2289 = vadd.f32 %v2251, %v2281
    %v2290 = vadd.f32 %v2252, %v2282
    %s2291 = sld [smem:[#allocation6 + $0x31]]
    %v2292 = vstv %s2291
    %v2293 = vmul.f32 %v2292, %v114
    %v2294 = vmul.f32 %v2292, %v106
    %v2295 = vmul.f32 %v2292, %v116
    %v2296 = vmul.f32 %v2292, %v115
    %v2297 = vmul.f32 %v2292, %v107
    %v2298 = vmul.f32 %v2292, %v117
    %v2305 = vrot.slane %v2293, 1
    %v2306 = vrot.slane %v2294, 1
    %v2307 = vrot.slane %v2295, 1
    %v2308 = vrot.slane %v2296, 1
    %v2309 = vrot.slane %v2297, 1
    %v2310 = vrot.slane %v2298, 1
    %2311 = vrot.lane.b32.xlu0 %v2305, 111
    %v2312 = vpop.permute.xlu0 %2311
    %2313 = vrot.lane.b32.xlu0 %v2306, 111
    %v2314 = vpop.permute.xlu0 %2313
    %2315 = vrot.lane.b32.xlu0 %v2307, 111
    %v2316 = vpop.permute.xlu0 %2315
    %2317 = vrot.lane.b32.xlu0 %v2308, 111
    %v2318 = vpop.permute.xlu0 %2317
    %2319 = vrot.lane.b32.xlu0 %v2309, 111
    %v2320 = vpop.permute.xlu0 %2319
    %2321 = vrot.lane.b32.xlu0 %v2310, 111
    %v2322 = vpop.permute.xlu0 %2321
    %v2323 = vsel %vm832, %v2312, %v2314
    %v2324 = vsel %vm832, %v2314, %v2316
    %v2325 = vsel %vm832, %v2318, %v2320
    %v2326 = vsel %vm832, %v2320, %v2322
    %v2331 = vadd.f32 %v2287, %v2323
    %v2332 = vadd.f32 %v2288, %v2324
    %v2333 = vadd.f32 %v2289, %v2325
    %v2334 = vadd.f32 %v2290, %v2326
    %s2335 = sld [smem:[#allocation6 + $0x3a]]
    %v2336 = vstv %s2335
    %v2337 = vmul.f32 %v2336, %v114
    %v2338 = vmul.f32 %v2336, %v106
    %v2339 = vmul.f32 %v2336, %v116
    %v2340 = vmul.f32 %v2336, %v115
    %v2341 = vmul.f32 %v2336, %v107
    %v2342 = vmul.f32 %v2336, %v117
    %v2349 = vrot.slane %v2337, 2
    %v2350 = vrot.slane %v2338, 2
    %v2351 = vrot.slane %v2339, 2
    %v2352 = vrot.slane %v2340, 2
    %v2353 = vrot.slane %v2341, 2
    %v2354 = vrot.slane %v2342, 2
    %2355 = vrot.lane.b32.xlu0 %v2349, 111
    %v2356 = vpop.permute.xlu0 %2355
    %2357 = vrot.lane.b32.xlu0 %v2350, 111
    %v2358 = vpop.permute.xlu0 %2357
    %2359 = vrot.lane.b32.xlu0 %v2351, 111
    %v2360 = vpop.permute.xlu0 %2359
    %2361 = vrot.lane.b32.xlu0 %v2352, 111
    %v2362 = vpop.permute.xlu0 %2361
    %2363 = vrot.lane.b32.xlu0 %v2353, 111
    %v2364 = vpop.permute.xlu0 %2363
    %2365 = vrot.lane.b32.xlu0 %v2354, 111
    %v2366 = vpop.permute.xlu0 %2365
    %v2367 = vsel %vm832, %v2356, %v2358
    %v2368 = vsel %vm832, %v2358, %v2360
    %v2369 = vsel %vm832, %v2362, %v2364
    %v2370 = vsel %vm832, %v2364, %v2366
    %v2375 = vadd.f32 %v2331, %v2367
    %v2376 = vadd.f32 %v2332, %v2368
    %v2377 = vadd.f32 %v2333, %v2369
    %v2378 = vadd.f32 %v2334, %v2370
    %s2379 = sld [smem:[#allocation6 + $0x43]]
    %v2380 = vstv %s2379
    %v2381 = vmul.f32 %v2380, %v114
    %v2382 = vmul.f32 %v2380, %v106
    %v2383 = vmul.f32 %v2380, %v116
    %v2384 = vmul.f32 %v2380, %v115
    %v2385 = vmul.f32 %v2380, %v107
    %v2386 = vmul.f32 %v2380, %v117
    %v2393 = vrot.slane %v2381, 3
    %v2394 = vrot.slane %v2382, 3
    %v2395 = vrot.slane %v2383, 3
    %v2396 = vrot.slane %v2384, 3
    %v2397 = vrot.slane %v2385, 3
    %v2398 = vrot.slane %v2386, 3
    %2399 = vrot.lane.b32.xlu0 %v2393, 111
    %v2400 = vpop.permute.xlu0 %2399
    %2401 = vrot.lane.b32.xlu0 %v2394, 111
    %v2402 = vpop.permute.xlu0 %2401
    %2403 = vrot.lane.b32.xlu0 %v2395, 111
    %v2404 = vpop.permute.xlu0 %2403
    %2405 = vrot.lane.b32.xlu0 %v2396, 111
    %v2406 = vpop.permute.xlu0 %2405
    %2407 = vrot.lane.b32.xlu0 %v2397, 111
    %v2408 = vpop.permute.xlu0 %2407
    %2409 = vrot.lane.b32.xlu0 %v2398, 111
    %v2410 = vpop.permute.xlu0 %2409
    %v2411 = vsel %vm832, %v2400, %v2402
    %v2412 = vsel %vm832, %v2402, %v2404
    %v2413 = vsel %vm832, %v2406, %v2408
    %v2414 = vsel %vm832, %v2408, %v2410
    %v2419 = vadd.f32 %v2375, %v2411
    %v2420 = vadd.f32 %v2376, %v2412
    %v2421 = vadd.f32 %v2377, %v2413
    %v2422 = vadd.f32 %v2378, %v2414
    %s2423 = sld [smem:[#allocation6 + $0x29]]
    %v2424 = vstv %s2423
    %v2425 = vmul.f32 %v2424, %v181
    %v2426 = vmul.f32 %v2424, %v182
    %v2427 = vmul.f32 %v2424, %v183
    %v2428 = vmul.f32 %v2424, %v184
    %v2429 = vmul.f32 %v2424, %v185
    %v2430 = vmul.f32 %v2424, %v186
    %2437 = vrot.lane.b32.xlu0 %v2425, 110
    %v2438 = vpop.permute.xlu0 %2437
    %2439 = vrot.lane.b32.xlu0 %v2426, 110
    %v2440 = vpop.permute.xlu0 %2439
    %2441 = vrot.lane.b32.xlu0 %v2427, 110
    %v2442 = vpop.permute.xlu0 %2441
    %2443 = vrot.lane.b32.xlu0 %v2428, 110
    %v2444 = vpop.permute.xlu0 %2443
    %2445 = vrot.lane.b32.xlu0 %v2429, 110
    %v2446 = vpop.permute.xlu0 %2445
    %2447 = vrot.lane.b32.xlu0 %v2430, 110
    %v2448 = vpop.permute.xlu0 %2447
    %v2449 = vsel %vm1003, %v2438, %v2440
    %v2450 = vsel %vm1003, %v2440, %v2442
    %v2451 = vsel %vm1003, %v2444, %v2446
    %v2452 = vsel %vm1003, %v2446, %v2448
    %v2457 = vadd.f32 %v2419, %v2449
    %v2458 = vadd.f32 %v2420, %v2450
    %v2459 = vadd.f32 %v2421, %v2451
    %v2460 = vadd.f32 %v2422, %v2452
    %s2461 = sld [smem:[#allocation6 + $0x32]]
    %v2462 = vstv %s2461
    %v2463 = vmul.f32 %v2462, %v181
    %v2464 = vmul.f32 %v2462, %v182
    %v2465 = vmul.f32 %v2462, %v183
    %v2466 = vmul.f32 %v2462, %v184
    %v2467 = vmul.f32 %v2462, %v185
    %v2468 = vmul.f32 %v2462, %v186
    %v2475 = vrot.slane %v2463, 1
    %v2476 = vrot.slane %v2464, 1
    %v2477 = vrot.slane %v2465, 1
    %v2478 = vrot.slane %v2466, 1
    %v2479 = vrot.slane %v2467, 1
    %v2480 = vrot.slane %v2468, 1
    %2481 = vrot.lane.b32.xlu0 %v2475, 110
    %v2482 = vpop.permute.xlu0 %2481
    %2483 = vrot.lane.b32.xlu0 %v2476, 110
    %v2484 = vpop.permute.xlu0 %2483
    %2485 = vrot.lane.b32.xlu0 %v2477, 110
    %v2486 = vpop.permute.xlu0 %2485
    %2487 = vrot.lane.b32.xlu0 %v2478, 110
    %v2488 = vpop.permute.xlu0 %2487
    %2489 = vrot.lane.b32.xlu0 %v2479, 110
    %v2490 = vpop.permute.xlu0 %2489
    %2491 = vrot.lane.b32.xlu0 %v2480, 110
    %v2492 = vpop.permute.xlu0 %2491
    %v2493 = vsel %vm1003, %v2482, %v2484
    %v2494 = vsel %vm1003, %v2484, %v2486
    %v2495 = vsel %vm1003, %v2488, %v2490
    %v2496 = vsel %vm1003, %v2490, %v2492
    %v2501 = vadd.f32 %v2457, %v2493
    %v2502 = vadd.f32 %v2458, %v2494
    %v2503 = vadd.f32 %v2459, %v2495
    %v2504 = vadd.f32 %v2460, %v2496
    %s2505 = sld [smem:[#allocation6 + $0x3b]]
    %v2506 = vstv %s2505
    %v2507 = vmul.f32 %v2506, %v181
    %v2508 = vmul.f32 %v2506, %v182
    %v2509 = vmul.f32 %v2506, %v183
    %v2510 = vmul.f32 %v2506, %v184
    %v2511 = vmul.f32 %v2506, %v185
    %v2512 = vmul.f32 %v2506, %v186
    %v2519 = vrot.slane %v2507, 2
    %v2520 = vrot.slane %v2508, 2
    %v2521 = vrot.slane %v2509, 2
    %v2522 = vrot.slane %v2510, 2
    %v2523 = vrot.slane %v2511, 2
    %v2524 = vrot.slane %v2512, 2
    %2525 = vrot.lane.b32.xlu0 %v2519, 110
    %v2526 = vpop.permute.xlu0 %2525
    %2527 = vrot.lane.b32.xlu0 %v2520, 110
    %v2528 = vpop.permute.xlu0 %2527
    %2529 = vrot.lane.b32.xlu0 %v2521, 110
    %v2530 = vpop.permute.xlu0 %2529
    %2531 = vrot.lane.b32.xlu0 %v2522, 110
    %v2532 = vpop.permute.xlu0 %2531
    %2533 = vrot.lane.b32.xlu0 %v2523, 110
    %v2534 = vpop.permute.xlu0 %2533
    %2535 = vrot.lane.b32.xlu0 %v2524, 110
    %v2536 = vpop.permute.xlu0 %2535
    %v2537 = vsel %vm1003, %v2526, %v2528
    %v2538 = vsel %vm1003, %v2528, %v2530
    %v2539 = vsel %vm1003, %v2532, %v2534
    %v2540 = vsel %vm1003, %v2534, %v2536
    %v2545 = vadd.f32 %v2501, %v2537
    %v2546 = vadd.f32 %v2502, %v2538
    %v2547 = vadd.f32 %v2503, %v2539
    %v2548 = vadd.f32 %v2504, %v2540
    %s2549 = sld [smem:[#allocation6 + $0x44]]
    %v2550 = vstv %s2549
    %v2551 = vmul.f32 %v2550, %v181
    %v2552 = vmul.f32 %v2550, %v182
    %v2553 = vmul.f32 %v2550, %v183
    %v2554 = vmul.f32 %v2550, %v184
    %v2555 = vmul.f32 %v2550, %v185
    %v2556 = vmul.f32 %v2550, %v186
    %v2563 = vrot.slane %v2551, 3
    %v2564 = vrot.slane %v2552, 3
    %v2565 = vrot.slane %v2553, 3
    %v2566 = vrot.slane %v2554, 3
    %v2567 = vrot.slane %v2555, 3
    %v2568 = vrot.slane %v2556, 3
    %2569 = vrot.lane.b32.xlu0 %v2563, 110
    %v2570 = vpop.permute.xlu0 %2569
    %2571 = vrot.lane.b32.xlu0 %v2564, 110
    %v2572 = vpop.permute.xlu0 %2571
    %2573 = vrot.lane.b32.xlu0 %v2565, 110
    %v2574 = vpop.permute.xlu0 %2573
    %2575 = vrot.lane.b32.xlu0 %v2566, 110
    %v2576 = vpop.permute.xlu0 %2575
    %2577 = vrot.lane.b32.xlu0 %v2567, 110
    %v2578 = vpop.permute.xlu0 %2577
    %2579 = vrot.lane.b32.xlu0 %v2568, 110
    %v2580 = vpop.permute.xlu0 %2579
    %v2581 = vsel %vm1003, %v2570, %v2572
    %v2582 = vsel %vm1003, %v2572, %v2574
    %v2583 = vsel %vm1003, %v2576, %v2578
    %v2584 = vsel %vm1003, %v2578, %v2580
    %v2589 = vadd.f32 %v2545, %v2581
    %v2590 = vadd.f32 %v2546, %v2582
    %v2591 = vadd.f32 %v2547, %v2583
    %v2592 = vadd.f32 %v2548, %v2584
    %s2593 = sld [smem:[#allocation6 + $0x2a]]
    %v2594 = vstv %s2593
    %v2595 = vmul.f32 %v2594, %v196
    %v2596 = vmul.f32 %v2594, %v197
    %v2597 = vmul.f32 %v2594, %v198
    %v2598 = vmul.f32 %v2594, %v199
    %v2599 = vmul.f32 %v2594, %v200
    %v2600 = vmul.f32 %v2594, %v201
    %2607 = vrot.lane.b32.xlu0 %v2595, 96
    %v2608 = vpop.permute.xlu0 %2607
    %2609 = vrot.lane.b32.xlu0 %v2596, 96
    %v2610 = vpop.permute.xlu0 %2609
    %2611 = vrot.lane.b32.xlu0 %v2597, 96
    %v2612 = vpop.permute.xlu0 %2611
    %2613 = vrot.lane.b32.xlu0 %v2598, 96
    %v2614 = vpop.permute.xlu0 %2613
    %2615 = vrot.lane.b32.xlu0 %v2599, 96
    %v2616 = vpop.permute.xlu0 %2615
    %2617 = vrot.lane.b32.xlu0 %v2600, 96
    %v2618 = vpop.permute.xlu0 %2617
    %v2619 = vsel %vm1174, %v2608, %v2610
    %v2620 = vsel %vm1174, %v2610, %v2612
    %v2621 = vsel %vm1174, %v2614, %v2616
    %v2622 = vsel %vm1174, %v2616, %v2618
    %v2627 = vadd.f32 %v2589, %v2619
    %v2628 = vadd.f32 %v2590, %v2620
    %v2629 = vadd.f32 %v2591, %v2621
    %v2630 = vadd.f32 %v2592, %v2622
    %s2631 = sld [smem:[#allocation6 + $0x33]]
    %v2632 = vstv %s2631
    %v2633 = vmul.f32 %v2632, %v196
    %v2634 = vmul.f32 %v2632, %v197
    %v2635 = vmul.f32 %v2632, %v198
    %v2636 = vmul.f32 %v2632, %v199
    %v2637 = vmul.f32 %v2632, %v200
    %v2638 = vmul.f32 %v2632, %v201
    %v2645 = vrot.slane %v2633, 1
    %v2646 = vrot.slane %v2634, 1
    %v2647 = vrot.slane %v2635, 1
    %v2648 = vrot.slane %v2636, 1
    %v2649 = vrot.slane %v2637, 1
    %v2650 = vrot.slane %v2638, 1
    %2651 = vrot.lane.b32.xlu0 %v2645, 96
    %v2652 = vpop.permute.xlu0 %2651
    %2653 = vrot.lane.b32.xlu0 %v2646, 96
    %v2654 = vpop.permute.xlu0 %2653
    %2655 = vrot.lane.b32.xlu0 %v2647, 96
    %v2656 = vpop.permute.xlu0 %2655
    %2657 = vrot.lane.b32.xlu0 %v2648, 96
    %v2658 = vpop.permute.xlu0 %2657
    %2659 = vrot.lane.b32.xlu0 %v2649, 96
    %v2660 = vpop.permute.xlu0 %2659
    %2661 = vrot.lane.b32.xlu0 %v2650, 96
    %v2662 = vpop.permute.xlu0 %2661
    %v2663 = vsel %vm1174, %v2652, %v2654
    %v2664 = vsel %vm1174, %v2654, %v2656
    %v2665 = vsel %vm1174, %v2658, %v2660
    %v2666 = vsel %vm1174, %v2660, %v2662
    %v2671 = vadd.f32 %v2627, %v2663
    %v2672 = vadd.f32 %v2628, %v2664
    %v2673 = vadd.f32 %v2629, %v2665
    %v2674 = vadd.f32 %v2630, %v2666
    %s2675 = sld [smem:[#allocation6 + $0x3c]]
    %v2676 = vstv %s2675
    %v2677 = vmul.f32 %v2676, %v196
    %v2678 = vmul.f32 %v2676, %v197
    %v2679 = vmul.f32 %v2676, %v198
    %v2680 = vmul.f32 %v2676, %v199
    %v2681 = vmul.f32 %v2676, %v200
    %v2682 = vmul.f32 %v2676, %v201
    %v2689 = vrot.slane %v2677, 2
    %v2690 = vrot.slane %v2678, 2
    %v2691 = vrot.slane %v2679, 2
    %v2692 = vrot.slane %v2680, 2
    %v2693 = vrot.slane %v2681, 2
    %v2694 = vrot.slane %v2682, 2
    %2695 = vrot.lane.b32.xlu0 %v2689, 96
    %v2696 = vpop.permute.xlu0 %2695
    %2697 = vrot.lane.b32.xlu0 %v2690, 96
    %v2698 = vpop.permute.xlu0 %2697
    %2699 = vrot.lane.b32.xlu0 %v2691, 96
    %v2700 = vpop.permute.xlu0 %2699
    %2701 = vrot.lane.b32.xlu0 %v2692, 96
    %v2702 = vpop.permute.xlu0 %2701
    %2703 = vrot.lane.b32.xlu0 %v2693, 96
    %v2704 = vpop.permute.xlu0 %2703
    %2705 = vrot.lane.b32.xlu0 %v2694, 96
    %v2706 = vpop.permute.xlu0 %2705
    %v2707 = vsel %vm1174, %v2696, %v2698
    %v2708 = vsel %vm1174, %v2698, %v2700
    %v2709 = vsel %vm1174, %v2702, %v2704
    %v2710 = vsel %vm1174, %v2704, %v2706
    %v2715 = vadd.f32 %v2671, %v2707
    %v2716 = vadd.f32 %v2672, %v2708
    %v2717 = vadd.f32 %v2673, %v2709
    %v2718 = vadd.f32 %v2674, %v2710
    %s2719 = sld [smem:[#allocation6 + $0x45]]
    %v2720 = vstv %s2719
    %v2721 = vmul.f32 %v2720, %v196
    %v2722 = vmul.f32 %v2720, %v197
    %v2723 = vmul.f32 %v2720, %v198
    %v2724 = vmul.f32 %v2720, %v199
    %v2725 = vmul.f32 %v2720, %v200
    %v2726 = vmul.f32 %v2720, %v201
    %v2733 = vrot.slane %v2721, 3
    %v2734 = vrot.slane %v2722, 3
    %v2735 = vrot.slane %v2723, 3
    %v2736 = vrot.slane %v2724, 3
    %v2737 = vrot.slane %v2725, 3
    %v2738 = vrot.slane %v2726, 3
    %2739 = vrot.lane.b32.xlu0 %v2733, 96
    %v2740 = vpop.permute.xlu0 %2739
    %2741 = vrot.lane.b32.xlu0 %v2734, 96
    %v2742 = vpop.permute.xlu0 %2741
    %2743 = vrot.lane.b32.xlu0 %v2735, 96
    %v2744 = vpop.permute.xlu0 %2743
    %2745 = vrot.lane.b32.xlu0 %v2736, 96
    %v2746 = vpop.permute.xlu0 %2745
    %2747 = vrot.lane.b32.xlu0 %v2737, 96
    %v2748 = vpop.permute.xlu0 %2747
    %2749 = vrot.lane.b32.xlu0 %v2738, 96
    %v2750 = vpop.permute.xlu0 %2749
    %v2751 = vsel %vm1174, %v2740, %v2742
    %v2752 = vsel %vm1174, %v2742, %v2744
    %v2753 = vsel %vm1174, %v2746, %v2748
    %v2754 = vsel %vm1174, %v2748, %v2750
    %v2759 = vadd.f32 %v2715, %v2751
    %v2760 = vadd.f32 %v2716, %v2752
    %v2761 = vadd.f32 %v2717, %v2753
    %v2762 = vadd.f32 %v2718, %v2754
    %s2763 = sld [smem:[#allocation6 + $0x2b]]
    %v2764 = vstv %s2763
    %v2765 = vmul.f32 %v2764, %v114
    %v2766 = vmul.f32 %v2764, %v106
    %v2767 = vmul.f32 %v2764, %v116
    %v2768 = vmul.f32 %v2764, %v115
    %v2769 = vmul.f32 %v2764, %v107
    %v2770 = vmul.f32 %v2764, %v117
    %2777 = vrot.lane.b32.xlu0 %v2765, 95
    %v2778 = vpop.permute.xlu0 %2777
    %2779 = vrot.lane.b32.xlu0 %v2766, 95
    %v2780 = vpop.permute.xlu0 %2779
    %2781 = vrot.lane.b32.xlu0 %v2767, 95
    %v2782 = vpop.permute.xlu0 %2781
    %2783 = vrot.lane.b32.xlu0 %v2768, 95
    %v2784 = vpop.permute.xlu0 %2783
    %2785 = vrot.lane.b32.xlu0 %v2769, 95
    %v2786 = vpop.permute.xlu0 %2785
    %2787 = vrot.lane.b32.xlu0 %v2770, 95
    %v2788 = vpop.permute.xlu0 %2787
    %v2789 = vsel %vm1345, %v2778, %v2780
    %v2790 = vsel %vm1345, %v2780, %v2782
    %v2791 = vsel %vm1345, %v2784, %v2786
    %v2792 = vsel %vm1345, %v2786, %v2788
    %v2797 = vadd.f32 %v2759, %v2789
    %v2798 = vadd.f32 %v2760, %v2790
    %v2799 = vadd.f32 %v2761, %v2791
    %v2800 = vadd.f32 %v2762, %v2792
    %s2801 = sld [smem:[#allocation6 + $0x34]]
    %v2802 = vstv %s2801
    %v2803 = vmul.f32 %v2802, %v114
    %v2804 = vmul.f32 %v2802, %v106
    %v2805 = vmul.f32 %v2802, %v116
    %v2806 = vmul.f32 %v2802, %v115
    %v2807 = vmul.f32 %v2802, %v107
    %v2808 = vmul.f32 %v2802, %v117
    %v2815 = vrot.slane %v2803, 1
    %v2816 = vrot.slane %v2804, 1
    %v2817 = vrot.slane %v2805, 1
    %v2818 = vrot.slane %v2806, 1
    %v2819 = vrot.slane %v2807, 1
    %v2820 = vrot.slane %v2808, 1
    %2821 = vrot.lane.b32.xlu0 %v2815, 95
    %v2822 = vpop.permute.xlu0 %2821
    %2823 = vrot.lane.b32.xlu0 %v2816, 95
    %v2824 = vpop.permute.xlu0 %2823
    %2825 = vrot.lane.b32.xlu0 %v2817, 95
    %v2826 = vpop.permute.xlu0 %2825
    %2827 = vrot.lane.b32.xlu0 %v2818, 95
    %v2828 = vpop.permute.xlu0 %2827
    %2829 = vrot.lane.b32.xlu0 %v2819, 95
    %v2830 = vpop.permute.xlu0 %2829
    %2831 = vrot.lane.b32.xlu0 %v2820, 95
    %v2832 = vpop.permute.xlu0 %2831
    %v2833 = vsel %vm1345, %v2822, %v2824
    %v2834 = vsel %vm1345, %v2824, %v2826
    %v2835 = vsel %vm1345, %v2828, %v2830
    %v2836 = vsel %vm1345, %v2830, %v2832
    %v2841 = vadd.f32 %v2797, %v2833
    %v2842 = vadd.f32 %v2798, %v2834
    %v2843 = vadd.f32 %v2799, %v2835
    %v2844 = vadd.f32 %v2800, %v2836
    %s2845 = sld [smem:[#allocation6 + $0x3d]]
    %v2846 = vstv %s2845
    %v2847 = vmul.f32 %v2846, %v114
    %v2848 = vmul.f32 %v2846, %v106
    %v2849 = vmul.f32 %v2846, %v116
    %v2850 = vmul.f32 %v2846, %v115
    %v2851 = vmul.f32 %v2846, %v107
    %v2852 = vmul.f32 %v2846, %v117
    %v2859 = vrot.slane %v2847, 2
    %v2860 = vrot.slane %v2848, 2
    %v2861 = vrot.slane %v2849, 2
    %v2862 = vrot.slane %v2850, 2
    %v2863 = vrot.slane %v2851, 2
    %v2864 = vrot.slane %v2852, 2
    %2865 = vrot.lane.b32.xlu0 %v2859, 95
    %v2866 = vpop.permute.xlu0 %2865
    %2867 = vrot.lane.b32.xlu0 %v2860, 95
    %v2868 = vpop.permute.xlu0 %2867
    %2869 = vrot.lane.b32.xlu0 %v2861, 95
    %v2870 = vpop.permute.xlu0 %2869
    %2871 = vrot.lane.b32.xlu0 %v2862, 95
    %v2872 = vpop.permute.xlu0 %2871
    %2873 = vrot.lane.b32.xlu0 %v2863, 95
    %v2874 = vpop.permute.xlu0 %2873
    %2875 = vrot.lane.b32.xlu0 %v2864, 95
    %v2876 = vpop.permute.xlu0 %2875
    %v2877 = vsel %vm1345, %v2866, %v2868
    %v2878 = vsel %vm1345, %v2868, %v2870
    %v2879 = vsel %vm1345, %v2872, %v2874
    %v2880 = vsel %vm1345, %v2874, %v2876
    %v2885 = vadd.f32 %v2841, %v2877
    %v2886 = vadd.f32 %v2842, %v2878
    %v2887 = vadd.f32 %v2843, %v2879
    %v2888 = vadd.f32 %v2844, %v2880
    %s2889 = sld [smem:[#allocation6 + $0x46]]
    %v2890 = vstv %s2889
    %v2891 = vmul.f32 %v2890, %v114
    %v2892 = vmul.f32 %v2890, %v106
    %v2893 = vmul.f32 %v2890, %v116
    %v2894 = vmul.f32 %v2890, %v115
    %v2895 = vmul.f32 %v2890, %v107
    %v2896 = vmul.f32 %v2890, %v117
    %v2903 = vrot.slane %v2891, 3
    %v2904 = vrot.slane %v2892, 3
    %v2905 = vrot.slane %v2893, 3
    %v2906 = vrot.slane %v2894, 3
    %v2907 = vrot.slane %v2895, 3
    %v2908 = vrot.slane %v2896, 3
    %2909 = vrot.lane.b32.xlu0 %v2903, 95
    %v2910 = vpop.permute.xlu0 %2909
    %2911 = vrot.lane.b32.xlu0 %v2904, 95
    %v2912 = vpop.permute.xlu0 %2911
    %2913 = vrot.lane.b32.xlu0 %v2905, 95
    %v2914 = vpop.permute.xlu0 %2913
    %2915 = vrot.lane.b32.xlu0 %v2906, 95
    %v2916 = vpop.permute.xlu0 %2915
    %2917 = vrot.lane.b32.xlu0 %v2907, 95
    %v2918 = vpop.permute.xlu0 %2917
    %2919 = vrot.lane.b32.xlu0 %v2908, 95
    %v2920 = vpop.permute.xlu0 %2919
    %v2921 = vsel %vm1345, %v2910, %v2912
    %v2922 = vsel %vm1345, %v2912, %v2914
    %v2923 = vsel %vm1345, %v2916, %v2918
    %v2924 = vsel %vm1345, %v2918, %v2920
    %v2929 = vadd.f32 %v2885, %v2921
    %v2930 = vadd.f32 %v2886, %v2922
    %v2931 = vadd.f32 %v2887, %v2923
    %v2932 = vadd.f32 %v2888, %v2924
    %s2933 = sld [smem:[#allocation6 + $0x2c]]
    %v2934 = vstv %s2933
    %v2935 = vmul.f32 %v2934, %v211
    %v2936 = vmul.f32 %v2934, %v212
    %v2937 = vmul.f32 %v2934, %v213
    %v2938 = vmul.f32 %v2934, %v214
    %v2939 = vmul.f32 %v2934, %v215
    %v2940 = vmul.f32 %v2934, %v216
    %2947 = vrot.lane.b32.xlu0 %v2935, 94
    %v2948 = vpop.permute.xlu0 %2947
    %2949 = vrot.lane.b32.xlu0 %v2936, 94
    %v2950 = vpop.permute.xlu0 %2949
    %2951 = vrot.lane.b32.xlu0 %v2937, 94
    %v2952 = vpop.permute.xlu0 %2951
    %2953 = vrot.lane.b32.xlu0 %v2938, 94
    %v2954 = vpop.permute.xlu0 %2953
    %2955 = vrot.lane.b32.xlu0 %v2939, 94
    %v2956 = vpop.permute.xlu0 %2955
    %2957 = vrot.lane.b32.xlu0 %v2940, 94
    %v2958 = vpop.permute.xlu0 %2957
    %v2959 = vsel %vm1516, %v2948, %v2950
    %v2960 = vsel %vm1516, %v2950, %v2952
    %v2961 = vsel %vm1516, %v2954, %v2956
    %v2962 = vsel %vm1516, %v2956, %v2958
    %v2967 = vadd.f32 %v2929, %v2959
    %v2968 = vadd.f32 %v2930, %v2960
    %v2969 = vadd.f32 %v2931, %v2961
    %v2970 = vadd.f32 %v2932, %v2962
    %s2971 = sld [smem:[#allocation6 + $0x35]]
    %v2972 = vstv %s2971
    %v2973 = vmul.f32 %v2972, %v211
    %v2974 = vmul.f32 %v2972, %v212
    %v2975 = vmul.f32 %v2972, %v213
    %v2976 = vmul.f32 %v2972, %v214
    %v2977 = vmul.f32 %v2972, %v215
    %v2978 = vmul.f32 %v2972, %v216
    %v2985 = vrot.slane %v2973, 1
    %v2986 = vrot.slane %v2974, 1
    %v2987 = vrot.slane %v2975, 1
    %v2988 = vrot.slane %v2976, 1
    %v2989 = vrot.slane %v2977, 1
    %v2990 = vrot.slane %v2978, 1
    %2991 = vrot.lane.b32.xlu0 %v2985, 94
    %v2992 = vpop.permute.xlu0 %2991
    %2993 = vrot.lane.b32.xlu0 %v2986, 94
    %v2994 = vpop.permute.xlu0 %2993
    %2995 = vrot.lane.b32.xlu0 %v2987, 94
    %v2996 = vpop.permute.xlu0 %2995
    %2997 = vrot.lane.b32.xlu0 %v2988, 94
    %v2998 = vpop.permute.xlu0 %2997
    %2999 = vrot.lane.b32.xlu0 %v2989, 94
    %v3000 = vpop.permute.xlu0 %2999
    %3001 = vrot.lane.b32.xlu0 %v2990, 94
    %v3002 = vpop.permute.xlu0 %3001
    %v3003 = vsel %vm1516, %v2992, %v2994
    %v3004 = vsel %vm1516, %v2994, %v2996
    %v3005 = vsel %vm1516, %v2998, %v3000
    %v3006 = vsel %vm1516, %v3000, %v3002
    %v3011 = vadd.f32 %v2967, %v3003
    %v3012 = vadd.f32 %v2968, %v3004
    %v3013 = vadd.f32 %v2969, %v3005
    %v3014 = vadd.f32 %v2970, %v3006
    %s3015 = sld [smem:[#allocation6 + $0x3e]]
    %v3016 = vstv %s3015
    %v3017 = vmul.f32 %v3016, %v211
    %v3018 = vmul.f32 %v3016, %v212
    %v3019 = vmul.f32 %v3016, %v213
    %v3020 = vmul.f32 %v3016, %v214
    %v3021 = vmul.f32 %v3016, %v215
    %v3022 = vmul.f32 %v3016, %v216
    %v3029 = vrot.slane %v3017, 2
    %v3030 = vrot.slane %v3018, 2
    %v3031 = vrot.slane %v3019, 2
    %v3032 = vrot.slane %v3020, 2
    %v3033 = vrot.slane %v3021, 2
    %v3034 = vrot.slane %v3022, 2
    %3035 = vrot.lane.b32.xlu0 %v3029, 94
    %v3036 = vpop.permute.xlu0 %3035
    %3037 = vrot.lane.b32.xlu0 %v3030, 94
    %v3038 = vpop.permute.xlu0 %3037
    %3039 = vrot.lane.b32.xlu0 %v3031, 94
    %v3040 = vpop.permute.xlu0 %3039
    %3041 = vrot.lane.b32.xlu0 %v3032, 94
    %v3042 = vpop.permute.xlu0 %3041
    %3043 = vrot.lane.b32.xlu0 %v3033, 94
    %v3044 = vpop.permute.xlu0 %3043
    %3045 = vrot.lane.b32.xlu0 %v3034, 94
    %v3046 = vpop.permute.xlu0 %3045
    %v3047 = vsel %vm1516, %v3036, %v3038
    %v3048 = vsel %vm1516, %v3038, %v3040
    %v3049 = vsel %vm1516, %v3042, %v3044
    %v3050 = vsel %vm1516, %v3044, %v3046
    %v3055 = vadd.f32 %v3011, %v3047
    %v3056 = vadd.f32 %v3012, %v3048
    %v3057 = vadd.f32 %v3013, %v3049
    %v3058 = vadd.f32 %v3014, %v3050
    %s3059 = sld [smem:[#allocation6 + $0x47]]
    %v3060 = vstv %s3059
    %v3061 = vmul.f32 %v3060, %v211
    %v3062 = vmul.f32 %v3060, %v212
    %v3063 = vmul.f32 %v3060, %v213
    %v3064 = vmul.f32 %v3060, %v214
    %v3065 = vmul.f32 %v3060, %v215
    %v3066 = vmul.f32 %v3060, %v216
    %v3073 = vrot.slane %v3061, 3
    %v3074 = vrot.slane %v3062, 3
    %v3075 = vrot.slane %v3063, 3
    %v3076 = vrot.slane %v3064, 3
    %v3077 = vrot.slane %v3065, 3
    %v3078 = vrot.slane %v3066, 3
    %3079 = vrot.lane.b32.xlu0 %v3073, 94
    %v3080 = vpop.permute.xlu0 %3079
    %3081 = vrot.lane.b32.xlu0 %v3074, 94
    %v3082 = vpop.permute.xlu0 %3081
    %3083 = vrot.lane.b32.xlu0 %v3075, 94
    %v3084 = vpop.permute.xlu0 %3083
    %3085 = vrot.lane.b32.xlu0 %v3076, 94
    %v3086 = vpop.permute.xlu0 %3085
    %3087 = vrot.lane.b32.xlu0 %v3077, 94
    %v3088 = vpop.permute.xlu0 %3087
    %3089 = vrot.lane.b32.xlu0 %v3078, 94
    %v3090 = vpop.permute.xlu0 %3089
    %v3091 = vsel %vm1516, %v3080, %v3082
    %v3092 = vsel %vm1516, %v3082, %v3084
    %v3093 = vsel %vm1516, %v3086, %v3088
    %v3094 = vsel %vm1516, %v3088, %v3090
    %v3099 = vadd.f32 %v3055, %v3091
    %v3100 = vadd.f32 %v3056, %v3092
    %v3101 = vadd.f32 %v3057, %v3093
    %v3102 = vadd.f32 %v3058, %v3094
    %s3103 = sld [smem:[#allocation7 + $0x1]]
    %v3104 = vstv %s3103
    %v3105 = vadd.f32 %v3099, %v3104
    %v3106 = vadd.f32 %v3100, %v3104
    %v3107 = vadd.f32 %v3101, %v3104
    %v3108 = vadd.f32 %v3102, %v3104
    %s3109 = sld [smem:[#allocation6 + $0x48]]
    %v3110 = vstv %s3109
    %v3111 = vmul.f32 %v3110, %v129
    %v3112 = vmul.f32 %v3110, %v130
    %v3113 = vmul.f32 %v3110, %v131
    %v3114 = vmul.f32 %v3110, %v132
    %v3115 = vadd.f32 %v3111, 0.0
    %v3116 = vadd.f32 %v3112, 0.0
    %v3117 = vadd.f32 %v3113, 0.0
    %v3118 = vadd.f32 %v3114, 0.0
    %s3119 = sld [smem:[#allocation6 + $0x51]]
    %v3120 = vstv %s3119
    %v3121 = vmul.f32 %v3120, %v129
    %v3122 = vmul.f32 %v3120, %v130
    %v3123 = vmul.f32 %v3120, %v131
    %v3124 = vmul.f32 %v3120, %v132
    %v3129 = vrot.slane %v3121, 1
    %v3130 = vrot.slane %v3122, 1
    %v3131 = vrot.slane %v3123, 1
    %v3132 = vrot.slane %v3124, 1
    %v3137 = vadd.f32 %v3115, %v3129
    %v3138 = vadd.f32 %v3116, %v3130
    %v3139 = vadd.f32 %v3117, %v3131
    %v3140 = vadd.f32 %v3118, %v3132
    %s3141 = sld [smem:[#allocation6 + $0x5a]]
    %v3142 = vstv %s3141
    %v3143 = vmul.f32 %v3142, %v129
    %v3144 = vmul.f32 %v3142, %v130
    %v3145 = vmul.f32 %v3142, %v131
    %v3146 = vmul.f32 %v3142, %v132
    %v3151 = vrot.slane %v3143, 2
    %v3152 = vrot.slane %v3144, 2
    %v3153 = vrot.slane %v3145, 2
    %v3154 = vrot.slane %v3146, 2
    %v3159 = vadd.f32 %v3137, %v3151
    %v3160 = vadd.f32 %v3138, %v3152
    %v3161 = vadd.f32 %v3139, %v3153
    %v3162 = vadd.f32 %v3140, %v3154
    %s3163 = sld [smem:[#allocation6 + $0x63]]
    %v3164 = vstv %s3163
    %v3165 = vmul.f32 %v3164, %v129
    %v3166 = vmul.f32 %v3164, %v130
    %v3167 = vmul.f32 %v3164, %v131
    %v3168 = vmul.f32 %v3164, %v132
    %v3173 = vrot.slane %v3165, 3
    %v3174 = vrot.slane %v3166, 3
    %v3175 = vrot.slane %v3167, 3
    %v3176 = vrot.slane %v3168, 3
    %v3181 = vadd.f32 %v3159, %v3173
    %v3182 = vadd.f32 %v3160, %v3174
    %v3183 = vadd.f32 %v3161, %v3175
    %v3184 = vadd.f32 %v3162, %v3176
    %s3185 = sld [smem:[#allocation6 + $0x49]]
    %v3186 = vstv %s3185
    %v3187 = vmul.f32 %v3186, %v114
    %v3188 = vmul.f32 %v3186, %v106
    %v3189 = vmul.f32 %v3186, %v116
    %v3190 = vmul.f32 %v3186, %v115
    %v3191 = vmul.f32 %v3186, %v107
    %v3192 = vmul.f32 %v3186, %v117
    %3199 = vrot.lane.b32.xlu0 %v3187, 127
    %v3200 = vpop.permute.xlu0 %3199
    %3201 = vrot.lane.b32.xlu0 %v3188, 127
    %v3202 = vpop.permute.xlu0 %3201
    %3203 = vrot.lane.b32.xlu0 %v3189, 127
    %v3204 = vpop.permute.xlu0 %3203
    %3205 = vrot.lane.b32.xlu0 %v3190, 127
    %v3206 = vpop.permute.xlu0 %3205
    %3207 = vrot.lane.b32.xlu0 %v3191, 127
    %v3208 = vpop.permute.xlu0 %3207
    %3209 = vrot.lane.b32.xlu0 %v3192, 127
    %v3210 = vpop.permute.xlu0 %3209
    %v3211 = vsel %vm319, %v3200, %v3202
    %v3212 = vsel %vm319, %v3202, %v3204
    %v3213 = vsel %vm319, %v3206, %v3208
    %v3214 = vsel %vm319, %v3208, %v3210
    %v3219 = vadd.f32 %v3181, %v3211
    %v3220 = vadd.f32 %v3182, %v3212
    %v3221 = vadd.f32 %v3183, %v3213
    %v3222 = vadd.f32 %v3184, %v3214
    %s3223 = sld [smem:[#allocation6 + $0x52]]
    %v3224 = vstv %s3223
    %v3225 = vmul.f32 %v3224, %v114
    %v3226 = vmul.f32 %v3224, %v106
    %v3227 = vmul.f32 %v3224, %v116
    %v3228 = vmul.f32 %v3224, %v115
    %v3229 = vmul.f32 %v3224, %v107
    %v3230 = vmul.f32 %v3224, %v117
    %v3237 = vrot.slane %v3225, 1
    %v3238 = vrot.slane %v3226, 1
    %v3239 = vrot.slane %v3227, 1
    %v3240 = vrot.slane %v3228, 1
    %v3241 = vrot.slane %v3229, 1
    %v3242 = vrot.slane %v3230, 1
    %3243 = vrot.lane.b32.xlu0 %v3237, 127
    %v3244 = vpop.permute.xlu0 %3243
    %3245 = vrot.lane.b32.xlu0 %v3238, 127
    %v3246 = vpop.permute.xlu0 %3245
    %3247 = vrot.lane.b32.xlu0 %v3239, 127
    %v3248 = vpop.permute.xlu0 %3247
    %3249 = vrot.lane.b32.xlu0 %v3240, 127
    %v3250 = vpop.permute.xlu0 %3249
    %3251 = vrot.lane.b32.xlu0 %v3241, 127
    %v3252 = vpop.permute.xlu0 %3251
    %3253 = vrot.lane.b32.xlu0 %v3242, 127
    %v3254 = vpop.permute.xlu0 %3253
    %v3255 = vsel %vm319, %v3244, %v3246
    %v3256 = vsel %vm319, %v3246, %v3248
    %v3257 = vsel %vm319, %v3250, %v3252
    %v3258 = vsel %vm319, %v3252, %v3254
    %v3263 = vadd.f32 %v3219, %v3255
    %v3264 = vadd.f32 %v3220, %v3256
    %v3265 = vadd.f32 %v3221, %v3257
    %v3266 = vadd.f32 %v3222, %v3258
    %s3267 = sld [smem:[#allocation6 + $0x5b]]
    %v3268 = vstv %s3267
    %v3269 = vmul.f32 %v3268, %v114
    %v3270 = vmul.f32 %v3268, %v106
    %v3271 = vmul.f32 %v3268, %v116
    %v3272 = vmul.f32 %v3268, %v115
    %v3273 = vmul.f32 %v3268, %v107
    %v3274 = vmul.f32 %v3268, %v117
    %v3281 = vrot.slane %v3269, 2
    %v3282 = vrot.slane %v3270, 2
    %v3283 = vrot.slane %v3271, 2
    %v3284 = vrot.slane %v3272, 2
    %v3285 = vrot.slane %v3273, 2
    %v3286 = vrot.slane %v3274, 2
    %3287 = vrot.lane.b32.xlu0 %v3281, 127
    %v3288 = vpop.permute.xlu0 %3287
    %3289 = vrot.lane.b32.xlu0 %v3282, 127
    %v3290 = vpop.permute.xlu0 %3289
    %3291 = vrot.lane.b32.xlu0 %v3283, 127
    %v3292 = vpop.permute.xlu0 %3291
    %3293 = vrot.lane.b32.xlu0 %v3284, 127
    %v3294 = vpop.permute.xlu0 %3293
    %3295 = vrot.lane.b32.xlu0 %v3285, 127
    %v3296 = vpop.permute.xlu0 %3295
    %3297 = vrot.lane.b32.xlu0 %v3286, 127
    %v3298 = vpop.permute.xlu0 %3297
    %v3299 = vsel %vm319, %v3288, %v3290
    %v3300 = vsel %vm319, %v3290, %v3292
    %v3301 = vsel %vm319, %v3294, %v3296
    %v3302 = vsel %vm319, %v3296, %v3298
    %v3307 = vadd.f32 %v3263, %v3299
    %v3308 = vadd.f32 %v3264, %v3300
    %v3309 = vadd.f32 %v3265, %v3301
    %v3310 = vadd.f32 %v3266, %v3302
    %s3311 = sld [smem:[#allocation6 + $0x64]]
    %v3312 = vstv %s3311
    %v3313 = vmul.f32 %v3312, %v114
    %v3314 = vmul.f32 %v3312, %v106
    %v3315 = vmul.f32 %v3312, %v116
    %v3316 = vmul.f32 %v3312, %v115
    %v3317 = vmul.f32 %v3312, %v107
    %v3318 = vmul.f32 %v3312, %v117
    %v3325 = vrot.slane %v3313, 3
    %v3326 = vrot.slane %v3314, 3
    %v3327 = vrot.slane %v3315, 3
    %v3328 = vrot.slane %v3316, 3
    %v3329 = vrot.slane %v3317, 3
    %v3330 = vrot.slane %v3318, 3
    %3331 = vrot.lane.b32.xlu0 %v3325, 127
    %v3332 = vpop.permute.xlu0 %3331
    %3333 = vrot.lane.b32.xlu0 %v3326, 127
    %v3334 = vpop.permute.xlu0 %3333
    %3335 = vrot.lane.b32.xlu0 %v3327, 127
    %v3336 = vpop.permute.xlu0 %3335
    %3337 = vrot.lane.b32.xlu0 %v3328, 127
    %v3338 = vpop.permute.xlu0 %3337
    %3339 = vrot.lane.b32.xlu0 %v3329, 127
    %v3340 = vpop.permute.xlu0 %3339
    %3341 = vrot.lane.b32.xlu0 %v3330, 127
    %v3342 = vpop.permute.xlu0 %3341
    %v3343 = vsel %vm319, %v3332, %v3334
    %v3344 = vsel %vm319, %v3334, %v3336
    %v3345 = vsel %vm319, %v3338, %v3340
    %v3346 = vsel %vm319, %v3340, %v3342
    %v3351 = vadd.f32 %v3307, %v3343
    %v3352 = vadd.f32 %v3308, %v3344
    %v3353 = vadd.f32 %v3309, %v3345
    %v3354 = vadd.f32 %v3310, %v3346
    %s3355 = sld [smem:[#allocation6 + $0x4a]]
    %v3356 = vstv %s3355
    %v3357 = vmul.f32 %v3356, %v151
    %v3358 = vmul.f32 %v3356, %v152
    %v3359 = vmul.f32 %v3356, %v153
    %v3360 = vmul.f32 %v3356, %v154
    %v3361 = vmul.f32 %v3356, %v155
    %v3362 = vmul.f32 %v3356, %v156
    %3369 = vrot.lane.b32.xlu0 %v3357, 126
    %v3370 = vpop.permute.xlu0 %3369
    %3371 = vrot.lane.b32.xlu0 %v3358, 126
    %v3372 = vpop.permute.xlu0 %3371
    %3373 = vrot.lane.b32.xlu0 %v3359, 126
    %v3374 = vpop.permute.xlu0 %3373
    %3375 = vrot.lane.b32.xlu0 %v3360, 126
    %v3376 = vpop.permute.xlu0 %3375
    %3377 = vrot.lane.b32.xlu0 %v3361, 126
    %v3378 = vpop.permute.xlu0 %3377
    %3379 = vrot.lane.b32.xlu0 %v3362, 126
    %v3380 = vpop.permute.xlu0 %3379
    %v3381 = vsel %vm490, %v3370, %v3372
    %v3382 = vsel %vm490, %v3372, %v3374
    %v3383 = vsel %vm490, %v3376, %v3378
    %v3384 = vsel %vm490, %v3378, %v3380
    %v3389 = vadd.f32 %v3351, %v3381
    %v3390 = vadd.f32 %v3352, %v3382
    %v3391 = vadd.f32 %v3353, %v3383
    %v3392 = vadd.f32 %v3354, %v3384
    %s3393 = sld [smem:[#allocation6 + $0x53]]
    %v3394 = vstv %s3393
    %v3395 = vmul.f32 %v3394, %v151
    %v3396 = vmul.f32 %v3394, %v152
    %v3397 = vmul.f32 %v3394, %v153
    %v3398 = vmul.f32 %v3394, %v154
    %v3399 = vmul.f32 %v3394, %v155
    %v3400 = vmul.f32 %v3394, %v156
    %v3407 = vrot.slane %v3395, 1
    %v3408 = vrot.slane %v3396, 1
    %v3409 = vrot.slane %v3397, 1
    %v3410 = vrot.slane %v3398, 1
    %v3411 = vrot.slane %v3399, 1
    %v3412 = vrot.slane %v3400, 1
    %3413 = vrot.lane.b32.xlu0 %v3407, 126
    %v3414 = vpop.permute.xlu0 %3413
    %3415 = vrot.lane.b32.xlu0 %v3408, 126
    %v3416 = vpop.permute.xlu0 %3415
    %3417 = vrot.lane.b32.xlu0 %v3409, 126
    %v3418 = vpop.permute.xlu0 %3417
    %3419 = vrot.lane.b32.xlu0 %v3410, 126
    %v3420 = vpop.permute.xlu0 %3419
    %3421 = vrot.lane.b32.xlu0 %v3411, 126
    %v3422 = vpop.permute.xlu0 %3421
    %3423 = vrot.lane.b32.xlu0 %v3412, 126
    %v3424 = vpop.permute.xlu0 %3423
    %v3425 = vsel %vm490, %v3414, %v3416
    %v3426 = vsel %vm490, %v3416, %v3418
    %v3427 = vsel %vm490, %v3420, %v3422
    %v3428 = vsel %vm490, %v3422, %v3424
    %v3433 = vadd.f32 %v3389, %v3425
    %v3434 = vadd.f32 %v3390, %v3426
    %v3435 = vadd.f32 %v3391, %v3427
    %v3436 = vadd.f32 %v3392, %v3428
    %s3437 = sld [smem:[#allocation6 + $0x5c]]
    %v3438 = vstv %s3437
    %v3439 = vmul.f32 %v3438, %v151
    %v3440 = vmul.f32 %v3438, %v152
    %v3441 = vmul.f32 %v3438, %v153
    %v3442 = vmul.f32 %v3438, %v154
    %v3443 = vmul.f32 %v3438, %v155
    %v3444 = vmul.f32 %v3438, %v156
    %v3451 = vrot.slane %v3439, 2
    %v3452 = vrot.slane %v3440, 2
    %v3453 = vrot.slane %v3441, 2
    %v3454 = vrot.slane %v3442, 2
    %v3455 = vrot.slane %v3443, 2
    %v3456 = vrot.slane %v3444, 2
    %3457 = vrot.lane.b32.xlu0 %v3451, 126
    %v3458 = vpop.permute.xlu0 %3457
    %3459 = vrot.lane.b32.xlu0 %v3452, 126
    %v3460 = vpop.permute.xlu0 %3459
    %3461 = vrot.lane.b32.xlu0 %v3453, 126
    %v3462 = vpop.permute.xlu0 %3461
    %3463 = vrot.lane.b32.xlu0 %v3454, 126
    %v3464 = vpop.permute.xlu0 %3463
    %3465 = vrot.lane.b32.xlu0 %v3455, 126
    %v3466 = vpop.permute.xlu0 %3465
    %3467 = vrot.lane.b32.xlu0 %v3456, 126
    %v3468 = vpop.permute.xlu0 %3467
    %v3469 = vsel %vm490, %v3458, %v3460
    %v3470 = vsel %vm490, %v3460, %v3462
    %v3471 = vsel %vm490, %v3464, %v3466
    %v3472 = vsel %vm490, %v3466, %v3468
    %v3477 = vadd.f32 %v3433, %v3469
    %v3478 = vadd.f32 %v3434, %v3470
    %v3479 = vadd.f32 %v3435, %v3471
    %v3480 = vadd.f32 %v3436, %v3472
    %s3481 = sld [smem:[#allocation6 + $0x65]]
    %v3482 = vstv %s3481
    %v3483 = vmul.f32 %v3482, %v151
    %v3484 = vmul.f32 %v3482, %v152
    %v3485 = vmul.f32 %v3482, %v153
    %v3486 = vmul.f32 %v3482, %v154
    %v3487 = vmul.f32 %v3482, %v155
    %v3488 = vmul.f32 %v3482, %v156
    %v3495 = vrot.slane %v3483, 3
    %v3496 = vrot.slane %v3484, 3
    %v3497 = vrot.slane %v3485, 3
    %v3498 = vrot.slane %v3486, 3
    %v3499 = vrot.slane %v3487, 3
    %v3500 = vrot.slane %v3488, 3
    %3501 = vrot.lane.b32.xlu0 %v3495, 126
    %v3502 = vpop.permute.xlu0 %3501
    %3503 = vrot.lane.b32.xlu0 %v3496, 126
    %v3504 = vpop.permute.xlu0 %3503
    %3505 = vrot.lane.b32.xlu0 %v3497, 126
    %v3506 = vpop.permute.xlu0 %3505
    %3507 = vrot.lane.b32.xlu0 %v3498, 126
    %v3508 = vpop.permute.xlu0 %3507
    %3509 = vrot.lane.b32.xlu0 %v3499, 126
    %v3510 = vpop.permute.xlu0 %3509
    %3511 = vrot.lane.b32.xlu0 %v3500, 126
    %v3512 = vpop.permute.xlu0 %3511
    %v3513 = vsel %vm490, %v3502, %v3504
    %v3514 = vsel %vm490, %v3504, %v3506
    %v3515 = vsel %vm490, %v3508, %v3510
    %v3516 = vsel %vm490, %v3510, %v3512
    %v3521 = vadd.f32 %v3477, %v3513
    %v3522 = vadd.f32 %v3478, %v3514
    %v3523 = vadd.f32 %v3479, %v3515
    %v3524 = vadd.f32 %v3480, %v3516
    %s3525 = sld [smem:[#allocation6 + $0x4b]]
    %v3526 = vstv %s3525
    %v3527 = vmul.f32 %v3526, %v166
    %v3528 = vmul.f32 %v3526, %v167
    %v3529 = vmul.f32 %v3526, %v168
    %v3530 = vmul.f32 %v3526, %v169
    %v3531 = vmul.f32 %v3526, %v170
    %v3532 = vmul.f32 %v3526, %v171
    %3539 = vrot.lane.b32.xlu0 %v3527, 112
    %v3540 = vpop.permute.xlu0 %3539
    %3541 = vrot.lane.b32.xlu0 %v3528, 112
    %v3542 = vpop.permute.xlu0 %3541
    %3543 = vrot.lane.b32.xlu0 %v3529, 112
    %v3544 = vpop.permute.xlu0 %3543
    %3545 = vrot.lane.b32.xlu0 %v3530, 112
    %v3546 = vpop.permute.xlu0 %3545
    %3547 = vrot.lane.b32.xlu0 %v3531, 112
    %v3548 = vpop.permute.xlu0 %3547
    %3549 = vrot.lane.b32.xlu0 %v3532, 112
    %v3550 = vpop.permute.xlu0 %3549
    %v3551 = vsel %vm661, %v3540, %v3542
    %v3552 = vsel %vm661, %v3542, %v3544
    %v3553 = vsel %vm661, %v3546, %v3548
    %v3554 = vsel %vm661, %v3548, %v3550
    %v3559 = vadd.f32 %v3521, %v3551
    %v3560 = vadd.f32 %v3522, %v3552
    %v3561 = vadd.f32 %v3523, %v3553
    %v3562 = vadd.f32 %v3524, %v3554
    %s3563 = sld [smem:[#allocation6 + $0x54]]
    %v3564 = vstv %s3563
    %v3565 = vmul.f32 %v3564, %v166
    %v3566 = vmul.f32 %v3564, %v167
    %v3567 = vmul.f32 %v3564, %v168
    %v3568 = vmul.f32 %v3564, %v169
    %v3569 = vmul.f32 %v3564, %v170
    %v3570 = vmul.f32 %v3564, %v171
    %v3577 = vrot.slane %v3565, 1
    %v3578 = vrot.slane %v3566, 1
    %v3579 = vrot.slane %v3567, 1
    %v3580 = vrot.slane %v3568, 1
    %v3581 = vrot.slane %v3569, 1
    %v3582 = vrot.slane %v3570, 1
    %3583 = vrot.lane.b32.xlu0 %v3577, 112
    %v3584 = vpop.permute.xlu0 %3583
    %3585 = vrot.lane.b32.xlu0 %v3578, 112
    %v3586 = vpop.permute.xlu0 %3585
    %3587 = vrot.lane.b32.xlu0 %v3579, 112
    %v3588 = vpop.permute.xlu0 %3587
    %3589 = vrot.lane.b32.xlu0 %v3580, 112
    %v3590 = vpop.permute.xlu0 %3589
    %3591 = vrot.lane.b32.xlu0 %v3581, 112
    %v3592 = vpop.permute.xlu0 %3591
    %3593 = vrot.lane.b32.xlu0 %v3582, 112
    %v3594 = vpop.permute.xlu0 %3593
    %v3595 = vsel %vm661, %v3584, %v3586
    %v3596 = vsel %vm661, %v3586, %v3588
    %v3597 = vsel %vm661, %v3590, %v3592
    %v3598 = vsel %vm661, %v3592, %v3594
    %v3603 = vadd.f32 %v3559, %v3595
    %v3604 = vadd.f32 %v3560, %v3596
    %v3605 = vadd.f32 %v3561, %v3597
    %v3606 = vadd.f32 %v3562, %v3598
    %s3607 = sld [smem:[#allocation6 + $0x5d]]
    %v3608 = vstv %s3607
    %v3609 = vmul.f32 %v3608, %v166
    %v3610 = vmul.f32 %v3608, %v167
    %v3611 = vmul.f32 %v3608, %v168
    %v3612 = vmul.f32 %v3608, %v169
    %v3613 = vmul.f32 %v3608, %v170
    %v3614 = vmul.f32 %v3608, %v171
    %v3621 = vrot.slane %v3609, 2
    %v3622 = vrot.slane %v3610, 2
    %v3623 = vrot.slane %v3611, 2
    %v3624 = vrot.slane %v3612, 2
    %v3625 = vrot.slane %v3613, 2
    %v3626 = vrot.slane %v3614, 2
    %3627 = vrot.lane.b32.xlu0 %v3621, 112
    %v3628 = vpop.permute.xlu0 %3627
    %3629 = vrot.lane.b32.xlu0 %v3622, 112
    %v3630 = vpop.permute.xlu0 %3629
    %3631 = vrot.lane.b32.xlu0 %v3623, 112
    %v3632 = vpop.permute.xlu0 %3631
    %3633 = vrot.lane.b32.xlu0 %v3624, 112
    %v3634 = vpop.permute.xlu0 %3633
    %3635 = vrot.lane.b32.xlu0 %v3625, 112
    %v3636 = vpop.permute.xlu0 %3635
    %3637 = vrot.lane.b32.xlu0 %v3626, 112
    %v3638 = vpop.permute.xlu0 %3637
    %v3639 = vsel %vm661, %v3628, %v3630
    %v3640 = vsel %vm661, %v3630, %v3632
    %v3641 = vsel %vm661, %v3634, %v3636
    %v3642 = vsel %vm661, %v3636, %v3638
    %v3647 = vadd.f32 %v3603, %v3639
    %v3648 = vadd.f32 %v3604, %v3640
    %v3649 = vadd.f32 %v3605, %v3641
    %v3650 = vadd.f32 %v3606, %v3642
    %s3651 = sld [smem:[#allocation6 + $0x66]]
    %v3652 = vstv %s3651
    %v3653 = vmul.f32 %v3652, %v166
    %v3654 = vmul.f32 %v3652, %v167
    %v3655 = vmul.f32 %v3652, %v168
    %v3656 = vmul.f32 %v3652, %v169
    %v3657 = vmul.f32 %v3652, %v170
    %v3658 = vmul.f32 %v3652, %v171
    %v3665 = vrot.slane %v3653, 3
    %v3666 = vrot.slane %v3654, 3
    %v3667 = vrot.slane %v3655, 3
    %v3668 = vrot.slane %v3656, 3
    %v3669 = vrot.slane %v3657, 3
    %v3670 = vrot.slane %v3658, 3
    %3671 = vrot.lane.b32.xlu0 %v3665, 112
    %v3672 = vpop.permute.xlu0 %3671
    %3673 = vrot.lane.b32.xlu0 %v3666, 112
    %v3674 = vpop.permute.xlu0 %3673
    %3675 = vrot.lane.b32.xlu0 %v3667, 112
    %v3676 = vpop.permute.xlu0 %3675
    %3677 = vrot.lane.b32.xlu0 %v3668, 112
    %v3678 = vpop.permute.xlu0 %3677
    %3679 = vrot.lane.b32.xlu0 %v3669, 112
    %v3680 = vpop.permute.xlu0 %3679
    %3681 = vrot.lane.b32.xlu0 %v3670, 112
    %v3682 = vpop.permute.xlu0 %3681
    %v3683 = vsel %vm661, %v3672, %v3674
    %v3684 = vsel %vm661, %v3674, %v3676
    %v3685 = vsel %vm661, %v3678, %v3680
    %v3686 = vsel %vm661, %v3680, %v3682
    %v3691 = vadd.f32 %v3647, %v3683
    %v3692 = vadd.f32 %v3648, %v3684
    %v3693 = vadd.f32 %v3649, %v3685
    %v3694 = vadd.f32 %v3650, %v3686
    %s3695 = sld [smem:[#allocation6 + $0x4c]]
    %v3696 = vstv %s3695
    %v3697 = vmul.f32 %v3696, %v114
    %v3698 = vmul.f32 %v3696, %v106
    %v3699 = vmul.f32 %v3696, %v116
    %v3700 = vmul.f32 %v3696, %v115
    %v3701 = vmul.f32 %v3696, %v107
    %v3702 = vmul.f32 %v3696, %v117
    %3709 = vrot.lane.b32.xlu0 %v3697, 111
    %v3710 = vpop.permute.xlu0 %3709
    %3711 = vrot.lane.b32.xlu0 %v3698, 111
    %v3712 = vpop.permute.xlu0 %3711
    %3713 = vrot.lane.b32.xlu0 %v3699, 111
    %v3714 = vpop.permute.xlu0 %3713
    %3715 = vrot.lane.b32.xlu0 %v3700, 111
    %v3716 = vpop.permute.xlu0 %3715
    %3717 = vrot.lane.b32.xlu0 %v3701, 111
    %v3718 = vpop.permute.xlu0 %3717
    %3719 = vrot.lane.b32.xlu0 %v3702, 111
    %v3720 = vpop.permute.xlu0 %3719
    %v3721 = vsel %vm832, %v3710, %v3712
    %v3722 = vsel %vm832, %v3712, %v3714
    %v3723 = vsel %vm832, %v3716, %v3718
    %v3724 = vsel %vm832, %v3718, %v3720
    %v3729 = vadd.f32 %v3691, %v3721
    %v3730 = vadd.f32 %v3692, %v3722
    %v3731 = vadd.f32 %v3693, %v3723
    %v3732 = vadd.f32 %v3694, %v3724
    %s3733 = sld [smem:[#allocation6 + $0x55]]
    %v3734 = vstv %s3733
    %v3735 = vmul.f32 %v3734, %v114
    %v3736 = vmul.f32 %v3734, %v106
    %v3737 = vmul.f32 %v3734, %v116
    %v3738 = vmul.f32 %v3734, %v115
    %v3739 = vmul.f32 %v3734, %v107
    %v3740 = vmul.f32 %v3734, %v117
    %v3747 = vrot.slane %v3735, 1
    %v3748 = vrot.slane %v3736, 1
    %v3749 = vrot.slane %v3737, 1
    %v3750 = vrot.slane %v3738, 1
    %v3751 = vrot.slane %v3739, 1
    %v3752 = vrot.slane %v3740, 1
    %3753 = vrot.lane.b32.xlu0 %v3747, 111
    %v3754 = vpop.permute.xlu0 %3753
    %3755 = vrot.lane.b32.xlu0 %v3748, 111
    %v3756 = vpop.permute.xlu0 %3755
    %3757 = vrot.lane.b32.xlu0 %v3749, 111
    %v3758 = vpop.permute.xlu0 %3757
    %3759 = vrot.lane.b32.xlu0 %v3750, 111
    %v3760 = vpop.permute.xlu0 %3759
    %3761 = vrot.lane.b32.xlu0 %v3751, 111
    %v3762 = vpop.permute.xlu0 %3761
    %3763 = vrot.lane.b32.xlu0 %v3752, 111
    %v3764 = vpop.permute.xlu0 %3763
    %v3765 = vsel %vm832, %v3754, %v3756
    %v3766 = vsel %vm832, %v3756, %v3758
    %v3767 = vsel %vm832, %v3760, %v3762
    %v3768 = vsel %vm832, %v3762, %v3764
    %v3773 = vadd.f32 %v3729, %v3765
    %v3774 = vadd.f32 %v3730, %v3766
    %v3775 = vadd.f32 %v3731, %v3767
    %v3776 = vadd.f32 %v3732, %v3768
    %s3777 = sld [smem:[#allocation6 + $0x5e]]
    %v3778 = vstv %s3777
    %v3779 = vmul.f32 %v3778, %v114
    %v3780 = vmul.f32 %v3778, %v106
    %v3781 = vmul.f32 %v3778, %v116
    %v3782 = vmul.f32 %v3778, %v115
    %v3783 = vmul.f32 %v3778, %v107
    %v3784 = vmul.f32 %v3778, %v117
    %v3791 = vrot.slane %v3779, 2
    %v3792 = vrot.slane %v3780, 2
    %v3793 = vrot.slane %v3781, 2
    %v3794 = vrot.slane %v3782, 2
    %v3795 = vrot.slane %v3783, 2
    %v3796 = vrot.slane %v3784, 2
    %3797 = vrot.lane.b32.xlu0 %v3791, 111
    %v3798 = vpop.permute.xlu0 %3797
    %3799 = vrot.lane.b32.xlu0 %v3792, 111
    %v3800 = vpop.permute.xlu0 %3799
    %3801 = vrot.lane.b32.xlu0 %v3793, 111
    %v3802 = vpop.permute.xlu0 %3801
    %3803 = vrot.lane.b32.xlu0 %v3794, 111
    %v3804 = vpop.permute.xlu0 %3803
    %3805 = vrot.lane.b32.xlu0 %v3795, 111
    %v3806 = vpop.permute.xlu0 %3805
    %3807 = vrot.lane.b32.xlu0 %v3796, 111
    %v3808 = vpop.permute.xlu0 %3807
    %v3809 = vsel %vm832, %v3798, %v3800
    %v3810 = vsel %vm832, %v3800, %v3802
    %v3811 = vsel %vm832, %v3804, %v3806
    %v3812 = vsel %vm832, %v3806, %v3808
    %v3817 = vadd.f32 %v3773, %v3809
    %v3818 = vadd.f32 %v3774, %v3810
    %v3819 = vadd.f32 %v3775, %v3811
    %v3820 = vadd.f32 %v3776, %v3812
    %s3821 = sld [smem:[#allocation6 + $0x67]]
    %v3822 = vstv %s3821
    %v3823 = vmul.f32 %v3822, %v114
    %v3824 = vmul.f32 %v3822, %v106
    %v3825 = vmul.f32 %v3822, %v116
    %v3826 = vmul.f32 %v3822, %v115
    %v3827 = vmul.f32 %v3822, %v107
    %v3828 = vmul.f32 %v3822, %v117
    %v3835 = vrot.slane %v3823, 3
    %v3836 = vrot.slane %v3824, 3
    %v3837 = vrot.slane %v3825, 3
    %v3838 = vrot.slane %v3826, 3
    %v3839 = vrot.slane %v3827, 3
    %v3840 = vrot.slane %v3828, 3
    %3841 = vrot.lane.b32.xlu0 %v3835, 111
    %v3842 = vpop.permute.xlu0 %3841
    %3843 = vrot.lane.b32.xlu0 %v3836, 111
    %v3844 = vpop.permute.xlu0 %3843
    %3845 = vrot.lane.b32.xlu0 %v3837, 111
    %v3846 = vpop.permute.xlu0 %3845
    %3847 = vrot.lane.b32.xlu0 %v3838, 111
    %v3848 = vpop.permute.xlu0 %3847
    %3849 = vrot.lane.b32.xlu0 %v3839, 111
    %v3850 = vpop.permute.xlu0 %3849
    %3851 = vrot.lane.b32.xlu0 %v3840, 111
    %v3852 = vpop.permute.xlu0 %3851
    %v3853 = vsel %vm832, %v3842, %v3844
    %v3854 = vsel %vm832, %v3844, %v3846
    %v3855 = vsel %vm832, %v3848, %v3850
    %v3856 = vsel %vm832, %v3850, %v3852
    %v3861 = vadd.f32 %v3817, %v3853
    %v3862 = vadd.f32 %v3818, %v3854
    %v3863 = vadd.f32 %v3819, %v3855
    %v3864 = vadd.f32 %v3820, %v3856
    %s3865 = sld [smem:[#allocation6 + $0x4d]]
    %v3866 = vstv %s3865
    %v3867 = vmul.f32 %v3866, %v181
    %v3868 = vmul.f32 %v3866, %v182
    %v3869 = vmul.f32 %v3866, %v183
    %v3870 = vmul.f32 %v3866, %v184
    %v3871 = vmul.f32 %v3866, %v185
    %v3872 = vmul.f32 %v3866, %v186
    %3879 = vrot.lane.b32.xlu0 %v3867, 110
    %v3880 = vpop.permute.xlu0 %3879
    %3881 = vrot.lane.b32.xlu0 %v3868, 110
    %v3882 = vpop.permute.xlu0 %3881
    %3883 = vrot.lane.b32.xlu0 %v3869, 110
    %v3884 = vpop.permute.xlu0 %3883
    %3885 = vrot.lane.b32.xlu0 %v3870, 110
    %v3886 = vpop.permute.xlu0 %3885
    %3887 = vrot.lane.b32.xlu0 %v3871, 110
    %v3888 = vpop.permute.xlu0 %3887
    %3889 = vrot.lane.b32.xlu0 %v3872, 110
    %v3890 = vpop.permute.xlu0 %3889
    %v3891 = vsel %vm1003, %v3880, %v3882
    %v3892 = vsel %vm1003, %v3882, %v3884
    %v3893 = vsel %vm1003, %v3886, %v3888
    %v3894 = vsel %vm1003, %v3888, %v3890
    %v3899 = vadd.f32 %v3861, %v3891
    %v3900 = vadd.f32 %v3862, %v3892
    %v3901 = vadd.f32 %v3863, %v3893
    %v3902 = vadd.f32 %v3864, %v3894
    %s3903 = sld [smem:[#allocation6 + $0x56]]
    %v3904 = vstv %s3903
    %v3905 = vmul.f32 %v3904, %v181
    %v3906 = vmul.f32 %v3904, %v182
    %v3907 = vmul.f32 %v3904, %v183
    %v3908 = vmul.f32 %v3904, %v184
    %v3909 = vmul.f32 %v3904, %v185
    %v3910 = vmul.f32 %v3904, %v186
    %v3917 = vrot.slane %v3905, 1
    %v3918 = vrot.slane %v3906, 1
    %v3919 = vrot.slane %v3907, 1
    %v3920 = vrot.slane %v3908, 1
    %v3921 = vrot.slane %v3909, 1
    %v3922 = vrot.slane %v3910, 1
    %3923 = vrot.lane.b32.xlu0 %v3917, 110
    %v3924 = vpop.permute.xlu0 %3923
    %3925 = vrot.lane.b32.xlu0 %v3918, 110
    %v3926 = vpop.permute.xlu0 %3925
    %3927 = vrot.lane.b32.xlu0 %v3919, 110
    %v3928 = vpop.permute.xlu0 %3927
    %3929 = vrot.lane.b32.xlu0 %v3920, 110
    %v3930 = vpop.permute.xlu0 %3929
    %3931 = vrot.lane.b32.xlu0 %v3921, 110
    %v3932 = vpop.permute.xlu0 %3931
    %3933 = vrot.lane.b32.xlu0 %v3922, 110
    %v3934 = vpop.permute.xlu0 %3933
    %v3935 = vsel %vm1003, %v3924, %v3926
    %v3936 = vsel %vm1003, %v3926, %v3928
    %v3937 = vsel %vm1003, %v3930, %v3932
    %v3938 = vsel %vm1003, %v3932, %v3934
    %v3943 = vadd.f32 %v3899, %v3935
    %v3944 = vadd.f32 %v3900, %v3936
    %v3945 = vadd.f32 %v3901, %v3937
    %v3946 = vadd.f32 %v3902, %v3938
    %s3947 = sld [smem:[#allocation6 + $0x5f]]
    %v3948 = vstv %s3947
    %v3949 = vmul.f32 %v3948, %v181
    %v3950 = vmul.f32 %v3948, %v182
    %v3951 = vmul.f32 %v3948, %v183
    %v3952 = vmul.f32 %v3948, %v184
    %v3953 = vmul.f32 %v3948, %v185
    %v3954 = vmul.f32 %v3948, %v186
    %v3961 = vrot.slane %v3949, 2
    %v3962 = vrot.slane %v3950, 2
    %v3963 = vrot.slane %v3951, 2
    %v3964 = vrot.slane %v3952, 2
    %v3965 = vrot.slane %v3953, 2
    %v3966 = vrot.slane %v3954, 2
    %3967 = vrot.lane.b32.xlu0 %v3961, 110
    %v3968 = vpop.permute.xlu0 %3967
    %3969 = vrot.lane.b32.xlu0 %v3962, 110
    %v3970 = vpop.permute.xlu0 %3969
    %3971 = vrot.lane.b32.xlu0 %v3963, 110
    %v3972 = vpop.permute.xlu0 %3971
    %3973 = vrot.lane.b32.xlu0 %v3964, 110
    %v3974 = vpop.permute.xlu0 %3973
    %3975 = vrot.lane.b32.xlu0 %v3965, 110
    %v3976 = vpop.permute.xlu0 %3975
    %3977 = vrot.lane.b32.xlu0 %v3966, 110
    %v3978 = vpop.permute.xlu0 %3977
    %v3979 = vsel %vm1003, %v3968, %v3970
    %v3980 = vsel %vm1003, %v3970, %v3972
    %v3981 = vsel %vm1003, %v3974, %v3976
    %v3982 = vsel %vm1003, %v3976, %v3978
    %v3987 = vadd.f32 %v3943, %v3979
    %v3988 = vadd.f32 %v3944, %v3980
    %v3989 = vadd.f32 %v3945, %v3981
    %v3990 = vadd.f32 %v3946, %v3982
    %s3991 = sld [smem:[#allocation6 + $0x68]]
    %v3992 = vstv %s3991
    %v3993 = vmul.f32 %v3992, %v181
    %v3994 = vmul.f32 %v3992, %v182
    %v3995 = vmul.f32 %v3992, %v183
    %v3996 = vmul.f32 %v3992, %v184
    %v3997 = vmul.f32 %v3992, %v185
    %v3998 = vmul.f32 %v3992, %v186
    %v4005 = vrot.slane %v3993, 3
    %v4006 = vrot.slane %v3994, 3
    %v4007 = vrot.slane %v3995, 3
    %v4008 = vrot.slane %v3996, 3
    %v4009 = vrot.slane %v3997, 3
    %v4010 = vrot.slane %v3998, 3
    %4011 = vrot.lane.b32.xlu0 %v4005, 110
    %v4012 = vpop.permute.xlu0 %4011
    %4013 = vrot.lane.b32.xlu0 %v4006, 110
    %v4014 = vpop.permute.xlu0 %4013
    %4015 = vrot.lane.b32.xlu0 %v4007, 110
    %v4016 = vpop.permute.xlu0 %4015
    %4017 = vrot.lane.b32.xlu0 %v4008, 110
    %v4018 = vpop.permute.xlu0 %4017
    %4019 = vrot.lane.b32.xlu0 %v4009, 110
    %v4020 = vpop.permute.xlu0 %4019
    %4021 = vrot.lane.b32.xlu0 %v4010, 110
    %v4022 = vpop.permute.xlu0 %4021
    %v4023 = vsel %vm1003, %v4012, %v4014
    %v4024 = vsel %vm1003, %v4014, %v4016
    %v4025 = vsel %vm1003, %v4018, %v4020
    %v4026 = vsel %vm1003, %v4020, %v4022
    %v4031 = vadd.f32 %v3987, %v4023
    %v4032 = vadd.f32 %v3988, %v4024
    %v4033 = vadd.f32 %v3989, %v4025
    %v4034 = vadd.f32 %v3990, %v4026
    %s4035 = sld [smem:[#allocation6 + $0x4e]]
    %v4036 = vstv %s4035
    %v4037 = vmul.f32 %v4036, %v196
    %v4038 = vmul.f32 %v4036, %v197
    %v4039 = vmul.f32 %v4036, %v198
    %v4040 = vmul.f32 %v4036, %v199
    %v4041 = vmul.f32 %v4036, %v200
    %v4042 = vmul.f32 %v4036, %v201
    %4049 = vrot.lane.b32.xlu0 %v4037, 96
    %v4050 = vpop.permute.xlu0 %4049
    %4051 = vrot.lane.b32.xlu0 %v4038, 96
    %v4052 = vpop.permute.xlu0 %4051
    %4053 = vrot.lane.b32.xlu0 %v4039, 96
    %v4054 = vpop.permute.xlu0 %4053
    %4055 = vrot.lane.b32.xlu0 %v4040, 96
    %v4056 = vpop.permute.xlu0 %4055
    %4057 = vrot.lane.b32.xlu0 %v4041, 96
    %v4058 = vpop.permute.xlu0 %4057
    %4059 = vrot.lane.b32.xlu0 %v4042, 96
    %v4060 = vpop.permute.xlu0 %4059
    %v4061 = vsel %vm1174, %v4050, %v4052
    %v4062 = vsel %vm1174, %v4052, %v4054
    %v4063 = vsel %vm1174, %v4056, %v4058
    %v4064 = vsel %vm1174, %v4058, %v4060
    %v4069 = vadd.f32 %v4031, %v4061
    %v4070 = vadd.f32 %v4032, %v4062
    %v4071 = vadd.f32 %v4033, %v4063
    %v4072 = vadd.f32 %v4034, %v4064
    %s4073 = sld [smem:[#allocation6 + $0x57]]
    %v4074 = vstv %s4073
    %v4075 = vmul.f32 %v4074, %v196
    %v4076 = vmul.f32 %v4074, %v197
    %v4077 = vmul.f32 %v4074, %v198
    %v4078 = vmul.f32 %v4074, %v199
    %v4079 = vmul.f32 %v4074, %v200
    %v4080 = vmul.f32 %v4074, %v201
    %v4087 = vrot.slane %v4075, 1
    %v4088 = vrot.slane %v4076, 1
    %v4089 = vrot.slane %v4077, 1
    %v4090 = vrot.slane %v4078, 1
    %v4091 = vrot.slane %v4079, 1
    %v4092 = vrot.slane %v4080, 1
    %4093 = vrot.lane.b32.xlu0 %v4087, 96
    %v4094 = vpop.permute.xlu0 %4093
    %4095 = vrot.lane.b32.xlu0 %v4088, 96
    %v4096 = vpop.permute.xlu0 %4095
    %4097 = vrot.lane.b32.xlu0 %v4089, 96
    %v4098 = vpop.permute.xlu0 %4097
    %4099 = vrot.lane.b32.xlu0 %v4090, 96
    %v4100 = vpop.permute.xlu0 %4099
    %4101 = vrot.lane.b32.xlu0 %v4091, 96
    %v4102 = vpop.permute.xlu0 %4101
    %4103 = vrot.lane.b32.xlu0 %v4092, 96
    %v4104 = vpop.permute.xlu0 %4103
    %v4105 = vsel %vm1174, %v4094, %v4096
    %v4106 = vsel %vm1174, %v4096, %v4098
    %v4107 = vsel %vm1174, %v4100, %v4102
    %v4108 = vsel %vm1174, %v4102, %v4104
    %v4113 = vadd.f32 %v4069, %v4105
    %v4114 = vadd.f32 %v4070, %v4106
    %v4115 = vadd.f32 %v4071, %v4107
    %v4116 = vadd.f32 %v4072, %v4108
    %s4117 = sld [smem:[#allocation6 + $0x60]]
    %v4118 = vstv %s4117
    %v4119 = vmul.f32 %v4118, %v196
    %v4120 = vmul.f32 %v4118, %v197
    %v4121 = vmul.f32 %v4118, %v198
    %v4122 = vmul.f32 %v4118, %v199
    %v4123 = vmul.f32 %v4118, %v200
    %v4124 = vmul.f32 %v4118, %v201
    %v4131 = vrot.slane %v4119, 2
    %v4132 = vrot.slane %v4120, 2
    %v4133 = vrot.slane %v4121, 2
    %v4134 = vrot.slane %v4122, 2
    %v4135 = vrot.slane %v4123, 2
    %v4136 = vrot.slane %v4124, 2
    %4137 = vrot.lane.b32.xlu0 %v4131, 96
    %v4138 = vpop.permute.xlu0 %4137
    %4139 = vrot.lane.b32.xlu0 %v4132, 96
    %v4140 = vpop.permute.xlu0 %4139
    %4141 = vrot.lane.b32.xlu0 %v4133, 96
    %v4142 = vpop.permute.xlu0 %4141
    %4143 = vrot.lane.b32.xlu0 %v4134, 96
    %v4144 = vpop.permute.xlu0 %4143
    %4145 = vrot.lane.b32.xlu0 %v4135, 96
    %v4146 = vpop.permute.xlu0 %4145
    %4147 = vrot.lane.b32.xlu0 %v4136, 96
    %v4148 = vpop.permute.xlu0 %4147
    %v4149 = vsel %vm1174, %v4138, %v4140
    %v4150 = vsel %vm1174, %v4140, %v4142
    %v4151 = vsel %vm1174, %v4144, %v4146
    %v4152 = vsel %vm1174, %v4146, %v4148
    %v4157 = vadd.f32 %v4113, %v4149
    %v4158 = vadd.f32 %v4114, %v4150
    %v4159 = vadd.f32 %v4115, %v4151
    %v4160 = vadd.f32 %v4116, %v4152
    %s4161 = sld [smem:[#allocation6 + $0x69]]
    %v4162 = vstv %s4161
    %v4163 = vmul.f32 %v4162, %v196
    %v4164 = vmul.f32 %v4162, %v197
    %v4165 = vmul.f32 %v4162, %v198
    %v4166 = vmul.f32 %v4162, %v199
    %v4167 = vmul.f32 %v4162, %v200
    %v4168 = vmul.f32 %v4162, %v201
    %v4175 = vrot.slane %v4163, 3
    %v4176 = vrot.slane %v4164, 3
    %v4177 = vrot.slane %v4165, 3
    %v4178 = vrot.slane %v4166, 3
    %v4179 = vrot.slane %v4167, 3
    %v4180 = vrot.slane %v4168, 3
    %4181 = vrot.lane.b32.xlu0 %v4175, 96
    %v4182 = vpop.permute.xlu0 %4181
    %4183 = vrot.lane.b32.xlu0 %v4176, 96
    %v4184 = vpop.permute.xlu0 %4183
    %4185 = vrot.lane.b32.xlu0 %v4177, 96
    %v4186 = vpop.permute.xlu0 %4185
    %4187 = vrot.lane.b32.xlu0 %v4178, 96
    %v4188 = vpop.permute.xlu0 %4187
    %4189 = vrot.lane.b32.xlu0 %v4179, 96
    %v4190 = vpop.permute.xlu0 %4189
    %4191 = vrot.lane.b32.xlu0 %v4180, 96
    %v4192 = vpop.permute.xlu0 %4191
    %v4193 = vsel %vm1174, %v4182, %v4184
    %v4194 = vsel %vm1174, %v4184, %v4186
    %v4195 = vsel %vm1174, %v4188, %v4190
    %v4196 = vsel %vm1174, %v4190, %v4192
    %v4201 = vadd.f32 %v4157, %v4193
    %v4202 = vadd.f32 %v4158, %v4194
    %v4203 = vadd.f32 %v4159, %v4195
    %v4204 = vadd.f32 %v4160, %v4196
    %s4205 = sld [smem:[#allocation6 + $0x4f]]
    %v4206 = vstv %s4205
    %v4207 = vmul.f32 %v4206, %v114
    %v4208 = vmul.f32 %v4206, %v106
    %v4209 = vmul.f32 %v4206, %v116
    %v4210 = vmul.f32 %v4206, %v115
    %v4211 = vmul.f32 %v4206, %v107
    %v4212 = vmul.f32 %v4206, %v117
    %4219 = vrot.lane.b32.xlu0 %v4207, 95
    %v4220 = vpop.permute.xlu0 %4219
    %4221 = vrot.lane.b32.xlu0 %v4208, 95
    %v4222 = vpop.permute.xlu0 %4221
    %4223 = vrot.lane.b32.xlu0 %v4209, 95
    %v4224 = vpop.permute.xlu0 %4223
    %4225 = vrot.lane.b32.xlu0 %v4210, 95
    %v4226 = vpop.permute.xlu0 %4225
    %4227 = vrot.lane.b32.xlu0 %v4211, 95
    %v4228 = vpop.permute.xlu0 %4227
    %4229 = vrot.lane.b32.xlu0 %v4212, 95
    %v4230 = vpop.permute.xlu0 %4229
    %v4231 = vsel %vm1345, %v4220, %v4222
    %v4232 = vsel %vm1345, %v4222, %v4224
    %v4233 = vsel %vm1345, %v4226, %v4228
    %v4234 = vsel %vm1345, %v4228, %v4230
    %v4239 = vadd.f32 %v4201, %v4231
    %v4240 = vadd.f32 %v4202, %v4232
    %v4241 = vadd.f32 %v4203, %v4233
    %v4242 = vadd.f32 %v4204, %v4234
    %s4243 = sld [smem:[#allocation6 + $0x58]]
    %v4244 = vstv %s4243
    %v4245 = vmul.f32 %v4244, %v114
    %v4246 = vmul.f32 %v4244, %v106
    %v4247 = vmul.f32 %v4244, %v116
    %v4248 = vmul.f32 %v4244, %v115
    %v4249 = vmul.f32 %v4244, %v107
    %v4250 = vmul.f32 %v4244, %v117
    %v4257 = vrot.slane %v4245, 1
    %v4258 = vrot.slane %v4246, 1
    %v4259 = vrot.slane %v4247, 1
    %v4260 = vrot.slane %v4248, 1
    %v4261 = vrot.slane %v4249, 1
    %v4262 = vrot.slane %v4250, 1
    %4263 = vrot.lane.b32.xlu0 %v4257, 95
    %v4264 = vpop.permute.xlu0 %4263
    %4265 = vrot.lane.b32.xlu0 %v4258, 95
    %v4266 = vpop.permute.xlu0 %4265
    %4267 = vrot.lane.b32.xlu0 %v4259, 95
    %v4268 = vpop.permute.xlu0 %4267
    %4269 = vrot.lane.b32.xlu0 %v4260, 95
    %v4270 = vpop.permute.xlu0 %4269
    %4271 = vrot.lane.b32.xlu0 %v4261, 95
    %v4272 = vpop.permute.xlu0 %4271
    %4273 = vrot.lane.b32.xlu0 %v4262, 95
    %v4274 = vpop.permute.xlu0 %4273
    %v4275 = vsel %vm1345, %v4264, %v4266
    %v4276 = vsel %vm1345, %v4266, %v4268
    %v4277 = vsel %vm1345, %v4270, %v4272
    %v4278 = vsel %vm1345, %v4272, %v4274
    %v4283 = vadd.f32 %v4239, %v4275
    %v4284 = vadd.f32 %v4240, %v4276
    %v4285 = vadd.f32 %v4241, %v4277
    %v4286 = vadd.f32 %v4242, %v4278
    %s4287 = sld [smem:[#allocation6 + $0x61]]
    %v4288 = vstv %s4287
    %v4289 = vmul.f32 %v4288, %v114
    %v4290 = vmul.f32 %v4288, %v106
    %v4291 = vmul.f32 %v4288, %v116
    %v4292 = vmul.f32 %v4288, %v115
    %v4293 = vmul.f32 %v4288, %v107
    %v4294 = vmul.f32 %v4288, %v117
    %v4301 = vrot.slane %v4289, 2
    %v4302 = vrot.slane %v4290, 2
    %v4303 = vrot.slane %v4291, 2
    %v4304 = vrot.slane %v4292, 2
    %v4305 = vrot.slane %v4293, 2
    %v4306 = vrot.slane %v4294, 2
    %4307 = vrot.lane.b32.xlu0 %v4301, 95
    %v4308 = vpop.permute.xlu0 %4307
    %4309 = vrot.lane.b32.xlu0 %v4302, 95
    %v4310 = vpop.permute.xlu0 %4309
    %4311 = vrot.lane.b32.xlu0 %v4303, 95
    %v4312 = vpop.permute.xlu0 %4311
    %4313 = vrot.lane.b32.xlu0 %v4304, 95
    %v4314 = vpop.permute.xlu0 %4313
    %4315 = vrot.lane.b32.xlu0 %v4305, 95
    %v4316 = vpop.permute.xlu0 %4315
    %4317 = vrot.lane.b32.xlu0 %v4306, 95
    %v4318 = vpop.permute.xlu0 %4317
    %v4319 = vsel %vm1345, %v4308, %v4310
    %v4320 = vsel %vm1345, %v4310, %v4312
    %v4321 = vsel %vm1345, %v4314, %v4316
    %v4322 = vsel %vm1345, %v4316, %v4318
    %v4327 = vadd.f32 %v4283, %v4319
    %v4328 = vadd.f32 %v4284, %v4320
    %v4329 = vadd.f32 %v4285, %v4321
    %v4330 = vadd.f32 %v4286, %v4322
    %s4331 = sld [smem:[#allocation6 + $0x6a]]
    %v4332 = vstv %s4331
    %v4333 = vmul.f32 %v4332, %v114
    %v4334 = vmul.f32 %v4332, %v106
    %v4335 = vmul.f32 %v4332, %v116
    %v4336 = vmul.f32 %v4332, %v115
    %v4337 = vmul.f32 %v4332, %v107
    %v4338 = vmul.f32 %v4332, %v117
    %v4345 = vrot.slane %v4333, 3
    %v4346 = vrot.slane %v4334, 3
    %v4347 = vrot.slane %v4335, 3
    %v4348 = vrot.slane %v4336, 3
    %v4349 = vrot.slane %v4337, 3
    %v4350 = vrot.slane %v4338, 3
    %4351 = vrot.lane.b32.xlu0 %v4345, 95
    %v4352 = vpop.permute.xlu0 %4351
    %4353 = vrot.lane.b32.xlu0 %v4346, 95
    %v4354 = vpop.permute.xlu0 %4353
    %4355 = vrot.lane.b32.xlu0 %v4347, 95
    %v4356 = vpop.permute.xlu0 %4355
    %4357 = vrot.lane.b32.xlu0 %v4348, 95
    %v4358 = vpop.permute.xlu0 %4357
    %4359 = vrot.lane.b32.xlu0 %v4349, 95
    %v4360 = vpop.permute.xlu0 %4359
    %4361 = vrot.lane.b32.xlu0 %v4350, 95
    %v4362 = vpop.permute.xlu0 %4361
    %v4363 = vsel %vm1345, %v4352, %v4354
    %v4364 = vsel %vm1345, %v4354, %v4356
    %v4365 = vsel %vm1345, %v4358, %v4360
    %v4366 = vsel %vm1345, %v4360, %v4362
    %v4371 = vadd.f32 %v4327, %v4363
    %v4372 = vadd.f32 %v4328, %v4364
    %v4373 = vadd.f32 %v4329, %v4365
    %v4374 = vadd.f32 %v4330, %v4366
    %s4375 = sld [smem:[#allocation6 + $0x50]]
    %v4376 = vstv %s4375
    %v4377 = vmul.f32 %v4376, %v211
    %v4378 = vmul.f32 %v4376, %v212
    %v4379 = vmul.f32 %v4376, %v213
    %v4380 = vmul.f32 %v4376, %v214
    %v4381 = vmul.f32 %v4376, %v215
    %v4382 = vmul.f32 %v4376, %v216
    %4389 = vrot.lane.b32.xlu0 %v4377, 94
    %v4390 = vpop.permute.xlu0 %4389
    %4391 = vrot.lane.b32.xlu0 %v4378, 94
    %v4392 = vpop.permute.xlu0 %4391
    %4393 = vrot.lane.b32.xlu0 %v4379, 94
    %v4394 = vpop.permute.xlu0 %4393
    %4395 = vrot.lane.b32.xlu0 %v4380, 94
    %v4396 = vpop.permute.xlu0 %4395
    %4397 = vrot.lane.b32.xlu0 %v4381, 94
    %v4398 = vpop.permute.xlu0 %4397
    %4399 = vrot.lane.b32.xlu0 %v4382, 94
    %v4400 = vpop.permute.xlu0 %4399
    %v4401 = vsel %vm1516, %v4390, %v4392
    %v4402 = vsel %vm1516, %v4392, %v4394
    %v4403 = vsel %vm1516, %v4396, %v4398
    %v4404 = vsel %vm1516, %v4398, %v4400
    %v4409 = vadd.f32 %v4371, %v4401
    %v4410 = vadd.f32 %v4372, %v4402
    %v4411 = vadd.f32 %v4373, %v4403
    %v4412 = vadd.f32 %v4374, %v4404
    %s4413 = sld [smem:[#allocation6 + $0x59]]
    %v4414 = vstv %s4413
    %v4415 = vmul.f32 %v4414, %v211
    %v4416 = vmul.f32 %v4414, %v212
    %v4417 = vmul.f32 %v4414, %v213
    %v4418 = vmul.f32 %v4414, %v214
    %v4419 = vmul.f32 %v4414, %v215
    %v4420 = vmul.f32 %v4414, %v216
    %v4427 = vrot.slane %v4415, 1
    %v4428 = vrot.slane %v4416, 1
    %v4429 = vrot.slane %v4417, 1
    %v4430 = vrot.slane %v4418, 1
    %v4431 = vrot.slane %v4419, 1
    %v4432 = vrot.slane %v4420, 1
    %4433 = vrot.lane.b32.xlu0 %v4427, 94
    %v4434 = vpop.permute.xlu0 %4433
    %4435 = vrot.lane.b32.xlu0 %v4428, 94
    %v4436 = vpop.permute.xlu0 %4435
    %4437 = vrot.lane.b32.xlu0 %v4429, 94
    %v4438 = vpop.permute.xlu0 %4437
    %4439 = vrot.lane.b32.xlu0 %v4430, 94
    %v4440 = vpop.permute.xlu0 %4439
    %4441 = vrot.lane.b32.xlu0 %v4431, 94
    %v4442 = vpop.permute.xlu0 %4441
    %4443 = vrot.lane.b32.xlu0 %v4432, 94
    %v4444 = vpop.permute.xlu0 %4443
    %v4445 = vsel %vm1516, %v4434, %v4436
    %v4446 = vsel %vm1516, %v4436, %v4438
    %v4447 = vsel %vm1516, %v4440, %v4442
    %v4448 = vsel %vm1516, %v4442, %v4444
    %v4453 = vadd.f32 %v4409, %v4445
    %v4454 = vadd.f32 %v4410, %v4446
    %v4455 = vadd.f32 %v4411, %v4447
    %v4456 = vadd.f32 %v4412, %v4448
    %s4457 = sld [smem:[#allocation6 + $0x62]]
    %v4458 = vstv %s4457
    %v4459 = vmul.f32 %v4458, %v211
    %v4460 = vmul.f32 %v4458, %v212
    %v4461 = vmul.f32 %v4458, %v213
    %v4462 = vmul.f32 %v4458, %v214
    %v4463 = vmul.f32 %v4458, %v215
    %v4464 = vmul.f32 %v4458, %v216
    %v4471 = vrot.slane %v4459, 2
    %v4472 = vrot.slane %v4460, 2
    %v4473 = vrot.slane %v4461, 2
    %v4474 = vrot.slane %v4462, 2
    %v4475 = vrot.slane %v4463, 2
    %v4476 = vrot.slane %v4464, 2
    %4477 = vrot.lane.b32.xlu0 %v4471, 94
    %v4478 = vpop.permute.xlu0 %4477
    %4479 = vrot.lane.b32.xlu0 %v4472, 94
    %v4480 = vpop.permute.xlu0 %4479
    %4481 = vrot.lane.b32.xlu0 %v4473, 94
    %v4482 = vpop.permute.xlu0 %4481
    %4483 = vrot.lane.b32.xlu0 %v4474, 94
    %v4484 = vpop.permute.xlu0 %4483
    %4485 = vrot.lane.b32.xlu0 %v4475, 94
    %v4486 = vpop.permute.xlu0 %4485
    %4487 = vrot.lane.b32.xlu0 %v4476, 94
    %v4488 = vpop.permute.xlu0 %4487
    %v4489 = vsel %vm1516, %v4478, %v4480
    %v4490 = vsel %vm1516, %v4480, %v4482
    %v4491 = vsel %vm1516, %v4484, %v4486
    %v4492 = vsel %vm1516, %v4486, %v4488
    %v4497 = vadd.f32 %v4453, %v4489
    %v4498 = vadd.f32 %v4454, %v4490
    %v4499 = vadd.f32 %v4455, %v4491
    %v4500 = vadd.f32 %v4456, %v4492
    %s4501 = sld [smem:[#allocation6 + $0x6b]]
    %v4502 = vstv %s4501
    %v4503 = vmul.f32 %v4502, %v211
    %v4504 = vmul.f32 %v4502, %v212
    %v4505 = vmul.f32 %v4502, %v213
    %v4506 = vmul.f32 %v4502, %v214
    %v4507 = vmul.f32 %v4502, %v215
    %v4508 = vmul.f32 %v4502, %v216
    %v4515 = vrot.slane %v4503, 3
    %v4516 = vrot.slane %v4504, 3
    %v4517 = vrot.slane %v4505, 3
    %v4518 = vrot.slane %v4506, 3
    %v4519 = vrot.slane %v4507, 3
    %v4520 = vrot.slane %v4508, 3
    %4521 = vrot.lane.b32.xlu0 %v4515, 94
    %v4522 = vpop.permute.xlu0 %4521
    %4523 = vrot.lane.b32.xlu0 %v4516, 94
    %v4524 = vpop.permute.xlu0 %4523
    %4525 = vrot.lane.b32.xlu0 %v4517, 94
    %v4526 = vpop.permute.xlu0 %4525
    %4527 = vrot.lane.b32.xlu0 %v4518, 94
    %v4528 = vpop.permute.xlu0 %4527
    %4529 = vrot.lane.b32.xlu0 %v4519, 94
    %v4530 = vpop.permute.xlu0 %4529
    %4531 = vrot.lane.b32.xlu0 %v4520, 94
    %v4532 = vpop.permute.xlu0 %4531
    %v4533 = vsel %vm1516, %v4522, %v4524
    %v4534 = vsel %vm1516, %v4524, %v4526
    %v4535 = vsel %vm1516, %v4528, %v4530
    %v4536 = vsel %vm1516, %v4530, %v4532
    %v4541 = vadd.f32 %v4497, %v4533
    %v4542 = vadd.f32 %v4498, %v4534
    %v4543 = vadd.f32 %v4499, %v4535
    %v4544 = vadd.f32 %v4500, %v4536
    %s4545 = sld [smem:[#allocation7 + $0x2]]
    %v4546 = vstv %s4545
    %v4547 = vadd.f32 %v4541, %v4546
    %v4548 = vadd.f32 %v4542, %v4546
    %v4549 = vadd.f32 %v4543, %v4546
    %v4550 = vadd.f32 %v4544, %v4546
    %s4551 = sld [smem:[#allocation6 + $0x6c]]
    %v4552 = vstv %s4551
    %v4553 = vmul.f32 %v4552, %v129
    %v4554 = vmul.f32 %v4552, %v130
    %v4555 = vmul.f32 %v4552, %v131
    %v4556 = vmul.f32 %v4552, %v132
    %v4557 = vadd.f32 %v4553, 0.0
    %v4558 = vadd.f32 %v4554, 0.0
    %v4559 = vadd.f32 %v4555, 0.0
    %v4560 = vadd.f32 %v4556, 0.0
    %s4561 = sld [smem:[#allocation6 + $0x75]]
    %v4562 = vstv %s4561
    %v4563 = vmul.f32 %v4562, %v129
    %v4564 = vmul.f32 %v4562, %v130
    %v4565 = vmul.f32 %v4562, %v131
    %v4566 = vmul.f32 %v4562, %v132
    %v4571 = vrot.slane %v4563, 1
    %v4572 = vrot.slane %v4564, 1
    %v4573 = vrot.slane %v4565, 1
    %v4574 = vrot.slane %v4566, 1
    %v4579 = vadd.f32 %v4557, %v4571
    %v4580 = vadd.f32 %v4558, %v4572
    %v4581 = vadd.f32 %v4559, %v4573
    %v4582 = vadd.f32 %v4560, %v4574
    %s4583 = sld [smem:[#allocation6 + $0x7e]]
    %v4584 = vstv %s4583
    %v4585 = vmul.f32 %v4584, %v129
    %v4586 = vmul.f32 %v4584, %v130
    %v4587 = vmul.f32 %v4584, %v131
    %v4588 = vmul.f32 %v4584, %v132
    %v4593 = vrot.slane %v4585, 2
    %v4594 = vrot.slane %v4586, 2
    %v4595 = vrot.slane %v4587, 2
    %v4596 = vrot.slane %v4588, 2
    %v4601 = vadd.f32 %v4579, %v4593
    %v4602 = vadd.f32 %v4580, %v4594
    %v4603 = vadd.f32 %v4581, %v4595
    %v4604 = vadd.f32 %v4582, %v4596
    %s4605 = sld [smem:[#allocation6 + $0x87]]
    %v4606 = vstv %s4605
    %v4607 = vmul.f32 %v4606, %v129
    %v4608 = vmul.f32 %v4606, %v130
    %v4609 = vmul.f32 %v4606, %v131
    %v4610 = vmul.f32 %v4606, %v132
    %v4615 = vrot.slane %v4607, 3
    %v4616 = vrot.slane %v4608, 3
    %v4617 = vrot.slane %v4609, 3
    %v4618 = vrot.slane %v4610, 3
    %v4623 = vadd.f32 %v4601, %v4615
    %v4624 = vadd.f32 %v4602, %v4616
    %v4625 = vadd.f32 %v4603, %v4617
    %v4626 = vadd.f32 %v4604, %v4618
    %s4627 = sld [smem:[#allocation6 + $0x6d]]
    %v4628 = vstv %s4627
    %v4629 = vmul.f32 %v4628, %v114
    %v4630 = vmul.f32 %v4628, %v106
    %v4631 = vmul.f32 %v4628, %v116
    %v4632 = vmul.f32 %v4628, %v115
    %v4633 = vmul.f32 %v4628, %v107
    %v4634 = vmul.f32 %v4628, %v117
    %4641 = vrot.lane.b32.xlu0 %v4629, 127
    %v4642 = vpop.permute.xlu0 %4641
    %4643 = vrot.lane.b32.xlu0 %v4630, 127
    %v4644 = vpop.permute.xlu0 %4643
    %4645 = vrot.lane.b32.xlu0 %v4631, 127
    %v4646 = vpop.permute.xlu0 %4645
    %4647 = vrot.lane.b32.xlu0 %v4632, 127
    %v4648 = vpop.permute.xlu0 %4647
    %4649 = vrot.lane.b32.xlu0 %v4633, 127
    %v4650 = vpop.permute.xlu0 %4649
    %4651 = vrot.lane.b32.xlu0 %v4634, 127
    %v4652 = vpop.permute.xlu0 %4651
    %v4653 = vsel %vm319, %v4642, %v4644
    %v4654 = vsel %vm319, %v4644, %v4646
    %v4655 = vsel %vm319, %v4648, %v4650
    %v4656 = vsel %vm319, %v4650, %v4652
    %v4661 = vadd.f32 %v4623, %v4653
    %v4662 = vadd.f32 %v4624, %v4654
    %v4663 = vadd.f32 %v4625, %v4655
    %v4664 = vadd.f32 %v4626, %v4656
    %s4665 = sld [smem:[#allocation6 + $0x76]]
    %v4666 = vstv %s4665
    %v4667 = vmul.f32 %v4666, %v114
    %v4668 = vmul.f32 %v4666, %v106
    %v4669 = vmul.f32 %v4666, %v116
    %v4670 = vmul.f32 %v4666, %v115
    %v4671 = vmul.f32 %v4666, %v107
    %v4672 = vmul.f32 %v4666, %v117
    %v4679 = vrot.slane %v4667, 1
    %v4680 = vrot.slane %v4668, 1
    %v4681 = vrot.slane %v4669, 1
    %v4682 = vrot.slane %v4670, 1
    %v4683 = vrot.slane %v4671, 1
    %v4684 = vrot.slane %v4672, 1
    %4685 = vrot.lane.b32.xlu0 %v4679, 127
    %v4686 = vpop.permute.xlu0 %4685
    %4687 = vrot.lane.b32.xlu0 %v4680, 127
    %v4688 = vpop.permute.xlu0 %4687
    %4689 = vrot.lane.b32.xlu0 %v4681, 127
    %v4690 = vpop.permute.xlu0 %4689
    %4691 = vrot.lane.b32.xlu0 %v4682, 127
    %v4692 = vpop.permute.xlu0 %4691
    %4693 = vrot.lane.b32.xlu0 %v4683, 127
    %v4694 = vpop.permute.xlu0 %4693
    %4695 = vrot.lane.b32.xlu0 %v4684, 127
    %v4696 = vpop.permute.xlu0 %4695
    %v4697 = vsel %vm319, %v4686, %v4688
    %v4698 = vsel %vm319, %v4688, %v4690
    %v4699 = vsel %vm319, %v4692, %v4694
    %v4700 = vsel %vm319, %v4694, %v4696
    %v4705 = vadd.f32 %v4661, %v4697
    %v4706 = vadd.f32 %v4662, %v4698
    %v4707 = vadd.f32 %v4663, %v4699
    %v4708 = vadd.f32 %v4664, %v4700
    %s4709 = sld [smem:[#allocation6 + $0x7f]]
    %v4710 = vstv %s4709
    %v4711 = vmul.f32 %v4710, %v114
    %v4712 = vmul.f32 %v4710, %v106
    %v4713 = vmul.f32 %v4710, %v116
    %v4714 = vmul.f32 %v4710, %v115
    %v4715 = vmul.f32 %v4710, %v107
    %v4716 = vmul.f32 %v4710, %v117
    %v4723 = vrot.slane %v4711, 2
    %v4724 = vrot.slane %v4712, 2
    %v4725 = vrot.slane %v4713, 2
    %v4726 = vrot.slane %v4714, 2
    %v4727 = vrot.slane %v4715, 2
    %v4728 = vrot.slane %v4716, 2
    %4729 = vrot.lane.b32.xlu0 %v4723, 127
    %v4730 = vpop.permute.xlu0 %4729
    %4731 = vrot.lane.b32.xlu0 %v4724, 127
    %v4732 = vpop.permute.xlu0 %4731
    %4733 = vrot.lane.b32.xlu0 %v4725, 127
    %v4734 = vpop.permute.xlu0 %4733
    %4735 = vrot.lane.b32.xlu0 %v4726, 127
    %v4736 = vpop.permute.xlu0 %4735
    %4737 = vrot.lane.b32.xlu0 %v4727, 127
    %v4738 = vpop.permute.xlu0 %4737
    %4739 = vrot.lane.b32.xlu0 %v4728, 127
    %v4740 = vpop.permute.xlu0 %4739
    %v4741 = vsel %vm319, %v4730, %v4732
    %v4742 = vsel %vm319, %v4732, %v4734
    %v4743 = vsel %vm319, %v4736, %v4738
    %v4744 = vsel %vm319, %v4738, %v4740
    %v4749 = vadd.f32 %v4705, %v4741
    %v4750 = vadd.f32 %v4706, %v4742
    %v4751 = vadd.f32 %v4707, %v4743
    %v4752 = vadd.f32 %v4708, %v4744
    %s4753 = sld [smem:[#allocation6 + $0x88]]
    %v4754 = vstv %s4753
    %v4755 = vmul.f32 %v4754, %v114
    %v4756 = vmul.f32 %v4754, %v106
    %v4757 = vmul.f32 %v4754, %v116
    %v4758 = vmul.f32 %v4754, %v115
    %v4759 = vmul.f32 %v4754, %v107
    %v4760 = vmul.f32 %v4754, %v117
    %v4767 = vrot.slane %v4755, 3
    %v4768 = vrot.slane %v4756, 3
    %v4769 = vrot.slane %v4757, 3
    %v4770 = vrot.slane %v4758, 3
    %v4771 = vrot.slane %v4759, 3
    %v4772 = vrot.slane %v4760, 3
    %4773 = vrot.lane.b32.xlu0 %v4767, 127
    %v4774 = vpop.permute.xlu0 %4773
    %4775 = vrot.lane.b32.xlu0 %v4768, 127
    %v4776 = vpop.permute.xlu0 %4775
    %4777 = vrot.lane.b32.xlu0 %v4769, 127
    %v4778 = vpop.permute.xlu0 %4777
    %4779 = vrot.lane.b32.xlu0 %v4770, 127
    %v4780 = vpop.permute.xlu0 %4779
    %4781 = vrot.lane.b32.xlu0 %v4771, 127
    %v4782 = vpop.permute.xlu0 %4781
    %4783 = vrot.lane.b32.xlu0 %v4772, 127
    %v4784 = vpop.permute.xlu0 %4783
    %v4785 = vsel %vm319, %v4774, %v4776
    %v4786 = vsel %vm319, %v4776, %v4778
    %v4787 = vsel %vm319, %v4780, %v4782
    %v4788 = vsel %vm319, %v4782, %v4784
    %v4793 = vadd.f32 %v4749, %v4785
    %v4794 = vadd.f32 %v4750, %v4786
    %v4795 = vadd.f32 %v4751, %v4787
    %v4796 = vadd.f32 %v4752, %v4788
    %s4797 = sld [smem:[#allocation6 + $0x6e]]
    %v4798 = vstv %s4797
    %v4799 = vmul.f32 %v4798, %v151
    %v4800 = vmul.f32 %v4798, %v152
    %v4801 = vmul.f32 %v4798, %v153
    %v4802 = vmul.f32 %v4798, %v154
    %v4803 = vmul.f32 %v4798, %v155
    %v4804 = vmul.f32 %v4798, %v156
    %4811 = vrot.lane.b32.xlu0 %v4799, 126
    %v4812 = vpop.permute.xlu0 %4811
    %4813 = vrot.lane.b32.xlu0 %v4800, 126
    %v4814 = vpop.permute.xlu0 %4813
    %4815 = vrot.lane.b32.xlu0 %v4801, 126
    %v4816 = vpop.permute.xlu0 %4815
    %4817 = vrot.lane.b32.xlu0 %v4802, 126
    %v4818 = vpop.permute.xlu0 %4817
    %4819 = vrot.lane.b32.xlu0 %v4803, 126
    %v4820 = vpop.permute.xlu0 %4819
    %4821 = vrot.lane.b32.xlu0 %v4804, 126
    %v4822 = vpop.permute.xlu0 %4821
    %v4823 = vsel %vm490, %v4812, %v4814
    %v4824 = vsel %vm490, %v4814, %v4816
    %v4825 = vsel %vm490, %v4818, %v4820
    %v4826 = vsel %vm490, %v4820, %v4822
    %v4831 = vadd.f32 %v4793, %v4823
    %v4832 = vadd.f32 %v4794, %v4824
    %v4833 = vadd.f32 %v4795, %v4825
    %v4834 = vadd.f32 %v4796, %v4826
    %s4835 = sld [smem:[#allocation6 + $0x77]]
    %v4836 = vstv %s4835
    %v4837 = vmul.f32 %v4836, %v151
    %v4838 = vmul.f32 %v4836, %v152
    %v4839 = vmul.f32 %v4836, %v153
    %v4840 = vmul.f32 %v4836, %v154
    %v4841 = vmul.f32 %v4836, %v155
    %v4842 = vmul.f32 %v4836, %v156
    %v4849 = vrot.slane %v4837, 1
    %v4850 = vrot.slane %v4838, 1
    %v4851 = vrot.slane %v4839, 1
    %v4852 = vrot.slane %v4840, 1
    %v4853 = vrot.slane %v4841, 1
    %v4854 = vrot.slane %v4842, 1
    %4855 = vrot.lane.b32.xlu0 %v4849, 126
    %v4856 = vpop.permute.xlu0 %4855
    %4857 = vrot.lane.b32.xlu0 %v4850, 126
    %v4858 = vpop.permute.xlu0 %4857
    %4859 = vrot.lane.b32.xlu0 %v4851, 126
    %v4860 = vpop.permute.xlu0 %4859
    %4861 = vrot.lane.b32.xlu0 %v4852, 126
    %v4862 = vpop.permute.xlu0 %4861
    %4863 = vrot.lane.b32.xlu0 %v4853, 126
    %v4864 = vpop.permute.xlu0 %4863
    %4865 = vrot.lane.b32.xlu0 %v4854, 126
    %v4866 = vpop.permute.xlu0 %4865
    %v4867 = vsel %vm490, %v4856, %v4858
    %v4868 = vsel %vm490, %v4858, %v4860
    %v4869 = vsel %vm490, %v4862, %v4864
    %v4870 = vsel %vm490, %v4864, %v4866
    %v4875 = vadd.f32 %v4831, %v4867
    %v4876 = vadd.f32 %v4832, %v4868
    %v4877 = vadd.f32 %v4833, %v4869
    %v4878 = vadd.f32 %v4834, %v4870
    %s4879 = sld [smem:[#allocation6 + $0x80]]
    %v4880 = vstv %s4879
    %v4881 = vmul.f32 %v4880, %v151
    %v4882 = vmul.f32 %v4880, %v152
    %v4883 = vmul.f32 %v4880, %v153
    %v4884 = vmul.f32 %v4880, %v154
    %v4885 = vmul.f32 %v4880, %v155
    %v4886 = vmul.f32 %v4880, %v156
    %v4893 = vrot.slane %v4881, 2
    %v4894 = vrot.slane %v4882, 2
    %v4895 = vrot.slane %v4883, 2
    %v4896 = vrot.slane %v4884, 2
    %v4897 = vrot.slane %v4885, 2
    %v4898 = vrot.slane %v4886, 2
    %4899 = vrot.lane.b32.xlu0 %v4893, 126
    %v4900 = vpop.permute.xlu0 %4899
    %4901 = vrot.lane.b32.xlu0 %v4894, 126
    %v4902 = vpop.permute.xlu0 %4901
    %4903 = vrot.lane.b32.xlu0 %v4895, 126
    %v4904 = vpop.permute.xlu0 %4903
    %4905 = vrot.lane.b32.xlu0 %v4896, 126
    %v4906 = vpop.permute.xlu0 %4905
    %4907 = vrot.lane.b32.xlu0 %v4897, 126
    %v4908 = vpop.permute.xlu0 %4907
    %4909 = vrot.lane.b32.xlu0 %v4898, 126
    %v4910 = vpop.permute.xlu0 %4909
    %v4911 = vsel %vm490, %v4900, %v4902
    %v4912 = vsel %vm490, %v4902, %v4904
    %v4913 = vsel %vm490, %v4906, %v4908
    %v4914 = vsel %vm490, %v4908, %v4910
    %v4919 = vadd.f32 %v4875, %v4911
    %v4920 = vadd.f32 %v4876, %v4912
    %v4921 = vadd.f32 %v4877, %v4913
    %v4922 = vadd.f32 %v4878, %v4914
    %s4923 = sld [smem:[#allocation6 + $0x89]]
    %v4924 = vstv %s4923
    %v4925 = vmul.f32 %v4924, %v151
    %v4926 = vmul.f32 %v4924, %v152
    %v4927 = vmul.f32 %v4924, %v153
    %v4928 = vmul.f32 %v4924, %v154
    %v4929 = vmul.f32 %v4924, %v155
    %v4930 = vmul.f32 %v4924, %v156
    %v4937 = vrot.slane %v4925, 3
    %v4938 = vrot.slane %v4926, 3
    %v4939 = vrot.slane %v4927, 3
    %v4940 = vrot.slane %v4928, 3
    %v4941 = vrot.slane %v4929, 3
    %v4942 = vrot.slane %v4930, 3
    %4943 = vrot.lane.b32.xlu0 %v4937, 126
    %v4944 = vpop.permute.xlu0 %4943
    %4945 = vrot.lane.b32.xlu0 %v4938, 126
    %v4946 = vpop.permute.xlu0 %4945
    %4947 = vrot.lane.b32.xlu0 %v4939, 126
    %v4948 = vpop.permute.xlu0 %4947
    %4949 = vrot.lane.b32.xlu0 %v4940, 126
    %v4950 = vpop.permute.xlu0 %4949
    %4951 = vrot.lane.b32.xlu0 %v4941, 126
    %v4952 = vpop.permute.xlu0 %4951
    %4953 = vrot.lane.b32.xlu0 %v4942, 126
    %v4954 = vpop.permute.xlu0 %4953
    %v4955 = vsel %vm490, %v4944, %v4946
    %v4956 = vsel %vm490, %v4946, %v4948
    %v4957 = vsel %vm490, %v4950, %v4952
    %v4958 = vsel %vm490, %v4952, %v4954
    %v4963 = vadd.f32 %v4919, %v4955
    %v4964 = vadd.f32 %v4920, %v4956
    %v4965 = vadd.f32 %v4921, %v4957
    %v4966 = vadd.f32 %v4922, %v4958
    %s4967 = sld [smem:[#allocation6 + $0x6f]]
    %v4968 = vstv %s4967
    %v4969 = vmul.f32 %v4968, %v166
    %v4970 = vmul.f32 %v4968, %v167
    %v4971 = vmul.f32 %v4968, %v168
    %v4972 = vmul.f32 %v4968, %v169
    %v4973 = vmul.f32 %v4968, %v170
    %v4974 = vmul.f32 %v4968, %v171
    %4981 = vrot.lane.b32.xlu0 %v4969, 112
    %v4982 = vpop.permute.xlu0 %4981
    %4983 = vrot.lane.b32.xlu0 %v4970, 112
    %v4984 = vpop.permute.xlu0 %4983
    %4985 = vrot.lane.b32.xlu0 %v4971, 112
    %v4986 = vpop.permute.xlu0 %4985
    %4987 = vrot.lane.b32.xlu0 %v4972, 112
    %v4988 = vpop.permute.xlu0 %4987
    %4989 = vrot.lane.b32.xlu0 %v4973, 112
    %v4990 = vpop.permute.xlu0 %4989
    %4991 = vrot.lane.b32.xlu0 %v4974, 112
    %v4992 = vpop.permute.xlu0 %4991
    %v4993 = vsel %vm661, %v4982, %v4984
    %v4994 = vsel %vm661, %v4984, %v4986
    %v4995 = vsel %vm661, %v4988, %v4990
    %v4996 = vsel %vm661, %v4990, %v4992
    %v5001 = vadd.f32 %v4963, %v4993
    %v5002 = vadd.f32 %v4964, %v4994
    %v5003 = vadd.f32 %v4965, %v4995
    %v5004 = vadd.f32 %v4966, %v4996
    %s5005 = sld [smem:[#allocation6 + $0x78]]
    %v5006 = vstv %s5005
    %v5007 = vmul.f32 %v5006, %v166
    %v5008 = vmul.f32 %v5006, %v167
    %v5009 = vmul.f32 %v5006, %v168
    %v5010 = vmul.f32 %v5006, %v169
    %v5011 = vmul.f32 %v5006, %v170
    %v5012 = vmul.f32 %v5006, %v171
    %v5019 = vrot.slane %v5007, 1
    %v5020 = vrot.slane %v5008, 1
    %v5021 = vrot.slane %v5009, 1
    %v5022 = vrot.slane %v5010, 1
    %v5023 = vrot.slane %v5011, 1
    %v5024 = vrot.slane %v5012, 1
    %5025 = vrot.lane.b32.xlu0 %v5019, 112
    %v5026 = vpop.permute.xlu0 %5025
    %5027 = vrot.lane.b32.xlu0 %v5020, 112
    %v5028 = vpop.permute.xlu0 %5027
    %5029 = vrot.lane.b32.xlu0 %v5021, 112
    %v5030 = vpop.permute.xlu0 %5029
    %5031 = vrot.lane.b32.xlu0 %v5022, 112
    %v5032 = vpop.permute.xlu0 %5031
    %5033 = vrot.lane.b32.xlu0 %v5023, 112
    %v5034 = vpop.permute.xlu0 %5033
    %5035 = vrot.lane.b32.xlu0 %v5024, 112
    %v5036 = vpop.permute.xlu0 %5035
    %v5037 = vsel %vm661, %v5026, %v5028
    %v5038 = vsel %vm661, %v5028, %v5030
    %v5039 = vsel %vm661, %v5032, %v5034
    %v5040 = vsel %vm661, %v5034, %v5036
    %v5045 = vadd.f32 %v5001, %v5037
    %v5046 = vadd.f32 %v5002, %v5038
    %v5047 = vadd.f32 %v5003, %v5039
    %v5048 = vadd.f32 %v5004, %v5040
    %s5049 = sld [smem:[#allocation6 + $0x81]]
    %v5050 = vstv %s5049
    %v5051 = vmul.f32 %v5050, %v166
    %v5052 = vmul.f32 %v5050, %v167
    %v5053 = vmul.f32 %v5050, %v168
    %v5054 = vmul.f32 %v5050, %v169
    %v5055 = vmul.f32 %v5050, %v170
    %v5056 = vmul.f32 %v5050, %v171
    %v5063 = vrot.slane %v5051, 2
    %v5064 = vrot.slane %v5052, 2
    %v5065 = vrot.slane %v5053, 2
    %v5066 = vrot.slane %v5054, 2
    %v5067 = vrot.slane %v5055, 2
    %v5068 = vrot.slane %v5056, 2
    %5069 = vrot.lane.b32.xlu0 %v5063, 112
    %v5070 = vpop.permute.xlu0 %5069
    %5071 = vrot.lane.b32.xlu0 %v5064, 112
    %v5072 = vpop.permute.xlu0 %5071
    %5073 = vrot.lane.b32.xlu0 %v5065, 112
    %v5074 = vpop.permute.xlu0 %5073
    %5075 = vrot.lane.b32.xlu0 %v5066, 112
    %v5076 = vpop.permute.xlu0 %5075
    %5077 = vrot.lane.b32.xlu0 %v5067, 112
    %v5078 = vpop.permute.xlu0 %5077
    %5079 = vrot.lane.b32.xlu0 %v5068, 112
    %v5080 = vpop.permute.xlu0 %5079
    %v5081 = vsel %vm661, %v5070, %v5072
    %v5082 = vsel %vm661, %v5072, %v5074
    %v5083 = vsel %vm661, %v5076, %v5078
    %v5084 = vsel %vm661, %v5078, %v5080
    %v5089 = vadd.f32 %v5045, %v5081
    %v5090 = vadd.f32 %v5046, %v5082
    %v5091 = vadd.f32 %v5047, %v5083
    %v5092 = vadd.f32 %v5048, %v5084
    %s5093 = sld [smem:[#allocation6 + $0x8a]]
    %v5094 = vstv %s5093
    %v5095 = vmul.f32 %v5094, %v166
    %v5096 = vmul.f32 %v5094, %v167
    %v5097 = vmul.f32 %v5094, %v168
    %v5098 = vmul.f32 %v5094, %v169
    %v5099 = vmul.f32 %v5094, %v170
    %v5100 = vmul.f32 %v5094, %v171
    %v5107 = vrot.slane %v5095, 3
    %v5108 = vrot.slane %v5096, 3
    %v5109 = vrot.slane %v5097, 3
    %v5110 = vrot.slane %v5098, 3
    %v5111 = vrot.slane %v5099, 3
    %v5112 = vrot.slane %v5100, 3
    %5113 = vrot.lane.b32.xlu0 %v5107, 112
    %v5114 = vpop.permute.xlu0 %5113
    %5115 = vrot.lane.b32.xlu0 %v5108, 112
    %v5116 = vpop.permute.xlu0 %5115
    %5117 = vrot.lane.b32.xlu0 %v5109, 112
    %v5118 = vpop.permute.xlu0 %5117
    %5119 = vrot.lane.b32.xlu0 %v5110, 112
    %v5120 = vpop.permute.xlu0 %5119
    %5121 = vrot.lane.b32.xlu0 %v5111, 112
    %v5122 = vpop.permute.xlu0 %5121
    %5123 = vrot.lane.b32.xlu0 %v5112, 112
    %v5124 = vpop.permute.xlu0 %5123
    %v5125 = vsel %vm661, %v5114, %v5116
    %v5126 = vsel %vm661, %v5116, %v5118
    %v5127 = vsel %vm661, %v5120, %v5122
    %v5128 = vsel %vm661, %v5122, %v5124
    %v5133 = vadd.f32 %v5089, %v5125
    %v5134 = vadd.f32 %v5090, %v5126
    %v5135 = vadd.f32 %v5091, %v5127
    %v5136 = vadd.f32 %v5092, %v5128
    %s5137 = sld [smem:[#allocation6 + $0x70]]
    %v5138 = vstv %s5137
    %v5139 = vmul.f32 %v5138, %v114
    %v5140 = vmul.f32 %v5138, %v106
    %v5141 = vmul.f32 %v5138, %v116
    %v5142 = vmul.f32 %v5138, %v115
    %v5143 = vmul.f32 %v5138, %v107
    %v5144 = vmul.f32 %v5138, %v117
    %5151 = vrot.lane.b32.xlu0 %v5139, 111
    %v5152 = vpop.permute.xlu0 %5151
    %5153 = vrot.lane.b32.xlu0 %v5140, 111
    %v5154 = vpop.permute.xlu0 %5153
    %5155 = vrot.lane.b32.xlu0 %v5141, 111
    %v5156 = vpop.permute.xlu0 %5155
    %5157 = vrot.lane.b32.xlu0 %v5142, 111
    %v5158 = vpop.permute.xlu0 %5157
    %5159 = vrot.lane.b32.xlu0 %v5143, 111
    %v5160 = vpop.permute.xlu0 %5159
    %5161 = vrot.lane.b32.xlu0 %v5144, 111
    %v5162 = vpop.permute.xlu0 %5161
    %v5163 = vsel %vm832, %v5152, %v5154
    %v5164 = vsel %vm832, %v5154, %v5156
    %v5165 = vsel %vm832, %v5158, %v5160
    %v5166 = vsel %vm832, %v5160, %v5162
    %v5171 = vadd.f32 %v5133, %v5163
    %v5172 = vadd.f32 %v5134, %v5164
    %v5173 = vadd.f32 %v5135, %v5165
    %v5174 = vadd.f32 %v5136, %v5166
    %s5175 = sld [smem:[#allocation6 + $0x79]]
    %v5176 = vstv %s5175
    %v5177 = vmul.f32 %v5176, %v114
    %v5178 = vmul.f32 %v5176, %v106
    %v5179 = vmul.f32 %v5176, %v116
    %v5180 = vmul.f32 %v5176, %v115
    %v5181 = vmul.f32 %v5176, %v107
    %v5182 = vmul.f32 %v5176, %v117
    %v5189 = vrot.slane %v5177, 1
    %v5190 = vrot.slane %v5178, 1
    %v5191 = vrot.slane %v5179, 1
    %v5192 = vrot.slane %v5180, 1
    %v5193 = vrot.slane %v5181, 1
    %v5194 = vrot.slane %v5182, 1
    %5195 = vrot.lane.b32.xlu0 %v5189, 111
    %v5196 = vpop.permute.xlu0 %5195
    %5197 = vrot.lane.b32.xlu0 %v5190, 111
    %v5198 = vpop.permute.xlu0 %5197
    %5199 = vrot.lane.b32.xlu0 %v5191, 111
    %v5200 = vpop.permute.xlu0 %5199
    %5201 = vrot.lane.b32.xlu0 %v5192, 111
    %v5202 = vpop.permute.xlu0 %5201
    %5203 = vrot.lane.b32.xlu0 %v5193, 111
    %v5204 = vpop.permute.xlu0 %5203
    %5205 = vrot.lane.b32.xlu0 %v5194, 111
    %v5206 = vpop.permute.xlu0 %5205
    %v5207 = vsel %vm832, %v5196, %v5198
    %v5208 = vsel %vm832, %v5198, %v5200
    %v5209 = vsel %vm832, %v5202, %v5204
    %v5210 = vsel %vm832, %v5204, %v5206
    %v5215 = vadd.f32 %v5171, %v5207
    %v5216 = vadd.f32 %v5172, %v5208
    %v5217 = vadd.f32 %v5173, %v5209
    %v5218 = vadd.f32 %v5174, %v5210
    %s5219 = sld [smem:[#allocation6 + $0x82]]
    %v5220 = vstv %s5219
    %v5221 = vmul.f32 %v5220, %v114
    %v5222 = vmul.f32 %v5220, %v106
    %v5223 = vmul.f32 %v5220, %v116
    %v5224 = vmul.f32 %v5220, %v115
    %v5225 = vmul.f32 %v5220, %v107
    %v5226 = vmul.f32 %v5220, %v117
    %v5233 = vrot.slane %v5221, 2
    %v5234 = vrot.slane %v5222, 2
    %v5235 = vrot.slane %v5223, 2
    %v5236 = vrot.slane %v5224, 2
    %v5237 = vrot.slane %v5225, 2
    %v5238 = vrot.slane %v5226, 2
    %5239 = vrot.lane.b32.xlu0 %v5233, 111
    %v5240 = vpop.permute.xlu0 %5239
    %5241 = vrot.lane.b32.xlu0 %v5234, 111
    %v5242 = vpop.permute.xlu0 %5241
    %5243 = vrot.lane.b32.xlu0 %v5235, 111
    %v5244 = vpop.permute.xlu0 %5243
    %5245 = vrot.lane.b32.xlu0 %v5236, 111
    %v5246 = vpop.permute.xlu0 %5245
    %5247 = vrot.lane.b32.xlu0 %v5237, 111
    %v5248 = vpop.permute.xlu0 %5247
    %5249 = vrot.lane.b32.xlu0 %v5238, 111
    %v5250 = vpop.permute.xlu0 %5249
    %v5251 = vsel %vm832, %v5240, %v5242
    %v5252 = vsel %vm832, %v5242, %v5244
    %v5253 = vsel %vm832, %v5246, %v5248
    %v5254 = vsel %vm832, %v5248, %v5250
    %v5259 = vadd.f32 %v5215, %v5251
    %v5260 = vadd.f32 %v5216, %v5252
    %v5261 = vadd.f32 %v5217, %v5253
    %v5262 = vadd.f32 %v5218, %v5254
    %s5263 = sld [smem:[#allocation6 + $0x8b]]
    %v5264 = vstv %s5263
    %v5265 = vmul.f32 %v5264, %v114
    %v5266 = vmul.f32 %v5264, %v106
    %v5267 = vmul.f32 %v5264, %v116
    %v5268 = vmul.f32 %v5264, %v115
    %v5269 = vmul.f32 %v5264, %v107
    %v5270 = vmul.f32 %v5264, %v117
    %v5277 = vrot.slane %v5265, 3
    %v5278 = vrot.slane %v5266, 3
    %v5279 = vrot.slane %v5267, 3
    %v5280 = vrot.slane %v5268, 3
    %v5281 = vrot.slane %v5269, 3
    %v5282 = vrot.slane %v5270, 3
    %5283 = vrot.lane.b32.xlu0 %v5277, 111
    %v5284 = vpop.permute.xlu0 %5283
    %5285 = vrot.lane.b32.xlu0 %v5278, 111
    %v5286 = vpop.permute.xlu0 %5285
    %5287 = vrot.lane.b32.xlu0 %v5279, 111
    %v5288 = vpop.permute.xlu0 %5287
    %5289 = vrot.lane.b32.xlu0 %v5280, 111
    %v5290 = vpop.permute.xlu0 %5289
    %5291 = vrot.lane.b32.xlu0 %v5281, 111
    %v5292 = vpop.permute.xlu0 %5291
    %5293 = vrot.lane.b32.xlu0 %v5282, 111
    %v5294 = vpop.permute.xlu0 %5293
    %v5295 = vsel %vm832, %v5284, %v5286
    %v5296 = vsel %vm832, %v5286, %v5288
    %v5297 = vsel %vm832, %v5290, %v5292
    %v5298 = vsel %vm832, %v5292, %v5294
    %v5303 = vadd.f32 %v5259, %v5295
    %v5304 = vadd.f32 %v5260, %v5296
    %v5305 = vadd.f32 %v5261, %v5297
    %v5306 = vadd.f32 %v5262, %v5298
    %s5307 = sld [smem:[#allocation6 + $0x71]]
    %v5308 = vstv %s5307
    %v5309 = vmul.f32 %v5308, %v181
    %v5310 = vmul.f32 %v5308, %v182
    %v5311 = vmul.f32 %v5308, %v183
    %v5312 = vmul.f32 %v5308, %v184
    %v5313 = vmul.f32 %v5308, %v185
    %v5314 = vmul.f32 %v5308, %v186
    %5321 = vrot.lane.b32.xlu0 %v5309, 110
    %v5322 = vpop.permute.xlu0 %5321
    %5323 = vrot.lane.b32.xlu0 %v5310, 110
    %v5324 = vpop.permute.xlu0 %5323
    %5325 = vrot.lane.b32.xlu0 %v5311, 110
    %v5326 = vpop.permute.xlu0 %5325
    %5327 = vrot.lane.b32.xlu0 %v5312, 110
    %v5328 = vpop.permute.xlu0 %5327
    %5329 = vrot.lane.b32.xlu0 %v5313, 110
    %v5330 = vpop.permute.xlu0 %5329
    %5331 = vrot.lane.b32.xlu0 %v5314, 110
    %v5332 = vpop.permute.xlu0 %5331
    %v5333 = vsel %vm1003, %v5322, %v5324
    %v5334 = vsel %vm1003, %v5324, %v5326
    %v5335 = vsel %vm1003, %v5328, %v5330
    %v5336 = vsel %vm1003, %v5330, %v5332
    %v5341 = vadd.f32 %v5303, %v5333
    %v5342 = vadd.f32 %v5304, %v5334
    %v5343 = vadd.f32 %v5305, %v5335
    %v5344 = vadd.f32 %v5306, %v5336
    %s5345 = sld [smem:[#allocation6 + $0x7a]]
    %v5346 = vstv %s5345
    %v5347 = vmul.f32 %v5346, %v181
    %v5348 = vmul.f32 %v5346, %v182
    %v5349 = vmul.f32 %v5346, %v183
    %v5350 = vmul.f32 %v5346, %v184
    %v5351 = vmul.f32 %v5346, %v185
    %v5352 = vmul.f32 %v5346, %v186
    %v5359 = vrot.slane %v5347, 1
    %v5360 = vrot.slane %v5348, 1
    %v5361 = vrot.slane %v5349, 1
    %v5362 = vrot.slane %v5350, 1
    %v5363 = vrot.slane %v5351, 1
    %v5364 = vrot.slane %v5352, 1
    %5365 = vrot.lane.b32.xlu0 %v5359, 110
    %v5366 = vpop.permute.xlu0 %5365
    %5367 = vrot.lane.b32.xlu0 %v5360, 110
    %v5368 = vpop.permute.xlu0 %5367
    %5369 = vrot.lane.b32.xlu0 %v5361, 110
    %v5370 = vpop.permute.xlu0 %5369
    %5371 = vrot.lane.b32.xlu0 %v5362, 110
    %v5372 = vpop.permute.xlu0 %5371
    %5373 = vrot.lane.b32.xlu0 %v5363, 110
    %v5374 = vpop.permute.xlu0 %5373
    %5375 = vrot.lane.b32.xlu0 %v5364, 110
    %v5376 = vpop.permute.xlu0 %5375
    %v5377 = vsel %vm1003, %v5366, %v5368
    %v5378 = vsel %vm1003, %v5368, %v5370
    %v5379 = vsel %vm1003, %v5372, %v5374
    %v5380 = vsel %vm1003, %v5374, %v5376
    %v5385 = vadd.f32 %v5341, %v5377
    %v5386 = vadd.f32 %v5342, %v5378
    %v5387 = vadd.f32 %v5343, %v5379
    %v5388 = vadd.f32 %v5344, %v5380
    %s5389 = sld [smem:[#allocation6 + $0x83]]
    %v5390 = vstv %s5389
    %v5391 = vmul.f32 %v5390, %v181
    %v5392 = vmul.f32 %v5390, %v182
    %v5393 = vmul.f32 %v5390, %v183
    %v5394 = vmul.f32 %v5390, %v184
    %v5395 = vmul.f32 %v5390, %v185
    %v5396 = vmul.f32 %v5390, %v186
    %v5403 = vrot.slane %v5391, 2
    %v5404 = vrot.slane %v5392, 2
    %v5405 = vrot.slane %v5393, 2
    %v5406 = vrot.slane %v5394, 2
    %v5407 = vrot.slane %v5395, 2
    %v5408 = vrot.slane %v5396, 2
    %5409 = vrot.lane.b32.xlu0 %v5403, 110
    %v5410 = vpop.permute.xlu0 %5409
    %5411 = vrot.lane.b32.xlu0 %v5404, 110
    %v5412 = vpop.permute.xlu0 %5411
    %5413 = vrot.lane.b32.xlu0 %v5405, 110
    %v5414 = vpop.permute.xlu0 %5413
    %5415 = vrot.lane.b32.xlu0 %v5406, 110
    %v5416 = vpop.permute.xlu0 %5415
    %5417 = vrot.lane.b32.xlu0 %v5407, 110
    %v5418 = vpop.permute.xlu0 %5417
    %5419 = vrot.lane.b32.xlu0 %v5408, 110
    %v5420 = vpop.permute.xlu0 %5419
    %v5421 = vsel %vm1003, %v5410, %v5412
    %v5422 = vsel %vm1003, %v5412, %v5414
    %v5423 = vsel %vm1003, %v5416, %v5418
    %v5424 = vsel %vm1003, %v5418, %v5420
    %v5429 = vadd.f32 %v5385, %v5421
    %v5430 = vadd.f32 %v5386, %v5422
    %v5431 = vadd.f32 %v5387, %v5423
    %v5432 = vadd.f32 %v5388, %v5424
    %s5433 = sld [smem:[#allocation6 + $0x8c]]
    %v5434 = vstv %s5433
    %v5435 = vmul.f32 %v5434, %v181
    %v5436 = vmul.f32 %v5434, %v182
    %v5437 = vmul.f32 %v5434, %v183
    %v5438 = vmul.f32 %v5434, %v184
    %v5439 = vmul.f32 %v5434, %v185
    %v5440 = vmul.f32 %v5434, %v186
    %v5447 = vrot.slane %v5435, 3
    %v5448 = vrot.slane %v5436, 3
    %v5449 = vrot.slane %v5437, 3
    %v5450 = vrot.slane %v5438, 3
    %v5451 = vrot.slane %v5439, 3
    %v5452 = vrot.slane %v5440, 3
    %5453 = vrot.lane.b32.xlu0 %v5447, 110
    %v5454 = vpop.permute.xlu0 %5453
    %5455 = vrot.lane.b32.xlu0 %v5448, 110
    %v5456 = vpop.permute.xlu0 %5455
    %5457 = vrot.lane.b32.xlu0 %v5449, 110
    %v5458 = vpop.permute.xlu0 %5457
    %5459 = vrot.lane.b32.xlu0 %v5450, 110
    %v5460 = vpop.permute.xlu0 %5459
    %5461 = vrot.lane.b32.xlu0 %v5451, 110
    %v5462 = vpop.permute.xlu0 %5461
    %5463 = vrot.lane.b32.xlu0 %v5452, 110
    %v5464 = vpop.permute.xlu0 %5463
    %v5465 = vsel %vm1003, %v5454, %v5456
    %v5466 = vsel %vm1003, %v5456, %v5458
    %v5467 = vsel %vm1003, %v5460, %v5462
    %v5468 = vsel %vm1003, %v5462, %v5464
    %v5473 = vadd.f32 %v5429, %v5465
    %v5474 = vadd.f32 %v5430, %v5466
    %v5475 = vadd.f32 %v5431, %v5467
    %v5476 = vadd.f32 %v5432, %v5468
    %s5477 = sld [smem:[#allocation6 + $0x72]]
    %v5478 = vstv %s5477
    %v5479 = vmul.f32 %v5478, %v196
    %v5480 = vmul.f32 %v5478, %v197
    %v5481 = vmul.f32 %v5478, %v198
    %v5482 = vmul.f32 %v5478, %v199
    %v5483 = vmul.f32 %v5478, %v200
    %v5484 = vmul.f32 %v5478, %v201
    %5491 = vrot.lane.b32.xlu0 %v5479, 96
    %v5492 = vpop.permute.xlu0 %5491
    %5493 = vrot.lane.b32.xlu0 %v5480, 96
    %v5494 = vpop.permute.xlu0 %5493
    %5495 = vrot.lane.b32.xlu0 %v5481, 96
    %v5496 = vpop.permute.xlu0 %5495
    %5497 = vrot.lane.b32.xlu0 %v5482, 96
    %v5498 = vpop.permute.xlu0 %5497
    %5499 = vrot.lane.b32.xlu0 %v5483, 96
    %v5500 = vpop.permute.xlu0 %5499
    %5501 = vrot.lane.b32.xlu0 %v5484, 96
    %v5502 = vpop.permute.xlu0 %5501
    %v5503 = vsel %vm1174, %v5492, %v5494
    %v5504 = vsel %vm1174, %v5494, %v5496
    %v5505 = vsel %vm1174, %v5498, %v5500
    %v5506 = vsel %vm1174, %v5500, %v5502
    %v5511 = vadd.f32 %v5473, %v5503
    %v5512 = vadd.f32 %v5474, %v5504
    %v5513 = vadd.f32 %v5475, %v5505
    %v5514 = vadd.f32 %v5476, %v5506
    %s5515 = sld [smem:[#allocation6 + $0x7b]]
    %v5516 = vstv %s5515
    %v5517 = vmul.f32 %v5516, %v196
    %v5518 = vmul.f32 %v5516, %v197
    %v5519 = vmul.f32 %v5516, %v198
    %v5520 = vmul.f32 %v5516, %v199
    %v5521 = vmul.f32 %v5516, %v200
    %v5522 = vmul.f32 %v5516, %v201
    %v5529 = vrot.slane %v5517, 1
    %v5530 = vrot.slane %v5518, 1
    %v5531 = vrot.slane %v5519, 1
    %v5532 = vrot.slane %v5520, 1
    %v5533 = vrot.slane %v5521, 1
    %v5534 = vrot.slane %v5522, 1
    %5535 = vrot.lane.b32.xlu0 %v5529, 96
    %v5536 = vpop.permute.xlu0 %5535
    %5537 = vrot.lane.b32.xlu0 %v5530, 96
    %v5538 = vpop.permute.xlu0 %5537
    %5539 = vrot.lane.b32.xlu0 %v5531, 96
    %v5540 = vpop.permute.xlu0 %5539
    %5541 = vrot.lane.b32.xlu0 %v5532, 96
    %v5542 = vpop.permute.xlu0 %5541
    %5543 = vrot.lane.b32.xlu0 %v5533, 96
    %v5544 = vpop.permute.xlu0 %5543
    %5545 = vrot.lane.b32.xlu0 %v5534, 96
    %v5546 = vpop.permute.xlu0 %5545
    %v5547 = vsel %vm1174, %v5536, %v5538
    %v5548 = vsel %vm1174, %v5538, %v5540
    %v5549 = vsel %vm1174, %v5542, %v5544
    %v5550 = vsel %vm1174, %v5544, %v5546
    %v5555 = vadd.f32 %v5511, %v5547
    %v5556 = vadd.f32 %v5512, %v5548
    %v5557 = vadd.f32 %v5513, %v5549
    %v5558 = vadd.f32 %v5514, %v5550
    %s5559 = sld [smem:[#allocation6 + $0x84]]
    %v5560 = vstv %s5559
    %v5561 = vmul.f32 %v5560, %v196
    %v5562 = vmul.f32 %v5560, %v197
    %v5563 = vmul.f32 %v5560, %v198
    %v5564 = vmul.f32 %v5560, %v199
    %v5565 = vmul.f32 %v5560, %v200
    %v5566 = vmul.f32 %v5560, %v201
    %v5573 = vrot.slane %v5561, 2
    %v5574 = vrot.slane %v5562, 2
    %v5575 = vrot.slane %v5563, 2
    %v5576 = vrot.slane %v5564, 2
    %v5577 = vrot.slane %v5565, 2
    %v5578 = vrot.slane %v5566, 2
    %5579 = vrot.lane.b32.xlu0 %v5573, 96
    %v5580 = vpop.permute.xlu0 %5579
    %5581 = vrot.lane.b32.xlu0 %v5574, 96
    %v5582 = vpop.permute.xlu0 %5581
    %5583 = vrot.lane.b32.xlu0 %v5575, 96
    %v5584 = vpop.permute.xlu0 %5583
    %5585 = vrot.lane.b32.xlu0 %v5576, 96
    %v5586 = vpop.permute.xlu0 %5585
    %5587 = vrot.lane.b32.xlu0 %v5577, 96
    %v5588 = vpop.permute.xlu0 %5587
    %5589 = vrot.lane.b32.xlu0 %v5578, 96
    %v5590 = vpop.permute.xlu0 %5589
    %v5591 = vsel %vm1174, %v5580, %v5582
    %v5592 = vsel %vm1174, %v5582, %v5584
    %v5593 = vsel %vm1174, %v5586, %v5588
    %v5594 = vsel %vm1174, %v5588, %v5590
    %v5599 = vadd.f32 %v5555, %v5591
    %v5600 = vadd.f32 %v5556, %v5592
    %v5601 = vadd.f32 %v5557, %v5593
    %v5602 = vadd.f32 %v5558, %v5594
    %s5603 = sld [smem:[#allocation6 + $0x8d]]
    %v5604 = vstv %s5603
    %v5605 = vmul.f32 %v5604, %v196
    %v5606 = vmul.f32 %v5604, %v197
    %v5607 = vmul.f32 %v5604, %v198
    %v5608 = vmul.f32 %v5604, %v199
    %v5609 = vmul.f32 %v5604, %v200
    %v5610 = vmul.f32 %v5604, %v201
    %v5617 = vrot.slane %v5605, 3
    %v5618 = vrot.slane %v5606, 3
    %v5619 = vrot.slane %v5607, 3
    %v5620 = vrot.slane %v5608, 3
    %v5621 = vrot.slane %v5609, 3
    %v5622 = vrot.slane %v5610, 3
    %5623 = vrot.lane.b32.xlu0 %v5617, 96
    %v5624 = vpop.permute.xlu0 %5623
    %5625 = vrot.lane.b32.xlu0 %v5618, 96
    %v5626 = vpop.permute.xlu0 %5625
    %5627 = vrot.lane.b32.xlu0 %v5619, 96
    %v5628 = vpop.permute.xlu0 %5627
    %5629 = vrot.lane.b32.xlu0 %v5620, 96
    %v5630 = vpop.permute.xlu0 %5629
    %5631 = vrot.lane.b32.xlu0 %v5621, 96
    %v5632 = vpop.permute.xlu0 %5631
    %5633 = vrot.lane.b32.xlu0 %v5622, 96
    %v5634 = vpop.permute.xlu0 %5633
    %v5635 = vsel %vm1174, %v5624, %v5626
    %v5636 = vsel %vm1174, %v5626, %v5628
    %v5637 = vsel %vm1174, %v5630, %v5632
    %v5638 = vsel %vm1174, %v5632, %v5634
    %v5643 = vadd.f32 %v5599, %v5635
    %v5644 = vadd.f32 %v5600, %v5636
    %v5645 = vadd.f32 %v5601, %v5637
    %v5646 = vadd.f32 %v5602, %v5638
    %s5647 = sld [smem:[#allocation6 + $0x73]]
    %v5648 = vstv %s5647
    %v5649 = vmul.f32 %v5648, %v114
    %v5650 = vmul.f32 %v5648, %v106
    %v5651 = vmul.f32 %v5648, %v116
    %v5652 = vmul.f32 %v5648, %v115
    %v5653 = vmul.f32 %v5648, %v107
    %v5654 = vmul.f32 %v5648, %v117
    %5661 = vrot.lane.b32.xlu0 %v5649, 95
    %v5662 = vpop.permute.xlu0 %5661
    %5663 = vrot.lane.b32.xlu0 %v5650, 95
    %v5664 = vpop.permute.xlu0 %5663
    %5665 = vrot.lane.b32.xlu0 %v5651, 95
    %v5666 = vpop.permute.xlu0 %5665
    %5667 = vrot.lane.b32.xlu0 %v5652, 95
    %v5668 = vpop.permute.xlu0 %5667
    %5669 = vrot.lane.b32.xlu0 %v5653, 95
    %v5670 = vpop.permute.xlu0 %5669
    %5671 = vrot.lane.b32.xlu0 %v5654, 95
    %v5672 = vpop.permute.xlu0 %5671
    %v5673 = vsel %vm1345, %v5662, %v5664
    %v5674 = vsel %vm1345, %v5664, %v5666
    %v5675 = vsel %vm1345, %v5668, %v5670
    %v5676 = vsel %vm1345, %v5670, %v5672
    %v5681 = vadd.f32 %v5643, %v5673
    %v5682 = vadd.f32 %v5644, %v5674
    %v5683 = vadd.f32 %v5645, %v5675
    %v5684 = vadd.f32 %v5646, %v5676
    %s5685 = sld [smem:[#allocation6 + $0x7c]]
    %v5686 = vstv %s5685
    %v5687 = vmul.f32 %v5686, %v114
    %v5688 = vmul.f32 %v5686, %v106
    %v5689 = vmul.f32 %v5686, %v116
    %v5690 = vmul.f32 %v5686, %v115
    %v5691 = vmul.f32 %v5686, %v107
    %v5692 = vmul.f32 %v5686, %v117
    %v5699 = vrot.slane %v5687, 1
    %v5700 = vrot.slane %v5688, 1
    %v5701 = vrot.slane %v5689, 1
    %v5702 = vrot.slane %v5690, 1
    %v5703 = vrot.slane %v5691, 1
    %v5704 = vrot.slane %v5692, 1
    %5705 = vrot.lane.b32.xlu0 %v5699, 95
    %v5706 = vpop.permute.xlu0 %5705
    %5707 = vrot.lane.b32.xlu0 %v5700, 95
    %v5708 = vpop.permute.xlu0 %5707
    %5709 = vrot.lane.b32.xlu0 %v5701, 95
    %v5710 = vpop.permute.xlu0 %5709
    %5711 = vrot.lane.b32.xlu0 %v5702, 95
    %v5712 = vpop.permute.xlu0 %5711
    %5713 = vrot.lane.b32.xlu0 %v5703, 95
    %v5714 = vpop.permute.xlu0 %5713
    %5715 = vrot.lane.b32.xlu0 %v5704, 95
    %v5716 = vpop.permute.xlu0 %5715
    %v5717 = vsel %vm1345, %v5706, %v5708
    %v5718 = vsel %vm1345, %v5708, %v5710
    %v5719 = vsel %vm1345, %v5712, %v5714
    %v5720 = vsel %vm1345, %v5714, %v5716
    %v5725 = vadd.f32 %v5681, %v5717
    %v5726 = vadd.f32 %v5682, %v5718
    %v5727 = vadd.f32 %v5683, %v5719
    %v5728 = vadd.f32 %v5684, %v5720
    %s5729 = sld [smem:[#allocation6 + $0x85]]
    %v5730 = vstv %s5729
    %v5731 = vmul.f32 %v5730, %v114
    %v5732 = vmul.f32 %v5730, %v106
    %v5733 = vmul.f32 %v5730, %v116
    %v5734 = vmul.f32 %v5730, %v115
    %v5735 = vmul.f32 %v5730, %v107
    %v5736 = vmul.f32 %v5730, %v117
    %v5743 = vrot.slane %v5731, 2
    %v5744 = vrot.slane %v5732, 2
    %v5745 = vrot.slane %v5733, 2
    %v5746 = vrot.slane %v5734, 2
    %v5747 = vrot.slane %v5735, 2
    %v5748 = vrot.slane %v5736, 2
    %5749 = vrot.lane.b32.xlu0 %v5743, 95
    %v5750 = vpop.permute.xlu0 %5749
    %5751 = vrot.lane.b32.xlu0 %v5744, 95
    %v5752 = vpop.permute.xlu0 %5751
    %5753 = vrot.lane.b32.xlu0 %v5745, 95
    %v5754 = vpop.permute.xlu0 %5753
    %5755 = vrot.lane.b32.xlu0 %v5746, 95
    %v5756 = vpop.permute.xlu0 %5755
    %5757 = vrot.lane.b32.xlu0 %v5747, 95
    %v5758 = vpop.permute.xlu0 %5757
    %5759 = vrot.lane.b32.xlu0 %v5748, 95
    %v5760 = vpop.permute.xlu0 %5759
    %v5761 = vsel %vm1345, %v5750, %v5752
    %v5762 = vsel %vm1345, %v5752, %v5754
    %v5763 = vsel %vm1345, %v5756, %v5758
    %v5764 = vsel %vm1345, %v5758, %v5760
    %v5769 = vadd.f32 %v5725, %v5761
    %v5770 = vadd.f32 %v5726, %v5762
    %v5771 = vadd.f32 %v5727, %v5763
    %v5772 = vadd.f32 %v5728, %v5764
    %s5773 = sld [smem:[#allocation6 + $0x8e]]
    %v5774 = vstv %s5773
    %v5775 = vmul.f32 %v5774, %v114
    %v5776 = vmul.f32 %v5774, %v106
    %v5777 = vmul.f32 %v5774, %v116
    %v5778 = vmul.f32 %v5774, %v115
    %v5779 = vmul.f32 %v5774, %v107
    %v5780 = vmul.f32 %v5774, %v117
    %v5787 = vrot.slane %v5775, 3
    %v5788 = vrot.slane %v5776, 3
    %v5789 = vrot.slane %v5777, 3
    %v5790 = vrot.slane %v5778, 3
    %v5791 = vrot.slane %v5779, 3
    %v5792 = vrot.slane %v5780, 3
    %5793 = vrot.lane.b32.xlu0 %v5787, 95
    %v5794 = vpop.permute.xlu0 %5793
    %5795 = vrot.lane.b32.xlu0 %v5788, 95
    %v5796 = vpop.permute.xlu0 %5795
    %5797 = vrot.lane.b32.xlu0 %v5789, 95
    %v5798 = vpop.permute.xlu0 %5797
    %5799 = vrot.lane.b32.xlu0 %v5790, 95
    %v5800 = vpop.permute.xlu0 %5799
    %5801 = vrot.lane.b32.xlu0 %v5791, 95
    %v5802 = vpop.permute.xlu0 %5801
    %5803 = vrot.lane.b32.xlu0 %v5792, 95
    %v5804 = vpop.permute.xlu0 %5803
    %v5805 = vsel %vm1345, %v5794, %v5796
    %v5806 = vsel %vm1345, %v5796, %v5798
    %v5807 = vsel %vm1345, %v5800, %v5802
    %v5808 = vsel %vm1345, %v5802, %v5804
    %v5813 = vadd.f32 %v5769, %v5805
    %v5814 = vadd.f32 %v5770, %v5806
    %v5815 = vadd.f32 %v5771, %v5807
    %v5816 = vadd.f32 %v5772, %v5808
    %s5817 = sld [smem:[#allocation6 + $0x74]]
    %v5818 = vstv %s5817
    %v5819 = vmul.f32 %v5818, %v211
    %v5820 = vmul.f32 %v5818, %v212
    %v5821 = vmul.f32 %v5818, %v213
    %v5822 = vmul.f32 %v5818, %v214
    %v5823 = vmul.f32 %v5818, %v215
    %v5824 = vmul.f32 %v5818, %v216
    %5831 = vrot.lane.b32.xlu0 %v5819, 94
    %v5832 = vpop.permute.xlu0 %5831
    %5833 = vrot.lane.b32.xlu0 %v5820, 94
    %v5834 = vpop.permute.xlu0 %5833
    %5835 = vrot.lane.b32.xlu0 %v5821, 94
    %v5836 = vpop.permute.xlu0 %5835
    %5837 = vrot.lane.b32.xlu0 %v5822, 94
    %v5838 = vpop.permute.xlu0 %5837
    %5839 = vrot.lane.b32.xlu0 %v5823, 94
    %v5840 = vpop.permute.xlu0 %5839
    %5841 = vrot.lane.b32.xlu0 %v5824, 94
    %v5842 = vpop.permute.xlu0 %5841
    %v5843 = vsel %vm1516, %v5832, %v5834
    %v5844 = vsel %vm1516, %v5834, %v5836
    %v5845 = vsel %vm1516, %v5838, %v5840
    %v5846 = vsel %vm1516, %v5840, %v5842
    %v5851 = vadd.f32 %v5813, %v5843
    %v5852 = vadd.f32 %v5814, %v5844
    %v5853 = vadd.f32 %v5815, %v5845
    %v5854 = vadd.f32 %v5816, %v5846
    %s5855 = sld [smem:[#allocation6 + $0x7d]]
    %v5856 = vstv %s5855
    %v5857 = vmul.f32 %v5856, %v211
    %v5858 = vmul.f32 %v5856, %v212
    %v5859 = vmul.f32 %v5856, %v213
    %v5860 = vmul.f32 %v5856, %v214
    %v5861 = vmul.f32 %v5856, %v215
    %v5862 = vmul.f32 %v5856, %v216
    %v5869 = vrot.slane %v5857, 1
    %v5870 = vrot.slane %v5858, 1
    %v5871 = vrot.slane %v5859, 1
    %v5872 = vrot.slane %v5860, 1
    %v5873 = vrot.slane %v5861, 1
    %v5874 = vrot.slane %v5862, 1
    %5875 = vrot.lane.b32.xlu0 %v5869, 94
    %v5876 = vpop.permute.xlu0 %5875
    %5877 = vrot.lane.b32.xlu0 %v5870, 94
    %v5878 = vpop.permute.xlu0 %5877
    %5879 = vrot.lane.b32.xlu0 %v5871, 94
    %v5880 = vpop.permute.xlu0 %5879
    %5881 = vrot.lane.b32.xlu0 %v5872, 94
    %v5882 = vpop.permute.xlu0 %5881
    %5883 = vrot.lane.b32.xlu0 %v5873, 94
    %v5884 = vpop.permute.xlu0 %5883
    %5885 = vrot.lane.b32.xlu0 %v5874, 94
    %v5886 = vpop.permute.xlu0 %5885
    %v5887 = vsel %vm1516, %v5876, %v5878
    %v5888 = vsel %vm1516, %v5878, %v5880
    %v5889 = vsel %vm1516, %v5882, %v5884
    %v5890 = vsel %vm1516, %v5884, %v5886
    %v5895 = vadd.f32 %v5851, %v5887
    %v5896 = vadd.f32 %v5852, %v5888
    %v5897 = vadd.f32 %v5853, %v5889
    %v5898 = vadd.f32 %v5854, %v5890
    %s5899 = sld [smem:[#allocation6 + $0x86]]
    %v5900 = vstv %s5899
    %v5901 = vmul.f32 %v5900, %v211
    %v5902 = vmul.f32 %v5900, %v212
    %v5903 = vmul.f32 %v5900, %v213
    %v5904 = vmul.f32 %v5900, %v214
    %v5905 = vmul.f32 %v5900, %v215
    %v5906 = vmul.f32 %v5900, %v216
    %v5913 = vrot.slane %v5901, 2
    %v5914 = vrot.slane %v5902, 2
    %v5915 = vrot.slane %v5903, 2
    %v5916 = vrot.slane %v5904, 2
    %v5917 = vrot.slane %v5905, 2
    %v5918 = vrot.slane %v5906, 2
    %5919 = vrot.lane.b32.xlu0 %v5913, 94
    %v5920 = vpop.permute.xlu0 %5919
    %5921 = vrot.lane.b32.xlu0 %v5914, 94
    %v5922 = vpop.permute.xlu0 %5921
    %5923 = vrot.lane.b32.xlu0 %v5915, 94
    %v5924 = vpop.permute.xlu0 %5923
    %5925 = vrot.lane.b32.xlu0 %v5916, 94
    %v5926 = vpop.permute.xlu0 %5925
    %5927 = vrot.lane.b32.xlu0 %v5917, 94
    %v5928 = vpop.permute.xlu0 %5927
    %5929 = vrot.lane.b32.xlu0 %v5918, 94
    %v5930 = vpop.permute.xlu0 %5929
    %v5931 = vsel %vm1516, %v5920, %v5922
    %v5932 = vsel %vm1516, %v5922, %v5924
    %v5933 = vsel %vm1516, %v5926, %v5928
    %v5934 = vsel %vm1516, %v5928, %v5930
    %v5939 = vadd.f32 %v5895, %v5931
    %v5940 = vadd.f32 %v5896, %v5932
    %v5941 = vadd.f32 %v5897, %v5933
    %v5942 = vadd.f32 %v5898, %v5934
    %s5943 = sld [smem:[#allocation6 + $0x8f]]
    %v5944 = vstv %s5943
    %v5945 = vmul.f32 %v5944, %v211
    %v5946 = vmul.f32 %v5944, %v212
    %v5947 = vmul.f32 %v5944, %v213
    %v5948 = vmul.f32 %v5944, %v214
    %v5949 = vmul.f32 %v5944, %v215
    %v5950 = vmul.f32 %v5944, %v216
    %v5957 = vrot.slane %v5945, 3
    %v5958 = vrot.slane %v5946, 3
    %v5959 = vrot.slane %v5947, 3
    %v5960 = vrot.slane %v5948, 3
    %v5961 = vrot.slane %v5949, 3
    %v5962 = vrot.slane %v5950, 3
    %5963 = vrot.lane.b32.xlu0 %v5957, 94
    %v5964 = vpop.permute.xlu0 %5963
    %5965 = vrot.lane.b32.xlu0 %v5958, 94
    %v5966 = vpop.permute.xlu0 %5965
    %5967 = vrot.lane.b32.xlu0 %v5959, 94
    %v5968 = vpop.permute.xlu0 %5967
    %5969 = vrot.lane.b32.xlu0 %v5960, 94
    %v5970 = vpop.permute.xlu0 %5969
    %5971 = vrot.lane.b32.xlu0 %v5961, 94
    %v5972 = vpop.permute.xlu0 %5971
    %5973 = vrot.lane.b32.xlu0 %v5962, 94
    %v5974 = vpop.permute.xlu0 %5973
    %v5975 = vsel %vm1516, %v5964, %v5966
    %v5976 = vsel %vm1516, %v5966, %v5968
    %v5977 = vsel %vm1516, %v5970, %v5972
    %v5978 = vsel %vm1516, %v5972, %v5974
    %v5983 = vadd.f32 %v5939, %v5975
    %v5984 = vadd.f32 %v5940, %v5976
    %v5985 = vadd.f32 %v5941, %v5977
    %v5986 = vadd.f32 %v5942, %v5978
    %s5987 = sld [smem:[#allocation7 + $0x3]]
    %v5988 = vstv %s5987
    %v5989 = vadd.f32 %v5983, %v5988
    %v5990 = vadd.f32 %v5984, %v5988
    %v5991 = vadd.f32 %v5985, %v5988
    %v5992 = vadd.f32 %v5986, %v5988
    %v5997 = vrot.slane %v3105, 7
    %v5998 = vrot.slane %v3106, 7
    %v5999 = vrot.slane %v3107, 7
    %v6000 = vrot.slane %v3108, 7
    %v6009 = vrot.slane %v4547, 6
    %v6010 = vrot.slane %v4548, 6
    %v6011 = vrot.slane %v4549, 6
    %v6012 = vrot.slane %v4550, 6
    %v6021 = vrot.slane %v5989, 5
    %v6022 = vrot.slane %v5990, 5
    %v6023 = vrot.slane %v5991, 5
    %v6024 = vrot.slane %v5992, 5
    %vm6029 = vcmask 1040384
    %v6030 = vsel %vm6029, %v1663, %v5997
    %v6031 = vsel %vm6029, %v1664, %v5998
    %v6032 = vsel %vm6029, %v1665, %v5999
    %v6033 = vsel %vm6029, %v1666, %v6000
    %vm6034 = vcmask 1041408
    %v6035 = vsel %vm6034, %v6030, %v6009
    %v6036 = vsel %vm6034, %v6031, %v6010
    %v6037 = vsel %vm6034, %v6032, %v6011
    %v6038 = vsel %vm6034, %v6033, %v6012
    %vm6039 = vcmask 1042432
    %v6040 = vsel %vm6039, %v6035, %v6021
    %v6041 = vsel %vm6039, %v6036, %v6022
    %v6042 = vsel %vm6039, %v6037, %v6023
    %v6043 = vsel %vm6039, %v6038, %v6024
    %v6044 = vmul.f32 %v6040, 0.01
    %v6045 = vmul.f32 %v6041, 0.01
    %v6046 = vmul.f32 %v6042, 0.01
    %v6047 = vmul.f32 %v6043, 0.01
    %v6048 = vmax.f32 %v6040, %v6044
    %v6049 = vmax.f32 %v6041, %v6045
    %v6050 = vmax.f32 %v6042, %v6046
    %v6051 = vmax.f32 %v6043, %v6047
    %6056 = vrot.lane.b32.xlu0 %v6048, 17
    %v6057 = vpop.permute.xlu0 %6056
    %6058 = vrot.lane.b32.xlu0 %v6049, 17
    %v6059 = vpop.permute.xlu0 %6058
    %6060 = vrot.lane.b32.xlu0 %v6050, 17
    %v6061 = vpop.permute.xlu0 %6060
    %6062 = vrot.lane.b32.xlu0 %v6051, 17
    %v6063 = vpop.permute.xlu0 %6062
    %v6064 = vsel %vm105, %v6057, %v6059
    %v6065 = vsel %vm105, %v6061, %v6063
    %v6072 = vsel %vm105, 0.0, %v6057
    %v6073 = vsel %vm105, 0.0, %v6061
    %v6074 = vsel %vm105, %v6059, 0.0
    %v6075 = vsel %vm105, %v6063, 0.0
    %v6076 = vmul.f32 %v6072, %v122
    %v6077 = vmul.f32 %v6064, %v126
    %v6078 = vmul.f32 %v6073, %v122
    %v6079 = vmul.f32 %v6065, %v126
    %v6080 = vmul.f32 %v6072, %v143
    %v6081 = vmul.f32 %v6064, %v147
    %v6082 = vmul.f32 %v6074, %v145
    %v6083 = vmul.f32 %v6073, %v143
    %v6084 = vmul.f32 %v6065, %v147
    %v6085 = vmul.f32 %v6075, %v145
    %v6086 = vmul.f32 %v6072, %v158
    %v6087 = vmul.f32 %v6064, %v162
    %v6088 = vmul.f32 %v6074, %v160
    %v6089 = vmul.f32 %v6073, %v158
    %v6090 = vmul.f32 %v6065, %v162
    %v6091 = vmul.f32 %v6075, %v160
    %v6092 = vmul.f32 %v6072, %v173
    %v6093 = vmul.f32 %v6064, %v177
    %v6094 = vmul.f32 %v6074, %v175
    %v6095 = vmul.f32 %v6073, %v173
    %v6096 = vmul.f32 %v6065, %v177
    %v6097 = vmul.f32 %v6075, %v175
    %v6098 = vmul.f32 %v6072, %v188
    %v6099 = vmul.f32 %v6064, %v192
    %v6100 = vmul.f32 %v6074, %v190
    %v6101 = vmul.f32 %v6073, %v188
    %v6102 = vmul.f32 %v6065, %v192
    %v6103 = vmul.f32 %v6075, %v190
    %v6104 = vmul.f32 %v6072, %v203
    %v6105 = vmul.f32 %v6064, %v207
    %v6106 = vmul.f32 %v6074, %v205
    %v6107 = vmul.f32 %v6073, %v203
    %v6108 = vmul.f32 %v6065, %v207
    %v6109 = vmul.f32 %v6075, %v205
    %s6110 = sld [smem:[#allocation9]]
    %v6111 = vstv %s6110
    %v6112 = vmul.f32 %v6111, %v6076
    %v6113 = vmul.f32 %v6111, %v6077
    %v6114 = vmul.f32 %v6111, %v6078
    %v6115 = vmul.f32 %v6111, %v6079
    %v6116 = vadd.f32 %v6112, 0.0
    %v6117 = vadd.f32 %v6113, 0.0
    %v6118 = vadd.f32 %v6114, 0.0
    %v6119 = vadd.f32 %v6115, 0.0
    %s6120 = sld [smem:[#allocation9 + $0x9]]
    %v6121 = vstv %s6120
    %v6122 = vmul.f32 %v6121, %v6076
    %v6123 = vmul.f32 %v6121, %v6077
    %v6124 = vmul.f32 %v6121, %v6078
    %v6125 = vmul.f32 %v6121, %v6079
    %v6130 = vrot.slane %v6122, 1
    %v6131 = vrot.slane %v6123, 1
    %v6132 = vrot.slane %v6124, 1
    %v6133 = vrot.slane %v6125, 1
    %v6138 = vadd.f32 %v6116, %v6130
    %v6139 = vadd.f32 %v6117, %v6131
    %v6140 = vadd.f32 %v6118, %v6132
    %v6141 = vadd.f32 %v6119, %v6133
    %s6142 = sld [smem:[#allocation9 + $0x12]]
    %v6143 = vstv %s6142
    %v6144 = vmul.f32 %v6143, %v6076
    %v6145 = vmul.f32 %v6143, %v6077
    %v6146 = vmul.f32 %v6143, %v6078
    %v6147 = vmul.f32 %v6143, %v6079
    %v6152 = vrot.slane %v6144, 2
    %v6153 = vrot.slane %v6145, 2
    %v6154 = vrot.slane %v6146, 2
    %v6155 = vrot.slane %v6147, 2
    %v6160 = vadd.f32 %v6138, %v6152
    %v6161 = vadd.f32 %v6139, %v6153
    %v6162 = vadd.f32 %v6140, %v6154
    %v6163 = vadd.f32 %v6141, %v6155
    %s6164 = sld [smem:[#allocation9 + $0x1b]]
    %v6165 = vstv %s6164
    %v6166 = vmul.f32 %v6165, %v6076
    %v6167 = vmul.f32 %v6165, %v6077
    %v6168 = vmul.f32 %v6165, %v6078
    %v6169 = vmul.f32 %v6165, %v6079
    %v6174 = vrot.slane %v6166, 3
    %v6175 = vrot.slane %v6167, 3
    %v6176 = vrot.slane %v6168, 3
    %v6177 = vrot.slane %v6169, 3
    %v6182 = vadd.f32 %v6160, %v6174
    %v6183 = vadd.f32 %v6161, %v6175
    %v6184 = vadd.f32 %v6162, %v6176
    %v6185 = vadd.f32 %v6163, %v6177
    %s6186 = sld [smem:[#allocation9 + $0x1]]
    %v6187 = vstv %s6186
    %v6188 = vmul.f32 %v6187, %v6072
    %v6189 = vmul.f32 %v6187, %v6064
    %v6190 = vmul.f32 %v6187, %v6074
    %v6191 = vmul.f32 %v6187, %v6073
    %v6192 = vmul.f32 %v6187, %v6065
    %v6193 = vmul.f32 %v6187, %v6075
    %6200 = vrot.lane.b32.xlu0 %v6188, 127
    %v6201 = vpop.permute.xlu0 %6200
    %6202 = vrot.lane.b32.xlu0 %v6189, 127
    %v6203 = vpop.permute.xlu0 %6202
    %6204 = vrot.lane.b32.xlu0 %v6190, 127
    %v6205 = vpop.permute.xlu0 %6204
    %6206 = vrot.lane.b32.xlu0 %v6191, 127
    %v6207 = vpop.permute.xlu0 %6206
    %6208 = vrot.lane.b32.xlu0 %v6192, 127
    %v6209 = vpop.permute.xlu0 %6208
    %6210 = vrot.lane.b32.xlu0 %v6193, 127
    %v6211 = vpop.permute.xlu0 %6210
    %v6212 = vsel %vm319, %v6201, %v6203
    %v6213 = vsel %vm319, %v6203, %v6205
    %v6214 = vsel %vm319, %v6207, %v6209
    %v6215 = vsel %vm319, %v6209, %v6211
    %v6220 = vadd.f32 %v6182, %v6212
    %v6221 = vadd.f32 %v6183, %v6213
    %v6222 = vadd.f32 %v6184, %v6214
    %v6223 = vadd.f32 %v6185, %v6215
    %s6224 = sld [smem:[#allocation9 + $0xa]]
    %v6225 = vstv %s6224
    %v6226 = vmul.f32 %v6225, %v6072
    %v6227 = vmul.f32 %v6225, %v6064
    %v6228 = vmul.f32 %v6225, %v6074
    %v6229 = vmul.f32 %v6225, %v6073
    %v6230 = vmul.f32 %v6225, %v6065
    %v6231 = vmul.f32 %v6225, %v6075
    %v6238 = vrot.slane %v6226, 1
    %v6239 = vrot.slane %v6227, 1
    %v6240 = vrot.slane %v6228, 1
    %v6241 = vrot.slane %v6229, 1
    %v6242 = vrot.slane %v6230, 1
    %v6243 = vrot.slane %v6231, 1
    %6244 = vrot.lane.b32.xlu0 %v6238, 127
    %v6245 = vpop.permute.xlu0 %6244
    %6246 = vrot.lane.b32.xlu0 %v6239, 127
    %v6247 = vpop.permute.xlu0 %6246
    %6248 = vrot.lane.b32.xlu0 %v6240, 127
    %v6249 = vpop.permute.xlu0 %6248
    %6250 = vrot.lane.b32.xlu0 %v6241, 127
    %v6251 = vpop.permute.xlu0 %6250
    %6252 = vrot.lane.b32.xlu0 %v6242, 127
    %v6253 = vpop.permute.xlu0 %6252
    %6254 = vrot.lane.b32.xlu0 %v6243, 127
    %v6255 = vpop.permute.xlu0 %6254
    %v6256 = vsel %vm319, %v6245, %v6247
    %v6257 = vsel %vm319, %v6247, %v6249
    %v6258 = vsel %vm319, %v6251, %v6253
    %v6259 = vsel %vm319, %v6253, %v6255
    %v6264 = vadd.f32 %v6220, %v6256
    %v6265 = vadd.f32 %v6221, %v6257
    %v6266 = vadd.f32 %v6222, %v6258
    %v6267 = vadd.f32 %v6223, %v6259
    %s6268 = sld [smem:[#allocation9 + $0x13]]
    %v6269 = vstv %s6268
    %v6270 = vmul.f32 %v6269, %v6072
    %v6271 = vmul.f32 %v6269, %v6064
    %v6272 = vmul.f32 %v6269, %v6074
    %v6273 = vmul.f32 %v6269, %v6073
    %v6274 = vmul.f32 %v6269, %v6065
    %v6275 = vmul.f32 %v6269, %v6075
    %v6282 = vrot.slane %v6270, 2
    %v6283 = vrot.slane %v6271, 2
    %v6284 = vrot.slane %v6272, 2
    %v6285 = vrot.slane %v6273, 2
    %v6286 = vrot.slane %v6274, 2
    %v6287 = vrot.slane %v6275, 2
    %6288 = vrot.lane.b32.xlu0 %v6282, 127
    %v6289 = vpop.permute.xlu0 %6288
    %6290 = vrot.lane.b32.xlu0 %v6283, 127
    %v6291 = vpop.permute.xlu0 %6290
    %6292 = vrot.lane.b32.xlu0 %v6284, 127
    %v6293 = vpop.permute.xlu0 %6292
    %6294 = vrot.lane.b32.xlu0 %v6285, 127
    %v6295 = vpop.permute.xlu0 %6294
    %6296 = vrot.lane.b32.xlu0 %v6286, 127
    %v6297 = vpop.permute.xlu0 %6296
    %6298 = vrot.lane.b32.xlu0 %v6287, 127
    %v6299 = vpop.permute.xlu0 %6298
    %v6300 = vsel %vm319, %v6289, %v6291
    %v6301 = vsel %vm319, %v6291, %v6293
    %v6302 = vsel %vm319, %v6295, %v6297
    %v6303 = vsel %vm319, %v6297, %v6299
    %v6308 = vadd.f32 %v6264, %v6300
    %v6309 = vadd.f32 %v6265, %v6301
    %v6310 = vadd.f32 %v6266, %v6302
    %v6311 = vadd.f32 %v6267, %v6303
    %s6312 = sld [smem:[#allocation9 + $0x1c]]
    %v6313 = vstv %s6312
    %v6314 = vmul.f32 %v6313, %v6072
    %v6315 = vmul.f32 %v6313, %v6064
    %v6316 = vmul.f32 %v6313, %v6074
    %v6317 = vmul.f32 %v6313, %v6073
    %v6318 = vmul.f32 %v6313, %v6065
    %v6319 = vmul.f32 %v6313, %v6075
    %v6326 = vrot.slane %v6314, 3
    %v6327 = vrot.slane %v6315, 3
    %v6328 = vrot.slane %v6316, 3
    %v6329 = vrot.slane %v6317, 3
    %v6330 = vrot.slane %v6318, 3
    %v6331 = vrot.slane %v6319, 3
    %6332 = vrot.lane.b32.xlu0 %v6326, 127
    %v6333 = vpop.permute.xlu0 %6332
    %6334 = vrot.lane.b32.xlu0 %v6327, 127
    %v6335 = vpop.permute.xlu0 %6334
    %6336 = vrot.lane.b32.xlu0 %v6328, 127
    %v6337 = vpop.permute.xlu0 %6336
    %6338 = vrot.lane.b32.xlu0 %v6329, 127
    %v6339 = vpop.permute.xlu0 %6338
    %6340 = vrot.lane.b32.xlu0 %v6330, 127
    %v6341 = vpop.permute.xlu0 %6340
    %6342 = vrot.lane.b32.xlu0 %v6331, 127
    %v6343 = vpop.permute.xlu0 %6342
    %v6344 = vsel %vm319, %v6333, %v6335
    %v6345 = vsel %vm319, %v6335, %v6337
    %v6346 = vsel %vm319, %v6339, %v6341
    %v6347 = vsel %vm319, %v6341, %v6343
    %v6352 = vadd.f32 %v6308, %v6344
    %v6353 = vadd.f32 %v6309, %v6345
    %v6354 = vadd.f32 %v6310, %v6346
    %v6355 = vadd.f32 %v6311, %v6347
    %s6356 = sld [smem:[#allocation9 + $0x2]]
    %v6357 = vstv %s6356
    %v6358 = vmul.f32 %v6357, %v6080
    %v6359 = vmul.f32 %v6357, %v6081
    %v6360 = vmul.f32 %v6357, %v6082
    %v6361 = vmul.f32 %v6357, %v6083
    %v6362 = vmul.f32 %v6357, %v6084
    %v6363 = vmul.f32 %v6357, %v6085
    %6370 = vrot.lane.b32.xlu0 %v6358, 126
    %v6371 = vpop.permute.xlu0 %6370
    %6372 = vrot.lane.b32.xlu0 %v6359, 126
    %v6373 = vpop.permute.xlu0 %6372
    %6374 = vrot.lane.b32.xlu0 %v6360, 126
    %v6375 = vpop.permute.xlu0 %6374
    %6376 = vrot.lane.b32.xlu0 %v6361, 126
    %v6377 = vpop.permute.xlu0 %6376
    %6378 = vrot.lane.b32.xlu0 %v6362, 126
    %v6379 = vpop.permute.xlu0 %6378
    %6380 = vrot.lane.b32.xlu0 %v6363, 126
    %v6381 = vpop.permute.xlu0 %6380
    %v6382 = vsel %vm490, %v6371, %v6373
    %v6383 = vsel %vm490, %v6373, %v6375
    %v6384 = vsel %vm490, %v6377, %v6379
    %v6385 = vsel %vm490, %v6379, %v6381
    %v6390 = vadd.f32 %v6352, %v6382
    %v6391 = vadd.f32 %v6353, %v6383
    %v6392 = vadd.f32 %v6354, %v6384
    %v6393 = vadd.f32 %v6355, %v6385
    %s6394 = sld [smem:[#allocation9 + $0xb]]
    %v6395 = vstv %s6394
    %v6396 = vmul.f32 %v6395, %v6080
    %v6397 = vmul.f32 %v6395, %v6081
    %v6398 = vmul.f32 %v6395, %v6082
    %v6399 = vmul.f32 %v6395, %v6083
    %v6400 = vmul.f32 %v6395, %v6084
    %v6401 = vmul.f32 %v6395, %v6085
    %v6408 = vrot.slane %v6396, 1
    %v6409 = vrot.slane %v6397, 1
    %v6410 = vrot.slane %v6398, 1
    %v6411 = vrot.slane %v6399, 1
    %v6412 = vrot.slane %v6400, 1
    %v6413 = vrot.slane %v6401, 1
    %6414 = vrot.lane.b32.xlu0 %v6408, 126
    %v6415 = vpop.permute.xlu0 %6414
    %6416 = vrot.lane.b32.xlu0 %v6409, 126
    %v6417 = vpop.permute.xlu0 %6416
    %6418 = vrot.lane.b32.xlu0 %v6410, 126
    %v6419 = vpop.permute.xlu0 %6418
    %6420 = vrot.lane.b32.xlu0 %v6411, 126
    %v6421 = vpop.permute.xlu0 %6420
    %6422 = vrot.lane.b32.xlu0 %v6412, 126
    %v6423 = vpop.permute.xlu0 %6422
    %6424 = vrot.lane.b32.xlu0 %v6413, 126
    %v6425 = vpop.permute.xlu0 %6424
    %v6426 = vsel %vm490, %v6415, %v6417
    %v6427 = vsel %vm490, %v6417, %v6419
    %v6428 = vsel %vm490, %v6421, %v6423
    %v6429 = vsel %vm490, %v6423, %v6425
    %v6434 = vadd.f32 %v6390, %v6426
    %v6435 = vadd.f32 %v6391, %v6427
    %v6436 = vadd.f32 %v6392, %v6428
    %v6437 = vadd.f32 %v6393, %v6429
    %s6438 = sld [smem:[#allocation9 + $0x14]]
    %v6439 = vstv %s6438
    %v6440 = vmul.f32 %v6439, %v6080
    %v6441 = vmul.f32 %v6439, %v6081
    %v6442 = vmul.f32 %v6439, %v6082
    %v6443 = vmul.f32 %v6439, %v6083
    %v6444 = vmul.f32 %v6439, %v6084
    %v6445 = vmul.f32 %v6439, %v6085
    %v6452 = vrot.slane %v6440, 2
    %v6453 = vrot.slane %v6441, 2
    %v6454 = vrot.slane %v6442, 2
    %v6455 = vrot.slane %v6443, 2
    %v6456 = vrot.slane %v6444, 2
    %v6457 = vrot.slane %v6445, 2
    %6458 = vrot.lane.b32.xlu0 %v6452, 126
    %v6459 = vpop.permute.xlu0 %6458
    %6460 = vrot.lane.b32.xlu0 %v6453, 126
    %v6461 = vpop.permute.xlu0 %6460
    %6462 = vrot.lane.b32.xlu0 %v6454, 126
    %v6463 = vpop.permute.xlu0 %6462
    %6464 = vrot.lane.b32.xlu0 %v6455, 126
    %v6465 = vpop.permute.xlu0 %6464
    %6466 = vrot.lane.b32.xlu0 %v6456, 126
    %v6467 = vpop.permute.xlu0 %6466
    %6468 = vrot.lane.b32.xlu0 %v6457, 126
    %v6469 = vpop.permute.xlu0 %6468
    %v6470 = vsel %vm490, %v6459, %v6461
    %v6471 = vsel %vm490, %v6461, %v6463
    %v6472 = vsel %vm490, %v6465, %v6467
    %v6473 = vsel %vm490, %v6467, %v6469
    %v6478 = vadd.f32 %v6434, %v6470
    %v6479 = vadd.f32 %v6435, %v6471
    %v6480 = vadd.f32 %v6436, %v6472
    %v6481 = vadd.f32 %v6437, %v6473
    %s6482 = sld [smem:[#allocation9 + $0x1d]]
    %v6483 = vstv %s6482
    %v6484 = vmul.f32 %v6483, %v6080
    %v6485 = vmul.f32 %v6483, %v6081
    %v6486 = vmul.f32 %v6483, %v6082
    %v6487 = vmul.f32 %v6483, %v6083
    %v6488 = vmul.f32 %v6483, %v6084
    %v6489 = vmul.f32 %v6483, %v6085
    %v6496 = vrot.slane %v6484, 3
    %v6497 = vrot.slane %v6485, 3
    %v6498 = vrot.slane %v6486, 3
    %v6499 = vrot.slane %v6487, 3
    %v6500 = vrot.slane %v6488, 3
    %v6501 = vrot.slane %v6489, 3
    %6502 = vrot.lane.b32.xlu0 %v6496, 126
    %v6503 = vpop.permute.xlu0 %6502
    %6504 = vrot.lane.b32.xlu0 %v6497, 126
    %v6505 = vpop.permute.xlu0 %6504
    %6506 = vrot.lane.b32.xlu0 %v6498, 126
    %v6507 = vpop.permute.xlu0 %6506
    %6508 = vrot.lane.b32.xlu0 %v6499, 126
    %v6509 = vpop.permute.xlu0 %6508
    %6510 = vrot.lane.b32.xlu0 %v6500, 126
    %v6511 = vpop.permute.xlu0 %6510
    %6512 = vrot.lane.b32.xlu0 %v6501, 126
    %v6513 = vpop.permute.xlu0 %6512
    %v6514 = vsel %vm490, %v6503, %v6505
    %v6515 = vsel %vm490, %v6505, %v6507
    %v6516 = vsel %vm490, %v6509, %v6511
    %v6517 = vsel %vm490, %v6511, %v6513
    %v6522 = vadd.f32 %v6478, %v6514
    %v6523 = vadd.f32 %v6479, %v6515
    %v6524 = vadd.f32 %v6480, %v6516
    %v6525 = vadd.f32 %v6481, %v6517
    %s6526 = sld [smem:[#allocation9 + $0x3]]
    %v6527 = vstv %s6526
    %v6528 = vmul.f32 %v6527, %v6086
    %v6529 = vmul.f32 %v6527, %v6087
    %v6530 = vmul.f32 %v6527, %v6088
    %v6531 = vmul.f32 %v6527, %v6089
    %v6532 = vmul.f32 %v6527, %v6090
    %v6533 = vmul.f32 %v6527, %v6091
    %6540 = vrot.lane.b32.xlu0 %v6528, 112
    %v6541 = vpop.permute.xlu0 %6540
    %6542 = vrot.lane.b32.xlu0 %v6529, 112
    %v6543 = vpop.permute.xlu0 %6542
    %6544 = vrot.lane.b32.xlu0 %v6530, 112
    %v6545 = vpop.permute.xlu0 %6544
    %6546 = vrot.lane.b32.xlu0 %v6531, 112
    %v6547 = vpop.permute.xlu0 %6546
    %6548 = vrot.lane.b32.xlu0 %v6532, 112
    %v6549 = vpop.permute.xlu0 %6548
    %6550 = vrot.lane.b32.xlu0 %v6533, 112
    %v6551 = vpop.permute.xlu0 %6550
    %v6552 = vsel %vm661, %v6541, %v6543
    %v6553 = vsel %vm661, %v6543, %v6545
    %v6554 = vsel %vm661, %v6547, %v6549
    %v6555 = vsel %vm661, %v6549, %v6551
    %v6560 = vadd.f32 %v6522, %v6552
    %v6561 = vadd.f32 %v6523, %v6553
    %v6562 = vadd.f32 %v6524, %v6554
    %v6563 = vadd.f32 %v6525, %v6555
    %s6564 = sld [smem:[#allocation9 + $0xc]]
    %v6565 = vstv %s6564
    %v6566 = vmul.f32 %v6565, %v6086
    %v6567 = vmul.f32 %v6565, %v6087
    %v6568 = vmul.f32 %v6565, %v6088
    %v6569 = vmul.f32 %v6565, %v6089
    %v6570 = vmul.f32 %v6565, %v6090
    %v6571 = vmul.f32 %v6565, %v6091
    %v6578 = vrot.slane %v6566, 1
    %v6579 = vrot.slane %v6567, 1
    %v6580 = vrot.slane %v6568, 1
    %v6581 = vrot.slane %v6569, 1
    %v6582 = vrot.slane %v6570, 1
    %v6583 = vrot.slane %v6571, 1
    %6584 = vrot.lane.b32.xlu0 %v6578, 112
    %v6585 = vpop.permute.xlu0 %6584
    %6586 = vrot.lane.b32.xlu0 %v6579, 112
    %v6587 = vpop.permute.xlu0 %6586
    %6588 = vrot.lane.b32.xlu0 %v6580, 112
    %v6589 = vpop.permute.xlu0 %6588
    %6590 = vrot.lane.b32.xlu0 %v6581, 112
    %v6591 = vpop.permute.xlu0 %6590
    %6592 = vrot.lane.b32.xlu0 %v6582, 112
    %v6593 = vpop.permute.xlu0 %6592
    %6594 = vrot.lane.b32.xlu0 %v6583, 112
    %v6595 = vpop.permute.xlu0 %6594
    %v6596 = vsel %vm661, %v6585, %v6587
    %v6597 = vsel %vm661, %v6587, %v6589
    %v6598 = vsel %vm661, %v6591, %v6593
    %v6599 = vsel %vm661, %v6593, %v6595
    %v6604 = vadd.f32 %v6560, %v6596
    %v6605 = vadd.f32 %v6561, %v6597
    %v6606 = vadd.f32 %v6562, %v6598
    %v6607 = vadd.f32 %v6563, %v6599
    %s6608 = sld [smem:[#allocation9 + $0x15]]
    %v6609 = vstv %s6608
    %v6610 = vmul.f32 %v6609, %v6086
    %v6611 = vmul.f32 %v6609, %v6087
    %v6612 = vmul.f32 %v6609, %v6088
    %v6613 = vmul.f32 %v6609, %v6089
    %v6614 = vmul.f32 %v6609, %v6090
    %v6615 = vmul.f32 %v6609, %v6091
    %v6622 = vrot.slane %v6610, 2
    %v6623 = vrot.slane %v6611, 2
    %v6624 = vrot.slane %v6612, 2
    %v6625 = vrot.slane %v6613, 2
    %v6626 = vrot.slane %v6614, 2
    %v6627 = vrot.slane %v6615, 2
    %6628 = vrot.lane.b32.xlu0 %v6622, 112
    %v6629 = vpop.permute.xlu0 %6628
    %6630 = vrot.lane.b32.xlu0 %v6623, 112
    %v6631 = vpop.permute.xlu0 %6630
    %6632 = vrot.lane.b32.xlu0 %v6624, 112
    %v6633 = vpop.permute.xlu0 %6632
    %6634 = vrot.lane.b32.xlu0 %v6625, 112
    %v6635 = vpop.permute.xlu0 %6634
    %6636 = vrot.lane.b32.xlu0 %v6626, 112
    %v6637 = vpop.permute.xlu0 %6636
    %6638 = vrot.lane.b32.xlu0 %v6627, 112
    %v6639 = vpop.permute.xlu0 %6638
    %v6640 = vsel %vm661, %v6629, %v6631
    %v6641 = vsel %vm661, %v6631, %v6633
    %v6642 = vsel %vm661, %v6635, %v6637
    %v6643 = vsel %vm661, %v6637, %v6639
    %v6648 = vadd.f32 %v6604, %v6640
    %v6649 = vadd.f32 %v6605, %v6641
    %v6650 = vadd.f32 %v6606, %v6642
    %v6651 = vadd.f32 %v6607, %v6643
    %s6652 = sld [smem:[#allocation9 + $0x1e]]
    %v6653 = vstv %s6652
    %v6654 = vmul.f32 %v6653, %v6086
    %v6655 = vmul.f32 %v6653, %v6087
    %v6656 = vmul.f32 %v6653, %v6088
    %v6657 = vmul.f32 %v6653, %v6089
    %v6658 = vmul.f32 %v6653, %v6090
    %v6659 = vmul.f32 %v6653, %v6091
    %v6666 = vrot.slane %v6654, 3
    %v6667 = vrot.slane %v6655, 3
    %v6668 = vrot.slane %v6656, 3
    %v6669 = vrot.slane %v6657, 3
    %v6670 = vrot.slane %v6658, 3
    %v6671 = vrot.slane %v6659, 3
    %6672 = vrot.lane.b32.xlu0 %v6666, 112
    %v6673 = vpop.permute.xlu0 %6672
    %6674 = vrot.lane.b32.xlu0 %v6667, 112
    %v6675 = vpop.permute.xlu0 %6674
    %6676 = vrot.lane.b32.xlu0 %v6668, 112
    %v6677 = vpop.permute.xlu0 %6676
    %6678 = vrot.lane.b32.xlu0 %v6669, 112
    %v6679 = vpop.permute.xlu0 %6678
    %6680 = vrot.lane.b32.xlu0 %v6670, 112
    %v6681 = vpop.permute.xlu0 %6680
    %6682 = vrot.lane.b32.xlu0 %v6671, 112
    %v6683 = vpop.permute.xlu0 %6682
    %v6684 = vsel %vm661, %v6673, %v6675
    %v6685 = vsel %vm661, %v6675, %v6677
    %v6686 = vsel %vm661, %v6679, %v6681
    %v6687 = vsel %vm661, %v6681, %v6683
    %v6692 = vadd.f32 %v6648, %v6684
    %v6693 = vadd.f32 %v6649, %v6685
    %v6694 = vadd.f32 %v6650, %v6686
    %v6695 = vadd.f32 %v6651, %v6687
    %s6696 = sld [smem:[#allocation9 + $0x4]]
    %v6697 = vstv %s6696
    %v6698 = vmul.f32 %v6697, %v6072
    %v6699 = vmul.f32 %v6697, %v6064
    %v6700 = vmul.f32 %v6697, %v6074
    %v6701 = vmul.f32 %v6697, %v6073
    %v6702 = vmul.f32 %v6697, %v6065
    %v6703 = vmul.f32 %v6697, %v6075
    %6710 = vrot.lane.b32.xlu0 %v6698, 111
    %v6711 = vpop.permute.xlu0 %6710
    %6712 = vrot.lane.b32.xlu0 %v6699, 111
    %v6713 = vpop.permute.xlu0 %6712
    %6714 = vrot.lane.b32.xlu0 %v6700, 111
    %v6715 = vpop.permute.xlu0 %6714
    %6716 = vrot.lane.b32.xlu0 %v6701, 111
    %v6717 = vpop.permute.xlu0 %6716
    %6718 = vrot.lane.b32.xlu0 %v6702, 111
    %v6719 = vpop.permute.xlu0 %6718
    %6720 = vrot.lane.b32.xlu0 %v6703, 111
    %v6721 = vpop.permute.xlu0 %6720
    %v6722 = vsel %vm832, %v6711, %v6713
    %v6723 = vsel %vm832, %v6713, %v6715
    %v6724 = vsel %vm832, %v6717, %v6719
    %v6725 = vsel %vm832, %v6719, %v6721
    %v6730 = vadd.f32 %v6692, %v6722
    %v6731 = vadd.f32 %v6693, %v6723
    %v6732 = vadd.f32 %v6694, %v6724
    %v6733 = vadd.f32 %v6695, %v6725
    %s6734 = sld [smem:[#allocation9 + $0xd]]
    %v6735 = vstv %s6734
    %v6736 = vmul.f32 %v6735, %v6072
    %v6737 = vmul.f32 %v6735, %v6064
    %v6738 = vmul.f32 %v6735, %v6074
    %v6739 = vmul.f32 %v6735, %v6073
    %v6740 = vmul.f32 %v6735, %v6065
    %v6741 = vmul.f32 %v6735, %v6075
    %v6748 = vrot.slane %v6736, 1
    %v6749 = vrot.slane %v6737, 1
    %v6750 = vrot.slane %v6738, 1
    %v6751 = vrot.slane %v6739, 1
    %v6752 = vrot.slane %v6740, 1
    %v6753 = vrot.slane %v6741, 1
    %6754 = vrot.lane.b32.xlu0 %v6748, 111
    %v6755 = vpop.permute.xlu0 %6754
    %6756 = vrot.lane.b32.xlu0 %v6749, 111
    %v6757 = vpop.permute.xlu0 %6756
    %6758 = vrot.lane.b32.xlu0 %v6750, 111
    %v6759 = vpop.permute.xlu0 %6758
    %6760 = vrot.lane.b32.xlu0 %v6751, 111
    %v6761 = vpop.permute.xlu0 %6760
    %6762 = vrot.lane.b32.xlu0 %v6752, 111
    %v6763 = vpop.permute.xlu0 %6762
    %6764 = vrot.lane.b32.xlu0 %v6753, 111
    %v6765 = vpop.permute.xlu0 %6764
    %v6766 = vsel %vm832, %v6755, %v6757
    %v6767 = vsel %vm832, %v6757, %v6759
    %v6768 = vsel %vm832, %v6761, %v6763
    %v6769 = vsel %vm832, %v6763, %v6765
    %v6774 = vadd.f32 %v6730, %v6766
    %v6775 = vadd.f32 %v6731, %v6767
    %v6776 = vadd.f32 %v6732, %v6768
    %v6777 = vadd.f32 %v6733, %v6769
    %s6778 = sld [smem:[#allocation9 + $0x16]]
    %v6779 = vstv %s6778
    %v6780 = vmul.f32 %v6779, %v6072
    %v6781 = vmul.f32 %v6779, %v6064
    %v6782 = vmul.f32 %v6779, %v6074
    %v6783 = vmul.f32 %v6779, %v6073
    %v6784 = vmul.f32 %v6779, %v6065
    %v6785 = vmul.f32 %v6779, %v6075
    %v6792 = vrot.slane %v6780, 2
    %v6793 = vrot.slane %v6781, 2
    %v6794 = vrot.slane %v6782, 2
    %v6795 = vrot.slane %v6783, 2
    %v6796 = vrot.slane %v6784, 2
    %v6797 = vrot.slane %v6785, 2
    %6798 = vrot.lane.b32.xlu0 %v6792, 111
    %v6799 = vpop.permute.xlu0 %6798
    %6800 = vrot.lane.b32.xlu0 %v6793, 111
    %v6801 = vpop.permute.xlu0 %6800
    %6802 = vrot.lane.b32.xlu0 %v6794, 111
    %v6803 = vpop.permute.xlu0 %6802
    %6804 = vrot.lane.b32.xlu0 %v6795, 111
    %v6805 = vpop.permute.xlu0 %6804
    %6806 = vrot.lane.b32.xlu0 %v6796, 111
    %v6807 = vpop.permute.xlu0 %6806
    %6808 = vrot.lane.b32.xlu0 %v6797, 111
    %v6809 = vpop.permute.xlu0 %6808
    %v6810 = vsel %vm832, %v6799, %v6801
    %v6811 = vsel %vm832, %v6801, %v6803
    %v6812 = vsel %vm832, %v6805, %v6807
    %v6813 = vsel %vm832, %v6807, %v6809
    %v6818 = vadd.f32 %v6774, %v6810
    %v6819 = vadd.f32 %v6775, %v6811
    %v6820 = vadd.f32 %v6776, %v6812
    %v6821 = vadd.f32 %v6777, %v6813
    %s6822 = sld [smem:[#allocation9 + $0x1f]]
    %v6823 = vstv %s6822
    %v6824 = vmul.f32 %v6823, %v6072
    %v6825 = vmul.f32 %v6823, %v6064
    %v6826 = vmul.f32 %v6823, %v6074
    %v6827 = vmul.f32 %v6823, %v6073
    %v6828 = vmul.f32 %v6823, %v6065
    %v6829 = vmul.f32 %v6823, %v6075
    %v6836 = vrot.slane %v6824, 3
    %v6837 = vrot.slane %v6825, 3
    %v6838 = vrot.slane %v6826, 3
    %v6839 = vrot.slane %v6827, 3
    %v6840 = vrot.slane %v6828, 3
    %v6841 = vrot.slane %v6829, 3
    %6842 = vrot.lane.b32.xlu0 %v6836, 111
    %v6843 = vpop.permute.xlu0 %6842
    %6844 = vrot.lane.b32.xlu0 %v6837, 111
    %v6845 = vpop.permute.xlu0 %6844
    %6846 = vrot.lane.b32.xlu0 %v6838, 111
    %v6847 = vpop.permute.xlu0 %6846
    %6848 = vrot.lane.b32.xlu0 %v6839, 111
    %v6849 = vpop.permute.xlu0 %6848
    %6850 = vrot.lane.b32.xlu0 %v6840, 111
    %v6851 = vpop.permute.xlu0 %6850
    %6852 = vrot.lane.b32.xlu0 %v6841, 111
    %v6853 = vpop.permute.xlu0 %6852
    %v6854 = vsel %vm832, %v6843, %v6845
    %v6855 = vsel %vm832, %v6845, %v6847
    %v6856 = vsel %vm832, %v6849, %v6851
    %v6857 = vsel %vm832, %v6851, %v6853
    %v6862 = vadd.f32 %v6818, %v6854
    %v6863 = vadd.f32 %v6819, %v6855
    %v6864 = vadd.f32 %v6820, %v6856
    %v6865 = vadd.f32 %v6821, %v6857
    %s6866 = sld [smem:[#allocation9 + $0x5]]
    %v6867 = vstv %s6866
    %v6868 = vmul.f32 %v6867, %v6092
    %v6869 = vmul.f32 %v6867, %v6093
    %v6870 = vmul.f32 %v6867, %v6094
    %v6871 = vmul.f32 %v6867, %v6095
    %v6872 = vmul.f32 %v6867, %v6096
    %v6873 = vmul.f32 %v6867, %v6097
    %6880 = vrot.lane.b32.xlu0 %v6868, 110
    %v6881 = vpop.permute.xlu0 %6880
    %6882 = vrot.lane.b32.xlu0 %v6869, 110
    %v6883 = vpop.permute.xlu0 %6882
    %6884 = vrot.lane.b32.xlu0 %v6870, 110
    %v6885 = vpop.permute.xlu0 %6884
    %6886 = vrot.lane.b32.xlu0 %v6871, 110
    %v6887 = vpop.permute.xlu0 %6886
    %6888 = vrot.lane.b32.xlu0 %v6872, 110
    %v6889 = vpop.permute.xlu0 %6888
    %6890 = vrot.lane.b32.xlu0 %v6873, 110
    %v6891 = vpop.permute.xlu0 %6890
    %v6892 = vsel %vm1003, %v6881, %v6883
    %v6893 = vsel %vm1003, %v6883, %v6885
    %v6894 = vsel %vm1003, %v6887, %v6889
    %v6895 = vsel %vm1003, %v6889, %v6891
    %v6900 = vadd.f32 %v6862, %v6892
    %v6901 = vadd.f32 %v6863, %v6893
    %v6902 = vadd.f32 %v6864, %v6894
    %v6903 = vadd.f32 %v6865, %v6895
    %s6904 = sld [smem:[#allocation9 + $0xe]]
    %v6905 = vstv %s6904
    %v6906 = vmul.f32 %v6905, %v6092
    %v6907 = vmul.f32 %v6905, %v6093
    %v6908 = vmul.f32 %v6905, %v6094
    %v6909 = vmul.f32 %v6905, %v6095
    %v6910 = vmul.f32 %v6905, %v6096
    %v6911 = vmul.f32 %v6905, %v6097
    %v6918 = vrot.slane %v6906, 1
    %v6919 = vrot.slane %v6907, 1
    %v6920 = vrot.slane %v6908, 1
    %v6921 = vrot.slane %v6909, 1
    %v6922 = vrot.slane %v6910, 1
    %v6923 = vrot.slane %v6911, 1
    %6924 = vrot.lane.b32.xlu0 %v6918, 110
    %v6925 = vpop.permute.xlu0 %6924
    %6926 = vrot.lane.b32.xlu0 %v6919, 110
    %v6927 = vpop.permute.xlu0 %6926
    %6928 = vrot.lane.b32.xlu0 %v6920, 110
    %v6929 = vpop.permute.xlu0 %6928
    %6930 = vrot.lane.b32.xlu0 %v6921, 110
    %v6931 = vpop.permute.xlu0 %6930
    %6932 = vrot.lane.b32.xlu0 %v6922, 110
    %v6933 = vpop.permute.xlu0 %6932
    %6934 = vrot.lane.b32.xlu0 %v6923, 110
    %v6935 = vpop.permute.xlu0 %6934
    %v6936 = vsel %vm1003, %v6925, %v6927
    %v6937 = vsel %vm1003, %v6927, %v6929
    %v6938 = vsel %vm1003, %v6931, %v6933
    %v6939 = vsel %vm1003, %v6933, %v6935
    %v6944 = vadd.f32 %v6900, %v6936
    %v6945 = vadd.f32 %v6901, %v6937
    %v6946 = vadd.f32 %v6902, %v6938
    %v6947 = vadd.f32 %v6903, %v6939
    %s6948 = sld [smem:[#allocation9 + $0x17]]
    %v6949 = vstv %s6948
    %v6950 = vmul.f32 %v6949, %v6092
    %v6951 = vmul.f32 %v6949, %v6093
    %v6952 = vmul.f32 %v6949, %v6094
    %v6953 = vmul.f32 %v6949, %v6095
    %v6954 = vmul.f32 %v6949, %v6096
    %v6955 = vmul.f32 %v6949, %v6097
    %v6962 = vrot.slane %v6950, 2
    %v6963 = vrot.slane %v6951, 2
    %v6964 = vrot.slane %v6952, 2
    %v6965 = vrot.slane %v6953, 2
    %v6966 = vrot.slane %v6954, 2
    %v6967 = vrot.slane %v6955, 2
    %6968 = vrot.lane.b32.xlu0 %v6962, 110
    %v6969 = vpop.permute.xlu0 %6968
    %6970 = vrot.lane.b32.xlu0 %v6963, 110
    %v6971 = vpop.permute.xlu0 %6970
    %6972 = vrot.lane.b32.xlu0 %v6964, 110
    %v6973 = vpop.permute.xlu0 %6972
    %6974 = vrot.lane.b32.xlu0 %v6965, 110
    %v6975 = vpop.permute.xlu0 %6974
    %6976 = vrot.lane.b32.xlu0 %v6966, 110
    %v6977 = vpop.permute.xlu0 %6976
    %6978 = vrot.lane.b32.xlu0 %v6967, 110
    %v6979 = vpop.permute.xlu0 %6978
    %v6980 = vsel %vm1003, %v6969, %v6971
    %v6981 = vsel %vm1003, %v6971, %v6973
    %v6982 = vsel %vm1003, %v6975, %v6977
    %v6983 = vsel %vm1003, %v6977, %v6979
    %v6988 = vadd.f32 %v6944, %v6980
    %v6989 = vadd.f32 %v6945, %v6981
    %v6990 = vadd.f32 %v6946, %v6982
    %v6991 = vadd.f32 %v6947, %v6983
    %s6992 = sld [smem:[#allocation9 + $0x20]]
    %v6993 = vstv %s6992
    %v6994 = vmul.f32 %v6993, %v6092
    %v6995 = vmul.f32 %v6993, %v6093
    %v6996 = vmul.f32 %v6993, %v6094
    %v6997 = vmul.f32 %v6993, %v6095
    %v6998 = vmul.f32 %v6993, %v6096
    %v6999 = vmul.f32 %v6993, %v6097
    %v7006 = vrot.slane %v6994, 3
    %v7007 = vrot.slane %v6995, 3
    %v7008 = vrot.slane %v6996, 3
    %v7009 = vrot.slane %v6997, 3
    %v7010 = vrot.slane %v6998, 3
    %v7011 = vrot.slane %v6999, 3
    %7012 = vrot.lane.b32.xlu0 %v7006, 110
    %v7013 = vpop.permute.xlu0 %7012
    %7014 = vrot.lane.b32.xlu0 %v7007, 110
    %v7015 = vpop.permute.xlu0 %7014
    %7016 = vrot.lane.b32.xlu0 %v7008, 110
    %v7017 = vpop.permute.xlu0 %7016
    %7018 = vrot.lane.b32.xlu0 %v7009, 110
    %v7019 = vpop.permute.xlu0 %7018
    %7020 = vrot.lane.b32.xlu0 %v7010, 110
    %v7021 = vpop.permute.xlu0 %7020
    %7022 = vrot.lane.b32.xlu0 %v7011, 110
    %v7023 = vpop.permute.xlu0 %7022
    %v7024 = vsel %vm1003, %v7013, %v7015
    %v7025 = vsel %vm1003, %v7015, %v7017
    %v7026 = vsel %vm1003, %v7019, %v7021
    %v7027 = vsel %vm1003, %v7021, %v7023
    %v7032 = vadd.f32 %v6988, %v7024
    %v7033 = vadd.f32 %v6989, %v7025
    %v7034 = vadd.f32 %v6990, %v7026
    %v7035 = vadd.f32 %v6991, %v7027
    %s7036 = sld [smem:[#allocation9 + $0x6]]
    %v7037 = vstv %s7036
    %v7038 = vmul.f32 %v7037, %v6098
    %v7039 = vmul.f32 %v7037, %v6099
    %v7040 = vmul.f32 %v7037, %v6100
    %v7041 = vmul.f32 %v7037, %v6101
    %v7042 = vmul.f32 %v7037, %v6102
    %v7043 = vmul.f32 %v7037, %v6103
    %7050 = vrot.lane.b32.xlu0 %v7038, 96
    %v7051 = vpop.permute.xlu0 %7050
    %7052 = vrot.lane.b32.xlu0 %v7039, 96
    %v7053 = vpop.permute.xlu0 %7052
    %7054 = vrot.lane.b32.xlu0 %v7040, 96
    %v7055 = vpop.permute.xlu0 %7054
    %7056 = vrot.lane.b32.xlu0 %v7041, 96
    %v7057 = vpop.permute.xlu0 %7056
    %7058 = vrot.lane.b32.xlu0 %v7042, 96
    %v7059 = vpop.permute.xlu0 %7058
    %7060 = vrot.lane.b32.xlu0 %v7043, 96
    %v7061 = vpop.permute.xlu0 %7060
    %v7062 = vsel %vm1174, %v7051, %v7053
    %v7063 = vsel %vm1174, %v7053, %v7055
    %v7064 = vsel %vm1174, %v7057, %v7059
    %v7065 = vsel %vm1174, %v7059, %v7061
    %v7070 = vadd.f32 %v7032, %v7062
    %v7071 = vadd.f32 %v7033, %v7063
    %v7072 = vadd.f32 %v7034, %v7064
    %v7073 = vadd.f32 %v7035, %v7065
    %s7074 = sld [smem:[#allocation9 + $0xf]]
    %v7075 = vstv %s7074
    %v7076 = vmul.f32 %v7075, %v6098
    %v7077 = vmul.f32 %v7075, %v6099
    %v7078 = vmul.f32 %v7075, %v6100
    %v7079 = vmul.f32 %v7075, %v6101
    %v7080 = vmul.f32 %v7075, %v6102
    %v7081 = vmul.f32 %v7075, %v6103
    %v7088 = vrot.slane %v7076, 1
    %v7089 = vrot.slane %v7077, 1
    %v7090 = vrot.slane %v7078, 1
    %v7091 = vrot.slane %v7079, 1
    %v7092 = vrot.slane %v7080, 1
    %v7093 = vrot.slane %v7081, 1
    %7094 = vrot.lane.b32.xlu0 %v7088, 96
    %v7095 = vpop.permute.xlu0 %7094
    %7096 = vrot.lane.b32.xlu0 %v7089, 96
    %v7097 = vpop.permute.xlu0 %7096
    %7098 = vrot.lane.b32.xlu0 %v7090, 96
    %v7099 = vpop.permute.xlu0 %7098
    %7100 = vrot.lane.b32.xlu0 %v7091, 96
    %v7101 = vpop.permute.xlu0 %7100
    %7102 = vrot.lane.b32.xlu0 %v7092, 96
    %v7103 = vpop.permute.xlu0 %7102
    %7104 = vrot.lane.b32.xlu0 %v7093, 96
    %v7105 = vpop.permute.xlu0 %7104
    %v7106 = vsel %vm1174, %v7095, %v7097
    %v7107 = vsel %vm1174, %v7097, %v7099
    %v7108 = vsel %vm1174, %v7101, %v7103
    %v7109 = vsel %vm1174, %v7103, %v7105
    %v7114 = vadd.f32 %v7070, %v7106
    %v7115 = vadd.f32 %v7071, %v7107
    %v7116 = vadd.f32 %v7072, %v7108
    %v7117 = vadd.f32 %v7073, %v7109
    %s7118 = sld [smem:[#allocation9 + $0x18]]
    %v7119 = vstv %s7118
    %v7120 = vmul.f32 %v7119, %v6098
    %v7121 = vmul.f32 %v7119, %v6099
    %v7122 = vmul.f32 %v7119, %v6100
    %v7123 = vmul.f32 %v7119, %v6101
    %v7124 = vmul.f32 %v7119, %v6102
    %v7125 = vmul.f32 %v7119, %v6103
    %v7132 = vrot.slane %v7120, 2
    %v7133 = vrot.slane %v7121, 2
    %v7134 = vrot.slane %v7122, 2
    %v7135 = vrot.slane %v7123, 2
    %v7136 = vrot.slane %v7124, 2
    %v7137 = vrot.slane %v7125, 2
    %7138 = vrot.lane.b32.xlu0 %v7132, 96
    %v7139 = vpop.permute.xlu0 %7138
    %7140 = vrot.lane.b32.xlu0 %v7133, 96
    %v7141 = vpop.permute.xlu0 %7140
    %7142 = vrot.lane.b32.xlu0 %v7134, 96
    %v7143 = vpop.permute.xlu0 %7142
    %7144 = vrot.lane.b32.xlu0 %v7135, 96
    %v7145 = vpop.permute.xlu0 %7144
    %7146 = vrot.lane.b32.xlu0 %v7136, 96
    %v7147 = vpop.permute.xlu0 %7146
    %7148 = vrot.lane.b32.xlu0 %v7137, 96
    %v7149 = vpop.permute.xlu0 %7148
    %v7150 = vsel %vm1174, %v7139, %v7141
    %v7151 = vsel %vm1174, %v7141, %v7143
    %v7152 = vsel %vm1174, %v7145, %v7147
    %v7153 = vsel %vm1174, %v7147, %v7149
    %v7158 = vadd.f32 %v7114, %v7150
    %v7159 = vadd.f32 %v7115, %v7151
    %v7160 = vadd.f32 %v7116, %v7152
    %v7161 = vadd.f32 %v7117, %v7153
    %s7162 = sld [smem:[#allocation9 + $0x21]]
    %v7163 = vstv %s7162
    %v7164 = vmul.f32 %v7163, %v6098
    %v7165 = vmul.f32 %v7163, %v6099
    %v7166 = vmul.f32 %v7163, %v6100
    %v7167 = vmul.f32 %v7163, %v6101
    %v7168 = vmul.f32 %v7163, %v6102
    %v7169 = vmul.f32 %v7163, %v6103
    %v7176 = vrot.slane %v7164, 3
    %v7177 = vrot.slane %v7165, 3
    %v7178 = vrot.slane %v7166, 3
    %v7179 = vrot.slane %v7167, 3
    %v7180 = vrot.slane %v7168, 3
    %v7181 = vrot.slane %v7169, 3
    %7182 = vrot.lane.b32.xlu0 %v7176, 96
    %v7183 = vpop.permute.xlu0 %7182
    %7184 = vrot.lane.b32.xlu0 %v7177, 96
    %v7185 = vpop.permute.xlu0 %7184
    %7186 = vrot.lane.b32.xlu0 %v7178, 96
    %v7187 = vpop.permute.xlu0 %7186
    %7188 = vrot.lane.b32.xlu0 %v7179, 96
    %v7189 = vpop.permute.xlu0 %7188
    %7190 = vrot.lane.b32.xlu0 %v7180, 96
    %v7191 = vpop.permute.xlu0 %7190
    %7192 = vrot.lane.b32.xlu0 %v7181, 96
    %v7193 = vpop.permute.xlu0 %7192
    %v7194 = vsel %vm1174, %v7183, %v7185
    %v7195 = vsel %vm1174, %v7185, %v7187
    %v7196 = vsel %vm1174, %v7189, %v7191
    %v7197 = vsel %vm1174, %v7191, %v7193
    %v7202 = vadd.f32 %v7158, %v7194
    %v7203 = vadd.f32 %v7159, %v7195
    %v7204 = vadd.f32 %v7160, %v7196
    %v7205 = vadd.f32 %v7161, %v7197
    %s7206 = sld [smem:[#allocation9 + $0x7]]
    %v7207 = vstv %s7206
    %v7208 = vmul.f32 %v7207, %v6072
    %v7209 = vmul.f32 %v7207, %v6064
    %v7210 = vmul.f32 %v7207, %v6074
    %v7211 = vmul.f32 %v7207, %v6073
    %v7212 = vmul.f32 %v7207, %v6065
    %v7213 = vmul.f32 %v7207, %v6075
    %7220 = vrot.lane.b32.xlu0 %v7208, 95
    %v7221 = vpop.permute.xlu0 %7220
    %7222 = vrot.lane.b32.xlu0 %v7209, 95
    %v7223 = vpop.permute.xlu0 %7222
    %7224 = vrot.lane.b32.xlu0 %v7210, 95
    %v7225 = vpop.permute.xlu0 %7224
    %7226 = vrot.lane.b32.xlu0 %v7211, 95
    %v7227 = vpop.permute.xlu0 %7226
    %7228 = vrot.lane.b32.xlu0 %v7212, 95
    %v7229 = vpop.permute.xlu0 %7228
    %7230 = vrot.lane.b32.xlu0 %v7213, 95
    %v7231 = vpop.permute.xlu0 %7230
    %v7232 = vsel %vm1345, %v7221, %v7223
    %v7233 = vsel %vm1345, %v7223, %v7225
    %v7234 = vsel %vm1345, %v7227, %v7229
    %v7235 = vsel %vm1345, %v7229, %v7231
    %v7240 = vadd.f32 %v7202, %v7232
    %v7241 = vadd.f32 %v7203, %v7233
    %v7242 = vadd.f32 %v7204, %v7234
    %v7243 = vadd.f32 %v7205, %v7235
    %s7244 = sld [smem:[#allocation9 + $0x10]]
    %v7245 = vstv %s7244
    %v7246 = vmul.f32 %v7245, %v6072
    %v7247 = vmul.f32 %v7245, %v6064
    %v7248 = vmul.f32 %v7245, %v6074
    %v7249 = vmul.f32 %v7245, %v6073
    %v7250 = vmul.f32 %v7245, %v6065
    %v7251 = vmul.f32 %v7245, %v6075
    %v7258 = vrot.slane %v7246, 1
    %v7259 = vrot.slane %v7247, 1
    %v7260 = vrot.slane %v7248, 1
    %v7261 = vrot.slane %v7249, 1
    %v7262 = vrot.slane %v7250, 1
    %v7263 = vrot.slane %v7251, 1
    %7264 = vrot.lane.b32.xlu0 %v7258, 95
    %v7265 = vpop.permute.xlu0 %7264
    %7266 = vrot.lane.b32.xlu0 %v7259, 95
    %v7267 = vpop.permute.xlu0 %7266
    %7268 = vrot.lane.b32.xlu0 %v7260, 95
    %v7269 = vpop.permute.xlu0 %7268
    %7270 = vrot.lane.b32.xlu0 %v7261, 95
    %v7271 = vpop.permute.xlu0 %7270
    %7272 = vrot.lane.b32.xlu0 %v7262, 95
    %v7273 = vpop.permute.xlu0 %7272
    %7274 = vrot.lane.b32.xlu0 %v7263, 95
    %v7275 = vpop.permute.xlu0 %7274
    %v7276 = vsel %vm1345, %v7265, %v7267
    %v7277 = vsel %vm1345, %v7267, %v7269
    %v7278 = vsel %vm1345, %v7271, %v7273
    %v7279 = vsel %vm1345, %v7273, %v7275
    %v7284 = vadd.f32 %v7240, %v7276
    %v7285 = vadd.f32 %v7241, %v7277
    %v7286 = vadd.f32 %v7242, %v7278
    %v7287 = vadd.f32 %v7243, %v7279
    %s7288 = sld [smem:[#allocation9 + $0x19]]
    %v7289 = vstv %s7288
    %v7290 = vmul.f32 %v7289, %v6072
    %v7291 = vmul.f32 %v7289, %v6064
    %v7292 = vmul.f32 %v7289, %v6074
    %v7293 = vmul.f32 %v7289, %v6073
    %v7294 = vmul.f32 %v7289, %v6065
    %v7295 = vmul.f32 %v7289, %v6075
    %v7302 = vrot.slane %v7290, 2
    %v7303 = vrot.slane %v7291, 2
    %v7304 = vrot.slane %v7292, 2
    %v7305 = vrot.slane %v7293, 2
    %v7306 = vrot.slane %v7294, 2
    %v7307 = vrot.slane %v7295, 2
    %7308 = vrot.lane.b32.xlu0 %v7302, 95
    %v7309 = vpop.permute.xlu0 %7308
    %7310 = vrot.lane.b32.xlu0 %v7303, 95
    %v7311 = vpop.permute.xlu0 %7310
    %7312 = vrot.lane.b32.xlu0 %v7304, 95
    %v7313 = vpop.permute.xlu0 %7312
    %7314 = vrot.lane.b32.xlu0 %v7305, 95
    %v7315 = vpop.permute.xlu0 %7314
    %7316 = vrot.lane.b32.xlu0 %v7306, 95
    %v7317 = vpop.permute.xlu0 %7316
    %7318 = vrot.lane.b32.xlu0 %v7307, 95
    %v7319 = vpop.permute.xlu0 %7318
    %v7320 = vsel %vm1345, %v7309, %v7311
    %v7321 = vsel %vm1345, %v7311, %v7313
    %v7322 = vsel %vm1345, %v7315, %v7317
    %v7323 = vsel %vm1345, %v7317, %v7319
    %v7328 = vadd.f32 %v7284, %v7320
    %v7329 = vadd.f32 %v7285, %v7321
    %v7330 = vadd.f32 %v7286, %v7322
    %v7331 = vadd.f32 %v7287, %v7323
    %s7332 = sld [smem:[#allocation9 + $0x22]]
    %v7333 = vstv %s7332
    %v7334 = vmul.f32 %v7333, %v6072
    %v7335 = vmul.f32 %v7333, %v6064
    %v7336 = vmul.f32 %v7333, %v6074
    %v7337 = vmul.f32 %v7333, %v6073
    %v7338 = vmul.f32 %v7333, %v6065
    %v7339 = vmul.f32 %v7333, %v6075
    %v7346 = vrot.slane %v7334, 3
    %v7347 = vrot.slane %v7335, 3
    %v7348 = vrot.slane %v7336, 3
    %v7349 = vrot.slane %v7337, 3
    %v7350 = vrot.slane %v7338, 3
    %v7351 = vrot.slane %v7339, 3
    %7352 = vrot.lane.b32.xlu0 %v7346, 95
    %v7353 = vpop.permute.xlu0 %7352
    %7354 = vrot.lane.b32.xlu0 %v7347, 95
    %v7355 = vpop.permute.xlu0 %7354
    %7356 = vrot.lane.b32.xlu0 %v7348, 95
    %v7357 = vpop.permute.xlu0 %7356
    %7358 = vrot.lane.b32.xlu0 %v7349, 95
    %v7359 = vpop.permute.xlu0 %7358
    %7360 = vrot.lane.b32.xlu0 %v7350, 95
    %v7361 = vpop.permute.xlu0 %7360
    %7362 = vrot.lane.b32.xlu0 %v7351, 95
    %v7363 = vpop.permute.xlu0 %7362
    %v7364 = vsel %vm1345, %v7353, %v7355
    %v7365 = vsel %vm1345, %v7355, %v7357
    %v7366 = vsel %vm1345, %v7359, %v7361
    %v7367 = vsel %vm1345, %v7361, %v7363
    %v7372 = vadd.f32 %v7328, %v7364
    %v7373 = vadd.f32 %v7329, %v7365
    %v7374 = vadd.f32 %v7330, %v7366
    %v7375 = vadd.f32 %v7331, %v7367
    %s7376 = sld [smem:[#allocation9 + $0x8]]
    %v7377 = vstv %s7376
    %v7378 = vmul.f32 %v7377, %v6104
    %v7379 = vmul.f32 %v7377, %v6105
    %v7380 = vmul.f32 %v7377, %v6106
    %v7381 = vmul.f32 %v7377, %v6107
    %v7382 = vmul.f32 %v7377, %v6108
    %v7383 = vmul.f32 %v7377, %v6109
    %7390 = vrot.lane.b32.xlu0 %v7378, 94
    %v7391 = vpop.permute.xlu0 %7390
    %7392 = vrot.lane.b32.xlu0 %v7379, 94
    %v7393 = vpop.permute.xlu0 %7392
    %7394 = vrot.lane.b32.xlu0 %v7380, 94
    %v7395 = vpop.permute.xlu0 %7394
    %7396 = vrot.lane.b32.xlu0 %v7381, 94
    %v7397 = vpop.permute.xlu0 %7396
    %7398 = vrot.lane.b32.xlu0 %v7382, 94
    %v7399 = vpop.permute.xlu0 %7398
    %7400 = vrot.lane.b32.xlu0 %v7383, 94
    %v7401 = vpop.permute.xlu0 %7400
    %v7402 = vsel %vm1516, %v7391, %v7393
    %v7403 = vsel %vm1516, %v7393, %v7395
    %v7404 = vsel %vm1516, %v7397, %v7399
    %v7405 = vsel %vm1516, %v7399, %v7401
    %v7410 = vadd.f32 %v7372, %v7402
    %v7411 = vadd.f32 %v7373, %v7403
    %v7412 = vadd.f32 %v7374, %v7404
    %v7413 = vadd.f32 %v7375, %v7405
    %s7414 = sld [smem:[#allocation9 + $0x11]]
    %v7415 = vstv %s7414
    %v7416 = vmul.f32 %v7415, %v6104
    %v7417 = vmul.f32 %v7415, %v6105
    %v7418 = vmul.f32 %v7415, %v6106
    %v7419 = vmul.f32 %v7415, %v6107
    %v7420 = vmul.f32 %v7415, %v6108
    %v7421 = vmul.f32 %v7415, %v6109
    %v7428 = vrot.slane %v7416, 1
    %v7429 = vrot.slane %v7417, 1
    %v7430 = vrot.slane %v7418, 1
    %v7431 = vrot.slane %v7419, 1
    %v7432 = vrot.slane %v7420, 1
    %v7433 = vrot.slane %v7421, 1
    %7434 = vrot.lane.b32.xlu0 %v7428, 94
    %v7435 = vpop.permute.xlu0 %7434
    %7436 = vrot.lane.b32.xlu0 %v7429, 94
    %v7437 = vpop.permute.xlu0 %7436
    %7438 = vrot.lane.b32.xlu0 %v7430, 94
    %v7439 = vpop.permute.xlu0 %7438
    %7440 = vrot.lane.b32.xlu0 %v7431, 94
    %v7441 = vpop.permute.xlu0 %7440
    %7442 = vrot.lane.b32.xlu0 %v7432, 94
    %v7443 = vpop.permute.xlu0 %7442
    %7444 = vrot.lane.b32.xlu0 %v7433, 94
    %v7445 = vpop.permute.xlu0 %7444
    %v7446 = vsel %vm1516, %v7435, %v7437
    %v7447 = vsel %vm1516, %v7437, %v7439
    %v7448 = vsel %vm1516, %v7441, %v7443
    %v7449 = vsel %vm1516, %v7443, %v7445
    %v7454 = vadd.f32 %v7410, %v7446
    %v7455 = vadd.f32 %v7411, %v7447
    %v7456 = vadd.f32 %v7412, %v7448
    %v7457 = vadd.f32 %v7413, %v7449
    %s7458 = sld [smem:[#allocation9 + $0x1a]]
    %v7459 = vstv %s7458
    %v7460 = vmul.f32 %v7459, %v6104
    %v7461 = vmul.f32 %v7459, %v6105
    %v7462 = vmul.f32 %v7459, %v6106
    %v7463 = vmul.f32 %v7459, %v6107
    %v7464 = vmul.f32 %v7459, %v6108
    %v7465 = vmul.f32 %v7459, %v6109
    %v7472 = vrot.slane %v7460, 2
    %v7473 = vrot.slane %v7461, 2
    %v7474 = vrot.slane %v7462, 2
    %v7475 = vrot.slane %v7463, 2
    %v7476 = vrot.slane %v7464, 2
    %v7477 = vrot.slane %v7465, 2
    %7478 = vrot.lane.b32.xlu0 %v7472, 94
    %v7479 = vpop.permute.xlu0 %7478
    %7480 = vrot.lane.b32.xlu0 %v7473, 94
    %v7481 = vpop.permute.xlu0 %7480
    %7482 = vrot.lane.b32.xlu0 %v7474, 94
    %v7483 = vpop.permute.xlu0 %7482
    %7484 = vrot.lane.b32.xlu0 %v7475, 94
    %v7485 = vpop.permute.xlu0 %7484
    %7486 = vrot.lane.b32.xlu0 %v7476, 94
    %v7487 = vpop.permute.xlu0 %7486
    %7488 = vrot.lane.b32.xlu0 %v7477, 94
    %v7489 = vpop.permute.xlu0 %7488
    %v7490 = vsel %vm1516, %v7479, %v7481
    %v7491 = vsel %vm1516, %v7481, %v7483
    %v7492 = vsel %vm1516, %v7485, %v7487
    %v7493 = vsel %vm1516, %v7487, %v7489
    %v7498 = vadd.f32 %v7454, %v7490
    %v7499 = vadd.f32 %v7455, %v7491
    %v7500 = vadd.f32 %v7456, %v7492
    %v7501 = vadd.f32 %v7457, %v7493
    %s7502 = sld [smem:[#allocation9 + $0x23]]
    %v7503 = vstv %s7502
    %v7504 = vmul.f32 %v7503, %v6104
    %v7505 = vmul.f32 %v7503, %v6105
    %v7506 = vmul.f32 %v7503, %v6106
    %v7507 = vmul.f32 %v7503, %v6107
    %v7508 = vmul.f32 %v7503, %v6108
    %v7509 = vmul.f32 %v7503, %v6109
    %v7516 = vrot.slane %v7504, 3
    %v7517 = vrot.slane %v7505, 3
    %v7518 = vrot.slane %v7506, 3
    %v7519 = vrot.slane %v7507, 3
    %v7520 = vrot.slane %v7508, 3
    %v7521 = vrot.slane %v7509, 3
    %7522 = vrot.lane.b32.xlu0 %v7516, 94
    %v7523 = vpop.permute.xlu0 %7522
    %7524 = vrot.lane.b32.xlu0 %v7517, 94
    %v7525 = vpop.permute.xlu0 %7524
    %7526 = vrot.lane.b32.xlu0 %v7518, 94
    %v7527 = vpop.permute.xlu0 %7526
    %7528 = vrot.lane.b32.xlu0 %v7519, 94
    %v7529 = vpop.permute.xlu0 %7528
    %7530 = vrot.lane.b32.xlu0 %v7520, 94
    %v7531 = vpop.permute.xlu0 %7530
    %7532 = vrot.lane.b32.xlu0 %v7521, 94
    %v7533 = vpop.permute.xlu0 %7532
    %v7534 = vsel %vm1516, %v7523, %v7525
    %v7535 = vsel %vm1516, %v7525, %v7527
    %v7536 = vsel %vm1516, %v7529, %v7531
    %v7537 = vsel %vm1516, %v7531, %v7533
    %v7542 = vadd.f32 %v7498, %v7534
    %v7543 = vadd.f32 %v7499, %v7535
    %v7544 = vadd.f32 %v7500, %v7536
    %v7545 = vadd.f32 %v7501, %v7537
    %s7546 = sld [smem:[#allocation10]]
    %v7547 = vstv %s7546
    %v7548 = vadd.f32 %v7542, %v7547
    %v7549 = vadd.f32 %v7543, %v7547
    %v7550 = vadd.f32 %v7544, %v7547
    %v7551 = vadd.f32 %v7545, %v7547
    %s7552 = sld [smem:[#allocation9 + $0x24]]
    %v7553 = vstv %s7552
    %v7554 = vmul.f32 %v7553, %v6076
    %v7555 = vmul.f32 %v7553, %v6077
    %v7556 = vmul.f32 %v7553, %v6078
    %v7557 = vmul.f32 %v7553, %v6079
    %v7558 = vadd.f32 %v7554, 0.0
    %v7559 = vadd.f32 %v7555, 0.0
    %v7560 = vadd.f32 %v7556, 0.0
    %v7561 = vadd.f32 %v7557, 0.0
    %s7562 = sld [smem:[#allocation9 + $0x2d]]
    %v7563 = vstv %s7562
    %v7564 = vmul.f32 %v7563, %v6076
    %v7565 = vmul.f32 %v7563, %v6077
    %v7566 = vmul.f32 %v7563, %v6078
    %v7567 = vmul.f32 %v7563, %v6079
    %v7572 = vrot.slane %v7564, 1
    %v7573 = vrot.slane %v7565, 1
    %v7574 = vrot.slane %v7566, 1
    %v7575 = vrot.slane %v7567, 1
    %v7580 = vadd.f32 %v7558, %v7572
    %v7581 = vadd.f32 %v7559, %v7573
    %v7582 = vadd.f32 %v7560, %v7574
    %v7583 = vadd.f32 %v7561, %v7575
    %s7584 = sld [smem:[#allocation9 + $0x36]]
    %v7585 = vstv %s7584
    %v7586 = vmul.f32 %v7585, %v6076
    %v7587 = vmul.f32 %v7585, %v6077
    %v7588 = vmul.f32 %v7585, %v6078
    %v7589 = vmul.f32 %v7585, %v6079
    %v7594 = vrot.slane %v7586, 2
    %v7595 = vrot.slane %v7587, 2
    %v7596 = vrot.slane %v7588, 2
    %v7597 = vrot.slane %v7589, 2
    %v7602 = vadd.f32 %v7580, %v7594
    %v7603 = vadd.f32 %v7581, %v7595
    %v7604 = vadd.f32 %v7582, %v7596
    %v7605 = vadd.f32 %v7583, %v7597
    %s7606 = sld [smem:[#allocation9 + $0x3f]]
    %v7607 = vstv %s7606
    %v7608 = vmul.f32 %v7607, %v6076
    %v7609 = vmul.f32 %v7607, %v6077
    %v7610 = vmul.f32 %v7607, %v6078
    %v7611 = vmul.f32 %v7607, %v6079
    %v7616 = vrot.slane %v7608, 3
    %v7617 = vrot.slane %v7609, 3
    %v7618 = vrot.slane %v7610, 3
    %v7619 = vrot.slane %v7611, 3
    %v7624 = vadd.f32 %v7602, %v7616
    %v7625 = vadd.f32 %v7603, %v7617
    %v7626 = vadd.f32 %v7604, %v7618
    %v7627 = vadd.f32 %v7605, %v7619
    %s7628 = sld [smem:[#allocation9 + $0x25]]
    %v7629 = vstv %s7628
    %v7630 = vmul.f32 %v7629, %v6072
    %v7631 = vmul.f32 %v7629, %v6064
    %v7632 = vmul.f32 %v7629, %v6074
    %v7633 = vmul.f32 %v7629, %v6073
    %v7634 = vmul.f32 %v7629, %v6065
    %v7635 = vmul.f32 %v7629, %v6075
    %7642 = vrot.lane.b32.xlu0 %v7630, 127
    %v7643 = vpop.permute.xlu0 %7642
    %7644 = vrot.lane.b32.xlu0 %v7631, 127
    %v7645 = vpop.permute.xlu0 %7644
    %7646 = vrot.lane.b32.xlu0 %v7632, 127
    %v7647 = vpop.permute.xlu0 %7646
    %7648 = vrot.lane.b32.xlu0 %v7633, 127
    %v7649 = vpop.permute.xlu0 %7648
    %7650 = vrot.lane.b32.xlu0 %v7634, 127
    %v7651 = vpop.permute.xlu0 %7650
    %7652 = vrot.lane.b32.xlu0 %v7635, 127
    %v7653 = vpop.permute.xlu0 %7652
    %v7654 = vsel %vm319, %v7643, %v7645
    %v7655 = vsel %vm319, %v7645, %v7647
    %v7656 = vsel %vm319, %v7649, %v7651
    %v7657 = vsel %vm319, %v7651, %v7653
    %v7662 = vadd.f32 %v7624, %v7654
    %v7663 = vadd.f32 %v7625, %v7655
    %v7664 = vadd.f32 %v7626, %v7656
    %v7665 = vadd.f32 %v7627, %v7657
    %s7666 = sld [smem:[#allocation9 + $0x2e]]
    %v7667 = vstv %s7666
    %v7668 = vmul.f32 %v7667, %v6072
    %v7669 = vmul.f32 %v7667, %v6064
    %v7670 = vmul.f32 %v7667, %v6074
    %v7671 = vmul.f32 %v7667, %v6073
    %v7672 = vmul.f32 %v7667, %v6065
    %v7673 = vmul.f32 %v7667, %v6075
    %v7680 = vrot.slane %v7668, 1
    %v7681 = vrot.slane %v7669, 1
    %v7682 = vrot.slane %v7670, 1
    %v7683 = vrot.slane %v7671, 1
    %v7684 = vrot.slane %v7672, 1
    %v7685 = vrot.slane %v7673, 1
    %7686 = vrot.lane.b32.xlu0 %v7680, 127
    %v7687 = vpop.permute.xlu0 %7686
    %7688 = vrot.lane.b32.xlu0 %v7681, 127
    %v7689 = vpop.permute.xlu0 %7688
    %7690 = vrot.lane.b32.xlu0 %v7682, 127
    %v7691 = vpop.permute.xlu0 %7690
    %7692 = vrot.lane.b32.xlu0 %v7683, 127
    %v7693 = vpop.permute.xlu0 %7692
    %7694 = vrot.lane.b32.xlu0 %v7684, 127
    %v7695 = vpop.permute.xlu0 %7694
    %7696 = vrot.lane.b32.xlu0 %v7685, 127
    %v7697 = vpop.permute.xlu0 %7696
    %v7698 = vsel %vm319, %v7687, %v7689
    %v7699 = vsel %vm319, %v7689, %v7691
    %v7700 = vsel %vm319, %v7693, %v7695
    %v7701 = vsel %vm319, %v7695, %v7697
    %v7706 = vadd.f32 %v7662, %v7698
    %v7707 = vadd.f32 %v7663, %v7699
    %v7708 = vadd.f32 %v7664, %v7700
    %v7709 = vadd.f32 %v7665, %v7701
    %s7710 = sld [smem:[#allocation9 + $0x37]]
    %v7711 = vstv %s7710
    %v7712 = vmul.f32 %v7711, %v6072
    %v7713 = vmul.f32 %v7711, %v6064
    %v7714 = vmul.f32 %v7711, %v6074
    %v7715 = vmul.f32 %v7711, %v6073
    %v7716 = vmul.f32 %v7711, %v6065
    %v7717 = vmul.f32 %v7711, %v6075
    %v7724 = vrot.slane %v7712, 2
    %v7725 = vrot.slane %v7713, 2
    %v7726 = vrot.slane %v7714, 2
    %v7727 = vrot.slane %v7715, 2
    %v7728 = vrot.slane %v7716, 2
    %v7729 = vrot.slane %v7717, 2
    %7730 = vrot.lane.b32.xlu0 %v7724, 127
    %v7731 = vpop.permute.xlu0 %7730
    %7732 = vrot.lane.b32.xlu0 %v7725, 127
    %v7733 = vpop.permute.xlu0 %7732
    %7734 = vrot.lane.b32.xlu0 %v7726, 127
    %v7735 = vpop.permute.xlu0 %7734
    %7736 = vrot.lane.b32.xlu0 %v7727, 127
    %v7737 = vpop.permute.xlu0 %7736
    %7738 = vrot.lane.b32.xlu0 %v7728, 127
    %v7739 = vpop.permute.xlu0 %7738
    %7740 = vrot.lane.b32.xlu0 %v7729, 127
    %v7741 = vpop.permute.xlu0 %7740
    %v7742 = vsel %vm319, %v7731, %v7733
    %v7743 = vsel %vm319, %v7733, %v7735
    %v7744 = vsel %vm319, %v7737, %v7739
    %v7745 = vsel %vm319, %v7739, %v7741
    %v7750 = vadd.f32 %v7706, %v7742
    %v7751 = vadd.f32 %v7707, %v7743
    %v7752 = vadd.f32 %v7708, %v7744
    %v7753 = vadd.f32 %v7709, %v7745
    %s7754 = sld [smem:[#allocation9 + $0x40]]
    %v7755 = vstv %s7754
    %v7756 = vmul.f32 %v7755, %v6072
    %v7757 = vmul.f32 %v7755, %v6064
    %v7758 = vmul.f32 %v7755, %v6074
    %v7759 = vmul.f32 %v7755, %v6073
    %v7760 = vmul.f32 %v7755, %v6065
    %v7761 = vmul.f32 %v7755, %v6075
    %v7768 = vrot.slane %v7756, 3
    %v7769 = vrot.slane %v7757, 3
    %v7770 = vrot.slane %v7758, 3
    %v7771 = vrot.slane %v7759, 3
    %v7772 = vrot.slane %v7760, 3
    %v7773 = vrot.slane %v7761, 3
    %7774 = vrot.lane.b32.xlu0 %v7768, 127
    %v7775 = vpop.permute.xlu0 %7774
    %7776 = vrot.lane.b32.xlu0 %v7769, 127
    %v7777 = vpop.permute.xlu0 %7776
    %7778 = vrot.lane.b32.xlu0 %v7770, 127
    %v7779 = vpop.permute.xlu0 %7778
    %7780 = vrot.lane.b32.xlu0 %v7771, 127
    %v7781 = vpop.permute.xlu0 %7780
    %7782 = vrot.lane.b32.xlu0 %v7772, 127
    %v7783 = vpop.permute.xlu0 %7782
    %7784 = vrot.lane.b32.xlu0 %v7773, 127
    %v7785 = vpop.permute.xlu0 %7784
    %v7786 = vsel %vm319, %v7775, %v7777
    %v7787 = vsel %vm319, %v7777, %v7779
    %v7788 = vsel %vm319, %v7781, %v7783
    %v7789 = vsel %vm319, %v7783, %v7785
    %v7794 = vadd.f32 %v7750, %v7786
    %v7795 = vadd.f32 %v7751, %v7787
    %v7796 = vadd.f32 %v7752, %v7788
    %v7797 = vadd.f32 %v7753, %v7789
    %s7798 = sld [smem:[#allocation9 + $0x26]]
    %v7799 = vstv %s7798
    %v7800 = vmul.f32 %v7799, %v6080
    %v7801 = vmul.f32 %v7799, %v6081
    %v7802 = vmul.f32 %v7799, %v6082
    %v7803 = vmul.f32 %v7799, %v6083
    %v7804 = vmul.f32 %v7799, %v6084
    %v7805 = vmul.f32 %v7799, %v6085
    %7812 = vrot.lane.b32.xlu0 %v7800, 126
    %v7813 = vpop.permute.xlu0 %7812
    %7814 = vrot.lane.b32.xlu0 %v7801, 126
    %v7815 = vpop.permute.xlu0 %7814
    %7816 = vrot.lane.b32.xlu0 %v7802, 126
    %v7817 = vpop.permute.xlu0 %7816
    %7818 = vrot.lane.b32.xlu0 %v7803, 126
    %v7819 = vpop.permute.xlu0 %7818
    %7820 = vrot.lane.b32.xlu0 %v7804, 126
    %v7821 = vpop.permute.xlu0 %7820
    %7822 = vrot.lane.b32.xlu0 %v7805, 126
    %v7823 = vpop.permute.xlu0 %7822
    %v7824 = vsel %vm490, %v7813, %v7815
    %v7825 = vsel %vm490, %v7815, %v7817
    %v7826 = vsel %vm490, %v7819, %v7821
    %v7827 = vsel %vm490, %v7821, %v7823
    %v7832 = vadd.f32 %v7794, %v7824
    %v7833 = vadd.f32 %v7795, %v7825
    %v7834 = vadd.f32 %v7796, %v7826
    %v7835 = vadd.f32 %v7797, %v7827
    %s7836 = sld [smem:[#allocation9 + $0x2f]]
    %v7837 = vstv %s7836
    %v7838 = vmul.f32 %v7837, %v6080
    %v7839 = vmul.f32 %v7837, %v6081
    %v7840 = vmul.f32 %v7837, %v6082
    %v7841 = vmul.f32 %v7837, %v6083
    %v7842 = vmul.f32 %v7837, %v6084
    %v7843 = vmul.f32 %v7837, %v6085
    %v7850 = vrot.slane %v7838, 1
    %v7851 = vrot.slane %v7839, 1
    %v7852 = vrot.slane %v7840, 1
    %v7853 = vrot.slane %v7841, 1
    %v7854 = vrot.slane %v7842, 1
    %v7855 = vrot.slane %v7843, 1
    %7856 = vrot.lane.b32.xlu0 %v7850, 126
    %v7857 = vpop.permute.xlu0 %7856
    %7858 = vrot.lane.b32.xlu0 %v7851, 126
    %v7859 = vpop.permute.xlu0 %7858
    %7860 = vrot.lane.b32.xlu0 %v7852, 126
    %v7861 = vpop.permute.xlu0 %7860
    %7862 = vrot.lane.b32.xlu0 %v7853, 126
    %v7863 = vpop.permute.xlu0 %7862
    %7864 = vrot.lane.b32.xlu0 %v7854, 126
    %v7865 = vpop.permute.xlu0 %7864
    %7866 = vrot.lane.b32.xlu0 %v7855, 126
    %v7867 = vpop.permute.xlu0 %7866
    %v7868 = vsel %vm490, %v7857, %v7859
    %v7869 = vsel %vm490, %v7859, %v7861
    %v7870 = vsel %vm490, %v7863, %v7865
    %v7871 = vsel %vm490, %v7865, %v7867
    %v7876 = vadd.f32 %v7832, %v7868
    %v7877 = vadd.f32 %v7833, %v7869
    %v7878 = vadd.f32 %v7834, %v7870
    %v7879 = vadd.f32 %v7835, %v7871
    %s7880 = sld [smem:[#allocation9 + $0x38]]
    %v7881 = vstv %s7880
    %v7882 = vmul.f32 %v7881, %v6080
    %v7883 = vmul.f32 %v7881, %v6081
    %v7884 = vmul.f32 %v7881, %v6082
    %v7885 = vmul.f32 %v7881, %v6083
    %v7886 = vmul.f32 %v7881, %v6084
    %v7887 = vmul.f32 %v7881, %v6085
    %v7894 = vrot.slane %v7882, 2
    %v7895 = vrot.slane %v7883, 2
    %v7896 = vrot.slane %v7884, 2
    %v7897 = vrot.slane %v7885, 2
    %v7898 = vrot.slane %v7886, 2
    %v7899 = vrot.slane %v7887, 2
    %7900 = vrot.lane.b32.xlu0 %v7894, 126
    %v7901 = vpop.permute.xlu0 %7900
    %7902 = vrot.lane.b32.xlu0 %v7895, 126
    %v7903 = vpop.permute.xlu0 %7902
    %7904 = vrot.lane.b32.xlu0 %v7896, 126
    %v7905 = vpop.permute.xlu0 %7904
    %7906 = vrot.lane.b32.xlu0 %v7897, 126
    %v7907 = vpop.permute.xlu0 %7906
    %7908 = vrot.lane.b32.xlu0 %v7898, 126
    %v7909 = vpop.permute.xlu0 %7908
    %7910 = vrot.lane.b32.xlu0 %v7899, 126
    %v7911 = vpop.permute.xlu0 %7910
    %v7912 = vsel %vm490, %v7901, %v7903
    %v7913 = vsel %vm490, %v7903, %v7905
    %v7914 = vsel %vm490, %v7907, %v7909
    %v7915 = vsel %vm490, %v7909, %v7911
    %v7920 = vadd.f32 %v7876, %v7912
    %v7921 = vadd.f32 %v7877, %v7913
    %v7922 = vadd.f32 %v7878, %v7914
    %v7923 = vadd.f32 %v7879, %v7915
    %s7924 = sld [smem:[#allocation9 + $0x41]]
    %v7925 = vstv %s7924
    %v7926 = vmul.f32 %v7925, %v6080
    %v7927 = vmul.f32 %v7925, %v6081
    %v7928 = vmul.f32 %v7925, %v6082
    %v7929 = vmul.f32 %v7925, %v6083
    %v7930 = vmul.f32 %v7925, %v6084
    %v7931 = vmul.f32 %v7925, %v6085
    %v7938 = vrot.slane %v7926, 3
    %v7939 = vrot.slane %v7927, 3
    %v7940 = vrot.slane %v7928, 3
    %v7941 = vrot.slane %v7929, 3
    %v7942 = vrot.slane %v7930, 3
    %v7943 = vrot.slane %v7931, 3
    %7944 = vrot.lane.b32.xlu0 %v7938, 126
    %v7945 = vpop.permute.xlu0 %7944
    %7946 = vrot.lane.b32.xlu0 %v7939, 126
    %v7947 = vpop.permute.xlu0 %7946
    %7948 = vrot.lane.b32.xlu0 %v7940, 126
    %v7949 = vpop.permute.xlu0 %7948
    %7950 = vrot.lane.b32.xlu0 %v7941, 126
    %v7951 = vpop.permute.xlu0 %7950
    %7952 = vrot.lane.b32.xlu0 %v7942, 126
    %v7953 = vpop.permute.xlu0 %7952
    %7954 = vrot.lane.b32.xlu0 %v7943, 126
    %v7955 = vpop.permute.xlu0 %7954
    %v7956 = vsel %vm490, %v7945, %v7947
    %v7957 = vsel %vm490, %v7947, %v7949
    %v7958 = vsel %vm490, %v7951, %v7953
    %v7959 = vsel %vm490, %v7953, %v7955
    %v7964 = vadd.f32 %v7920, %v7956
    %v7965 = vadd.f32 %v7921, %v7957
    %v7966 = vadd.f32 %v7922, %v7958
    %v7967 = vadd.f32 %v7923, %v7959
    %s7968 = sld [smem:[#allocation9 + $0x27]]
    %v7969 = vstv %s7968
    %v7970 = vmul.f32 %v7969, %v6086
    %v7971 = vmul.f32 %v7969, %v6087
    %v7972 = vmul.f32 %v7969, %v6088
    %v7973 = vmul.f32 %v7969, %v6089
    %v7974 = vmul.f32 %v7969, %v6090
    %v7975 = vmul.f32 %v7969, %v6091
    %7982 = vrot.lane.b32.xlu0 %v7970, 112
    %v7983 = vpop.permute.xlu0 %7982
    %7984 = vrot.lane.b32.xlu0 %v7971, 112
    %v7985 = vpop.permute.xlu0 %7984
    %7986 = vrot.lane.b32.xlu0 %v7972, 112
    %v7987 = vpop.permute.xlu0 %7986
    %7988 = vrot.lane.b32.xlu0 %v7973, 112
    %v7989 = vpop.permute.xlu0 %7988
    %7990 = vrot.lane.b32.xlu0 %v7974, 112
    %v7991 = vpop.permute.xlu0 %7990
    %7992 = vrot.lane.b32.xlu0 %v7975, 112
    %v7993 = vpop.permute.xlu0 %7992
    %v7994 = vsel %vm661, %v7983, %v7985
    %v7995 = vsel %vm661, %v7985, %v7987
    %v7996 = vsel %vm661, %v7989, %v7991
    %v7997 = vsel %vm661, %v7991, %v7993
    %v8002 = vadd.f32 %v7964, %v7994
    %v8003 = vadd.f32 %v7965, %v7995
    %v8004 = vadd.f32 %v7966, %v7996
    %v8005 = vadd.f32 %v7967, %v7997
    %s8006 = sld [smem:[#allocation9 + $0x30]]
    %v8007 = vstv %s8006
    %v8008 = vmul.f32 %v8007, %v6086
    %v8009 = vmul.f32 %v8007, %v6087
    %v8010 = vmul.f32 %v8007, %v6088
    %v8011 = vmul.f32 %v8007, %v6089
    %v8012 = vmul.f32 %v8007, %v6090
    %v8013 = vmul.f32 %v8007, %v6091
    %v8020 = vrot.slane %v8008, 1
    %v8021 = vrot.slane %v8009, 1
    %v8022 = vrot.slane %v8010, 1
    %v8023 = vrot.slane %v8011, 1
    %v8024 = vrot.slane %v8012, 1
    %v8025 = vrot.slane %v8013, 1
    %8026 = vrot.lane.b32.xlu0 %v8020, 112
    %v8027 = vpop.permute.xlu0 %8026
    %8028 = vrot.lane.b32.xlu0 %v8021, 112
    %v8029 = vpop.permute.xlu0 %8028
    %8030 = vrot.lane.b32.xlu0 %v8022, 112
    %v8031 = vpop.permute.xlu0 %8030
    %8032 = vrot.lane.b32.xlu0 %v8023, 112
    %v8033 = vpop.permute.xlu0 %8032
    %8034 = vrot.lane.b32.xlu0 %v8024, 112
    %v8035 = vpop.permute.xlu0 %8034
    %8036 = vrot.lane.b32.xlu0 %v8025, 112
    %v8037 = vpop.permute.xlu0 %8036
    %v8038 = vsel %vm661, %v8027, %v8029
    %v8039 = vsel %vm661, %v8029, %v8031
    %v8040 = vsel %vm661, %v8033, %v8035
    %v8041 = vsel %vm661, %v8035, %v8037
    %v8046 = vadd.f32 %v8002, %v8038
    %v8047 = vadd.f32 %v8003, %v8039
    %v8048 = vadd.f32 %v8004, %v8040
    %v8049 = vadd.f32 %v8005, %v8041
    %s8050 = sld [smem:[#allocation9 + $0x39]]
    %v8051 = vstv %s8050
    %v8052 = vmul.f32 %v8051, %v6086
    %v8053 = vmul.f32 %v8051, %v6087
    %v8054 = vmul.f32 %v8051, %v6088
    %v8055 = vmul.f32 %v8051, %v6089
    %v8056 = vmul.f32 %v8051, %v6090
    %v8057 = vmul.f32 %v8051, %v6091
    %v8064 = vrot.slane %v8052, 2
    %v8065 = vrot.slane %v8053, 2
    %v8066 = vrot.slane %v8054, 2
    %v8067 = vrot.slane %v8055, 2
    %v8068 = vrot.slane %v8056, 2
    %v8069 = vrot.slane %v8057, 2
    %8070 = vrot.lane.b32.xlu0 %v8064, 112
    %v8071 = vpop.permute.xlu0 %8070
    %8072 = vrot.lane.b32.xlu0 %v8065, 112
    %v8073 = vpop.permute.xlu0 %8072
    %8074 = vrot.lane.b32.xlu0 %v8066, 112
    %v8075 = vpop.permute.xlu0 %8074
    %8076 = vrot.lane.b32.xlu0 %v8067, 112
    %v8077 = vpop.permute.xlu0 %8076
    %8078 = vrot.lane.b32.xlu0 %v8068, 112
    %v8079 = vpop.permute.xlu0 %8078
    %8080 = vrot.lane.b32.xlu0 %v8069, 112
    %v8081 = vpop.permute.xlu0 %8080
    %v8082 = vsel %vm661, %v8071, %v8073
    %v8083 = vsel %vm661, %v8073, %v8075
    %v8084 = vsel %vm661, %v8077, %v8079
    %v8085 = vsel %vm661, %v8079, %v8081
    %v8090 = vadd.f32 %v8046, %v8082
    %v8091 = vadd.f32 %v8047, %v8083
    %v8092 = vadd.f32 %v8048, %v8084
    %v8093 = vadd.f32 %v8049, %v8085
    %s8094 = sld [smem:[#allocation9 + $0x42]]
    %v8095 = vstv %s8094
    %v8096 = vmul.f32 %v8095, %v6086
    %v8097 = vmul.f32 %v8095, %v6087
    %v8098 = vmul.f32 %v8095, %v6088
    %v8099 = vmul.f32 %v8095, %v6089
    %v8100 = vmul.f32 %v8095, %v6090
    %v8101 = vmul.f32 %v8095, %v6091
    %v8108 = vrot.slane %v8096, 3
    %v8109 = vrot.slane %v8097, 3
    %v8110 = vrot.slane %v8098, 3
    %v8111 = vrot.slane %v8099, 3
    %v8112 = vrot.slane %v8100, 3
    %v8113 = vrot.slane %v8101, 3
    %8114 = vrot.lane.b32.xlu0 %v8108, 112
    %v8115 = vpop.permute.xlu0 %8114
    %8116 = vrot.lane.b32.xlu0 %v8109, 112
    %v8117 = vpop.permute.xlu0 %8116
    %8118 = vrot.lane.b32.xlu0 %v8110, 112
    %v8119 = vpop.permute.xlu0 %8118
    %8120 = vrot.lane.b32.xlu0 %v8111, 112
    %v8121 = vpop.permute.xlu0 %8120
    %8122 = vrot.lane.b32.xlu0 %v8112, 112
    %v8123 = vpop.permute.xlu0 %8122
    %8124 = vrot.lane.b32.xlu0 %v8113, 112
    %v8125 = vpop.permute.xlu0 %8124
    %v8126 = vsel %vm661, %v8115, %v8117
    %v8127 = vsel %vm661, %v8117, %v8119
    %v8128 = vsel %vm661, %v8121, %v8123
    %v8129 = vsel %vm661, %v8123, %v8125
    %v8134 = vadd.f32 %v8090, %v8126
    %v8135 = vadd.f32 %v8091, %v8127
    %v8136 = vadd.f32 %v8092, %v8128
    %v8137 = vadd.f32 %v8093, %v8129
    %s8138 = sld [smem:[#allocation9 + $0x28]]
    %v8139 = vstv %s8138
    %v8140 = vmul.f32 %v8139, %v6072
    %v8141 = vmul.f32 %v8139, %v6064
    %v8142 = vmul.f32 %v8139, %v6074
    %v8143 = vmul.f32 %v8139, %v6073
    %v8144 = vmul.f32 %v8139, %v6065
    %v8145 = vmul.f32 %v8139, %v6075
    %8152 = vrot.lane.b32.xlu0 %v8140, 111
    %v8153 = vpop.permute.xlu0 %8152
    %8154 = vrot.lane.b32.xlu0 %v8141, 111
    %v8155 = vpop.permute.xlu0 %8154
    %8156 = vrot.lane.b32.xlu0 %v8142, 111
    %v8157 = vpop.permute.xlu0 %8156
    %8158 = vrot.lane.b32.xlu0 %v8143, 111
    %v8159 = vpop.permute.xlu0 %8158
    %8160 = vrot.lane.b32.xlu0 %v8144, 111
    %v8161 = vpop.permute.xlu0 %8160
    %8162 = vrot.lane.b32.xlu0 %v8145, 111
    %v8163 = vpop.permute.xlu0 %8162
    %v8164 = vsel %vm832, %v8153, %v8155
    %v8165 = vsel %vm832, %v8155, %v8157
    %v8166 = vsel %vm832, %v8159, %v8161
    %v8167 = vsel %vm832, %v8161, %v8163
    %v8172 = vadd.f32 %v8134, %v8164
    %v8173 = vadd.f32 %v8135, %v8165
    %v8174 = vadd.f32 %v8136, %v8166
    %v8175 = vadd.f32 %v8137, %v8167
    %s8176 = sld [smem:[#allocation9 + $0x31]]
    %v8177 = vstv %s8176
    %v8178 = vmul.f32 %v8177, %v6072
    %v8179 = vmul.f32 %v8177, %v6064
    %v8180 = vmul.f32 %v8177, %v6074
    %v8181 = vmul.f32 %v8177, %v6073
    %v8182 = vmul.f32 %v8177, %v6065
    %v8183 = vmul.f32 %v8177, %v6075
    %v8190 = vrot.slane %v8178, 1
    %v8191 = vrot.slane %v8179, 1
    %v8192 = vrot.slane %v8180, 1
    %v8193 = vrot.slane %v8181, 1
    %v8194 = vrot.slane %v8182, 1
    %v8195 = vrot.slane %v8183, 1
    %8196 = vrot.lane.b32.xlu0 %v8190, 111
    %v8197 = vpop.permute.xlu0 %8196
    %8198 = vrot.lane.b32.xlu0 %v8191, 111
    %v8199 = vpop.permute.xlu0 %8198
    %8200 = vrot.lane.b32.xlu0 %v8192, 111
    %v8201 = vpop.permute.xlu0 %8200
    %8202 = vrot.lane.b32.xlu0 %v8193, 111
    %v8203 = vpop.permute.xlu0 %8202
    %8204 = vrot.lane.b32.xlu0 %v8194, 111
    %v8205 = vpop.permute.xlu0 %8204
    %8206 = vrot.lane.b32.xlu0 %v8195, 111
    %v8207 = vpop.permute.xlu0 %8206
    %v8208 = vsel %vm832, %v8197, %v8199
    %v8209 = vsel %vm832, %v8199, %v8201
    %v8210 = vsel %vm832, %v8203, %v8205
    %v8211 = vsel %vm832, %v8205, %v8207
    %v8216 = vadd.f32 %v8172, %v8208
    %v8217 = vadd.f32 %v8173, %v8209
    %v8218 = vadd.f32 %v8174, %v8210
    %v8219 = vadd.f32 %v8175, %v8211
    %s8220 = sld [smem:[#allocation9 + $0x3a]]
    %v8221 = vstv %s8220
    %v8222 = vmul.f32 %v8221, %v6072
    %v8223 = vmul.f32 %v8221, %v6064
    %v8224 = vmul.f32 %v8221, %v6074
    %v8225 = vmul.f32 %v8221, %v6073
    %v8226 = vmul.f32 %v8221, %v6065
    %v8227 = vmul.f32 %v8221, %v6075
    %v8234 = vrot.slane %v8222, 2
    %v8235 = vrot.slane %v8223, 2
    %v8236 = vrot.slane %v8224, 2
    %v8237 = vrot.slane %v8225, 2
    %v8238 = vrot.slane %v8226, 2
    %v8239 = vrot.slane %v8227, 2
    %8240 = vrot.lane.b32.xlu0 %v8234, 111
    %v8241 = vpop.permute.xlu0 %8240
    %8242 = vrot.lane.b32.xlu0 %v8235, 111
    %v8243 = vpop.permute.xlu0 %8242
    %8244 = vrot.lane.b32.xlu0 %v8236, 111
    %v8245 = vpop.permute.xlu0 %8244
    %8246 = vrot.lane.b32.xlu0 %v8237, 111
    %v8247 = vpop.permute.xlu0 %8246
    %8248 = vrot.lane.b32.xlu0 %v8238, 111
    %v8249 = vpop.permute.xlu0 %8248
    %8250 = vrot.lane.b32.xlu0 %v8239, 111
    %v8251 = vpop.permute.xlu0 %8250
    %v8252 = vsel %vm832, %v8241, %v8243
    %v8253 = vsel %vm832, %v8243, %v8245
    %v8254 = vsel %vm832, %v8247, %v8249
    %v8255 = vsel %vm832, %v8249, %v8251
    %v8260 = vadd.f32 %v8216, %v8252
    %v8261 = vadd.f32 %v8217, %v8253
    %v8262 = vadd.f32 %v8218, %v8254
    %v8263 = vadd.f32 %v8219, %v8255
    %s8264 = sld [smem:[#allocation9 + $0x43]]
    %v8265 = vstv %s8264
    %v8266 = vmul.f32 %v8265, %v6072
    %v8267 = vmul.f32 %v8265, %v6064
    %v8268 = vmul.f32 %v8265, %v6074
    %v8269 = vmul.f32 %v8265, %v6073
    %v8270 = vmul.f32 %v8265, %v6065
    %v8271 = vmul.f32 %v8265, %v6075
    %v8278 = vrot.slane %v8266, 3
    %v8279 = vrot.slane %v8267, 3
    %v8280 = vrot.slane %v8268, 3
    %v8281 = vrot.slane %v8269, 3
    %v8282 = vrot.slane %v8270, 3
    %v8283 = vrot.slane %v8271, 3
    %8284 = vrot.lane.b32.xlu0 %v8278, 111
    %v8285 = vpop.permute.xlu0 %8284
    %8286 = vrot.lane.b32.xlu0 %v8279, 111
    %v8287 = vpop.permute.xlu0 %8286
    %8288 = vrot.lane.b32.xlu0 %v8280, 111
    %v8289 = vpop.permute.xlu0 %8288
    %8290 = vrot.lane.b32.xlu0 %v8281, 111
    %v8291 = vpop.permute.xlu0 %8290
    %8292 = vrot.lane.b32.xlu0 %v8282, 111
    %v8293 = vpop.permute.xlu0 %8292
    %8294 = vrot.lane.b32.xlu0 %v8283, 111
    %v8295 = vpop.permute.xlu0 %8294
    %v8296 = vsel %vm832, %v8285, %v8287
    %v8297 = vsel %vm832, %v8287, %v8289
    %v8298 = vsel %vm832, %v8291, %v8293
    %v8299 = vsel %vm832, %v8293, %v8295
    %v8304 = vadd.f32 %v8260, %v8296
    %v8305 = vadd.f32 %v8261, %v8297
    %v8306 = vadd.f32 %v8262, %v8298
    %v8307 = vadd.f32 %v8263, %v8299
    %s8308 = sld [smem:[#allocation9 + $0x29]]
    %v8309 = vstv %s8308
    %v8310 = vmul.f32 %v8309, %v6092
    %v8311 = vmul.f32 %v8309, %v6093
    %v8312 = vmul.f32 %v8309, %v6094
    %v8313 = vmul.f32 %v8309, %v6095
    %v8314 = vmul.f32 %v8309, %v6096
    %v8315 = vmul.f32 %v8309, %v6097
    %8322 = vrot.lane.b32.xlu0 %v8310, 110
    %v8323 = vpop.permute.xlu0 %8322
    %8324 = vrot.lane.b32.xlu0 %v8311, 110
    %v8325 = vpop.permute.xlu0 %8324
    %8326 = vrot.lane.b32.xlu0 %v8312, 110
    %v8327 = vpop.permute.xlu0 %8326
    %8328 = vrot.lane.b32.xlu0 %v8313, 110
    %v8329 = vpop.permute.xlu0 %8328
    %8330 = vrot.lane.b32.xlu0 %v8314, 110
    %v8331 = vpop.permute.xlu0 %8330
    %8332 = vrot.lane.b32.xlu0 %v8315, 110
    %v8333 = vpop.permute.xlu0 %8332
    %v8334 = vsel %vm1003, %v8323, %v8325
    %v8335 = vsel %vm1003, %v8325, %v8327
    %v8336 = vsel %vm1003, %v8329, %v8331
    %v8337 = vsel %vm1003, %v8331, %v8333
    %v8342 = vadd.f32 %v8304, %v8334
    %v8343 = vadd.f32 %v8305, %v8335
    %v8344 = vadd.f32 %v8306, %v8336
    %v8345 = vadd.f32 %v8307, %v8337
    %s8346 = sld [smem:[#allocation9 + $0x32]]
    %v8347 = vstv %s8346
    %v8348 = vmul.f32 %v8347, %v6092
    %v8349 = vmul.f32 %v8347, %v6093
    %v8350 = vmul.f32 %v8347, %v6094
    %v8351 = vmul.f32 %v8347, %v6095
    %v8352 = vmul.f32 %v8347, %v6096
    %v8353 = vmul.f32 %v8347, %v6097
    %v8360 = vrot.slane %v8348, 1
    %v8361 = vrot.slane %v8349, 1
    %v8362 = vrot.slane %v8350, 1
    %v8363 = vrot.slane %v8351, 1
    %v8364 = vrot.slane %v8352, 1
    %v8365 = vrot.slane %v8353, 1
    %8366 = vrot.lane.b32.xlu0 %v8360, 110
    %v8367 = vpop.permute.xlu0 %8366
    %8368 = vrot.lane.b32.xlu0 %v8361, 110
    %v8369 = vpop.permute.xlu0 %8368
    %8370 = vrot.lane.b32.xlu0 %v8362, 110
    %v8371 = vpop.permute.xlu0 %8370
    %8372 = vrot.lane.b32.xlu0 %v8363, 110
    %v8373 = vpop.permute.xlu0 %8372
    %8374 = vrot.lane.b32.xlu0 %v8364, 110
    %v8375 = vpop.permute.xlu0 %8374
    %8376 = vrot.lane.b32.xlu0 %v8365, 110
    %v8377 = vpop.permute.xlu0 %8376
    %v8378 = vsel %vm1003, %v8367, %v8369
    %v8379 = vsel %vm1003, %v8369, %v8371
    %v8380 = vsel %vm1003, %v8373, %v8375
    %v8381 = vsel %vm1003, %v8375, %v8377
    %v8386 = vadd.f32 %v8342, %v8378
    %v8387 = vadd.f32 %v8343, %v8379
    %v8388 = vadd.f32 %v8344, %v8380
    %v8389 = vadd.f32 %v8345, %v8381
    %s8390 = sld [smem:[#allocation9 + $0x3b]]
    %v8391 = vstv %s8390
    %v8392 = vmul.f32 %v8391, %v6092
    %v8393 = vmul.f32 %v8391, %v6093
    %v8394 = vmul.f32 %v8391, %v6094
    %v8395 = vmul.f32 %v8391, %v6095
    %v8396 = vmul.f32 %v8391, %v6096
    %v8397 = vmul.f32 %v8391, %v6097
    %v8404 = vrot.slane %v8392, 2
    %v8405 = vrot.slane %v8393, 2
    %v8406 = vrot.slane %v8394, 2
    %v8407 = vrot.slane %v8395, 2
    %v8408 = vrot.slane %v8396, 2
    %v8409 = vrot.slane %v8397, 2
    %8410 = vrot.lane.b32.xlu0 %v8404, 110
    %v8411 = vpop.permute.xlu0 %8410
    %8412 = vrot.lane.b32.xlu0 %v8405, 110
    %v8413 = vpop.permute.xlu0 %8412
    %8414 = vrot.lane.b32.xlu0 %v8406, 110
    %v8415 = vpop.permute.xlu0 %8414
    %8416 = vrot.lane.b32.xlu0 %v8407, 110
    %v8417 = vpop.permute.xlu0 %8416
    %8418 = vrot.lane.b32.xlu0 %v8408, 110
    %v8419 = vpop.permute.xlu0 %8418
    %8420 = vrot.lane.b32.xlu0 %v8409, 110
    %v8421 = vpop.permute.xlu0 %8420
    %v8422 = vsel %vm1003, %v8411, %v8413
    %v8423 = vsel %vm1003, %v8413, %v8415
    %v8424 = vsel %vm1003, %v8417, %v8419
    %v8425 = vsel %vm1003, %v8419, %v8421
    %v8430 = vadd.f32 %v8386, %v8422
    %v8431 = vadd.f32 %v8387, %v8423
    %v8432 = vadd.f32 %v8388, %v8424
    %v8433 = vadd.f32 %v8389, %v8425
    %s8434 = sld [smem:[#allocation9 + $0x44]]
    %v8435 = vstv %s8434
    %v8436 = vmul.f32 %v8435, %v6092
    %v8437 = vmul.f32 %v8435, %v6093
    %v8438 = vmul.f32 %v8435, %v6094
    %v8439 = vmul.f32 %v8435, %v6095
    %v8440 = vmul.f32 %v8435, %v6096
    %v8441 = vmul.f32 %v8435, %v6097
    %v8448 = vrot.slane %v8436, 3
    %v8449 = vrot.slane %v8437, 3
    %v8450 = vrot.slane %v8438, 3
    %v8451 = vrot.slane %v8439, 3
    %v8452 = vrot.slane %v8440, 3
    %v8453 = vrot.slane %v8441, 3
    %8454 = vrot.lane.b32.xlu0 %v8448, 110
    %v8455 = vpop.permute.xlu0 %8454
    %8456 = vrot.lane.b32.xlu0 %v8449, 110
    %v8457 = vpop.permute.xlu0 %8456
    %8458 = vrot.lane.b32.xlu0 %v8450, 110
    %v8459 = vpop.permute.xlu0 %8458
    %8460 = vrot.lane.b32.xlu0 %v8451, 110
    %v8461 = vpop.permute.xlu0 %8460
    %8462 = vrot.lane.b32.xlu0 %v8452, 110
    %v8463 = vpop.permute.xlu0 %8462
    %8464 = vrot.lane.b32.xlu0 %v8453, 110
    %v8465 = vpop.permute.xlu0 %8464
    %v8466 = vsel %vm1003, %v8455, %v8457
    %v8467 = vsel %vm1003, %v8457, %v8459
    %v8468 = vsel %vm1003, %v8461, %v8463
    %v8469 = vsel %vm1003, %v8463, %v8465
    %v8474 = vadd.f32 %v8430, %v8466
    %v8475 = vadd.f32 %v8431, %v8467
    %v8476 = vadd.f32 %v8432, %v8468
    %v8477 = vadd.f32 %v8433, %v8469
    %s8478 = sld [smem:[#allocation9 + $0x2a]]
    %v8479 = vstv %s8478
    %v8480 = vmul.f32 %v8479, %v6098
    %v8481 = vmul.f32 %v8479, %v6099
    %v8482 = vmul.f32 %v8479, %v6100
    %v8483 = vmul.f32 %v8479, %v6101
    %v8484 = vmul.f32 %v8479, %v6102
    %v8485 = vmul.f32 %v8479, %v6103
    %8492 = vrot.lane.b32.xlu0 %v8480, 96
    %v8493 = vpop.permute.xlu0 %8492
    %8494 = vrot.lane.b32.xlu0 %v8481, 96
    %v8495 = vpop.permute.xlu0 %8494
    %8496 = vrot.lane.b32.xlu0 %v8482, 96
    %v8497 = vpop.permute.xlu0 %8496
    %8498 = vrot.lane.b32.xlu0 %v8483, 96
    %v8499 = vpop.permute.xlu0 %8498
    %8500 = vrot.lane.b32.xlu0 %v8484, 96
    %v8501 = vpop.permute.xlu0 %8500
    %8502 = vrot.lane.b32.xlu0 %v8485, 96
    %v8503 = vpop.permute.xlu0 %8502
    %v8504 = vsel %vm1174, %v8493, %v8495
    %v8505 = vsel %vm1174, %v8495, %v8497
    %v8506 = vsel %vm1174, %v8499, %v8501
    %v8507 = vsel %vm1174, %v8501, %v8503
    %v8512 = vadd.f32 %v8474, %v8504
    %v8513 = vadd.f32 %v8475, %v8505
    %v8514 = vadd.f32 %v8476, %v8506
    %v8515 = vadd.f32 %v8477, %v8507
    %s8516 = sld [smem:[#allocation9 + $0x33]]
    %v8517 = vstv %s8516
    %v8518 = vmul.f32 %v8517, %v6098
    %v8519 = vmul.f32 %v8517, %v6099
    %v8520 = vmul.f32 %v8517, %v6100
    %v8521 = vmul.f32 %v8517, %v6101
    %v8522 = vmul.f32 %v8517, %v6102
    %v8523 = vmul.f32 %v8517, %v6103
    %v8530 = vrot.slane %v8518, 1
    %v8531 = vrot.slane %v8519, 1
    %v8532 = vrot.slane %v8520, 1
    %v8533 = vrot.slane %v8521, 1
    %v8534 = vrot.slane %v8522, 1
    %v8535 = vrot.slane %v8523, 1
    %8536 = vrot.lane.b32.xlu0 %v8530, 96
    %v8537 = vpop.permute.xlu0 %8536
    %8538 = vrot.lane.b32.xlu0 %v8531, 96
    %v8539 = vpop.permute.xlu0 %8538
    %8540 = vrot.lane.b32.xlu0 %v8532, 96
    %v8541 = vpop.permute.xlu0 %8540
    %8542 = vrot.lane.b32.xlu0 %v8533, 96
    %v8543 = vpop.permute.xlu0 %8542
    %8544 = vrot.lane.b32.xlu0 %v8534, 96
    %v8545 = vpop.permute.xlu0 %8544
    %8546 = vrot.lane.b32.xlu0 %v8535, 96
    %v8547 = vpop.permute.xlu0 %8546
    %v8548 = vsel %vm1174, %v8537, %v8539
    %v8549 = vsel %vm1174, %v8539, %v8541
    %v8550 = vsel %vm1174, %v8543, %v8545
    %v8551 = vsel %vm1174, %v8545, %v8547
    %v8556 = vadd.f32 %v8512, %v8548
    %v8557 = vadd.f32 %v8513, %v8549
    %v8558 = vadd.f32 %v8514, %v8550
    %v8559 = vadd.f32 %v8515, %v8551
    %s8560 = sld [smem:[#allocation9 + $0x3c]]
    %v8561 = vstv %s8560
    %v8562 = vmul.f32 %v8561, %v6098
    %v8563 = vmul.f32 %v8561, %v6099
    %v8564 = vmul.f32 %v8561, %v6100
    %v8565 = vmul.f32 %v8561, %v6101
    %v8566 = vmul.f32 %v8561, %v6102
    %v8567 = vmul.f32 %v8561, %v6103
    %v8574 = vrot.slane %v8562, 2
    %v8575 = vrot.slane %v8563, 2
    %v8576 = vrot.slane %v8564, 2
    %v8577 = vrot.slane %v8565, 2
    %v8578 = vrot.slane %v8566, 2
    %v8579 = vrot.slane %v8567, 2
    %8580 = vrot.lane.b32.xlu0 %v8574, 96
    %v8581 = vpop.permute.xlu0 %8580
    %8582 = vrot.lane.b32.xlu0 %v8575, 96
    %v8583 = vpop.permute.xlu0 %8582
    %8584 = vrot.lane.b32.xlu0 %v8576, 96
    %v8585 = vpop.permute.xlu0 %8584
    %8586 = vrot.lane.b32.xlu0 %v8577, 96
    %v8587 = vpop.permute.xlu0 %8586
    %8588 = vrot.lane.b32.xlu0 %v8578, 96
    %v8589 = vpop.permute.xlu0 %8588
    %8590 = vrot.lane.b32.xlu0 %v8579, 96
    %v8591 = vpop.permute.xlu0 %8590
    %v8592 = vsel %vm1174, %v8581, %v8583
    %v8593 = vsel %vm1174, %v8583, %v8585
    %v8594 = vsel %vm1174, %v8587, %v8589
    %v8595 = vsel %vm1174, %v8589, %v8591
    %v8600 = vadd.f32 %v8556, %v8592
    %v8601 = vadd.f32 %v8557, %v8593
    %v8602 = vadd.f32 %v8558, %v8594
    %v8603 = vadd.f32 %v8559, %v8595
    %s8604 = sld [smem:[#allocation9 + $0x45]]
    %v8605 = vstv %s8604
    %v8606 = vmul.f32 %v8605, %v6098
    %v8607 = vmul.f32 %v8605, %v6099
    %v8608 = vmul.f32 %v8605, %v6100
    %v8609 = vmul.f32 %v8605, %v6101
    %v8610 = vmul.f32 %v8605, %v6102
    %v8611 = vmul.f32 %v8605, %v6103
    %v8618 = vrot.slane %v8606, 3
    %v8619 = vrot.slane %v8607, 3
    %v8620 = vrot.slane %v8608, 3
    %v8621 = vrot.slane %v8609, 3
    %v8622 = vrot.slane %v8610, 3
    %v8623 = vrot.slane %v8611, 3
    %8624 = vrot.lane.b32.xlu0 %v8618, 96
    %v8625 = vpop.permute.xlu0 %8624
    %8626 = vrot.lane.b32.xlu0 %v8619, 96
    %v8627 = vpop.permute.xlu0 %8626
    %8628 = vrot.lane.b32.xlu0 %v8620, 96
    %v8629 = vpop.permute.xlu0 %8628
    %8630 = vrot.lane.b32.xlu0 %v8621, 96
    %v8631 = vpop.permute.xlu0 %8630
    %8632 = vrot.lane.b32.xlu0 %v8622, 96
    %v8633 = vpop.permute.xlu0 %8632
    %8634 = vrot.lane.b32.xlu0 %v8623, 96
    %v8635 = vpop.permute.xlu0 %8634
    %v8636 = vsel %vm1174, %v8625, %v8627
    %v8637 = vsel %vm1174, %v8627, %v8629
    %v8638 = vsel %vm1174, %v8631, %v8633
    %v8639 = vsel %vm1174, %v8633, %v8635
    %v8644 = vadd.f32 %v8600, %v8636
    %v8645 = vadd.f32 %v8601, %v8637
    %v8646 = vadd.f32 %v8602, %v8638
    %v8647 = vadd.f32 %v8603, %v8639
    %s8648 = sld [smem:[#allocation9 + $0x2b]]
    %v8649 = vstv %s8648
    %v8650 = vmul.f32 %v8649, %v6072
    %v8651 = vmul.f32 %v8649, %v6064
    %v8652 = vmul.f32 %v8649, %v6074
    %v8653 = vmul.f32 %v8649, %v6073
    %v8654 = vmul.f32 %v8649, %v6065
    %v8655 = vmul.f32 %v8649, %v6075
    %8662 = vrot.lane.b32.xlu0 %v8650, 95
    %v8663 = vpop.permute.xlu0 %8662
    %8664 = vrot.lane.b32.xlu0 %v8651, 95
    %v8665 = vpop.permute.xlu0 %8664
    %8666 = vrot.lane.b32.xlu0 %v8652, 95
    %v8667 = vpop.permute.xlu0 %8666
    %8668 = vrot.lane.b32.xlu0 %v8653, 95
    %v8669 = vpop.permute.xlu0 %8668
    %8670 = vrot.lane.b32.xlu0 %v8654, 95
    %v8671 = vpop.permute.xlu0 %8670
    %8672 = vrot.lane.b32.xlu0 %v8655, 95
    %v8673 = vpop.permute.xlu0 %8672
    %v8674 = vsel %vm1345, %v8663, %v8665
    %v8675 = vsel %vm1345, %v8665, %v8667
    %v8676 = vsel %vm1345, %v8669, %v8671
    %v8677 = vsel %vm1345, %v8671, %v8673
    %v8682 = vadd.f32 %v8644, %v8674
    %v8683 = vadd.f32 %v8645, %v8675
    %v8684 = vadd.f32 %v8646, %v8676
    %v8685 = vadd.f32 %v8647, %v8677
    %s8686 = sld [smem:[#allocation9 + $0x34]]
    %v8687 = vstv %s8686
    %v8688 = vmul.f32 %v8687, %v6072
    %v8689 = vmul.f32 %v8687, %v6064
    %v8690 = vmul.f32 %v8687, %v6074
    %v8691 = vmul.f32 %v8687, %v6073
    %v8692 = vmul.f32 %v8687, %v6065
    %v8693 = vmul.f32 %v8687, %v6075
    %v8700 = vrot.slane %v8688, 1
    %v8701 = vrot.slane %v8689, 1
    %v8702 = vrot.slane %v8690, 1
    %v8703 = vrot.slane %v8691, 1
    %v8704 = vrot.slane %v8692, 1
    %v8705 = vrot.slane %v8693, 1
    %8706 = vrot.lane.b32.xlu0 %v8700, 95
    %v8707 = vpop.permute.xlu0 %8706
    %8708 = vrot.lane.b32.xlu0 %v8701, 95
    %v8709 = vpop.permute.xlu0 %8708
    %8710 = vrot.lane.b32.xlu0 %v8702, 95
    %v8711 = vpop.permute.xlu0 %8710
    %8712 = vrot.lane.b32.xlu0 %v8703, 95
    %v8713 = vpop.permute.xlu0 %8712
    %8714 = vrot.lane.b32.xlu0 %v8704, 95
    %v8715 = vpop.permute.xlu0 %8714
    %8716 = vrot.lane.b32.xlu0 %v8705, 95
    %v8717 = vpop.permute.xlu0 %8716
    %v8718 = vsel %vm1345, %v8707, %v8709
    %v8719 = vsel %vm1345, %v8709, %v8711
    %v8720 = vsel %vm1345, %v8713, %v8715
    %v8721 = vsel %vm1345, %v8715, %v8717
    %v8726 = vadd.f32 %v8682, %v8718
    %v8727 = vadd.f32 %v8683, %v8719
    %v8728 = vadd.f32 %v8684, %v8720
    %v8729 = vadd.f32 %v8685, %v8721
    %s8730 = sld [smem:[#allocation9 + $0x3d]]
    %v8731 = vstv %s8730
    %v8732 = vmul.f32 %v8731, %v6072
    %v8733 = vmul.f32 %v8731, %v6064
    %v8734 = vmul.f32 %v8731, %v6074
    %v8735 = vmul.f32 %v8731, %v6073
    %v8736 = vmul.f32 %v8731, %v6065
    %v8737 = vmul.f32 %v8731, %v6075
    %v8744 = vrot.slane %v8732, 2
    %v8745 = vrot.slane %v8733, 2
    %v8746 = vrot.slane %v8734, 2
    %v8747 = vrot.slane %v8735, 2
    %v8748 = vrot.slane %v8736, 2
    %v8749 = vrot.slane %v8737, 2
    %8750 = vrot.lane.b32.xlu0 %v8744, 95
    %v8751 = vpop.permute.xlu0 %8750
    %8752 = vrot.lane.b32.xlu0 %v8745, 95
    %v8753 = vpop.permute.xlu0 %8752
    %8754 = vrot.lane.b32.xlu0 %v8746, 95
    %v8755 = vpop.permute.xlu0 %8754
    %8756 = vrot.lane.b32.xlu0 %v8747, 95
    %v8757 = vpop.permute.xlu0 %8756
    %8758 = vrot.lane.b32.xlu0 %v8748, 95
    %v8759 = vpop.permute.xlu0 %8758
    %8760 = vrot.lane.b32.xlu0 %v8749, 95
    %v8761 = vpop.permute.xlu0 %8760
    %v8762 = vsel %vm1345, %v8751, %v8753
    %v8763 = vsel %vm1345, %v8753, %v8755
    %v8764 = vsel %vm1345, %v8757, %v8759
    %v8765 = vsel %vm1345, %v8759, %v8761
    %v8770 = vadd.f32 %v8726, %v8762
    %v8771 = vadd.f32 %v8727, %v8763
    %v8772 = vadd.f32 %v8728, %v8764
    %v8773 = vadd.f32 %v8729, %v8765
    %s8774 = sld [smem:[#allocation9 + $0x46]]
    %v8775 = vstv %s8774
    %v8776 = vmul.f32 %v8775, %v6072
    %v8777 = vmul.f32 %v8775, %v6064
    %v8778 = vmul.f32 %v8775, %v6074
    %v8779 = vmul.f32 %v8775, %v6073
    %v8780 = vmul.f32 %v8775, %v6065
    %v8781 = vmul.f32 %v8775, %v6075
    %v8788 = vrot.slane %v8776, 3
    %v8789 = vrot.slane %v8777, 3
    %v8790 = vrot.slane %v8778, 3
    %v8791 = vrot.slane %v8779, 3
    %v8792 = vrot.slane %v8780, 3
    %v8793 = vrot.slane %v8781, 3
    %8794 = vrot.lane.b32.xlu0 %v8788, 95
    %v8795 = vpop.permute.xlu0 %8794
    %8796 = vrot.lane.b32.xlu0 %v8789, 95
    %v8797 = vpop.permute.xlu0 %8796
    %8798 = vrot.lane.b32.xlu0 %v8790, 95
    %v8799 = vpop.permute.xlu0 %8798
    %8800 = vrot.lane.b32.xlu0 %v8791, 95
    %v8801 = vpop.permute.xlu0 %8800
    %8802 = vrot.lane.b32.xlu0 %v8792, 95
    %v8803 = vpop.permute.xlu0 %8802
    %8804 = vrot.lane.b32.xlu0 %v8793, 95
    %v8805 = vpop.permute.xlu0 %8804
    %v8806 = vsel %vm1345, %v8795, %v8797
    %v8807 = vsel %vm1345, %v8797, %v8799
    %v8808 = vsel %vm1345, %v8801, %v8803
    %v8809 = vsel %vm1345, %v8803, %v8805
    %v8814 = vadd.f32 %v8770, %v8806
    %v8815 = vadd.f32 %v8771, %v8807
    %v8816 = vadd.f32 %v8772, %v8808
    %v8817 = vadd.f32 %v8773, %v8809
    %s8818 = sld [smem:[#allocation9 + $0x2c]]
    %v8819 = vstv %s8818
    %v8820 = vmul.f32 %v8819, %v6104
    %v8821 = vmul.f32 %v8819, %v6105
    %v8822 = vmul.f32 %v8819, %v6106
    %v8823 = vmul.f32 %v8819, %v6107
    %v8824 = vmul.f32 %v8819, %v6108
    %v8825 = vmul.f32 %v8819, %v6109
    %8832 = vrot.lane.b32.xlu0 %v8820, 94
    %v8833 = vpop.permute.xlu0 %8832
    %8834 = vrot.lane.b32.xlu0 %v8821, 94
    %v8835 = vpop.permute.xlu0 %8834
    %8836 = vrot.lane.b32.xlu0 %v8822, 94
    %v8837 = vpop.permute.xlu0 %8836
    %8838 = vrot.lane.b32.xlu0 %v8823, 94
    %v8839 = vpop.permute.xlu0 %8838
    %8840 = vrot.lane.b32.xlu0 %v8824, 94
    %v8841 = vpop.permute.xlu0 %8840
    %8842 = vrot.lane.b32.xlu0 %v8825, 94
    %v8843 = vpop.permute.xlu0 %8842
    %v8844 = vsel %vm1516, %v8833, %v8835
    %v8845 = vsel %vm1516, %v8835, %v8837
    %v8846 = vsel %vm1516, %v8839, %v8841
    %v8847 = vsel %vm1516, %v8841, %v8843
    %v8852 = vadd.f32 %v8814, %v8844
    %v8853 = vadd.f32 %v8815, %v8845
    %v8854 = vadd.f32 %v8816, %v8846
    %v8855 = vadd.f32 %v8817, %v8847
    %s8856 = sld [smem:[#allocation9 + $0x35]]
    %v8857 = vstv %s8856
    %v8858 = vmul.f32 %v8857, %v6104
    %v8859 = vmul.f32 %v8857, %v6105
    %v8860 = vmul.f32 %v8857, %v6106
    %v8861 = vmul.f32 %v8857, %v6107
    %v8862 = vmul.f32 %v8857, %v6108
    %v8863 = vmul.f32 %v8857, %v6109
    %v8870 = vrot.slane %v8858, 1
    %v8871 = vrot.slane %v8859, 1
    %v8872 = vrot.slane %v8860, 1
    %v8873 = vrot.slane %v8861, 1
    %v8874 = vrot.slane %v8862, 1
    %v8875 = vrot.slane %v8863, 1
    %8876 = vrot.lane.b32.xlu0 %v8870, 94
    %v8877 = vpop.permute.xlu0 %8876
    %8878 = vrot.lane.b32.xlu0 %v8871, 94
    %v8879 = vpop.permute.xlu0 %8878
    %8880 = vrot.lane.b32.xlu0 %v8872, 94
    %v8881 = vpop.permute.xlu0 %8880
    %8882 = vrot.lane.b32.xlu0 %v8873, 94
    %v8883 = vpop.permute.xlu0 %8882
    %8884 = vrot.lane.b32.xlu0 %v8874, 94
    %v8885 = vpop.permute.xlu0 %8884
    %8886 = vrot.lane.b32.xlu0 %v8875, 94
    %v8887 = vpop.permute.xlu0 %8886
    %v8888 = vsel %vm1516, %v8877, %v8879
    %v8889 = vsel %vm1516, %v8879, %v8881
    %v8890 = vsel %vm1516, %v8883, %v8885
    %v8891 = vsel %vm1516, %v8885, %v8887
    %v8896 = vadd.f32 %v8852, %v8888
    %v8897 = vadd.f32 %v8853, %v8889
    %v8898 = vadd.f32 %v8854, %v8890
    %v8899 = vadd.f32 %v8855, %v8891
    %s8900 = sld [smem:[#allocation9 + $0x3e]]
    %v8901 = vstv %s8900
    %v8902 = vmul.f32 %v8901, %v6104
    %v8903 = vmul.f32 %v8901, %v6105
    %v8904 = vmul.f32 %v8901, %v6106
    %v8905 = vmul.f32 %v8901, %v6107
    %v8906 = vmul.f32 %v8901, %v6108
    %v8907 = vmul.f32 %v8901, %v6109
    %v8914 = vrot.slane %v8902, 2
    %v8915 = vrot.slane %v8903, 2
    %v8916 = vrot.slane %v8904, 2
    %v8917 = vrot.slane %v8905, 2
    %v8918 = vrot.slane %v8906, 2
    %v8919 = vrot.slane %v8907, 2
    %8920 = vrot.lane.b32.xlu0 %v8914, 94
    %v8921 = vpop.permute.xlu0 %8920
    %8922 = vrot.lane.b32.xlu0 %v8915, 94
    %v8923 = vpop.permute.xlu0 %8922
    %8924 = vrot.lane.b32.xlu0 %v8916, 94
    %v8925 = vpop.permute.xlu0 %8924
    %8926 = vrot.lane.b32.xlu0 %v8917, 94
    %v8927 = vpop.permute.xlu0 %8926
    %8928 = vrot.lane.b32.xlu0 %v8918, 94
    %v8929 = vpop.permute.xlu0 %8928
    %8930 = vrot.lane.b32.xlu0 %v8919, 94
    %v8931 = vpop.permute.xlu0 %8930
    %v8932 = vsel %vm1516, %v8921, %v8923
    %v8933 = vsel %vm1516, %v8923, %v8925
    %v8934 = vsel %vm1516, %v8927, %v8929
    %v8935 = vsel %vm1516, %v8929, %v8931
    %v8940 = vadd.f32 %v8896, %v8932
    %v8941 = vadd.f32 %v8897, %v8933
    %v8942 = vadd.f32 %v8898, %v8934
    %v8943 = vadd.f32 %v8899, %v8935
    %s8944 = sld [smem:[#allocation9 + $0x47]]
    %v8945 = vstv %s8944
    %v8946 = vmul.f32 %v8945, %v6104
    %v8947 = vmul.f32 %v8945, %v6105
    %v8948 = vmul.f32 %v8945, %v6106
    %v8949 = vmul.f32 %v8945, %v6107
    %v8950 = vmul.f32 %v8945, %v6108
    %v8951 = vmul.f32 %v8945, %v6109
    %v8958 = vrot.slane %v8946, 3
    %v8959 = vrot.slane %v8947, 3
    %v8960 = vrot.slane %v8948, 3
    %v8961 = vrot.slane %v8949, 3
    %v8962 = vrot.slane %v8950, 3
    %v8963 = vrot.slane %v8951, 3
    %8964 = vrot.lane.b32.xlu0 %v8958, 94
    %v8965 = vpop.permute.xlu0 %8964
    %8966 = vrot.lane.b32.xlu0 %v8959, 94
    %v8967 = vpop.permute.xlu0 %8966
    %8968 = vrot.lane.b32.xlu0 %v8960, 94
    %v8969 = vpop.permute.xlu0 %8968
    %8970 = vrot.lane.b32.xlu0 %v8961, 94
    %v8971 = vpop.permute.xlu0 %8970
    %8972 = vrot.lane.b32.xlu0 %v8962, 94
    %v8973 = vpop.permute.xlu0 %8972
    %8974 = vrot.lane.b32.xlu0 %v8963, 94
    %v8975 = vpop.permute.xlu0 %8974
    %v8976 = vsel %vm1516, %v8965, %v8967
    %v8977 = vsel %vm1516, %v8967, %v8969
    %v8978 = vsel %vm1516, %v8971, %v8973
    %v8979 = vsel %vm1516, %v8973, %v8975
    %v8984 = vadd.f32 %v8940, %v8976
    %v8985 = vadd.f32 %v8941, %v8977
    %v8986 = vadd.f32 %v8942, %v8978
    %v8987 = vadd.f32 %v8943, %v8979
    %s8988 = sld [smem:[#allocation10 + $0x1]]
    %v8989 = vstv %s8988
    %v8990 = vadd.f32 %v8984, %v8989
    %v8991 = vadd.f32 %v8985, %v8989
    %v8992 = vadd.f32 %v8986, %v8989
    %v8993 = vadd.f32 %v8987, %v8989
    %s8994 = sld [smem:[#allocation9 + $0x48]]
    %v8995 = vstv %s8994
    %v8996 = vmul.f32 %v8995, %v6076
    %v8997 = vmul.f32 %v8995, %v6077
    %v8998 = vmul.f32 %v8995, %v6078
    %v8999 = vmul.f32 %v8995, %v6079
    %v9000 = vadd.f32 %v8996, 0.0
    %v9001 = vadd.f32 %v8997, 0.0
    %v9002 = vadd.f32 %v8998, 0.0
    %v9003 = vadd.f32 %v8999, 0.0
    %s9004 = sld [smem:[#allocation9 + $0x51]]
    %v9005 = vstv %s9004
    %v9006 = vmul.f32 %v9005, %v6076
    %v9007 = vmul.f32 %v9005, %v6077
    %v9008 = vmul.f32 %v9005, %v6078
    %v9009 = vmul.f32 %v9005, %v6079
    %v9014 = vrot.slane %v9006, 1
    %v9015 = vrot.slane %v9007, 1
    %v9016 = vrot.slane %v9008, 1
    %v9017 = vrot.slane %v9009, 1
    %v9022 = vadd.f32 %v9000, %v9014
    %v9023 = vadd.f32 %v9001, %v9015
    %v9024 = vadd.f32 %v9002, %v9016
    %v9025 = vadd.f32 %v9003, %v9017
    %s9026 = sld [smem:[#allocation9 + $0x5a]]
    %v9027 = vstv %s9026
    %v9028 = vmul.f32 %v9027, %v6076
    %v9029 = vmul.f32 %v9027, %v6077
    %v9030 = vmul.f32 %v9027, %v6078
    %v9031 = vmul.f32 %v9027, %v6079
    %v9036 = vrot.slane %v9028, 2
    %v9037 = vrot.slane %v9029, 2
    %v9038 = vrot.slane %v9030, 2
    %v9039 = vrot.slane %v9031, 2
    %v9044 = vadd.f32 %v9022, %v9036
    %v9045 = vadd.f32 %v9023, %v9037
    %v9046 = vadd.f32 %v9024, %v9038
    %v9047 = vadd.f32 %v9025, %v9039
    %s9048 = sld [smem:[#allocation9 + $0x63]]
    %v9049 = vstv %s9048
    %v9050 = vmul.f32 %v9049, %v6076
    %v9051 = vmul.f32 %v9049, %v6077
    %v9052 = vmul.f32 %v9049, %v6078
    %v9053 = vmul.f32 %v9049, %v6079
    %v9058 = vrot.slane %v9050, 3
    %v9059 = vrot.slane %v9051, 3
    %v9060 = vrot.slane %v9052, 3
    %v9061 = vrot.slane %v9053, 3
    %v9066 = vadd.f32 %v9044, %v9058
    %v9067 = vadd.f32 %v9045, %v9059
    %v9068 = vadd.f32 %v9046, %v9060
    %v9069 = vadd.f32 %v9047, %v9061
    %s9070 = sld [smem:[#allocation9 + $0x49]]
    %v9071 = vstv %s9070
    %v9072 = vmul.f32 %v9071, %v6072
    %v9073 = vmul.f32 %v9071, %v6064
    %v9074 = vmul.f32 %v9071, %v6074
    %v9075 = vmul.f32 %v9071, %v6073
    %v9076 = vmul.f32 %v9071, %v6065
    %v9077 = vmul.f32 %v9071, %v6075
    %9084 = vrot.lane.b32.xlu0 %v9072, 127
    %v9085 = vpop.permute.xlu0 %9084
    %9086 = vrot.lane.b32.xlu0 %v9073, 127
    %v9087 = vpop.permute.xlu0 %9086
    %9088 = vrot.lane.b32.xlu0 %v9074, 127
    %v9089 = vpop.permute.xlu0 %9088
    %9090 = vrot.lane.b32.xlu0 %v9075, 127
    %v9091 = vpop.permute.xlu0 %9090
    %9092 = vrot.lane.b32.xlu0 %v9076, 127
    %v9093 = vpop.permute.xlu0 %9092
    %9094 = vrot.lane.b32.xlu0 %v9077, 127
    %v9095 = vpop.permute.xlu0 %9094
    %v9096 = vsel %vm319, %v9085, %v9087
    %v9097 = vsel %vm319, %v9087, %v9089
    %v9098 = vsel %vm319, %v9091, %v9093
    %v9099 = vsel %vm319, %v9093, %v9095
    %v9104 = vadd.f32 %v9066, %v9096
    %v9105 = vadd.f32 %v9067, %v9097
    %v9106 = vadd.f32 %v9068, %v9098
    %v9107 = vadd.f32 %v9069, %v9099
    %s9108 = sld [smem:[#allocation9 + $0x52]]
    %v9109 = vstv %s9108
    %v9110 = vmul.f32 %v9109, %v6072
    %v9111 = vmul.f32 %v9109, %v6064
    %v9112 = vmul.f32 %v9109, %v6074
    %v9113 = vmul.f32 %v9109, %v6073
    %v9114 = vmul.f32 %v9109, %v6065
    %v9115 = vmul.f32 %v9109, %v6075
    %v9122 = vrot.slane %v9110, 1
    %v9123 = vrot.slane %v9111, 1
    %v9124 = vrot.slane %v9112, 1
    %v9125 = vrot.slane %v9113, 1
    %v9126 = vrot.slane %v9114, 1
    %v9127 = vrot.slane %v9115, 1
    %9128 = vrot.lane.b32.xlu0 %v9122, 127
    %v9129 = vpop.permute.xlu0 %9128
    %9130 = vrot.lane.b32.xlu0 %v9123, 127
    %v9131 = vpop.permute.xlu0 %9130
    %9132 = vrot.lane.b32.xlu0 %v9124, 127
    %v9133 = vpop.permute.xlu0 %9132
    %9134 = vrot.lane.b32.xlu0 %v9125, 127
    %v9135 = vpop.permute.xlu0 %9134
    %9136 = vrot.lane.b32.xlu0 %v9126, 127
    %v9137 = vpop.permute.xlu0 %9136
    %9138 = vrot.lane.b32.xlu0 %v9127, 127
    %v9139 = vpop.permute.xlu0 %9138
    %v9140 = vsel %vm319, %v9129, %v9131
    %v9141 = vsel %vm319, %v9131, %v9133
    %v9142 = vsel %vm319, %v9135, %v9137
    %v9143 = vsel %vm319, %v9137, %v9139
    %v9148 = vadd.f32 %v9104, %v9140
    %v9149 = vadd.f32 %v9105, %v9141
    %v9150 = vadd.f32 %v9106, %v9142
    %v9151 = vadd.f32 %v9107, %v9143
    %s9152 = sld [smem:[#allocation9 + $0x5b]]
    %v9153 = vstv %s9152
    %v9154 = vmul.f32 %v9153, %v6072
    %v9155 = vmul.f32 %v9153, %v6064
    %v9156 = vmul.f32 %v9153, %v6074
    %v9157 = vmul.f32 %v9153, %v6073
    %v9158 = vmul.f32 %v9153, %v6065
    %v9159 = vmul.f32 %v9153, %v6075
    %v9166 = vrot.slane %v9154, 2
    %v9167 = vrot.slane %v9155, 2
    %v9168 = vrot.slane %v9156, 2
    %v9169 = vrot.slane %v9157, 2
    %v9170 = vrot.slane %v9158, 2
    %v9171 = vrot.slane %v9159, 2
    %9172 = vrot.lane.b32.xlu0 %v9166, 127
    %v9173 = vpop.permute.xlu0 %9172
    %9174 = vrot.lane.b32.xlu0 %v9167, 127
    %v9175 = vpop.permute.xlu0 %9174
    %9176 = vrot.lane.b32.xlu0 %v9168, 127
    %v9177 = vpop.permute.xlu0 %9176
    %9178 = vrot.lane.b32.xlu0 %v9169, 127
    %v9179 = vpop.permute.xlu0 %9178
    %9180 = vrot.lane.b32.xlu0 %v9170, 127
    %v9181 = vpop.permute.xlu0 %9180
    %9182 = vrot.lane.b32.xlu0 %v9171, 127
    %v9183 = vpop.permute.xlu0 %9182
    %v9184 = vsel %vm319, %v9173, %v9175
    %v9185 = vsel %vm319, %v9175, %v9177
    %v9186 = vsel %vm319, %v9179, %v9181
    %v9187 = vsel %vm319, %v9181, %v9183
    %v9192 = vadd.f32 %v9148, %v9184
    %v9193 = vadd.f32 %v9149, %v9185
    %v9194 = vadd.f32 %v9150, %v9186
    %v9195 = vadd.f32 %v9151, %v9187
    %s9196 = sld [smem:[#allocation9 + $0x64]]
    %v9197 = vstv %s9196
    %v9198 = vmul.f32 %v9197, %v6072
    %v9199 = vmul.f32 %v9197, %v6064
    %v9200 = vmul.f32 %v9197, %v6074
    %v9201 = vmul.f32 %v9197, %v6073
    %v9202 = vmul.f32 %v9197, %v6065
    %v9203 = vmul.f32 %v9197, %v6075
    %v9210 = vrot.slane %v9198, 3
    %v9211 = vrot.slane %v9199, 3
    %v9212 = vrot.slane %v9200, 3
    %v9213 = vrot.slane %v9201, 3
    %v9214 = vrot.slane %v9202, 3
    %v9215 = vrot.slane %v9203, 3
    %9216 = vrot.lane.b32.xlu0 %v9210, 127
    %v9217 = vpop.permute.xlu0 %9216
    %9218 = vrot.lane.b32.xlu0 %v9211, 127
    %v9219 = vpop.permute.xlu0 %9218
    %9220 = vrot.lane.b32.xlu0 %v9212, 127
    %v9221 = vpop.permute.xlu0 %9220
    %9222 = vrot.lane.b32.xlu0 %v9213, 127
    %v9223 = vpop.permute.xlu0 %9222
    %9224 = vrot.lane.b32.xlu0 %v9214, 127
    %v9225 = vpop.permute.xlu0 %9224
    %9226 = vrot.lane.b32.xlu0 %v9215, 127
    %v9227 = vpop.permute.xlu0 %9226
    %v9228 = vsel %vm319, %v9217, %v9219
    %v9229 = vsel %vm319, %v9219, %v9221
    %v9230 = vsel %vm319, %v9223, %v9225
    %v9231 = vsel %vm319, %v9225, %v9227
    %v9236 = vadd.f32 %v9192, %v9228
    %v9237 = vadd.f32 %v9193, %v9229
    %v9238 = vadd.f32 %v9194, %v9230
    %v9239 = vadd.f32 %v9195, %v9231
    %s9240 = sld [smem:[#allocation9 + $0x4a]]
    %v9241 = vstv %s9240
    %v9242 = vmul.f32 %v9241, %v6080
    %v9243 = vmul.f32 %v9241, %v6081
    %v9244 = vmul.f32 %v9241, %v6082
    %v9245 = vmul.f32 %v9241, %v6083
    %v9246 = vmul.f32 %v9241, %v6084
    %v9247 = vmul.f32 %v9241, %v6085
    %9254 = vrot.lane.b32.xlu0 %v9242, 126
    %v9255 = vpop.permute.xlu0 %9254
    %9256 = vrot.lane.b32.xlu0 %v9243, 126
    %v9257 = vpop.permute.xlu0 %9256
    %9258 = vrot.lane.b32.xlu0 %v9244, 126
    %v9259 = vpop.permute.xlu0 %9258
    %9260 = vrot.lane.b32.xlu0 %v9245, 126
    %v9261 = vpop.permute.xlu0 %9260
    %9262 = vrot.lane.b32.xlu0 %v9246, 126
    %v9263 = vpop.permute.xlu0 %9262
    %9264 = vrot.lane.b32.xlu0 %v9247, 126
    %v9265 = vpop.permute.xlu0 %9264
    %v9266 = vsel %vm490, %v9255, %v9257
    %v9267 = vsel %vm490, %v9257, %v9259
    %v9268 = vsel %vm490, %v9261, %v9263
    %v9269 = vsel %vm490, %v9263, %v9265
    %v9274 = vadd.f32 %v9236, %v9266
    %v9275 = vadd.f32 %v9237, %v9267
    %v9276 = vadd.f32 %v9238, %v9268
    %v9277 = vadd.f32 %v9239, %v9269
    %s9278 = sld [smem:[#allocation9 + $0x53]]
    %v9279 = vstv %s9278
    %v9280 = vmul.f32 %v9279, %v6080
    %v9281 = vmul.f32 %v9279, %v6081
    %v9282 = vmul.f32 %v9279, %v6082
    %v9283 = vmul.f32 %v9279, %v6083
    %v9284 = vmul.f32 %v9279, %v6084
    %v9285 = vmul.f32 %v9279, %v6085
    %v9292 = vrot.slane %v9280, 1
    %v9293 = vrot.slane %v9281, 1
    %v9294 = vrot.slane %v9282, 1
    %v9295 = vrot.slane %v9283, 1
    %v9296 = vrot.slane %v9284, 1
    %v9297 = vrot.slane %v9285, 1
    %9298 = vrot.lane.b32.xlu0 %v9292, 126
    %v9299 = vpop.permute.xlu0 %9298
    %9300 = vrot.lane.b32.xlu0 %v9293, 126
    %v9301 = vpop.permute.xlu0 %9300
    %9302 = vrot.lane.b32.xlu0 %v9294, 126
    %v9303 = vpop.permute.xlu0 %9302
    %9304 = vrot.lane.b32.xlu0 %v9295, 126
    %v9305 = vpop.permute.xlu0 %9304
    %9306 = vrot.lane.b32.xlu0 %v9296, 126
    %v9307 = vpop.permute.xlu0 %9306
    %9308 = vrot.lane.b32.xlu0 %v9297, 126
    %v9309 = vpop.permute.xlu0 %9308
    %v9310 = vsel %vm490, %v9299, %v9301
    %v9311 = vsel %vm490, %v9301, %v9303
    %v9312 = vsel %vm490, %v9305, %v9307
    %v9313 = vsel %vm490, %v9307, %v9309
    %v9318 = vadd.f32 %v9274, %v9310
    %v9319 = vadd.f32 %v9275, %v9311
    %v9320 = vadd.f32 %v9276, %v9312
    %v9321 = vadd.f32 %v9277, %v9313
    %s9322 = sld [smem:[#allocation9 + $0x5c]]
    %v9323 = vstv %s9322
    %v9324 = vmul.f32 %v9323, %v6080
    %v9325 = vmul.f32 %v9323, %v6081
    %v9326 = vmul.f32 %v9323, %v6082
    %v9327 = vmul.f32 %v9323, %v6083
    %v9328 = vmul.f32 %v9323, %v6084
    %v9329 = vmul.f32 %v9323, %v6085
    %v9336 = vrot.slane %v9324, 2
    %v9337 = vrot.slane %v9325, 2
    %v9338 = vrot.slane %v9326, 2
    %v9339 = vrot.slane %v9327, 2
    %v9340 = vrot.slane %v9328, 2
    %v9341 = vrot.slane %v9329, 2
    %9342 = vrot.lane.b32.xlu0 %v9336, 126
    %v9343 = vpop.permute.xlu0 %9342
    %9344 = vrot.lane.b32.xlu0 %v9337, 126
    %v9345 = vpop.permute.xlu0 %9344
    %9346 = vrot.lane.b32.xlu0 %v9338, 126
    %v9347 = vpop.permute.xlu0 %9346
    %9348 = vrot.lane.b32.xlu0 %v9339, 126
    %v9349 = vpop.permute.xlu0 %9348
    %9350 = vrot.lane.b32.xlu0 %v9340, 126
    %v9351 = vpop.permute.xlu0 %9350
    %9352 = vrot.lane.b32.xlu0 %v9341, 126
    %v9353 = vpop.permute.xlu0 %9352
    %v9354 = vsel %vm490, %v9343, %v9345
    %v9355 = vsel %vm490, %v9345, %v9347
    %v9356 = vsel %vm490, %v9349, %v9351
    %v9357 = vsel %vm490, %v9351, %v9353
    %v9362 = vadd.f32 %v9318, %v9354
    %v9363 = vadd.f32 %v9319, %v9355
    %v9364 = vadd.f32 %v9320, %v9356
    %v9365 = vadd.f32 %v9321, %v9357
    %s9366 = sld [smem:[#allocation9 + $0x65]]
    %v9367 = vstv %s9366
    %v9368 = vmul.f32 %v9367, %v6080
    %v9369 = vmul.f32 %v9367, %v6081
    %v9370 = vmul.f32 %v9367, %v6082
    %v9371 = vmul.f32 %v9367, %v6083
    %v9372 = vmul.f32 %v9367, %v6084
    %v9373 = vmul.f32 %v9367, %v6085
    %v9380 = vrot.slane %v9368, 3
    %v9381 = vrot.slane %v9369, 3
    %v9382 = vrot.slane %v9370, 3
    %v9383 = vrot.slane %v9371, 3
    %v9384 = vrot.slane %v9372, 3
    %v9385 = vrot.slane %v9373, 3
    %9386 = vrot.lane.b32.xlu0 %v9380, 126
    %v9387 = vpop.permute.xlu0 %9386
    %9388 = vrot.lane.b32.xlu0 %v9381, 126
    %v9389 = vpop.permute.xlu0 %9388
    %9390 = vrot.lane.b32.xlu0 %v9382, 126
    %v9391 = vpop.permute.xlu0 %9390
    %9392 = vrot.lane.b32.xlu0 %v9383, 126
    %v9393 = vpop.permute.xlu0 %9392
    %9394 = vrot.lane.b32.xlu0 %v9384, 126
    %v9395 = vpop.permute.xlu0 %9394
    %9396 = vrot.lane.b32.xlu0 %v9385, 126
    %v9397 = vpop.permute.xlu0 %9396
    %v9398 = vsel %vm490, %v9387, %v9389
    %v9399 = vsel %vm490, %v9389, %v9391
    %v9400 = vsel %vm490, %v9393, %v9395
    %v9401 = vsel %vm490, %v9395, %v9397
    %v9406 = vadd.f32 %v9362, %v9398
    %v9407 = vadd.f32 %v9363, %v9399
    %v9408 = vadd.f32 %v9364, %v9400
    %v9409 = vadd.f32 %v9365, %v9401
    %s9410 = sld [smem:[#allocation9 + $0x4b]]
    %v9411 = vstv %s9410
    %v9412 = vmul.f32 %v9411, %v6086
    %v9413 = vmul.f32 %v9411, %v6087
    %v9414 = vmul.f32 %v9411, %v6088
    %v9415 = vmul.f32 %v9411, %v6089
    %v9416 = vmul.f32 %v9411, %v6090
    %v9417 = vmul.f32 %v9411, %v6091
    %9424 = vrot.lane.b32.xlu0 %v9412, 112
    %v9425 = vpop.permute.xlu0 %9424
    %9426 = vrot.lane.b32.xlu0 %v9413, 112
    %v9427 = vpop.permute.xlu0 %9426
    %9428 = vrot.lane.b32.xlu0 %v9414, 112
    %v9429 = vpop.permute.xlu0 %9428
    %9430 = vrot.lane.b32.xlu0 %v9415, 112
    %v9431 = vpop.permute.xlu0 %9430
    %9432 = vrot.lane.b32.xlu0 %v9416, 112
    %v9433 = vpop.permute.xlu0 %9432
    %9434 = vrot.lane.b32.xlu0 %v9417, 112
    %v9435 = vpop.permute.xlu0 %9434
    %v9436 = vsel %vm661, %v9425, %v9427
    %v9437 = vsel %vm661, %v9427, %v9429
    %v9438 = vsel %vm661, %v9431, %v9433
    %v9439 = vsel %vm661, %v9433, %v9435
    %v9444 = vadd.f32 %v9406, %v9436
    %v9445 = vadd.f32 %v9407, %v9437
    %v9446 = vadd.f32 %v9408, %v9438
    %v9447 = vadd.f32 %v9409, %v9439
    %s9448 = sld [smem:[#allocation9 + $0x54]]
    %v9449 = vstv %s9448
    %v9450 = vmul.f32 %v9449, %v6086
    %v9451 = vmul.f32 %v9449, %v6087
    %v9452 = vmul.f32 %v9449, %v6088
    %v9453 = vmul.f32 %v9449, %v6089
    %v9454 = vmul.f32 %v9449, %v6090
    %v9455 = vmul.f32 %v9449, %v6091
    %v9462 = vrot.slane %v9450, 1
    %v9463 = vrot.slane %v9451, 1
    %v9464 = vrot.slane %v9452, 1
    %v9465 = vrot.slane %v9453, 1
    %v9466 = vrot.slane %v9454, 1
    %v9467 = vrot.slane %v9455, 1
    %9468 = vrot.lane.b32.xlu0 %v9462, 112
    %v9469 = vpop.permute.xlu0 %9468
    %9470 = vrot.lane.b32.xlu0 %v9463, 112
    %v9471 = vpop.permute.xlu0 %9470
    %9472 = vrot.lane.b32.xlu0 %v9464, 112
    %v9473 = vpop.permute.xlu0 %9472
    %9474 = vrot.lane.b32.xlu0 %v9465, 112
    %v9475 = vpop.permute.xlu0 %9474
    %9476 = vrot.lane.b32.xlu0 %v9466, 112
    %v9477 = vpop.permute.xlu0 %9476
    %9478 = vrot.lane.b32.xlu0 %v9467, 112
    %v9479 = vpop.permute.xlu0 %9478
    %v9480 = vsel %vm661, %v9469, %v9471
    %v9481 = vsel %vm661, %v9471, %v9473
    %v9482 = vsel %vm661, %v9475, %v9477
    %v9483 = vsel %vm661, %v9477, %v9479
    %v9488 = vadd.f32 %v9444, %v9480
    %v9489 = vadd.f32 %v9445, %v9481
    %v9490 = vadd.f32 %v9446, %v9482
    %v9491 = vadd.f32 %v9447, %v9483
    %s9492 = sld [smem:[#allocation9 + $0x5d]]
    %v9493 = vstv %s9492
    %v9494 = vmul.f32 %v9493, %v6086
    %v9495 = vmul.f32 %v9493, %v6087
    %v9496 = vmul.f32 %v9493, %v6088
    %v9497 = vmul.f32 %v9493, %v6089
    %v9498 = vmul.f32 %v9493, %v6090
    %v9499 = vmul.f32 %v9493, %v6091
    %v9506 = vrot.slane %v9494, 2
    %v9507 = vrot.slane %v9495, 2
    %v9508 = vrot.slane %v9496, 2
    %v9509 = vrot.slane %v9497, 2
    %v9510 = vrot.slane %v9498, 2
    %v9511 = vrot.slane %v9499, 2
    %9512 = vrot.lane.b32.xlu0 %v9506, 112
    %v9513 = vpop.permute.xlu0 %9512
    %9514 = vrot.lane.b32.xlu0 %v9507, 112
    %v9515 = vpop.permute.xlu0 %9514
    %9516 = vrot.lane.b32.xlu0 %v9508, 112
    %v9517 = vpop.permute.xlu0 %9516
    %9518 = vrot.lane.b32.xlu0 %v9509, 112
    %v9519 = vpop.permute.xlu0 %9518
    %9520 = vrot.lane.b32.xlu0 %v9510, 112
    %v9521 = vpop.permute.xlu0 %9520
    %9522 = vrot.lane.b32.xlu0 %v9511, 112
    %v9523 = vpop.permute.xlu0 %9522
    %v9524 = vsel %vm661, %v9513, %v9515
    %v9525 = vsel %vm661, %v9515, %v9517
    %v9526 = vsel %vm661, %v9519, %v9521
    %v9527 = vsel %vm661, %v9521, %v9523
    %v9532 = vadd.f32 %v9488, %v9524
    %v9533 = vadd.f32 %v9489, %v9525
    %v9534 = vadd.f32 %v9490, %v9526
    %v9535 = vadd.f32 %v9491, %v9527
    %s9536 = sld [smem:[#allocation9 + $0x66]]
    %v9537 = vstv %s9536
    %v9538 = vmul.f32 %v9537, %v6086
    %v9539 = vmul.f32 %v9537, %v6087
    %v9540 = vmul.f32 %v9537, %v6088
    %v9541 = vmul.f32 %v9537, %v6089
    %v9542 = vmul.f32 %v9537, %v6090
    %v9543 = vmul.f32 %v9537, %v6091
    %v9550 = vrot.slane %v9538, 3
    %v9551 = vrot.slane %v9539, 3
    %v9552 = vrot.slane %v9540, 3
    %v9553 = vrot.slane %v9541, 3
    %v9554 = vrot.slane %v9542, 3
    %v9555 = vrot.slane %v9543, 3
    %9556 = vrot.lane.b32.xlu0 %v9550, 112
    %v9557 = vpop.permute.xlu0 %9556
    %9558 = vrot.lane.b32.xlu0 %v9551, 112
    %v9559 = vpop.permute.xlu0 %9558
    %9560 = vrot.lane.b32.xlu0 %v9552, 112
    %v9561 = vpop.permute.xlu0 %9560
    %9562 = vrot.lane.b32.xlu0 %v9553, 112
    %v9563 = vpop.permute.xlu0 %9562
    %9564 = vrot.lane.b32.xlu0 %v9554, 112
    %v9565 = vpop.permute.xlu0 %9564
    %9566 = vrot.lane.b32.xlu0 %v9555, 112
    %v9567 = vpop.permute.xlu0 %9566
    %v9568 = vsel %vm661, %v9557, %v9559
    %v9569 = vsel %vm661, %v9559, %v9561
    %v9570 = vsel %vm661, %v9563, %v9565
    %v9571 = vsel %vm661, %v9565, %v9567
    %v9576 = vadd.f32 %v9532, %v9568
    %v9577 = vadd.f32 %v9533, %v9569
    %v9578 = vadd.f32 %v9534, %v9570
    %v9579 = vadd.f32 %v9535, %v9571
    %s9580 = sld [smem:[#allocation9 + $0x4c]]
    %v9581 = vstv %s9580
    %v9582 = vmul.f32 %v9581, %v6072
    %v9583 = vmul.f32 %v9581, %v6064
    %v9584 = vmul.f32 %v9581, %v6074
    %v9585 = vmul.f32 %v9581, %v6073
    %v9586 = vmul.f32 %v9581, %v6065
    %v9587 = vmul.f32 %v9581, %v6075
    %9594 = vrot.lane.b32.xlu0 %v9582, 111
    %v9595 = vpop.permute.xlu0 %9594
    %9596 = vrot.lane.b32.xlu0 %v9583, 111
    %v9597 = vpop.permute.xlu0 %9596
    %9598 = vrot.lane.b32.xlu0 %v9584, 111
    %v9599 = vpop.permute.xlu0 %9598
    %9600 = vrot.lane.b32.xlu0 %v9585, 111
    %v9601 = vpop.permute.xlu0 %9600
    %9602 = vrot.lane.b32.xlu0 %v9586, 111
    %v9603 = vpop.permute.xlu0 %9602
    %9604 = vrot.lane.b32.xlu0 %v9587, 111
    %v9605 = vpop.permute.xlu0 %9604
    %v9606 = vsel %vm832, %v9595, %v9597
    %v9607 = vsel %vm832, %v9597, %v9599
    %v9608 = vsel %vm832, %v9601, %v9603
    %v9609 = vsel %vm832, %v9603, %v9605
    %v9614 = vadd.f32 %v9576, %v9606
    %v9615 = vadd.f32 %v9577, %v9607
    %v9616 = vadd.f32 %v9578, %v9608
    %v9617 = vadd.f32 %v9579, %v9609
    %s9618 = sld [smem:[#allocation9 + $0x55]]
    %v9619 = vstv %s9618
    %v9620 = vmul.f32 %v9619, %v6072
    %v9621 = vmul.f32 %v9619, %v6064
    %v9622 = vmul.f32 %v9619, %v6074
    %v9623 = vmul.f32 %v9619, %v6073
    %v9624 = vmul.f32 %v9619, %v6065
    %v9625 = vmul.f32 %v9619, %v6075
    %v9632 = vrot.slane %v9620, 1
    %v9633 = vrot.slane %v9621, 1
    %v9634 = vrot.slane %v9622, 1
    %v9635 = vrot.slane %v9623, 1
    %v9636 = vrot.slane %v9624, 1
    %v9637 = vrot.slane %v9625, 1
    %9638 = vrot.lane.b32.xlu0 %v9632, 111
    %v9639 = vpop.permute.xlu0 %9638
    %9640 = vrot.lane.b32.xlu0 %v9633, 111
    %v9641 = vpop.permute.xlu0 %9640
    %9642 = vrot.lane.b32.xlu0 %v9634, 111
    %v9643 = vpop.permute.xlu0 %9642
    %9644 = vrot.lane.b32.xlu0 %v9635, 111
    %v9645 = vpop.permute.xlu0 %9644
    %9646 = vrot.lane.b32.xlu0 %v9636, 111
    %v9647 = vpop.permute.xlu0 %9646
    %9648 = vrot.lane.b32.xlu0 %v9637, 111
    %v9649 = vpop.permute.xlu0 %9648
    %v9650 = vsel %vm832, %v9639, %v9641
    %v9651 = vsel %vm832, %v9641, %v9643
    %v9652 = vsel %vm832, %v9645, %v9647
    %v9653 = vsel %vm832, %v9647, %v9649
    %v9658 = vadd.f32 %v9614, %v9650
    %v9659 = vadd.f32 %v9615, %v9651
    %v9660 = vadd.f32 %v9616, %v9652
    %v9661 = vadd.f32 %v9617, %v9653
    %s9662 = sld [smem:[#allocation9 + $0x5e]]
    %v9663 = vstv %s9662
    %v9664 = vmul.f32 %v9663, %v6072
    %v9665 = vmul.f32 %v9663, %v6064
    %v9666 = vmul.f32 %v9663, %v6074
    %v9667 = vmul.f32 %v9663, %v6073
    %v9668 = vmul.f32 %v9663, %v6065
    %v9669 = vmul.f32 %v9663, %v6075
    %v9676 = vrot.slane %v9664, 2
    %v9677 = vrot.slane %v9665, 2
    %v9678 = vrot.slane %v9666, 2
    %v9679 = vrot.slane %v9667, 2
    %v9680 = vrot.slane %v9668, 2
    %v9681 = vrot.slane %v9669, 2
    %9682 = vrot.lane.b32.xlu0 %v9676, 111
    %v9683 = vpop.permute.xlu0 %9682
    %9684 = vrot.lane.b32.xlu0 %v9677, 111
    %v9685 = vpop.permute.xlu0 %9684
    %9686 = vrot.lane.b32.xlu0 %v9678, 111
    %v9687 = vpop.permute.xlu0 %9686
    %9688 = vrot.lane.b32.xlu0 %v9679, 111
    %v9689 = vpop.permute.xlu0 %9688
    %9690 = vrot.lane.b32.xlu0 %v9680, 111
    %v9691 = vpop.permute.xlu0 %9690
    %9692 = vrot.lane.b32.xlu0 %v9681, 111
    %v9693 = vpop.permute.xlu0 %9692
    %v9694 = vsel %vm832, %v9683, %v9685
    %v9695 = vsel %vm832, %v9685, %v9687
    %v9696 = vsel %vm832, %v9689, %v9691
    %v9697 = vsel %vm832, %v9691, %v9693
    %v9702 = vadd.f32 %v9658, %v9694
    %v9703 = vadd.f32 %v9659, %v9695
    %v9704 = vadd.f32 %v9660, %v9696
    %v9705 = vadd.f32 %v9661, %v9697
    %s9706 = sld [smem:[#allocation9 + $0x67]]
    %v9707 = vstv %s9706
    %v9708 = vmul.f32 %v9707, %v6072
    %v9709 = vmul.f32 %v9707, %v6064
    %v9710 = vmul.f32 %v9707, %v6074
    %v9711 = vmul.f32 %v9707, %v6073
    %v9712 = vmul.f32 %v9707, %v6065
    %v9713 = vmul.f32 %v9707, %v6075
    %v9720 = vrot.slane %v9708, 3
    %v9721 = vrot.slane %v9709, 3
    %v9722 = vrot.slane %v9710, 3
    %v9723 = vrot.slane %v9711, 3
    %v9724 = vrot.slane %v9712, 3
    %v9725 = vrot.slane %v9713, 3
    %9726 = vrot.lane.b32.xlu0 %v9720, 111
    %v9727 = vpop.permute.xlu0 %9726
    %9728 = vrot.lane.b32.xlu0 %v9721, 111
    %v9729 = vpop.permute.xlu0 %9728
    %9730 = vrot.lane.b32.xlu0 %v9722, 111
    %v9731 = vpop.permute.xlu0 %9730
    %9732 = vrot.lane.b32.xlu0 %v9723, 111
    %v9733 = vpop.permute.xlu0 %9732
    %9734 = vrot.lane.b32.xlu0 %v9724, 111
    %v9735 = vpop.permute.xlu0 %9734
    %9736 = vrot.lane.b32.xlu0 %v9725, 111
    %v9737 = vpop.permute.xlu0 %9736
    %v9738 = vsel %vm832, %v9727, %v9729
    %v9739 = vsel %vm832, %v9729, %v9731
    %v9740 = vsel %vm832, %v9733, %v9735
    %v9741 = vsel %vm832, %v9735, %v9737
    %v9746 = vadd.f32 %v9702, %v9738
    %v9747 = vadd.f32 %v9703, %v9739
    %v9748 = vadd.f32 %v9704, %v9740
    %v9749 = vadd.f32 %v9705, %v9741
    %s9750 = sld [smem:[#allocation9 + $0x4d]]
    %v9751 = vstv %s9750
    %v9752 = vmul.f32 %v9751, %v6092
    %v9753 = vmul.f32 %v9751, %v6093
    %v9754 = vmul.f32 %v9751, %v6094
    %v9755 = vmul.f32 %v9751, %v6095
    %v9756 = vmul.f32 %v9751, %v6096
    %v9757 = vmul.f32 %v9751, %v6097
    %9764 = vrot.lane.b32.xlu0 %v9752, 110
    %v9765 = vpop.permute.xlu0 %9764
    %9766 = vrot.lane.b32.xlu0 %v9753, 110
    %v9767 = vpop.permute.xlu0 %9766
    %9768 = vrot.lane.b32.xlu0 %v9754, 110
    %v9769 = vpop.permute.xlu0 %9768
    %9770 = vrot.lane.b32.xlu0 %v9755, 110
    %v9771 = vpop.permute.xlu0 %9770
    %9772 = vrot.lane.b32.xlu0 %v9756, 110
    %v9773 = vpop.permute.xlu0 %9772
    %9774 = vrot.lane.b32.xlu0 %v9757, 110
    %v9775 = vpop.permute.xlu0 %9774
    %v9776 = vsel %vm1003, %v9765, %v9767
    %v9777 = vsel %vm1003, %v9767, %v9769
    %v9778 = vsel %vm1003, %v9771, %v9773
    %v9779 = vsel %vm1003, %v9773, %v9775
    %v9784 = vadd.f32 %v9746, %v9776
    %v9785 = vadd.f32 %v9747, %v9777
    %v9786 = vadd.f32 %v9748, %v9778
    %v9787 = vadd.f32 %v9749, %v9779
    %s9788 = sld [smem:[#allocation9 + $0x56]]
    %v9789 = vstv %s9788
    %v9790 = vmul.f32 %v9789, %v6092
    %v9791 = vmul.f32 %v9789, %v6093
    %v9792 = vmul.f32 %v9789, %v6094
    %v9793 = vmul.f32 %v9789, %v6095
    %v9794 = vmul.f32 %v9789, %v6096
    %v9795 = vmul.f32 %v9789, %v6097
    %v9802 = vrot.slane %v9790, 1
    %v9803 = vrot.slane %v9791, 1
    %v9804 = vrot.slane %v9792, 1
    %v9805 = vrot.slane %v9793, 1
    %v9806 = vrot.slane %v9794, 1
    %v9807 = vrot.slane %v9795, 1
    %9808 = vrot.lane.b32.xlu0 %v9802, 110
    %v9809 = vpop.permute.xlu0 %9808
    %9810 = vrot.lane.b32.xlu0 %v9803, 110
    %v9811 = vpop.permute.xlu0 %9810
    %9812 = vrot.lane.b32.xlu0 %v9804, 110
    %v9813 = vpop.permute.xlu0 %9812
    %9814 = vrot.lane.b32.xlu0 %v9805, 110
    %v9815 = vpop.permute.xlu0 %9814
    %9816 = vrot.lane.b32.xlu0 %v9806, 110
    %v9817 = vpop.permute.xlu0 %9816
    %9818 = vrot.lane.b32.xlu0 %v9807, 110
    %v9819 = vpop.permute.xlu0 %9818
    %v9820 = vsel %vm1003, %v9809, %v9811
    %v9821 = vsel %vm1003, %v9811, %v9813
    %v9822 = vsel %vm1003, %v9815, %v9817
    %v9823 = vsel %vm1003, %v9817, %v9819
    %v9828 = vadd.f32 %v9784, %v9820
    %v9829 = vadd.f32 %v9785, %v9821
    %v9830 = vadd.f32 %v9786, %v9822
    %v9831 = vadd.f32 %v9787, %v9823
    %s9832 = sld [smem:[#allocation9 + $0x5f]]
    %v9833 = vstv %s9832
    %v9834 = vmul.f32 %v9833, %v6092
    %v9835 = vmul.f32 %v9833, %v6093
    %v9836 = vmul.f32 %v9833, %v6094
    %v9837 = vmul.f32 %v9833, %v6095
    %v9838 = vmul.f32 %v9833, %v6096
    %v9839 = vmul.f32 %v9833, %v6097
    %v9846 = vrot.slane %v9834, 2
    %v9847 = vrot.slane %v9835, 2
    %v9848 = vrot.slane %v9836, 2
    %v9849 = vrot.slane %v9837, 2
    %v9850 = vrot.slane %v9838, 2
    %v9851 = vrot.slane %v9839, 2
    %9852 = vrot.lane.b32.xlu0 %v9846, 110
    %v9853 = vpop.permute.xlu0 %9852
    %9854 = vrot.lane.b32.xlu0 %v9847, 110
    %v9855 = vpop.permute.xlu0 %9854
    %9856 = vrot.lane.b32.xlu0 %v9848, 110
    %v9857 = vpop.permute.xlu0 %9856
    %9858 = vrot.lane.b32.xlu0 %v9849, 110
    %v9859 = vpop.permute.xlu0 %9858
    %9860 = vrot.lane.b32.xlu0 %v9850, 110
    %v9861 = vpop.permute.xlu0 %9860
    %9862 = vrot.lane.b32.xlu0 %v9851, 110
    %v9863 = vpop.permute.xlu0 %9862
    %v9864 = vsel %vm1003, %v9853, %v9855
    %v9865 = vsel %vm1003, %v9855, %v9857
    %v9866 = vsel %vm1003, %v9859, %v9861
    %v9867 = vsel %vm1003, %v9861, %v9863
    %v9872 = vadd.f32 %v9828, %v9864
    %v9873 = vadd.f32 %v9829, %v9865
    %v9874 = vadd.f32 %v9830, %v9866
    %v9875 = vadd.f32 %v9831, %v9867
    %s9876 = sld [smem:[#allocation9 + $0x68]]
    %v9877 = vstv %s9876
    %v9878 = vmul.f32 %v9877, %v6092
    %v9879 = vmul.f32 %v9877, %v6093
    %v9880 = vmul.f32 %v9877, %v6094
    %v9881 = vmul.f32 %v9877, %v6095
    %v9882 = vmul.f32 %v9877, %v6096
    %v9883 = vmul.f32 %v9877, %v6097
    %v9890 = vrot.slane %v9878, 3
    %v9891 = vrot.slane %v9879, 3
    %v9892 = vrot.slane %v9880, 3
    %v9893 = vrot.slane %v9881, 3
    %v9894 = vrot.slane %v9882, 3
    %v9895 = vrot.slane %v9883, 3
    %9896 = vrot.lane.b32.xlu0 %v9890, 110
    %v9897 = vpop.permute.xlu0 %9896
    %9898 = vrot.lane.b32.xlu0 %v9891, 110
    %v9899 = vpop.permute.xlu0 %9898
    %9900 = vrot.lane.b32.xlu0 %v9892, 110
    %v9901 = vpop.permute.xlu0 %9900
    %9902 = vrot.lane.b32.xlu0 %v9893, 110
    %v9903 = vpop.permute.xlu0 %9902
    %9904 = vrot.lane.b32.xlu0 %v9894, 110
    %v9905 = vpop.permute.xlu0 %9904
    %9906 = vrot.lane.b32.xlu0 %v9895, 110
    %v9907 = vpop.permute.xlu0 %9906
    %v9908 = vsel %vm1003, %v9897, %v9899
    %v9909 = vsel %vm1003, %v9899, %v9901
    %v9910 = vsel %vm1003, %v9903, %v9905
    %v9911 = vsel %vm1003, %v9905, %v9907
    %v9916 = vadd.f32 %v9872, %v9908
    %v9917 = vadd.f32 %v9873, %v9909
    %v9918 = vadd.f32 %v9874, %v9910
    %v9919 = vadd.f32 %v9875, %v9911
    %s9920 = sld [smem:[#allocation9 + $0x4e]]
    %v9921 = vstv %s9920
    %v9922 = vmul.f32 %v9921, %v6098
    %v9923 = vmul.f32 %v9921, %v6099
    %v9924 = vmul.f32 %v9921, %v6100
    %v9925 = vmul.f32 %v9921, %v6101
    %v9926 = vmul.f32 %v9921, %v6102
    %v9927 = vmul.f32 %v9921, %v6103
    %9934 = vrot.lane.b32.xlu0 %v9922, 96
    %v9935 = vpop.permute.xlu0 %9934
    %9936 = vrot.lane.b32.xlu0 %v9923, 96
    %v9937 = vpop.permute.xlu0 %9936
    %9938 = vrot.lane.b32.xlu0 %v9924, 96
    %v9939 = vpop.permute.xlu0 %9938
    %9940 = vrot.lane.b32.xlu0 %v9925, 96
    %v9941 = vpop.permute.xlu0 %9940
    %9942 = vrot.lane.b32.xlu0 %v9926, 96
    %v9943 = vpop.permute.xlu0 %9942
    %9944 = vrot.lane.b32.xlu0 %v9927, 96
    %v9945 = vpop.permute.xlu0 %9944
    %v9946 = vsel %vm1174, %v9935, %v9937
    %v9947 = vsel %vm1174, %v9937, %v9939
    %v9948 = vsel %vm1174, %v9941, %v9943
    %v9949 = vsel %vm1174, %v9943, %v9945
    %v9954 = vadd.f32 %v9916, %v9946
    %v9955 = vadd.f32 %v9917, %v9947
    %v9956 = vadd.f32 %v9918, %v9948
    %v9957 = vadd.f32 %v9919, %v9949
    %s9958 = sld [smem:[#allocation9 + $0x57]]
    %v9959 = vstv %s9958
    %v9960 = vmul.f32 %v9959, %v6098
    %v9961 = vmul.f32 %v9959, %v6099
    %v9962 = vmul.f32 %v9959, %v6100
    %v9963 = vmul.f32 %v9959, %v6101
    %v9964 = vmul.f32 %v9959, %v6102
    %v9965 = vmul.f32 %v9959, %v6103
    %v9972 = vrot.slane %v9960, 1
    %v9973 = vrot.slane %v9961, 1
    %v9974 = vrot.slane %v9962, 1
    %v9975 = vrot.slane %v9963, 1
    %v9976 = vrot.slane %v9964, 1
    %v9977 = vrot.slane %v9965, 1
    %9978 = vrot.lane.b32.xlu0 %v9972, 96
    %v9979 = vpop.permute.xlu0 %9978
    %9980 = vrot.lane.b32.xlu0 %v9973, 96
    %v9981 = vpop.permute.xlu0 %9980
    %9982 = vrot.lane.b32.xlu0 %v9974, 96
    %v9983 = vpop.permute.xlu0 %9982
    %9984 = vrot.lane.b32.xlu0 %v9975, 96
    %v9985 = vpop.permute.xlu0 %9984
    %9986 = vrot.lane.b32.xlu0 %v9976, 96
    %v9987 = vpop.permute.xlu0 %9986
    %9988 = vrot.lane.b32.xlu0 %v9977, 96
    %v9989 = vpop.permute.xlu0 %9988
    %v9990 = vsel %vm1174, %v9979, %v9981
    %v9991 = vsel %vm1174, %v9981, %v9983
    %v9992 = vsel %vm1174, %v9985, %v9987
    %v9993 = vsel %vm1174, %v9987, %v9989
    %v9998 = vadd.f32 %v9954, %v9990
    %v9999 = vadd.f32 %v9955, %v9991
    %v10000 = vadd.f32 %v9956, %v9992
    %v10001 = vadd.f32 %v9957, %v9993
    %s10002 = sld [smem:[#allocation9 + $0x60]]
    %v10003 = vstv %s10002
    %v10004 = vmul.f32 %v10003, %v6098
    %v10005 = vmul.f32 %v10003, %v6099
    %v10006 = vmul.f32 %v10003, %v6100
    %v10007 = vmul.f32 %v10003, %v6101
    %v10008 = vmul.f32 %v10003, %v6102
    %v10009 = vmul.f32 %v10003, %v6103
    %v10016 = vrot.slane %v10004, 2
    %v10017 = vrot.slane %v10005, 2
    %v10018 = vrot.slane %v10006, 2
    %v10019 = vrot.slane %v10007, 2
    %v10020 = vrot.slane %v10008, 2
    %v10021 = vrot.slane %v10009, 2
    %10022 = vrot.lane.b32.xlu0 %v10016, 96
    %v10023 = vpop.permute.xlu0 %10022
    %10024 = vrot.lane.b32.xlu0 %v10017, 96
    %v10025 = vpop.permute.xlu0 %10024
    %10026 = vrot.lane.b32.xlu0 %v10018, 96
    %v10027 = vpop.permute.xlu0 %10026
    %10028 = vrot.lane.b32.xlu0 %v10019, 96
    %v10029 = vpop.permute.xlu0 %10028
    %10030 = vrot.lane.b32.xlu0 %v10020, 96
    %v10031 = vpop.permute.xlu0 %10030
    %10032 = vrot.lane.b32.xlu0 %v10021, 96
    %v10033 = vpop.permute.xlu0 %10032
    %v10034 = vsel %vm1174, %v10023, %v10025
    %v10035 = vsel %vm1174, %v10025, %v10027
    %v10036 = vsel %vm1174, %v10029, %v10031
    %v10037 = vsel %vm1174, %v10031, %v10033
    %v10042 = vadd.f32 %v9998, %v10034
    %v10043 = vadd.f32 %v9999, %v10035
    %v10044 = vadd.f32 %v10000, %v10036
    %v10045 = vadd.f32 %v10001, %v10037
    %s10046 = sld [smem:[#allocation9 + $0x69]]
    %v10047 = vstv %s10046
    %v10048 = vmul.f32 %v10047, %v6098
    %v10049 = vmul.f32 %v10047, %v6099
    %v10050 = vmul.f32 %v10047, %v6100
    %v10051 = vmul.f32 %v10047, %v6101
    %v10052 = vmul.f32 %v10047, %v6102
    %v10053 = vmul.f32 %v10047, %v6103
    %v10060 = vrot.slane %v10048, 3
    %v10061 = vrot.slane %v10049, 3
    %v10062 = vrot.slane %v10050, 3
    %v10063 = vrot.slane %v10051, 3
    %v10064 = vrot.slane %v10052, 3
    %v10065 = vrot.slane %v10053, 3
    %10066 = vrot.lane.b32.xlu0 %v10060, 96
    %v10067 = vpop.permute.xlu0 %10066
    %10068 = vrot.lane.b32.xlu0 %v10061, 96
    %v10069 = vpop.permute.xlu0 %10068
    %10070 = vrot.lane.b32.xlu0 %v10062, 96
    %v10071 = vpop.permute.xlu0 %10070
    %10072 = vrot.lane.b32.xlu0 %v10063, 96
    %v10073 = vpop.permute.xlu0 %10072
    %10074 = vrot.lane.b32.xlu0 %v10064, 96
    %v10075 = vpop.permute.xlu0 %10074
    %10076 = vrot.lane.b32.xlu0 %v10065, 96
    %v10077 = vpop.permute.xlu0 %10076
    %v10078 = vsel %vm1174, %v10067, %v10069
    %v10079 = vsel %vm1174, %v10069, %v10071
    %v10080 = vsel %vm1174, %v10073, %v10075
    %v10081 = vsel %vm1174, %v10075, %v10077
    %v10086 = vadd.f32 %v10042, %v10078
    %v10087 = vadd.f32 %v10043, %v10079
    %v10088 = vadd.f32 %v10044, %v10080
    %v10089 = vadd.f32 %v10045, %v10081
    %s10090 = sld [smem:[#allocation9 + $0x4f]]
    %v10091 = vstv %s10090
    %v10092 = vmul.f32 %v10091, %v6072
    %v10093 = vmul.f32 %v10091, %v6064
    %v10094 = vmul.f32 %v10091, %v6074
    %v10095 = vmul.f32 %v10091, %v6073
    %v10096 = vmul.f32 %v10091, %v6065
    %v10097 = vmul.f32 %v10091, %v6075
    %10104 = vrot.lane.b32.xlu0 %v10092, 95
    %v10105 = vpop.permute.xlu0 %10104
    %10106 = vrot.lane.b32.xlu0 %v10093, 95
    %v10107 = vpop.permute.xlu0 %10106
    %10108 = vrot.lane.b32.xlu0 %v10094, 95
    %v10109 = vpop.permute.xlu0 %10108
    %10110 = vrot.lane.b32.xlu0 %v10095, 95
    %v10111 = vpop.permute.xlu0 %10110
    %10112 = vrot.lane.b32.xlu0 %v10096, 95
    %v10113 = vpop.permute.xlu0 %10112
    %10114 = vrot.lane.b32.xlu0 %v10097, 95
    %v10115 = vpop.permute.xlu0 %10114
    %v10116 = vsel %vm1345, %v10105, %v10107
    %v10117 = vsel %vm1345, %v10107, %v10109
    %v10118 = vsel %vm1345, %v10111, %v10113
    %v10119 = vsel %vm1345, %v10113, %v10115
    %v10124 = vadd.f32 %v10086, %v10116
    %v10125 = vadd.f32 %v10087, %v10117
    %v10126 = vadd.f32 %v10088, %v10118
    %v10127 = vadd.f32 %v10089, %v10119
    %s10128 = sld [smem:[#allocation9 + $0x58]]
    %v10129 = vstv %s10128
    %v10130 = vmul.f32 %v10129, %v6072
    %v10131 = vmul.f32 %v10129, %v6064
    %v10132 = vmul.f32 %v10129, %v6074
    %v10133 = vmul.f32 %v10129, %v6073
    %v10134 = vmul.f32 %v10129, %v6065
    %v10135 = vmul.f32 %v10129, %v6075
    %v10142 = vrot.slane %v10130, 1
    %v10143 = vrot.slane %v10131, 1
    %v10144 = vrot.slane %v10132, 1
    %v10145 = vrot.slane %v10133, 1
    %v10146 = vrot.slane %v10134, 1
    %v10147 = vrot.slane %v10135, 1
    %10148 = vrot.lane.b32.xlu0 %v10142, 95
    %v10149 = vpop.permute.xlu0 %10148
    %10150 = vrot.lane.b32.xlu0 %v10143, 95
    %v10151 = vpop.permute.xlu0 %10150
    %10152 = vrot.lane.b32.xlu0 %v10144, 95
    %v10153 = vpop.permute.xlu0 %10152
    %10154 = vrot.lane.b32.xlu0 %v10145, 95
    %v10155 = vpop.permute.xlu0 %10154
    %10156 = vrot.lane.b32.xlu0 %v10146, 95
    %v10157 = vpop.permute.xlu0 %10156
    %10158 = vrot.lane.b32.xlu0 %v10147, 95
    %v10159 = vpop.permute.xlu0 %10158
    %v10160 = vsel %vm1345, %v10149, %v10151
    %v10161 = vsel %vm1345, %v10151, %v10153
    %v10162 = vsel %vm1345, %v10155, %v10157
    %v10163 = vsel %vm1345, %v10157, %v10159
    %v10168 = vadd.f32 %v10124, %v10160
    %v10169 = vadd.f32 %v10125, %v10161
    %v10170 = vadd.f32 %v10126, %v10162
    %v10171 = vadd.f32 %v10127, %v10163
    %s10172 = sld [smem:[#allocation9 + $0x61]]
    %v10173 = vstv %s10172
    %v10174 = vmul.f32 %v10173, %v6072
    %v10175 = vmul.f32 %v10173, %v6064
    %v10176 = vmul.f32 %v10173, %v6074
    %v10177 = vmul.f32 %v10173, %v6073
    %v10178 = vmul.f32 %v10173, %v6065
    %v10179 = vmul.f32 %v10173, %v6075
    %v10186 = vrot.slane %v10174, 2
    %v10187 = vrot.slane %v10175, 2
    %v10188 = vrot.slane %v10176, 2
    %v10189 = vrot.slane %v10177, 2
    %v10190 = vrot.slane %v10178, 2
    %v10191 = vrot.slane %v10179, 2
    %10192 = vrot.lane.b32.xlu0 %v10186, 95
    %v10193 = vpop.permute.xlu0 %10192
    %10194 = vrot.lane.b32.xlu0 %v10187, 95
    %v10195 = vpop.permute.xlu0 %10194
    %10196 = vrot.lane.b32.xlu0 %v10188, 95
    %v10197 = vpop.permute.xlu0 %10196
    %10198 = vrot.lane.b32.xlu0 %v10189, 95
    %v10199 = vpop.permute.xlu0 %10198
    %10200 = vrot.lane.b32.xlu0 %v10190, 95
    %v10201 = vpop.permute.xlu0 %10200
    %10202 = vrot.lane.b32.xlu0 %v10191, 95
    %v10203 = vpop.permute.xlu0 %10202
    %v10204 = vsel %vm1345, %v10193, %v10195
    %v10205 = vsel %vm1345, %v10195, %v10197
    %v10206 = vsel %vm1345, %v10199, %v10201
    %v10207 = vsel %vm1345, %v10201, %v10203
    %v10212 = vadd.f32 %v10168, %v10204
    %v10213 = vadd.f32 %v10169, %v10205
    %v10214 = vadd.f32 %v10170, %v10206
    %v10215 = vadd.f32 %v10171, %v10207
    %s10216 = sld [smem:[#allocation9 + $0x6a]]
    %v10217 = vstv %s10216
    %v10218 = vmul.f32 %v10217, %v6072
    %v10219 = vmul.f32 %v10217, %v6064
    %v10220 = vmul.f32 %v10217, %v6074
    %v10221 = vmul.f32 %v10217, %v6073
    %v10222 = vmul.f32 %v10217, %v6065
    %v10223 = vmul.f32 %v10217, %v6075
    %v10230 = vrot.slane %v10218, 3
    %v10231 = vrot.slane %v10219, 3
    %v10232 = vrot.slane %v10220, 3
    %v10233 = vrot.slane %v10221, 3
    %v10234 = vrot.slane %v10222, 3
    %v10235 = vrot.slane %v10223, 3
    %10236 = vrot.lane.b32.xlu0 %v10230, 95
    %v10237 = vpop.permute.xlu0 %10236
    %10238 = vrot.lane.b32.xlu0 %v10231, 95
    %v10239 = vpop.permute.xlu0 %10238
    %10240 = vrot.lane.b32.xlu0 %v10232, 95
    %v10241 = vpop.permute.xlu0 %10240
    %10242 = vrot.lane.b32.xlu0 %v10233, 95
    %v10243 = vpop.permute.xlu0 %10242
    %10244 = vrot.lane.b32.xlu0 %v10234, 95
    %v10245 = vpop.permute.xlu0 %10244
    %10246 = vrot.lane.b32.xlu0 %v10235, 95
    %v10247 = vpop.permute.xlu0 %10246
    %v10248 = vsel %vm1345, %v10237, %v10239
    %v10249 = vsel %vm1345, %v10239, %v10241
    %v10250 = vsel %vm1345, %v10243, %v10245
    %v10251 = vsel %vm1345, %v10245, %v10247
    %v10256 = vadd.f32 %v10212, %v10248
    %v10257 = vadd.f32 %v10213, %v10249
    %v10258 = vadd.f32 %v10214, %v10250
    %v10259 = vadd.f32 %v10215, %v10251
    %s10260 = sld [smem:[#allocation9 + $0x50]]
    %v10261 = vstv %s10260
    %v10262 = vmul.f32 %v10261, %v6104
    %v10263 = vmul.f32 %v10261, %v6105
    %v10264 = vmul.f32 %v10261, %v6106
    %v10265 = vmul.f32 %v10261, %v6107
    %v10266 = vmul.f32 %v10261, %v6108
    %v10267 = vmul.f32 %v10261, %v6109
    %10274 = vrot.lane.b32.xlu0 %v10262, 94
    %v10275 = vpop.permute.xlu0 %10274
    %10276 = vrot.lane.b32.xlu0 %v10263, 94
    %v10277 = vpop.permute.xlu0 %10276
    %10278 = vrot.lane.b32.xlu0 %v10264, 94
    %v10279 = vpop.permute.xlu0 %10278
    %10280 = vrot.lane.b32.xlu0 %v10265, 94
    %v10281 = vpop.permute.xlu0 %10280
    %10282 = vrot.lane.b32.xlu0 %v10266, 94
    %v10283 = vpop.permute.xlu0 %10282
    %10284 = vrot.lane.b32.xlu0 %v10267, 94
    %v10285 = vpop.permute.xlu0 %10284
    %v10286 = vsel %vm1516, %v10275, %v10277
    %v10287 = vsel %vm1516, %v10277, %v10279
    %v10288 = vsel %vm1516, %v10281, %v10283
    %v10289 = vsel %vm1516, %v10283, %v10285
    %v10294 = vadd.f32 %v10256, %v10286
    %v10295 = vadd.f32 %v10257, %v10287
    %v10296 = vadd.f32 %v10258, %v10288
    %v10297 = vadd.f32 %v10259, %v10289
    %s10298 = sld [smem:[#allocation9 + $0x59]]
    %v10299 = vstv %s10298
    %v10300 = vmul.f32 %v10299, %v6104
    %v10301 = vmul.f32 %v10299, %v6105
    %v10302 = vmul.f32 %v10299, %v6106
    %v10303 = vmul.f32 %v10299, %v6107
    %v10304 = vmul.f32 %v10299, %v6108
    %v10305 = vmul.f32 %v10299, %v6109
    %v10312 = vrot.slane %v10300, 1
    %v10313 = vrot.slane %v10301, 1
    %v10314 = vrot.slane %v10302, 1
    %v10315 = vrot.slane %v10303, 1
    %v10316 = vrot.slane %v10304, 1
    %v10317 = vrot.slane %v10305, 1
    %10318 = vrot.lane.b32.xlu0 %v10312, 94
    %v10319 = vpop.permute.xlu0 %10318
    %10320 = vrot.lane.b32.xlu0 %v10313, 94
    %v10321 = vpop.permute.xlu0 %10320
    %10322 = vrot.lane.b32.xlu0 %v10314, 94
    %v10323 = vpop.permute.xlu0 %10322
    %10324 = vrot.lane.b32.xlu0 %v10315, 94
    %v10325 = vpop.permute.xlu0 %10324
    %10326 = vrot.lane.b32.xlu0 %v10316, 94
    %v10327 = vpop.permute.xlu0 %10326
    %10328 = vrot.lane.b32.xlu0 %v10317, 94
    %v10329 = vpop.permute.xlu0 %10328
    %v10330 = vsel %vm1516, %v10319, %v10321
    %v10331 = vsel %vm1516, %v10321, %v10323
    %v10332 = vsel %vm1516, %v10325, %v10327
    %v10333 = vsel %vm1516, %v10327, %v10329
    %v10338 = vadd.f32 %v10294, %v10330
    %v10339 = vadd.f32 %v10295, %v10331
    %v10340 = vadd.f32 %v10296, %v10332
    %v10341 = vadd.f32 %v10297, %v10333
    %s10342 = sld [smem:[#allocation9 + $0x62]]
    %v10343 = vstv %s10342
    %v10344 = vmul.f32 %v10343, %v6104
    %v10345 = vmul.f32 %v10343, %v6105
    %v10346 = vmul.f32 %v10343, %v6106
    %v10347 = vmul.f32 %v10343, %v6107
    %v10348 = vmul.f32 %v10343, %v6108
    %v10349 = vmul.f32 %v10343, %v6109
    %v10356 = vrot.slane %v10344, 2
    %v10357 = vrot.slane %v10345, 2
    %v10358 = vrot.slane %v10346, 2
    %v10359 = vrot.slane %v10347, 2
    %v10360 = vrot.slane %v10348, 2
    %v10361 = vrot.slane %v10349, 2
    %10362 = vrot.lane.b32.xlu0 %v10356, 94
    %v10363 = vpop.permute.xlu0 %10362
    %10364 = vrot.lane.b32.xlu0 %v10357, 94
    %v10365 = vpop.permute.xlu0 %10364
    %10366 = vrot.lane.b32.xlu0 %v10358, 94
    %v10367 = vpop.permute.xlu0 %10366
    %10368 = vrot.lane.b32.xlu0 %v10359, 94
    %v10369 = vpop.permute.xlu0 %10368
    %10370 = vrot.lane.b32.xlu0 %v10360, 94
    %v10371 = vpop.permute.xlu0 %10370
    %10372 = vrot.lane.b32.xlu0 %v10361, 94
    %v10373 = vpop.permute.xlu0 %10372
    %v10374 = vsel %vm1516, %v10363, %v10365
    %v10375 = vsel %vm1516, %v10365, %v10367
    %v10376 = vsel %vm1516, %v10369, %v10371
    %v10377 = vsel %vm1516, %v10371, %v10373
    %v10382 = vadd.f32 %v10338, %v10374
    %v10383 = vadd.f32 %v10339, %v10375
    %v10384 = vadd.f32 %v10340, %v10376
    %v10385 = vadd.f32 %v10341, %v10377
    %s10386 = sld [smem:[#allocation9 + $0x6b]]
    %v10387 = vstv %s10386
    %v10388 = vmul.f32 %v10387, %v6104
    %v10389 = vmul.f32 %v10387, %v6105
    %v10390 = vmul.f32 %v10387, %v6106
    %v10391 = vmul.f32 %v10387, %v6107
    %v10392 = vmul.f32 %v10387, %v6108
    %v10393 = vmul.f32 %v10387, %v6109
    %v10400 = vrot.slane %v10388, 3
    %v10401 = vrot.slane %v10389, 3
    %v10402 = vrot.slane %v10390, 3
    %v10403 = vrot.slane %v10391, 3
    %v10404 = vrot.slane %v10392, 3
    %v10405 = vrot.slane %v10393, 3
    %10406 = vrot.lane.b32.xlu0 %v10400, 94
    %v10407 = vpop.permute.xlu0 %10406
    %10408 = vrot.lane.b32.xlu0 %v10401, 94
    %v10409 = vpop.permute.xlu0 %10408
    %10410 = vrot.lane.b32.xlu0 %v10402, 94
    %v10411 = vpop.permute.xlu0 %10410
    %10412 = vrot.lane.b32.xlu0 %v10403, 94
    %v10413 = vpop.permute.xlu0 %10412
    %10414 = vrot.lane.b32.xlu0 %v10404, 94
    %v10415 = vpop.permute.xlu0 %10414
    %10416 = vrot.lane.b32.xlu0 %v10405, 94
    %v10417 = vpop.permute.xlu0 %10416
    %v10418 = vsel %vm1516, %v10407, %v10409
    %v10419 = vsel %vm1516, %v10409, %v10411
    %v10420 = vsel %vm1516, %v10413, %v10415
    %v10421 = vsel %vm1516, %v10415, %v10417
    %v10426 = vadd.f32 %v10382, %v10418
    %v10427 = vadd.f32 %v10383, %v10419
    %v10428 = vadd.f32 %v10384, %v10420
    %v10429 = vadd.f32 %v10385, %v10421
    %s10430 = sld [smem:[#allocation10 + $0x2]]
    %v10431 = vstv %s10430
    %v10432 = vadd.f32 %v10426, %v10431
    %v10433 = vadd.f32 %v10427, %v10431
    %v10434 = vadd.f32 %v10428, %v10431
    %v10435 = vadd.f32 %v10429, %v10431
    %s10436 = sld [smem:[#allocation9 + $0x6c]]
    %v10437 = vstv %s10436
    %v10438 = vmul.f32 %v10437, %v6076
    %v10439 = vmul.f32 %v10437, %v6077
    %v10440 = vmul.f32 %v10437, %v6078
    %v10441 = vmul.f32 %v10437, %v6079
    %v10442 = vadd.f32 %v10438, 0.0
    %v10443 = vadd.f32 %v10439, 0.0
    %v10444 = vadd.f32 %v10440, 0.0
    %v10445 = vadd.f32 %v10441, 0.0
    %s10446 = sld [smem:[#allocation9 + $0x75]]
    %v10447 = vstv %s10446
    %v10448 = vmul.f32 %v10447, %v6076
    %v10449 = vmul.f32 %v10447, %v6077
    %v10450 = vmul.f32 %v10447, %v6078
    %v10451 = vmul.f32 %v10447, %v6079
    %v10456 = vrot.slane %v10448, 1
    %v10457 = vrot.slane %v10449, 1
    %v10458 = vrot.slane %v10450, 1
    %v10459 = vrot.slane %v10451, 1
    %v10464 = vadd.f32 %v10442, %v10456
    %v10465 = vadd.f32 %v10443, %v10457
    %v10466 = vadd.f32 %v10444, %v10458
    %v10467 = vadd.f32 %v10445, %v10459
    %s10468 = sld [smem:[#allocation9 + $0x7e]]
    %v10469 = vstv %s10468
    %v10470 = vmul.f32 %v10469, %v6076
    %v10471 = vmul.f32 %v10469, %v6077
    %v10472 = vmul.f32 %v10469, %v6078
    %v10473 = vmul.f32 %v10469, %v6079
    %v10478 = vrot.slane %v10470, 2
    %v10479 = vrot.slane %v10471, 2
    %v10480 = vrot.slane %v10472, 2
    %v10481 = vrot.slane %v10473, 2
    %v10486 = vadd.f32 %v10464, %v10478
    %v10487 = vadd.f32 %v10465, %v10479
    %v10488 = vadd.f32 %v10466, %v10480
    %v10489 = vadd.f32 %v10467, %v10481
    %s10490 = sld [smem:[#allocation9 + $0x87]]
    %v10491 = vstv %s10490
    %v10492 = vmul.f32 %v10491, %v6076
    %v10493 = vmul.f32 %v10491, %v6077
    %v10494 = vmul.f32 %v10491, %v6078
    %v10495 = vmul.f32 %v10491, %v6079
    %v10500 = vrot.slane %v10492, 3
    %v10501 = vrot.slane %v10493, 3
    %v10502 = vrot.slane %v10494, 3
    %v10503 = vrot.slane %v10495, 3
    %v10508 = vadd.f32 %v10486, %v10500
    %v10509 = vadd.f32 %v10487, %v10501
    %v10510 = vadd.f32 %v10488, %v10502
    %v10511 = vadd.f32 %v10489, %v10503
    %s10512 = sld [smem:[#allocation9 + $0x6d]]
    %v10513 = vstv %s10512
    %v10514 = vmul.f32 %v10513, %v6072
    %v10515 = vmul.f32 %v10513, %v6064
    %v10516 = vmul.f32 %v10513, %v6074
    %v10517 = vmul.f32 %v10513, %v6073
    %v10518 = vmul.f32 %v10513, %v6065
    %v10519 = vmul.f32 %v10513, %v6075
    %10526 = vrot.lane.b32.xlu0 %v10514, 127
    %v10527 = vpop.permute.xlu0 %10526
    %10528 = vrot.lane.b32.xlu0 %v10515, 127
    %v10529 = vpop.permute.xlu0 %10528
    %10530 = vrot.lane.b32.xlu0 %v10516, 127
    %v10531 = vpop.permute.xlu0 %10530
    %10532 = vrot.lane.b32.xlu0 %v10517, 127
    %v10533 = vpop.permute.xlu0 %10532
    %10534 = vrot.lane.b32.xlu0 %v10518, 127
    %v10535 = vpop.permute.xlu0 %10534
    %10536 = vrot.lane.b32.xlu0 %v10519, 127
    %v10537 = vpop.permute.xlu0 %10536
    %v10538 = vsel %vm319, %v10527, %v10529
    %v10539 = vsel %vm319, %v10529, %v10531
    %v10540 = vsel %vm319, %v10533, %v10535
    %v10541 = vsel %vm319, %v10535, %v10537
    %v10546 = vadd.f32 %v10508, %v10538
    %v10547 = vadd.f32 %v10509, %v10539
    %v10548 = vadd.f32 %v10510, %v10540
    %v10549 = vadd.f32 %v10511, %v10541
    %s10550 = sld [smem:[#allocation9 + $0x76]]
    %v10551 = vstv %s10550
    %v10552 = vmul.f32 %v10551, %v6072
    %v10553 = vmul.f32 %v10551, %v6064
    %v10554 = vmul.f32 %v10551, %v6074
    %v10555 = vmul.f32 %v10551, %v6073
    %v10556 = vmul.f32 %v10551, %v6065
    %v10557 = vmul.f32 %v10551, %v6075
    %v10564 = vrot.slane %v10552, 1
    %v10565 = vrot.slane %v10553, 1
    %v10566 = vrot.slane %v10554, 1
    %v10567 = vrot.slane %v10555, 1
    %v10568 = vrot.slane %v10556, 1
    %v10569 = vrot.slane %v10557, 1
    %10570 = vrot.lane.b32.xlu0 %v10564, 127
    %v10571 = vpop.permute.xlu0 %10570
    %10572 = vrot.lane.b32.xlu0 %v10565, 127
    %v10573 = vpop.permute.xlu0 %10572
    %10574 = vrot.lane.b32.xlu0 %v10566, 127
    %v10575 = vpop.permute.xlu0 %10574
    %10576 = vrot.lane.b32.xlu0 %v10567, 127
    %v10577 = vpop.permute.xlu0 %10576
    %10578 = vrot.lane.b32.xlu0 %v10568, 127
    %v10579 = vpop.permute.xlu0 %10578
    %10580 = vrot.lane.b32.xlu0 %v10569, 127
    %v10581 = vpop.permute.xlu0 %10580
    %v10582 = vsel %vm319, %v10571, %v10573
    %v10583 = vsel %vm319, %v10573, %v10575
    %v10584 = vsel %vm319, %v10577, %v10579
    %v10585 = vsel %vm319, %v10579, %v10581
    %v10590 = vadd.f32 %v10546, %v10582
    %v10591 = vadd.f32 %v10547, %v10583
    %v10592 = vadd.f32 %v10548, %v10584
    %v10593 = vadd.f32 %v10549, %v10585
    %s10594 = sld [smem:[#allocation9 + $0x7f]]
    %v10595 = vstv %s10594
    %v10596 = vmul.f32 %v10595, %v6072
    %v10597 = vmul.f32 %v10595, %v6064
    %v10598 = vmul.f32 %v10595, %v6074
    %v10599 = vmul.f32 %v10595, %v6073
    %v10600 = vmul.f32 %v10595, %v6065
    %v10601 = vmul.f32 %v10595, %v6075
    %v10608 = vrot.slane %v10596, 2
    %v10609 = vrot.slane %v10597, 2
    %v10610 = vrot.slane %v10598, 2
    %v10611 = vrot.slane %v10599, 2
    %v10612 = vrot.slane %v10600, 2
    %v10613 = vrot.slane %v10601, 2
    %10614 = vrot.lane.b32.xlu0 %v10608, 127
    %v10615 = vpop.permute.xlu0 %10614
    %10616 = vrot.lane.b32.xlu0 %v10609, 127
    %v10617 = vpop.permute.xlu0 %10616
    %10618 = vrot.lane.b32.xlu0 %v10610, 127
    %v10619 = vpop.permute.xlu0 %10618
    %10620 = vrot.lane.b32.xlu0 %v10611, 127
    %v10621 = vpop.permute.xlu0 %10620
    %10622 = vrot.lane.b32.xlu0 %v10612, 127
    %v10623 = vpop.permute.xlu0 %10622
    %10624 = vrot.lane.b32.xlu0 %v10613, 127
    %v10625 = vpop.permute.xlu0 %10624
    %v10626 = vsel %vm319, %v10615, %v10617
    %v10627 = vsel %vm319, %v10617, %v10619
    %v10628 = vsel %vm319, %v10621, %v10623
    %v10629 = vsel %vm319, %v10623, %v10625
    %v10634 = vadd.f32 %v10590, %v10626
    %v10635 = vadd.f32 %v10591, %v10627
    %v10636 = vadd.f32 %v10592, %v10628
    %v10637 = vadd.f32 %v10593, %v10629
    %s10638 = sld [smem:[#allocation9 + $0x88]]
    %v10639 = vstv %s10638
    %v10640 = vmul.f32 %v10639, %v6072
    %v10641 = vmul.f32 %v10639, %v6064
    %v10642 = vmul.f32 %v10639, %v6074
    %v10643 = vmul.f32 %v10639, %v6073
    %v10644 = vmul.f32 %v10639, %v6065
    %v10645 = vmul.f32 %v10639, %v6075
    %v10652 = vrot.slane %v10640, 3
    %v10653 = vrot.slane %v10641, 3
    %v10654 = vrot.slane %v10642, 3
    %v10655 = vrot.slane %v10643, 3
    %v10656 = vrot.slane %v10644, 3
    %v10657 = vrot.slane %v10645, 3
    %10658 = vrot.lane.b32.xlu0 %v10652, 127
    %v10659 = vpop.permute.xlu0 %10658
    %10660 = vrot.lane.b32.xlu0 %v10653, 127
    %v10661 = vpop.permute.xlu0 %10660
    %10662 = vrot.lane.b32.xlu0 %v10654, 127
    %v10663 = vpop.permute.xlu0 %10662
    %10664 = vrot.lane.b32.xlu0 %v10655, 127
    %v10665 = vpop.permute.xlu0 %10664
    %10666 = vrot.lane.b32.xlu0 %v10656, 127
    %v10667 = vpop.permute.xlu0 %10666
    %10668 = vrot.lane.b32.xlu0 %v10657, 127
    %v10669 = vpop.permute.xlu0 %10668
    %v10670 = vsel %vm319, %v10659, %v10661
    %v10671 = vsel %vm319, %v10661, %v10663
    %v10672 = vsel %vm319, %v10665, %v10667
    %v10673 = vsel %vm319, %v10667, %v10669
    %v10678 = vadd.f32 %v10634, %v10670
    %v10679 = vadd.f32 %v10635, %v10671
    %v10680 = vadd.f32 %v10636, %v10672
    %v10681 = vadd.f32 %v10637, %v10673
    %s10682 = sld [smem:[#allocation9 + $0x6e]]
    %v10683 = vstv %s10682
    %v10684 = vmul.f32 %v10683, %v6080
    %v10685 = vmul.f32 %v10683, %v6081
    %v10686 = vmul.f32 %v10683, %v6082
    %v10687 = vmul.f32 %v10683, %v6083
    %v10688 = vmul.f32 %v10683, %v6084
    %v10689 = vmul.f32 %v10683, %v6085
    %10696 = vrot.lane.b32.xlu0 %v10684, 126
    %v10697 = vpop.permute.xlu0 %10696
    %10698 = vrot.lane.b32.xlu0 %v10685, 126
    %v10699 = vpop.permute.xlu0 %10698
    %10700 = vrot.lane.b32.xlu0 %v10686, 126
    %v10701 = vpop.permute.xlu0 %10700
    %10702 = vrot.lane.b32.xlu0 %v10687, 126
    %v10703 = vpop.permute.xlu0 %10702
    %10704 = vrot.lane.b32.xlu0 %v10688, 126
    %v10705 = vpop.permute.xlu0 %10704
    %10706 = vrot.lane.b32.xlu0 %v10689, 126
    %v10707 = vpop.permute.xlu0 %10706
    %v10708 = vsel %vm490, %v10697, %v10699
    %v10709 = vsel %vm490, %v10699, %v10701
    %v10710 = vsel %vm490, %v10703, %v10705
    %v10711 = vsel %vm490, %v10705, %v10707
    %v10716 = vadd.f32 %v10678, %v10708
    %v10717 = vadd.f32 %v10679, %v10709
    %v10718 = vadd.f32 %v10680, %v10710
    %v10719 = vadd.f32 %v10681, %v10711
    %s10720 = sld [smem:[#allocation9 + $0x77]]
    %v10721 = vstv %s10720
    %v10722 = vmul.f32 %v10721, %v6080
    %v10723 = vmul.f32 %v10721, %v6081
    %v10724 = vmul.f32 %v10721, %v6082
    %v10725 = vmul.f32 %v10721, %v6083
    %v10726 = vmul.f32 %v10721, %v6084
    %v10727 = vmul.f32 %v10721, %v6085
    %v10734 = vrot.slane %v10722, 1
    %v10735 = vrot.slane %v10723, 1
    %v10736 = vrot.slane %v10724, 1
    %v10737 = vrot.slane %v10725, 1
    %v10738 = vrot.slane %v10726, 1
    %v10739 = vrot.slane %v10727, 1
    %10740 = vrot.lane.b32.xlu0 %v10734, 126
    %v10741 = vpop.permute.xlu0 %10740
    %10742 = vrot.lane.b32.xlu0 %v10735, 126
    %v10743 = vpop.permute.xlu0 %10742
    %10744 = vrot.lane.b32.xlu0 %v10736, 126
    %v10745 = vpop.permute.xlu0 %10744
    %10746 = vrot.lane.b32.xlu0 %v10737, 126
    %v10747 = vpop.permute.xlu0 %10746
    %10748 = vrot.lane.b32.xlu0 %v10738, 126
    %v10749 = vpop.permute.xlu0 %10748
    %10750 = vrot.lane.b32.xlu0 %v10739, 126
    %v10751 = vpop.permute.xlu0 %10750
    %v10752 = vsel %vm490, %v10741, %v10743
    %v10753 = vsel %vm490, %v10743, %v10745
    %v10754 = vsel %vm490, %v10747, %v10749
    %v10755 = vsel %vm490, %v10749, %v10751
    %v10760 = vadd.f32 %v10716, %v10752
    %v10761 = vadd.f32 %v10717, %v10753
    %v10762 = vadd.f32 %v10718, %v10754
    %v10763 = vadd.f32 %v10719, %v10755
    %s10764 = sld [smem:[#allocation9 + $0x80]]
    %v10765 = vstv %s10764
    %v10766 = vmul.f32 %v10765, %v6080
    %v10767 = vmul.f32 %v10765, %v6081
    %v10768 = vmul.f32 %v10765, %v6082
    %v10769 = vmul.f32 %v10765, %v6083
    %v10770 = vmul.f32 %v10765, %v6084
    %v10771 = vmul.f32 %v10765, %v6085
    %v10778 = vrot.slane %v10766, 2
    %v10779 = vrot.slane %v10767, 2
    %v10780 = vrot.slane %v10768, 2
    %v10781 = vrot.slane %v10769, 2
    %v10782 = vrot.slane %v10770, 2
    %v10783 = vrot.slane %v10771, 2
    %10784 = vrot.lane.b32.xlu0 %v10778, 126
    %v10785 = vpop.permute.xlu0 %10784
    %10786 = vrot.lane.b32.xlu0 %v10779, 126
    %v10787 = vpop.permute.xlu0 %10786
    %10788 = vrot.lane.b32.xlu0 %v10780, 126
    %v10789 = vpop.permute.xlu0 %10788
    %10790 = vrot.lane.b32.xlu0 %v10781, 126
    %v10791 = vpop.permute.xlu0 %10790
    %10792 = vrot.lane.b32.xlu0 %v10782, 126
    %v10793 = vpop.permute.xlu0 %10792
    %10794 = vrot.lane.b32.xlu0 %v10783, 126
    %v10795 = vpop.permute.xlu0 %10794
    %v10796 = vsel %vm490, %v10785, %v10787
    %v10797 = vsel %vm490, %v10787, %v10789
    %v10798 = vsel %vm490, %v10791, %v10793
    %v10799 = vsel %vm490, %v10793, %v10795
    %v10804 = vadd.f32 %v10760, %v10796
    %v10805 = vadd.f32 %v10761, %v10797
    %v10806 = vadd.f32 %v10762, %v10798
    %v10807 = vadd.f32 %v10763, %v10799
    %s10808 = sld [smem:[#allocation9 + $0x89]]
    %v10809 = vstv %s10808
    %v10810 = vmul.f32 %v10809, %v6080
    %v10811 = vmul.f32 %v10809, %v6081
    %v10812 = vmul.f32 %v10809, %v6082
    %v10813 = vmul.f32 %v10809, %v6083
    %v10814 = vmul.f32 %v10809, %v6084
    %v10815 = vmul.f32 %v10809, %v6085
    %v10822 = vrot.slane %v10810, 3
    %v10823 = vrot.slane %v10811, 3
    %v10824 = vrot.slane %v10812, 3
    %v10825 = vrot.slane %v10813, 3
    %v10826 = vrot.slane %v10814, 3
    %v10827 = vrot.slane %v10815, 3
    %10828 = vrot.lane.b32.xlu0 %v10822, 126
    %v10829 = vpop.permute.xlu0 %10828
    %10830 = vrot.lane.b32.xlu0 %v10823, 126
    %v10831 = vpop.permute.xlu0 %10830
    %10832 = vrot.lane.b32.xlu0 %v10824, 126
    %v10833 = vpop.permute.xlu0 %10832
    %10834 = vrot.lane.b32.xlu0 %v10825, 126
    %v10835 = vpop.permute.xlu0 %10834
    %10836 = vrot.lane.b32.xlu0 %v10826, 126
    %v10837 = vpop.permute.xlu0 %10836
    %10838 = vrot.lane.b32.xlu0 %v10827, 126
    %v10839 = vpop.permute.xlu0 %10838
    %v10840 = vsel %vm490, %v10829, %v10831
    %v10841 = vsel %vm490, %v10831, %v10833
    %v10842 = vsel %vm490, %v10835, %v10837
    %v10843 = vsel %vm490, %v10837, %v10839
    %v10848 = vadd.f32 %v10804, %v10840
    %v10849 = vadd.f32 %v10805, %v10841
    %v10850 = vadd.f32 %v10806, %v10842
    %v10851 = vadd.f32 %v10807, %v10843
    %s10852 = sld [smem:[#allocation9 + $0x6f]]
    %v10853 = vstv %s10852
    %v10854 = vmul.f32 %v10853, %v6086
    %v10855 = vmul.f32 %v10853, %v6087
    %v10856 = vmul.f32 %v10853, %v6088
    %v10857 = vmul.f32 %v10853, %v6089
    %v10858 = vmul.f32 %v10853, %v6090
    %v10859 = vmul.f32 %v10853, %v6091
    %10866 = vrot.lane.b32.xlu0 %v10854, 112
    %v10867 = vpop.permute.xlu0 %10866
    %10868 = vrot.lane.b32.xlu0 %v10855, 112
    %v10869 = vpop.permute.xlu0 %10868
    %10870 = vrot.lane.b32.xlu0 %v10856, 112
    %v10871 = vpop.permute.xlu0 %10870
    %10872 = vrot.lane.b32.xlu0 %v10857, 112
    %v10873 = vpop.permute.xlu0 %10872
    %10874 = vrot.lane.b32.xlu0 %v10858, 112
    %v10875 = vpop.permute.xlu0 %10874
    %10876 = vrot.lane.b32.xlu0 %v10859, 112
    %v10877 = vpop.permute.xlu0 %10876
    %v10878 = vsel %vm661, %v10867, %v10869
    %v10879 = vsel %vm661, %v10869, %v10871
    %v10880 = vsel %vm661, %v10873, %v10875
    %v10881 = vsel %vm661, %v10875, %v10877
    %v10886 = vadd.f32 %v10848, %v10878
    %v10887 = vadd.f32 %v10849, %v10879
    %v10888 = vadd.f32 %v10850, %v10880
    %v10889 = vadd.f32 %v10851, %v10881
    %s10890 = sld [smem:[#allocation9 + $0x78]]
    %v10891 = vstv %s10890
    %v10892 = vmul.f32 %v10891, %v6086
    %v10893 = vmul.f32 %v10891, %v6087
    %v10894 = vmul.f32 %v10891, %v6088
    %v10895 = vmul.f32 %v10891, %v6089
    %v10896 = vmul.f32 %v10891, %v6090
    %v10897 = vmul.f32 %v10891, %v6091
    %v10904 = vrot.slane %v10892, 1
    %v10905 = vrot.slane %v10893, 1
    %v10906 = vrot.slane %v10894, 1
    %v10907 = vrot.slane %v10895, 1
    %v10908 = vrot.slane %v10896, 1
    %v10909 = vrot.slane %v10897, 1
    %10910 = vrot.lane.b32.xlu0 %v10904, 112
    %v10911 = vpop.permute.xlu0 %10910
    %10912 = vrot.lane.b32.xlu0 %v10905, 112
    %v10913 = vpop.permute.xlu0 %10912
    %10914 = vrot.lane.b32.xlu0 %v10906, 112
    %v10915 = vpop.permute.xlu0 %10914
    %10916 = vrot.lane.b32.xlu0 %v10907, 112
    %v10917 = vpop.permute.xlu0 %10916
    %10918 = vrot.lane.b32.xlu0 %v10908, 112
    %v10919 = vpop.permute.xlu0 %10918
    %10920 = vrot.lane.b32.xlu0 %v10909, 112
    %v10921 = vpop.permute.xlu0 %10920
    %v10922 = vsel %vm661, %v10911, %v10913
    %v10923 = vsel %vm661, %v10913, %v10915
    %v10924 = vsel %vm661, %v10917, %v10919
    %v10925 = vsel %vm661, %v10919, %v10921
    %v10930 = vadd.f32 %v10886, %v10922
    %v10931 = vadd.f32 %v10887, %v10923
    %v10932 = vadd.f32 %v10888, %v10924
    %v10933 = vadd.f32 %v10889, %v10925
    %s10934 = sld [smem:[#allocation9 + $0x81]]
    %v10935 = vstv %s10934
    %v10936 = vmul.f32 %v10935, %v6086
    %v10937 = vmul.f32 %v10935, %v6087
    %v10938 = vmul.f32 %v10935, %v6088
    %v10939 = vmul.f32 %v10935, %v6089
    %v10940 = vmul.f32 %v10935, %v6090
    %v10941 = vmul.f32 %v10935, %v6091
    %v10948 = vrot.slane %v10936, 2
    %v10949 = vrot.slane %v10937, 2
    %v10950 = vrot.slane %v10938, 2
    %v10951 = vrot.slane %v10939, 2
    %v10952 = vrot.slane %v10940, 2
    %v10953 = vrot.slane %v10941, 2
    %10954 = vrot.lane.b32.xlu0 %v10948, 112
    %v10955 = vpop.permute.xlu0 %10954
    %10956 = vrot.lane.b32.xlu0 %v10949, 112
    %v10957 = vpop.permute.xlu0 %10956
    %10958 = vrot.lane.b32.xlu0 %v10950, 112
    %v10959 = vpop.permute.xlu0 %10958
    %10960 = vrot.lane.b32.xlu0 %v10951, 112
    %v10961 = vpop.permute.xlu0 %10960
    %10962 = vrot.lane.b32.xlu0 %v10952, 112
    %v10963 = vpop.permute.xlu0 %10962
    %10964 = vrot.lane.b32.xlu0 %v10953, 112
    %v10965 = vpop.permute.xlu0 %10964
    %v10966 = vsel %vm661, %v10955, %v10957
    %v10967 = vsel %vm661, %v10957, %v10959
    %v10968 = vsel %vm661, %v10961, %v10963
    %v10969 = vsel %vm661, %v10963, %v10965
    %v10974 = vadd.f32 %v10930, %v10966
    %v10975 = vadd.f32 %v10931, %v10967
    %v10976 = vadd.f32 %v10932, %v10968
    %v10977 = vadd.f32 %v10933, %v10969
    %s10978 = sld [smem:[#allocation9 + $0x8a]]
    %v10979 = vstv %s10978
    %v10980 = vmul.f32 %v10979, %v6086
    %v10981 = vmul.f32 %v10979, %v6087
    %v10982 = vmul.f32 %v10979, %v6088
    %v10983 = vmul.f32 %v10979, %v6089
    %v10984 = vmul.f32 %v10979, %v6090
    %v10985 = vmul.f32 %v10979, %v6091
    %v10992 = vrot.slane %v10980, 3
    %v10993 = vrot.slane %v10981, 3
    %v10994 = vrot.slane %v10982, 3
    %v10995 = vrot.slane %v10983, 3
    %v10996 = vrot.slane %v10984, 3
    %v10997 = vrot.slane %v10985, 3
    %10998 = vrot.lane.b32.xlu0 %v10992, 112
    %v10999 = vpop.permute.xlu0 %10998
    %11000 = vrot.lane.b32.xlu0 %v10993, 112
    %v11001 = vpop.permute.xlu0 %11000
    %11002 = vrot.lane.b32.xlu0 %v10994, 112
    %v11003 = vpop.permute.xlu0 %11002
    %11004 = vrot.lane.b32.xlu0 %v10995, 112
    %v11005 = vpop.permute.xlu0 %11004
    %11006 = vrot.lane.b32.xlu0 %v10996, 112
    %v11007 = vpop.permute.xlu0 %11006
    %11008 = vrot.lane.b32.xlu0 %v10997, 112
    %v11009 = vpop.permute.xlu0 %11008
    %v11010 = vsel %vm661, %v10999, %v11001
    %v11011 = vsel %vm661, %v11001, %v11003
    %v11012 = vsel %vm661, %v11005, %v11007
    %v11013 = vsel %vm661, %v11007, %v11009
    %v11018 = vadd.f32 %v10974, %v11010
    %v11019 = vadd.f32 %v10975, %v11011
    %v11020 = vadd.f32 %v10976, %v11012
    %v11021 = vadd.f32 %v10977, %v11013
    %s11022 = sld [smem:[#allocation9 + $0x70]]
    %v11023 = vstv %s11022
    %v11024 = vmul.f32 %v11023, %v6072
    %v11025 = vmul.f32 %v11023, %v6064
    %v11026 = vmul.f32 %v11023, %v6074
    %v11027 = vmul.f32 %v11023, %v6073
    %v11028 = vmul.f32 %v11023, %v6065
    %v11029 = vmul.f32 %v11023, %v6075
    %11036 = vrot.lane.b32.xlu0 %v11024, 111
    %v11037 = vpop.permute.xlu0 %11036
    %11038 = vrot.lane.b32.xlu0 %v11025, 111
    %v11039 = vpop.permute.xlu0 %11038
    %11040 = vrot.lane.b32.xlu0 %v11026, 111
    %v11041 = vpop.permute.xlu0 %11040
    %11042 = vrot.lane.b32.xlu0 %v11027, 111
    %v11043 = vpop.permute.xlu0 %11042
    %11044 = vrot.lane.b32.xlu0 %v11028, 111
    %v11045 = vpop.permute.xlu0 %11044
    %11046 = vrot.lane.b32.xlu0 %v11029, 111
    %v11047 = vpop.permute.xlu0 %11046
    %v11048 = vsel %vm832, %v11037, %v11039
    %v11049 = vsel %vm832, %v11039, %v11041
    %v11050 = vsel %vm832, %v11043, %v11045
    %v11051 = vsel %vm832, %v11045, %v11047
    %v11056 = vadd.f32 %v11018, %v11048
    %v11057 = vadd.f32 %v11019, %v11049
    %v11058 = vadd.f32 %v11020, %v11050
    %v11059 = vadd.f32 %v11021, %v11051
    %s11060 = sld [smem:[#allocation9 + $0x79]]
    %v11061 = vstv %s11060
    %v11062 = vmul.f32 %v11061, %v6072
    %v11063 = vmul.f32 %v11061, %v6064
    %v11064 = vmul.f32 %v11061, %v6074
    %v11065 = vmul.f32 %v11061, %v6073
    %v11066 = vmul.f32 %v11061, %v6065
    %v11067 = vmul.f32 %v11061, %v6075
    %v11074 = vrot.slane %v11062, 1
    %v11075 = vrot.slane %v11063, 1
    %v11076 = vrot.slane %v11064, 1
    %v11077 = vrot.slane %v11065, 1
    %v11078 = vrot.slane %v11066, 1
    %v11079 = vrot.slane %v11067, 1
    %11080 = vrot.lane.b32.xlu0 %v11074, 111
    %v11081 = vpop.permute.xlu0 %11080
    %11082 = vrot.lane.b32.xlu0 %v11075, 111
    %v11083 = vpop.permute.xlu0 %11082
    %11084 = vrot.lane.b32.xlu0 %v11076, 111
    %v11085 = vpop.permute.xlu0 %11084
    %11086 = vrot.lane.b32.xlu0 %v11077, 111
    %v11087 = vpop.permute.xlu0 %11086
    %11088 = vrot.lane.b32.xlu0 %v11078, 111
    %v11089 = vpop.permute.xlu0 %11088
    %11090 = vrot.lane.b32.xlu0 %v11079, 111
    %v11091 = vpop.permute.xlu0 %11090
    %v11092 = vsel %vm832, %v11081, %v11083
    %v11093 = vsel %vm832, %v11083, %v11085
    %v11094 = vsel %vm832, %v11087, %v11089
    %v11095 = vsel %vm832, %v11089, %v11091
    %v11100 = vadd.f32 %v11056, %v11092
    %v11101 = vadd.f32 %v11057, %v11093
    %v11102 = vadd.f32 %v11058, %v11094
    %v11103 = vadd.f32 %v11059, %v11095
    %s11104 = sld [smem:[#allocation9 + $0x82]]
    %v11105 = vstv %s11104
    %v11106 = vmul.f32 %v11105, %v6072
    %v11107 = vmul.f32 %v11105, %v6064
    %v11108 = vmul.f32 %v11105, %v6074
    %v11109 = vmul.f32 %v11105, %v6073
    %v11110 = vmul.f32 %v11105, %v6065
    %v11111 = vmul.f32 %v11105, %v6075
    %v11118 = vrot.slane %v11106, 2
    %v11119 = vrot.slane %v11107, 2
    %v11120 = vrot.slane %v11108, 2
    %v11121 = vrot.slane %v11109, 2
    %v11122 = vrot.slane %v11110, 2
    %v11123 = vrot.slane %v11111, 2
    %11124 = vrot.lane.b32.xlu0 %v11118, 111
    %v11125 = vpop.permute.xlu0 %11124
    %11126 = vrot.lane.b32.xlu0 %v11119, 111
    %v11127 = vpop.permute.xlu0 %11126
    %11128 = vrot.lane.b32.xlu0 %v11120, 111
    %v11129 = vpop.permute.xlu0 %11128
    %11130 = vrot.lane.b32.xlu0 %v11121, 111
    %v11131 = vpop.permute.xlu0 %11130
    %11132 = vrot.lane.b32.xlu0 %v11122, 111
    %v11133 = vpop.permute.xlu0 %11132
    %11134 = vrot.lane.b32.xlu0 %v11123, 111
    %v11135 = vpop.permute.xlu0 %11134
    %v11136 = vsel %vm832, %v11125, %v11127
    %v11137 = vsel %vm832, %v11127, %v11129
    %v11138 = vsel %vm832, %v11131, %v11133
    %v11139 = vsel %vm832, %v11133, %v11135
    %v11144 = vadd.f32 %v11100, %v11136
    %v11145 = vadd.f32 %v11101, %v11137
    %v11146 = vadd.f32 %v11102, %v11138
    %v11147 = vadd.f32 %v11103, %v11139
    %s11148 = sld [smem:[#allocation9 + $0x8b]]
    %v11149 = vstv %s11148
    %v11150 = vmul.f32 %v11149, %v6072
    %v11151 = vmul.f32 %v11149, %v6064
    %v11152 = vmul.f32 %v11149, %v6074
    %v11153 = vmul.f32 %v11149, %v6073
    %v11154 = vmul.f32 %v11149, %v6065
    %v11155 = vmul.f32 %v11149, %v6075
    %v11162 = vrot.slane %v11150, 3
    %v11163 = vrot.slane %v11151, 3
    %v11164 = vrot.slane %v11152, 3
    %v11165 = vrot.slane %v11153, 3
    %v11166 = vrot.slane %v11154, 3
    %v11167 = vrot.slane %v11155, 3
    %11168 = vrot.lane.b32.xlu0 %v11162, 111
    %v11169 = vpop.permute.xlu0 %11168
    %11170 = vrot.lane.b32.xlu0 %v11163, 111
    %v11171 = vpop.permute.xlu0 %11170
    %11172 = vrot.lane.b32.xlu0 %v11164, 111
    %v11173 = vpop.permute.xlu0 %11172
    %11174 = vrot.lane.b32.xlu0 %v11165, 111
    %v11175 = vpop.permute.xlu0 %11174
    %11176 = vrot.lane.b32.xlu0 %v11166, 111
    %v11177 = vpop.permute.xlu0 %11176
    %11178 = vrot.lane.b32.xlu0 %v11167, 111
    %v11179 = vpop.permute.xlu0 %11178
    %v11180 = vsel %vm832, %v11169, %v11171
    %v11181 = vsel %vm832, %v11171, %v11173
    %v11182 = vsel %vm832, %v11175, %v11177
    %v11183 = vsel %vm832, %v11177, %v11179
    %v11188 = vadd.f32 %v11144, %v11180
    %v11189 = vadd.f32 %v11145, %v11181
    %v11190 = vadd.f32 %v11146, %v11182
    %v11191 = vadd.f32 %v11147, %v11183
    %s11192 = sld [smem:[#allocation9 + $0x71]]
    %v11193 = vstv %s11192
    %v11194 = vmul.f32 %v11193, %v6092
    %v11195 = vmul.f32 %v11193, %v6093
    %v11196 = vmul.f32 %v11193, %v6094
    %v11197 = vmul.f32 %v11193, %v6095
    %v11198 = vmul.f32 %v11193, %v6096
    %v11199 = vmul.f32 %v11193, %v6097
    %11206 = vrot.lane.b32.xlu0 %v11194, 110
    %v11207 = vpop.permute.xlu0 %11206
    %11208 = vrot.lane.b32.xlu0 %v11195, 110
    %v11209 = vpop.permute.xlu0 %11208
    %11210 = vrot.lane.b32.xlu0 %v11196, 110
    %v11211 = vpop.permute.xlu0 %11210
    %11212 = vrot.lane.b32.xlu0 %v11197, 110
    %v11213 = vpop.permute.xlu0 %11212
    %11214 = vrot.lane.b32.xlu0 %v11198, 110
    %v11215 = vpop.permute.xlu0 %11214
    %11216 = vrot.lane.b32.xlu0 %v11199, 110
    %v11217 = vpop.permute.xlu0 %11216
    %v11218 = vsel %vm1003, %v11207, %v11209
    %v11219 = vsel %vm1003, %v11209, %v11211
    %v11220 = vsel %vm1003, %v11213, %v11215
    %v11221 = vsel %vm1003, %v11215, %v11217
    %v11226 = vadd.f32 %v11188, %v11218
    %v11227 = vadd.f32 %v11189, %v11219
    %v11228 = vadd.f32 %v11190, %v11220
    %v11229 = vadd.f32 %v11191, %v11221
    %s11230 = sld [smem:[#allocation9 + $0x7a]]
    %v11231 = vstv %s11230
    %v11232 = vmul.f32 %v11231, %v6092
    %v11233 = vmul.f32 %v11231, %v6093
    %v11234 = vmul.f32 %v11231, %v6094
    %v11235 = vmul.f32 %v11231, %v6095
    %v11236 = vmul.f32 %v11231, %v6096
    %v11237 = vmul.f32 %v11231, %v6097
    %v11244 = vrot.slane %v11232, 1
    %v11245 = vrot.slane %v11233, 1
    %v11246 = vrot.slane %v11234, 1
    %v11247 = vrot.slane %v11235, 1
    %v11248 = vrot.slane %v11236, 1
    %v11249 = vrot.slane %v11237, 1
    %11250 = vrot.lane.b32.xlu0 %v11244, 110
    %v11251 = vpop.permute.xlu0 %11250
    %11252 = vrot.lane.b32.xlu0 %v11245, 110
    %v11253 = vpop.permute.xlu0 %11252
    %11254 = vrot.lane.b32.xlu0 %v11246, 110
    %v11255 = vpop.permute.xlu0 %11254
    %11256 = vrot.lane.b32.xlu0 %v11247, 110
    %v11257 = vpop.permute.xlu0 %11256
    %11258 = vrot.lane.b32.xlu0 %v11248, 110
    %v11259 = vpop.permute.xlu0 %11258
    %11260 = vrot.lane.b32.xlu0 %v11249, 110
    %v11261 = vpop.permute.xlu0 %11260
    %v11262 = vsel %vm1003, %v11251, %v11253
    %v11263 = vsel %vm1003, %v11253, %v11255
    %v11264 = vsel %vm1003, %v11257, %v11259
    %v11265 = vsel %vm1003, %v11259, %v11261
    %v11270 = vadd.f32 %v11226, %v11262
    %v11271 = vadd.f32 %v11227, %v11263
    %v11272 = vadd.f32 %v11228, %v11264
    %v11273 = vadd.f32 %v11229, %v11265
    %s11274 = sld [smem:[#allocation9 + $0x83]]
    %v11275 = vstv %s11274
    %v11276 = vmul.f32 %v11275, %v6092
    %v11277 = vmul.f32 %v11275, %v6093
    %v11278 = vmul.f32 %v11275, %v6094
    %v11279 = vmul.f32 %v11275, %v6095
    %v11280 = vmul.f32 %v11275, %v6096
    %v11281 = vmul.f32 %v11275, %v6097
    %v11288 = vrot.slane %v11276, 2
    %v11289 = vrot.slane %v11277, 2
    %v11290 = vrot.slane %v11278, 2
    %v11291 = vrot.slane %v11279, 2
    %v11292 = vrot.slane %v11280, 2
    %v11293 = vrot.slane %v11281, 2
    %11294 = vrot.lane.b32.xlu0 %v11288, 110
    %v11295 = vpop.permute.xlu0 %11294
    %11296 = vrot.lane.b32.xlu0 %v11289, 110
    %v11297 = vpop.permute.xlu0 %11296
    %11298 = vrot.lane.b32.xlu0 %v11290, 110
    %v11299 = vpop.permute.xlu0 %11298
    %11300 = vrot.lane.b32.xlu0 %v11291, 110
    %v11301 = vpop.permute.xlu0 %11300
    %11302 = vrot.lane.b32.xlu0 %v11292, 110
    %v11303 = vpop.permute.xlu0 %11302
    %11304 = vrot.lane.b32.xlu0 %v11293, 110
    %v11305 = vpop.permute.xlu0 %11304
    %v11306 = vsel %vm1003, %v11295, %v11297
    %v11307 = vsel %vm1003, %v11297, %v11299
    %v11308 = vsel %vm1003, %v11301, %v11303
    %v11309 = vsel %vm1003, %v11303, %v11305
    %v11314 = vadd.f32 %v11270, %v11306
    %v11315 = vadd.f32 %v11271, %v11307
    %v11316 = vadd.f32 %v11272, %v11308
    %v11317 = vadd.f32 %v11273, %v11309
    %s11318 = sld [smem:[#allocation9 + $0x8c]]
    %v11319 = vstv %s11318
    %v11320 = vmul.f32 %v11319, %v6092
    %v11321 = vmul.f32 %v11319, %v6093
    %v11322 = vmul.f32 %v11319, %v6094
    %v11323 = vmul.f32 %v11319, %v6095
    %v11324 = vmul.f32 %v11319, %v6096
    %v11325 = vmul.f32 %v11319, %v6097
    %v11332 = vrot.slane %v11320, 3
    %v11333 = vrot.slane %v11321, 3
    %v11334 = vrot.slane %v11322, 3
    %v11335 = vrot.slane %v11323, 3
    %v11336 = vrot.slane %v11324, 3
    %v11337 = vrot.slane %v11325, 3
    %11338 = vrot.lane.b32.xlu0 %v11332, 110
    %v11339 = vpop.permute.xlu0 %11338
    %11340 = vrot.lane.b32.xlu0 %v11333, 110
    %v11341 = vpop.permute.xlu0 %11340
    %11342 = vrot.lane.b32.xlu0 %v11334, 110
    %v11343 = vpop.permute.xlu0 %11342
    %11344 = vrot.lane.b32.xlu0 %v11335, 110
    %v11345 = vpop.permute.xlu0 %11344
    %11346 = vrot.lane.b32.xlu0 %v11336, 110
    %v11347 = vpop.permute.xlu0 %11346
    %11348 = vrot.lane.b32.xlu0 %v11337, 110
    %v11349 = vpop.permute.xlu0 %11348
    %v11350 = vsel %vm1003, %v11339, %v11341
    %v11351 = vsel %vm1003, %v11341, %v11343
    %v11352 = vsel %vm1003, %v11345, %v11347
    %v11353 = vsel %vm1003, %v11347, %v11349
    %v11358 = vadd.f32 %v11314, %v11350
    %v11359 = vadd.f32 %v11315, %v11351
    %v11360 = vadd.f32 %v11316, %v11352
    %v11361 = vadd.f32 %v11317, %v11353
    %s11362 = sld [smem:[#allocation9 + $0x72]]
    %v11363 = vstv %s11362
    %v11364 = vmul.f32 %v11363, %v6098
    %v11365 = vmul.f32 %v11363, %v6099
    %v11366 = vmul.f32 %v11363, %v6100
    %v11367 = vmul.f32 %v11363, %v6101
    %v11368 = vmul.f32 %v11363, %v6102
    %v11369 = vmul.f32 %v11363, %v6103
    %11376 = vrot.lane.b32.xlu0 %v11364, 96
    %v11377 = vpop.permute.xlu0 %11376
    %11378 = vrot.lane.b32.xlu0 %v11365, 96
    %v11379 = vpop.permute.xlu0 %11378
    %11380 = vrot.lane.b32.xlu0 %v11366, 96
    %v11381 = vpop.permute.xlu0 %11380
    %11382 = vrot.lane.b32.xlu0 %v11367, 96
    %v11383 = vpop.permute.xlu0 %11382
    %11384 = vrot.lane.b32.xlu0 %v11368, 96
    %v11385 = vpop.permute.xlu0 %11384
    %11386 = vrot.lane.b32.xlu0 %v11369, 96
    %v11387 = vpop.permute.xlu0 %11386
    %v11388 = vsel %vm1174, %v11377, %v11379
    %v11389 = vsel %vm1174, %v11379, %v11381
    %v11390 = vsel %vm1174, %v11383, %v11385
    %v11391 = vsel %vm1174, %v11385, %v11387
    %v11396 = vadd.f32 %v11358, %v11388
    %v11397 = vadd.f32 %v11359, %v11389
    %v11398 = vadd.f32 %v11360, %v11390
    %v11399 = vadd.f32 %v11361, %v11391
    %s11400 = sld [smem:[#allocation9 + $0x7b]]
    %v11401 = vstv %s11400
    %v11402 = vmul.f32 %v11401, %v6098
    %v11403 = vmul.f32 %v11401, %v6099
    %v11404 = vmul.f32 %v11401, %v6100
    %v11405 = vmul.f32 %v11401, %v6101
    %v11406 = vmul.f32 %v11401, %v6102
    %v11407 = vmul.f32 %v11401, %v6103
    %v11414 = vrot.slane %v11402, 1
    %v11415 = vrot.slane %v11403, 1
    %v11416 = vrot.slane %v11404, 1
    %v11417 = vrot.slane %v11405, 1
    %v11418 = vrot.slane %v11406, 1
    %v11419 = vrot.slane %v11407, 1
    %11420 = vrot.lane.b32.xlu0 %v11414, 96
    %v11421 = vpop.permute.xlu0 %11420
    %11422 = vrot.lane.b32.xlu0 %v11415, 96
    %v11423 = vpop.permute.xlu0 %11422
    %11424 = vrot.lane.b32.xlu0 %v11416, 96
    %v11425 = vpop.permute.xlu0 %11424
    %11426 = vrot.lane.b32.xlu0 %v11417, 96
    %v11427 = vpop.permute.xlu0 %11426
    %11428 = vrot.lane.b32.xlu0 %v11418, 96
    %v11429 = vpop.permute.xlu0 %11428
    %11430 = vrot.lane.b32.xlu0 %v11419, 96
    %v11431 = vpop.permute.xlu0 %11430
    %v11432 = vsel %vm1174, %v11421, %v11423
    %v11433 = vsel %vm1174, %v11423, %v11425
    %v11434 = vsel %vm1174, %v11427, %v11429
    %v11435 = vsel %vm1174, %v11429, %v11431
    %v11440 = vadd.f32 %v11396, %v11432
    %v11441 = vadd.f32 %v11397, %v11433
    %v11442 = vadd.f32 %v11398, %v11434
    %v11443 = vadd.f32 %v11399, %v11435
    %s11444 = sld [smem:[#allocation9 + $0x84]]
    %v11445 = vstv %s11444
    %v11446 = vmul.f32 %v11445, %v6098
    %v11447 = vmul.f32 %v11445, %v6099
    %v11448 = vmul.f32 %v11445, %v6100
    %v11449 = vmul.f32 %v11445, %v6101
    %v11450 = vmul.f32 %v11445, %v6102
    %v11451 = vmul.f32 %v11445, %v6103
    %v11458 = vrot.slane %v11446, 2
    %v11459 = vrot.slane %v11447, 2
    %v11460 = vrot.slane %v11448, 2
    %v11461 = vrot.slane %v11449, 2
    %v11462 = vrot.slane %v11450, 2
    %v11463 = vrot.slane %v11451, 2
    %11464 = vrot.lane.b32.xlu0 %v11458, 96
    %v11465 = vpop.permute.xlu0 %11464
    %11466 = vrot.lane.b32.xlu0 %v11459, 96
    %v11467 = vpop.permute.xlu0 %11466
    %11468 = vrot.lane.b32.xlu0 %v11460, 96
    %v11469 = vpop.permute.xlu0 %11468
    %11470 = vrot.lane.b32.xlu0 %v11461, 96
    %v11471 = vpop.permute.xlu0 %11470
    %11472 = vrot.lane.b32.xlu0 %v11462, 96
    %v11473 = vpop.permute.xlu0 %11472
    %11474 = vrot.lane.b32.xlu0 %v11463, 96
    %v11475 = vpop.permute.xlu0 %11474
    %v11476 = vsel %vm1174, %v11465, %v11467
    %v11477 = vsel %vm1174, %v11467, %v11469
    %v11478 = vsel %vm1174, %v11471, %v11473
    %v11479 = vsel %vm1174, %v11473, %v11475
    %v11484 = vadd.f32 %v11440, %v11476
    %v11485 = vadd.f32 %v11441, %v11477
    %v11486 = vadd.f32 %v11442, %v11478
    %v11487 = vadd.f32 %v11443, %v11479
    %s11488 = sld [smem:[#allocation9 + $0x8d]]
    %v11489 = vstv %s11488
    %v11490 = vmul.f32 %v11489, %v6098
    %v11491 = vmul.f32 %v11489, %v6099
    %v11492 = vmul.f32 %v11489, %v6100
    %v11493 = vmul.f32 %v11489, %v6101
    %v11494 = vmul.f32 %v11489, %v6102
    %v11495 = vmul.f32 %v11489, %v6103
    %v11502 = vrot.slane %v11490, 3
    %v11503 = vrot.slane %v11491, 3
    %v11504 = vrot.slane %v11492, 3
    %v11505 = vrot.slane %v11493, 3
    %v11506 = vrot.slane %v11494, 3
    %v11507 = vrot.slane %v11495, 3
    %11508 = vrot.lane.b32.xlu0 %v11502, 96
    %v11509 = vpop.permute.xlu0 %11508
    %11510 = vrot.lane.b32.xlu0 %v11503, 96
    %v11511 = vpop.permute.xlu0 %11510
    %11512 = vrot.lane.b32.xlu0 %v11504, 96
    %v11513 = vpop.permute.xlu0 %11512
    %11514 = vrot.lane.b32.xlu0 %v11505, 96
    %v11515 = vpop.permute.xlu0 %11514
    %11516 = vrot.lane.b32.xlu0 %v11506, 96
    %v11517 = vpop.permute.xlu0 %11516
    %11518 = vrot.lane.b32.xlu0 %v11507, 96
    %v11519 = vpop.permute.xlu0 %11518
    %v11520 = vsel %vm1174, %v11509, %v11511
    %v11521 = vsel %vm1174, %v11511, %v11513
    %v11522 = vsel %vm1174, %v11515, %v11517
    %v11523 = vsel %vm1174, %v11517, %v11519
    %v11528 = vadd.f32 %v11484, %v11520
    %v11529 = vadd.f32 %v11485, %v11521
    %v11530 = vadd.f32 %v11486, %v11522
    %v11531 = vadd.f32 %v11487, %v11523
    %s11532 = sld [smem:[#allocation9 + $0x73]]
    %v11533 = vstv %s11532
    %v11534 = vmul.f32 %v11533, %v6072
    %v11535 = vmul.f32 %v11533, %v6064
    %v11536 = vmul.f32 %v11533, %v6074
    %v11537 = vmul.f32 %v11533, %v6073
    %v11538 = vmul.f32 %v11533, %v6065
    %v11539 = vmul.f32 %v11533, %v6075
    %11546 = vrot.lane.b32.xlu0 %v11534, 95
    %v11547 = vpop.permute.xlu0 %11546
    %11548 = vrot.lane.b32.xlu0 %v11535, 95
    %v11549 = vpop.permute.xlu0 %11548
    %11550 = vrot.lane.b32.xlu0 %v11536, 95
    %v11551 = vpop.permute.xlu0 %11550
    %11552 = vrot.lane.b32.xlu0 %v11537, 95
    %v11553 = vpop.permute.xlu0 %11552
    %11554 = vrot.lane.b32.xlu0 %v11538, 95
    %v11555 = vpop.permute.xlu0 %11554
    %11556 = vrot.lane.b32.xlu0 %v11539, 95
    %v11557 = vpop.permute.xlu0 %11556
    %v11558 = vsel %vm1345, %v11547, %v11549
    %v11559 = vsel %vm1345, %v11549, %v11551
    %v11560 = vsel %vm1345, %v11553, %v11555
    %v11561 = vsel %vm1345, %v11555, %v11557
    %v11566 = vadd.f32 %v11528, %v11558
    %v11567 = vadd.f32 %v11529, %v11559
    %v11568 = vadd.f32 %v11530, %v11560
    %v11569 = vadd.f32 %v11531, %v11561
    %s11570 = sld [smem:[#allocation9 + $0x7c]]
    %v11571 = vstv %s11570
    %v11572 = vmul.f32 %v11571, %v6072
    %v11573 = vmul.f32 %v11571, %v6064
    %v11574 = vmul.f32 %v11571, %v6074
    %v11575 = vmul.f32 %v11571, %v6073
    %v11576 = vmul.f32 %v11571, %v6065
    %v11577 = vmul.f32 %v11571, %v6075
    %v11584 = vrot.slane %v11572, 1
    %v11585 = vrot.slane %v11573, 1
    %v11586 = vrot.slane %v11574, 1
    %v11587 = vrot.slane %v11575, 1
    %v11588 = vrot.slane %v11576, 1
    %v11589 = vrot.slane %v11577, 1
    %11590 = vrot.lane.b32.xlu0 %v11584, 95
    %v11591 = vpop.permute.xlu0 %11590
    %11592 = vrot.lane.b32.xlu0 %v11585, 95
    %v11593 = vpop.permute.xlu0 %11592
    %11594 = vrot.lane.b32.xlu0 %v11586, 95
    %v11595 = vpop.permute.xlu0 %11594
    %11596 = vrot.lane.b32.xlu0 %v11587, 95
    %v11597 = vpop.permute.xlu0 %11596
    %11598 = vrot.lane.b32.xlu0 %v11588, 95
    %v11599 = vpop.permute.xlu0 %11598
    %11600 = vrot.lane.b32.xlu0 %v11589, 95
    %v11601 = vpop.permute.xlu0 %11600
    %v11602 = vsel %vm1345, %v11591, %v11593
    %v11603 = vsel %vm1345, %v11593, %v11595
    %v11604 = vsel %vm1345, %v11597, %v11599
    %v11605 = vsel %vm1345, %v11599, %v11601
    %v11610 = vadd.f32 %v11566, %v11602
    %v11611 = vadd.f32 %v11567, %v11603
    %v11612 = vadd.f32 %v11568, %v11604
    %v11613 = vadd.f32 %v11569, %v11605
    %s11614 = sld [smem:[#allocation9 + $0x85]]
    %v11615 = vstv %s11614
    %v11616 = vmul.f32 %v11615, %v6072
    %v11617 = vmul.f32 %v11615, %v6064
    %v11618 = vmul.f32 %v11615, %v6074
    %v11619 = vmul.f32 %v11615, %v6073
    %v11620 = vmul.f32 %v11615, %v6065
    %v11621 = vmul.f32 %v11615, %v6075
    %v11628 = vrot.slane %v11616, 2
    %v11629 = vrot.slane %v11617, 2
    %v11630 = vrot.slane %v11618, 2
    %v11631 = vrot.slane %v11619, 2
    %v11632 = vrot.slane %v11620, 2
    %v11633 = vrot.slane %v11621, 2
    %11634 = vrot.lane.b32.xlu0 %v11628, 95
    %v11635 = vpop.permute.xlu0 %11634
    %11636 = vrot.lane.b32.xlu0 %v11629, 95
    %v11637 = vpop.permute.xlu0 %11636
    %11638 = vrot.lane.b32.xlu0 %v11630, 95
    %v11639 = vpop.permute.xlu0 %11638
    %11640 = vrot.lane.b32.xlu0 %v11631, 95
    %v11641 = vpop.permute.xlu0 %11640
    %11642 = vrot.lane.b32.xlu0 %v11632, 95
    %v11643 = vpop.permute.xlu0 %11642
    %11644 = vrot.lane.b32.xlu0 %v11633, 95
    %v11645 = vpop.permute.xlu0 %11644
    %v11646 = vsel %vm1345, %v11635, %v11637
    %v11647 = vsel %vm1345, %v11637, %v11639
    %v11648 = vsel %vm1345, %v11641, %v11643
    %v11649 = vsel %vm1345, %v11643, %v11645
    %v11654 = vadd.f32 %v11610, %v11646
    %v11655 = vadd.f32 %v11611, %v11647
    %v11656 = vadd.f32 %v11612, %v11648
    %v11657 = vadd.f32 %v11613, %v11649
    %s11658 = sld [smem:[#allocation9 + $0x8e]]
    %v11659 = vstv %s11658
    %v11660 = vmul.f32 %v11659, %v6072
    %v11661 = vmul.f32 %v11659, %v6064
    %v11662 = vmul.f32 %v11659, %v6074
    %v11663 = vmul.f32 %v11659, %v6073
    %v11664 = vmul.f32 %v11659, %v6065
    %v11665 = vmul.f32 %v11659, %v6075
    %v11672 = vrot.slane %v11660, 3
    %v11673 = vrot.slane %v11661, 3
    %v11674 = vrot.slane %v11662, 3
    %v11675 = vrot.slane %v11663, 3
    %v11676 = vrot.slane %v11664, 3
    %v11677 = vrot.slane %v11665, 3
    %11678 = vrot.lane.b32.xlu0 %v11672, 95
    %v11679 = vpop.permute.xlu0 %11678
    %11680 = vrot.lane.b32.xlu0 %v11673, 95
    %v11681 = vpop.permute.xlu0 %11680
    %11682 = vrot.lane.b32.xlu0 %v11674, 95
    %v11683 = vpop.permute.xlu0 %11682
    %11684 = vrot.lane.b32.xlu0 %v11675, 95
    %v11685 = vpop.permute.xlu0 %11684
    %11686 = vrot.lane.b32.xlu0 %v11676, 95
    %v11687 = vpop.permute.xlu0 %11686
    %11688 = vrot.lane.b32.xlu0 %v11677, 95
    %v11689 = vpop.permute.xlu0 %11688
    %v11690 = vsel %vm1345, %v11679, %v11681
    %v11691 = vsel %vm1345, %v11681, %v11683
    %v11692 = vsel %vm1345, %v11685, %v11687
    %v11693 = vsel %vm1345, %v11687, %v11689
    %v11698 = vadd.f32 %v11654, %v11690
    %v11699 = vadd.f32 %v11655, %v11691
    %v11700 = vadd.f32 %v11656, %v11692
    %v11701 = vadd.f32 %v11657, %v11693
    %s11702 = sld [smem:[#allocation9 + $0x74]]
    %v11703 = vstv %s11702
    %v11704 = vmul.f32 %v11703, %v6104
    %v11705 = vmul.f32 %v11703, %v6105
    %v11706 = vmul.f32 %v11703, %v6106
    %v11707 = vmul.f32 %v11703, %v6107
    %v11708 = vmul.f32 %v11703, %v6108
    %v11709 = vmul.f32 %v11703, %v6109
    %11716 = vrot.lane.b32.xlu0 %v11704, 94
    %v11717 = vpop.permute.xlu0 %11716
    %11718 = vrot.lane.b32.xlu0 %v11705, 94
    %v11719 = vpop.permute.xlu0 %11718
    %11720 = vrot.lane.b32.xlu0 %v11706, 94
    %v11721 = vpop.permute.xlu0 %11720
    %11722 = vrot.lane.b32.xlu0 %v11707, 94
    %v11723 = vpop.permute.xlu0 %11722
    %11724 = vrot.lane.b32.xlu0 %v11708, 94
    %v11725 = vpop.permute.xlu0 %11724
    %11726 = vrot.lane.b32.xlu0 %v11709, 94
    %v11727 = vpop.permute.xlu0 %11726
    %v11728 = vsel %vm1516, %v11717, %v11719
    %v11729 = vsel %vm1516, %v11719, %v11721
    %v11730 = vsel %vm1516, %v11723, %v11725
    %v11731 = vsel %vm1516, %v11725, %v11727
    %v11736 = vadd.f32 %v11698, %v11728
    %v11737 = vadd.f32 %v11699, %v11729
    %v11738 = vadd.f32 %v11700, %v11730
    %v11739 = vadd.f32 %v11701, %v11731
    %s11740 = sld [smem:[#allocation9 + $0x7d]]
    %v11741 = vstv %s11740
    %v11742 = vmul.f32 %v11741, %v6104
    %v11743 = vmul.f32 %v11741, %v6105
    %v11744 = vmul.f32 %v11741, %v6106
    %v11745 = vmul.f32 %v11741, %v6107
    %v11746 = vmul.f32 %v11741, %v6108
    %v11747 = vmul.f32 %v11741, %v6109
    %v11754 = vrot.slane %v11742, 1
    %v11755 = vrot.slane %v11743, 1
    %v11756 = vrot.slane %v11744, 1
    %v11757 = vrot.slane %v11745, 1
    %v11758 = vrot.slane %v11746, 1
    %v11759 = vrot.slane %v11747, 1
    %11760 = vrot.lane.b32.xlu0 %v11754, 94
    %v11761 = vpop.permute.xlu0 %11760
    %11762 = vrot.lane.b32.xlu0 %v11755, 94
    %v11763 = vpop.permute.xlu0 %11762
    %11764 = vrot.lane.b32.xlu0 %v11756, 94
    %v11765 = vpop.permute.xlu0 %11764
    %11766 = vrot.lane.b32.xlu0 %v11757, 94
    %v11767 = vpop.permute.xlu0 %11766
    %11768 = vrot.lane.b32.xlu0 %v11758, 94
    %v11769 = vpop.permute.xlu0 %11768
    %11770 = vrot.lane.b32.xlu0 %v11759, 94
    %v11771 = vpop.permute.xlu0 %11770
    %v11772 = vsel %vm1516, %v11761, %v11763
    %v11773 = vsel %vm1516, %v11763, %v11765
    %v11774 = vsel %vm1516, %v11767, %v11769
    %v11775 = vsel %vm1516, %v11769, %v11771
    %v11780 = vadd.f32 %v11736, %v11772
    %v11781 = vadd.f32 %v11737, %v11773
    %v11782 = vadd.f32 %v11738, %v11774
    %v11783 = vadd.f32 %v11739, %v11775
    %s11784 = sld [smem:[#allocation9 + $0x86]]
    %v11785 = vstv %s11784
    %v11786 = vmul.f32 %v11785, %v6104
    %v11787 = vmul.f32 %v11785, %v6105
    %v11788 = vmul.f32 %v11785, %v6106
    %v11789 = vmul.f32 %v11785, %v6107
    %v11790 = vmul.f32 %v11785, %v6108
    %v11791 = vmul.f32 %v11785, %v6109
    %v11798 = vrot.slane %v11786, 2
    %v11799 = vrot.slane %v11787, 2
    %v11800 = vrot.slane %v11788, 2
    %v11801 = vrot.slane %v11789, 2
    %v11802 = vrot.slane %v11790, 2
    %v11803 = vrot.slane %v11791, 2
    %11804 = vrot.lane.b32.xlu0 %v11798, 94
    %v11805 = vpop.permute.xlu0 %11804
    %11806 = vrot.lane.b32.xlu0 %v11799, 94
    %v11807 = vpop.permute.xlu0 %11806
    %11808 = vrot.lane.b32.xlu0 %v11800, 94
    %v11809 = vpop.permute.xlu0 %11808
    %11810 = vrot.lane.b32.xlu0 %v11801, 94
    %v11811 = vpop.permute.xlu0 %11810
    %11812 = vrot.lane.b32.xlu0 %v11802, 94
    %v11813 = vpop.permute.xlu0 %11812
    %11814 = vrot.lane.b32.xlu0 %v11803, 94
    %v11815 = vpop.permute.xlu0 %11814
    %v11816 = vsel %vm1516, %v11805, %v11807
    %v11817 = vsel %vm1516, %v11807, %v11809
    %v11818 = vsel %vm1516, %v11811, %v11813
    %v11819 = vsel %vm1516, %v11813, %v11815
    %v11824 = vadd.f32 %v11780, %v11816
    %v11825 = vadd.f32 %v11781, %v11817
    %v11826 = vadd.f32 %v11782, %v11818
    %v11827 = vadd.f32 %v11783, %v11819
    %s11828 = sld [smem:[#allocation9 + $0x8f]]
    %v11829 = vstv %s11828
    %v11830 = vmul.f32 %v11829, %v6104
    %v11831 = vmul.f32 %v11829, %v6105
    %v11832 = vmul.f32 %v11829, %v6106
    %v11833 = vmul.f32 %v11829, %v6107
    %v11834 = vmul.f32 %v11829, %v6108
    %v11835 = vmul.f32 %v11829, %v6109
    %v11842 = vrot.slane %v11830, 3
    %v11843 = vrot.slane %v11831, 3
    %v11844 = vrot.slane %v11832, 3
    %v11845 = vrot.slane %v11833, 3
    %v11846 = vrot.slane %v11834, 3
    %v11847 = vrot.slane %v11835, 3
    %11848 = vrot.lane.b32.xlu0 %v11842, 94
    %v11849 = vpop.permute.xlu0 %11848
    %11850 = vrot.lane.b32.xlu0 %v11843, 94
    %v11851 = vpop.permute.xlu0 %11850
    %11852 = vrot.lane.b32.xlu0 %v11844, 94
    %v11853 = vpop.permute.xlu0 %11852
    %11854 = vrot.lane.b32.xlu0 %v11845, 94
    %v11855 = vpop.permute.xlu0 %11854
    %11856 = vrot.lane.b32.xlu0 %v11846, 94
    %v11857 = vpop.permute.xlu0 %11856
    %11858 = vrot.lane.b32.xlu0 %v11847, 94
    %v11859 = vpop.permute.xlu0 %11858
    %v11860 = vsel %vm1516, %v11849, %v11851
    %v11861 = vsel %vm1516, %v11851, %v11853
    %v11862 = vsel %vm1516, %v11855, %v11857
    %v11863 = vsel %vm1516, %v11857, %v11859
    %v11868 = vadd.f32 %v11824, %v11860
    %v11869 = vadd.f32 %v11825, %v11861
    %v11870 = vadd.f32 %v11826, %v11862
    %v11871 = vadd.f32 %v11827, %v11863
    %s11872 = sld [smem:[#allocation10 + $0x3]]
    %v11873 = vstv %s11872
    %v11874 = vadd.f32 %v11868, %v11873
    %v11875 = vadd.f32 %v11869, %v11873
    %v11876 = vadd.f32 %v11870, %v11873
    %v11877 = vadd.f32 %v11871, %v11873
    %v11882 = vrot.slane %v8990, 7
    %v11883 = vrot.slane %v8991, 7
    %v11884 = vrot.slane %v8992, 7
    %v11885 = vrot.slane %v8993, 7
    %v11894 = vrot.slane %v10432, 6
    %v11895 = vrot.slane %v10433, 6
    %v11896 = vrot.slane %v10434, 6
    %v11897 = vrot.slane %v10435, 6
    %v11906 = vrot.slane %v11874, 5
    %v11907 = vrot.slane %v11875, 5
    %v11908 = vrot.slane %v11876, 5
    %v11909 = vrot.slane %v11877, 5
    %v11914 = vsel %vm6029, %v7548, %v11882
    %v11915 = vsel %vm6029, %v7549, %v11883
    %v11916 = vsel %vm6029, %v7550, %v11884
    %v11917 = vsel %vm6029, %v7551, %v11885
    %v11918 = vsel %vm6034, %v11914, %v11894
    %v11919 = vsel %vm6034, %v11915, %v11895
    %v11920 = vsel %vm6034, %v11916, %v11896
    %v11921 = vsel %vm6034, %v11917, %v11897
    %v11922 = vsel %vm6039, %v11918, %v11906
    %v11923 = vsel %vm6039, %v11919, %v11907
    %v11924 = vsel %vm6039, %v11920, %v11908
    %v11925 = vsel %vm6039, %v11921, %v11909
    %v11928 = vadd.f32 %v11922, %v89
    %v11929 = vadd.f32 %v11923, %v95
    %v11930 = vadd.f32 %v11924, %v90
    %v11931 = vadd.f32 %v11925, %v96
    %v11936 = vcombine.low %v11928, %v11929
    %v11937 = vcombine.low %v11930, %v11931
    %11940 = vst [vmem:[#allocation12] sm:$0xff] %v11936
    %11941 = vst [vmem:[#allocation12 + $0x8] sm:$0xff] %v11937
    // Predicated region
    $region50: #{tpu_custom_call.1} parent=1 // pred_check
      _
    $region51: #{tpu_custom_call.1} parent=1 // pred_check_branch
      %11943 = sbr.rel (0) target = $region53
    $region52: #{tpu_custom_call.1} parent=1 // pred_region
      %s11945 = ssub.s32 256, 256
      %11946 = vsyncadd [#allocation4], %s11945
      %s11947 = sshll.u32 [#allocation12], 4
      %s11948 = int_to_ptr.vmem [resolvable:$true] %s11947
      %11953 = dma.vmem_to_hbm [thread:$0]  %s11948, 256, %s7, [#allocation4], 128, 128, 8
    $region53: #{tpu_custom_call.1} parent=1 // pred_fallthru
      _
    // Predicated region
    $region54: #{tpu_custom_call.1} parent=1 // pred_check
      _
    $region55: #{tpu_custom_call.1} parent=1 // pred_check_branch
      %11955 = sbr.rel (0) target = $region57
    $region56: #{tpu_custom_call.1} parent=1 // pred_region
      %11956 = dma.done [#allocation4], 256
    $region57: #{tpu_custom_call.1} parent=1 // pred_fallthru
      _
    %11957 = vsyncpa [#allocation3], 1
    %11958 = vsyncpa [#allocation4], 1
    %11959 = vsyncpa [#allocation5], 1
    %11960 = vsyncpa [#allocation8], 1
    %11961 = vsyncpa [#allocation11], 1

</llo_original>
